<compile_context>
chip_gen: v7x
topology: tpu7x:2x2x1
jax: 0.10.0
libtpu: 0.0.40
codegen_flags: <defaults>
</compile_context>

<pallas_src>
import jax
import jax.numpy as jnp
from jax import lax
from jax.experimental import pallas as pl
from jax.experimental.pallas import tpu as pltpu


# ----------------------------------------------------------------------------
# shared config helpers
# ----------------------------------------------------------------------------
def _compiler_params():
    return pltpu.CompilerParams(
        dimension_semantics=("parallel",),
        vmem_limit_bytes=32 * 1024 * 1024,
    )


def _pick_bs_tiling(bs, k, c_max, itemsize, budget_bytes=16 * 1024 * 1024):
    """VMEM-aware tile width for the flattened B*S axis.

    Per lane-column of tbs we budget the double-buffered input+output
    activation blocks (act dtype) plus the f32 in-kernel intermediates
    (conv result, norms, scales, pool selects)."""
    def rup(x, m):
        return ((x + m - 1) // m) * m
    per_col = 3 * k * c_max * (4 * itemsize + 16)
    tbs_cap = max(128, (budget_bytes // per_col) // 128 * 128)
    # keep >=2 grid steps whenever possible: v7x megacore sharding + DMA overlap
    tbs_split = rup(-(-bs // 2), 128) if bs > 128 else 128
    tbs = int(min(tbs_cap, tbs_split, 2048))
    bsp = rup(bs, tbs)
    return bsp, tbs


def pack_activation(x, tbs, dtype):
    """[3, K, C, BS] -> [C, nt*3*K*tbs], lane order (tile, comp, k, pos).

    Zero padding of the BS axis is inert: padded columns stay exactly zero
    through conv/QBN/Qrelu and contribute 0 to every Gram partial."""
    three, k, c, bs = x.shape
    bsp = -(-bs // tbs) * tbs
    nt = bsp // tbs
    if bsp != bs:
        x = jnp.pad(x, ((0, 0), (0, 0), (0, 0), (0, bsp - bs)))
    x = x.reshape(3, k, c, nt, tbs)
    x = jnp.transpose(x, (2, 3, 0, 1, 4))          # [C, nt, 3, K, tbs]
    return x.reshape(c, nt * 3 * k * tbs).astype(dtype)


_DN_LANES = (((1,), (1,)), ((), ()))               # contract the lane axis (A @ B^T)


# ----------------------------------------------------------------------------
# Pallas kernels
# ----------------------------------------------------------------------------
def _gram_kernel(x_ref, g_ref):
    """Per-tile Gram partial of the raw (packed) input: G_t = x x^T.

    One MXU matmul contracting the 3*K*tbs lane axis; used for layer-0 QBN
    stats: diag(w0 G w0^T) = sum of squares of the layer-0 pre-activation."""
    x = x_ref[...]
    g_ref[0] = lax.dot_general(x, x, _DN_LANES,
                               preferred_element_type=jnp.float32)


def _apply_gram_kernel(x_ref, w_ref, inv_ref, inv2_ref, o_ref, g_ref):
    """conv -> QBN_RM -> Qrelu for one layer, fused with the Gram partial of
    its OUTPUT (used for the next layer's QBN stats).

    Lane layout of the [Cin, 3*K*tbs] block is component-major, so the three
    components are 128-aligned lane slices of the single matmul result."""
    kt = x_ref.shape[1] // 3
    ya = jnp.dot(w_ref[...], x_ref[...],
                 preferred_element_type=jnp.float32)              # [Cout, 3*K*tbs]
    y0, y1, y2 = ya[:, 0:kt], ya[:, kt:2 * kt], ya[:, 2 * kt:3 * kt]
    r = jnp.sqrt(y0 * y0 + y1 * y1 + y2 * y2)                     # 3-vector norm
    # fused QBN * Qrelu coefficient:  inv * min(r*inv, 1) == min(r*inv^2, inv)
    scale = jnp.minimum(r * inv2_ref[...], inv_ref[...])
    z0 = (y0 * scale).astype(o_ref.dtype)
    z1 = (y1 * scale).astype(o_ref.dtype)
    z2 = (y2 * scale).astype(o_ref.dtype)
    o_ref[:, 0:kt] = z0
    o_ref[:, kt:2 * kt] = z1
    o_ref[:, 2 * kt:3 * kt] = z2
    # Gram of the (storage-dtype) output: stats for the next layer, on the MXU.
    g_ref[0] = (lax.dot_general(z0, z0, _DN_LANES, preferred_element_type=jnp.float32)
                + lax.dot_general(z1, z1, _DN_LANES, preferred_element_type=jnp.float32)
                + lax.dot_general(z2, z2, _DN_LANES, preferred_element_type=jnp.float32))


def _apply_pool_kernel(x_ref, w_ref, inv_ref, inv2_ref, p_ref):
    """Last layer (conv -> QBN_RM -> Qrelu) fused with the vector-norm max-pool
    over the group axis K.

    Selection uses the pre-scale squared norm: ||z|| = min(r^2*inv^2, r*inv) is
    strictly increasing in r, so the per-(channel, position) argmax over k is
    unchanged.  Strict '>' keeps the first max on ties.  Outputs are lane-dense
    [3, CL, tbs] stores."""
    kt = x_ref.shape[1] // 3
    tbs = p_ref.shape[2]
    nk = kt // tbs
    ya = jnp.dot(w_ref[...], x_ref[...],
                 preferred_element_type=jnp.float32)              # [CL, 3*K*tbs]
    y0, y1, y2 = ya[:, 0:kt], ya[:, kt:2 * kt], ya[:, 2 * kt:3 * kt]
    rsq = y0 * y0 + y1 * y1 + y2 * y2
    scale = jnp.minimum(jnp.sqrt(rsq) * inv2_ref[...], inv_ref[...])
    z0, z1, z2 = y0 * scale, y1 * scale, y2 * scale
    best = rsq[:, 0:tbs]
    b0, b1, b2 = z0[:, 0:tbs], z1[:, 0:tbs], z2[:, 0:tbs]
    # TODO(synk): for very large K fold this select into a fori_loop /
    # sublane-reshape max to bound vreg live ranges.
    for k in range(1, nk):
        lo, hi = k * tbs, (k + 1) * tbs
        rk = rsq[:, lo:hi]
        upd = rk > best
        best = jnp.where(upd, rk, best)
        b0 = jnp.where(upd, z0[:, lo:hi], b0)
        b1 = jnp.where(upd, z1[:, lo:hi], b1)
        b2 = jnp.where(upd, z2[:, lo:hi], b2)
    p_ref[0] = b0
    p_ref[1] = b1
    p_ref[2] = b2


# ----------------------------------------------------------------------------
# pallas_call wrappers (two-phase reduction: tiles write [C,C] Gram partials,
# sum + rsqrt finishes in tiny plain-JAX glue, grid stays "parallel")
# ----------------------------------------------------------------------------
def qgram(xp, k, tbs):
    """xp: [C, nt*3*K*tbs] -> Gram [C, C] summed over tiles."""
    c, lanes = xp.shape
    blk = 3 * k * tbs
    nt = lanes // blk
    fn = pl.pallas_call(
        _gram_kernel,
        grid=(nt,),
        in_specs=[pl.BlockSpec((c, blk), lambda t: (0, t))],
        out_specs=pl.BlockSpec((1, c, c), lambda t: (t, 0, 0)),
        out_shape=jax.ShapeDtypeStruct((nt, c, c), jnp.float32),
        compiler_params=_compiler_params(),
    )
    return jnp.sum(fn(xp), axis=0)


def qconv_bn_relu_gram(xp, w, inv, inv2, k, tbs):
    """Apply one layer (conv+QBN+Qrelu) and emit the Gram of its output."""
    ci, lanes = xp.shape
    co = w.shape[0]
    blk = 3 * k * tbs
    nt = lanes // blk
    fn = pl.pallas_call(
        _apply_gram_kernel,
        grid=(nt,),
        in_specs=[pl.BlockSpec((ci, blk), lambda t: (0, t)),
                  pl.BlockSpec((co, ci), lambda t: (0, 0)),
                  pl.BlockSpec((co, 1), lambda t: (0, 0)),
                  pl.BlockSpec((co, 1), lambda t: (0, 0))],
        out_specs=[pl.BlockSpec((co, blk), lambda t: (0, t)),
                   pl.BlockSpec((1, co, co), lambda t: (t, 0, 0))],
        out_shape=[jax.ShapeDtypeStruct((co, lanes), xp.dtype),
                   jax.ShapeDtypeStruct((nt, co, co), jnp.float32)],
        compiler_params=_compiler_params(),
    )
    z, gpart = fn(xp, w, inv, inv2)
    return z, jnp.sum(gpart, axis=0)


def qconv_bn_relu_pool(xp, w, inv, inv2, k, tbs):
    """Apply the last layer and max-pool over K -> [3, CL, BSp] (f32)."""
    ci, lanes = xp.shape
    cl = w.shape[0]
    blk = 3 * k * tbs
    nt = lanes // blk
    fn = pl.pallas_call(
        _apply_pool_kernel,
        grid=(nt,),
        in_specs=[pl.BlockSpec((ci, blk), lambda t: (0, t)),
                  pl.BlockSpec((cl, ci), lambda t: (0, 0)),
                  pl.BlockSpec((cl, 1), lambda t: (0, 0)),
                  pl.BlockSpec((cl, 1), lambda t: (0, 0))],
        out_specs=pl.BlockSpec((3, cl, tbs), lambda t: (0, 0, t)),
        out_shape=jax.ShapeDtypeStruct((3, cl, nt * tbs), jnp.float32),
        compiler_params=_compiler_params(),
    )
    return fn(xp, w, inv, inv2)


# ----------------------------------------------------------------------------
# plain-JAX glue (sampling / grouping)
# ----------------------------------------------------------------------------
def square_distance(src, dst):
    dist = -2.0 * jnp.einsum('bnc,bmc->bnm', src, dst)
    dist = dist + jnp.sum(src ** 2, -1)[:, :, None]
    dist = dist + jnp.sum(dst ** 2, -1)[:, None, :]
    return dist


def index_points(points, idx):
    b = points.shape[0]
    bidx = jnp.arange(b).reshape((b,) + (1,) * (idx.ndim - 1))
    bidx = jnp.broadcast_to(bidx, idx.shape)
    return points[bidx, idx]


def farthest_point_sample(xyz, npoint):
    b, n, _ = xyz.shape
    distance = jnp.full((b, n), 1e10, dtype=xyz.dtype)
    centroid = jnp.mean(xyz, axis=1, keepdims=True)
    distance = jnp.minimum(distance, jnp.sum((xyz - centroid) ** 2, -1))
    farthest = jnp.argmax(distance, axis=-1)
    idxs = []
    for _ in range(npoint):
        idxs.append(farthest)
        centroid = index_points(xyz, farthest[:, None])            # [B,1,3]
        distance = jnp.minimum(distance, jnp.sum((xyz - centroid) ** 2, -1))
        farthest = jnp.argmax(distance, axis=-1)
    return jnp.stack(idxs, axis=1)


def query_ball_point(radius, nsample, xyz, new_xyz):
    b, n, _ = xyz.shape
    s = new_xyz.shape[1]
    sqrdists = square_distance(new_xyz, xyz)
    group_idx = jnp.broadcast_to(jnp.arange(n, dtype=jnp.int32), (b, s, n))
    group_idx = jnp.where(sqrdists > radius ** 2, n, group_idx)
    group_idx = jnp.sort(group_idx, axis=-1)[:, :, :nsample]
    group_first = group_idx[:, :, 0:1]
    return jnp.where(group_idx == n, group_first, group_idx)


# ----------------------------------------------------------------------------
# module
# ----------------------------------------------------------------------------
class PointNetSetAbstractionMsgQ:
    def __init__(self, npoint, radius_list, nsample_list, in_channel, mlp_list, key,
                 act_dtype=jnp.bfloat16):
        self.npoint = npoint
        self.radius_list = radius_list
        self.nsample_list = nsample_list
        self.mlp_list = mlp_list
        self.eps = 1e-5
        self.act_dtype = act_dtype           # inter-layer storage / MXU input dtype
        self.weights = []
        for mlp in mlp_list:
            ws = []
            last = in_channel + 1
            for out_ch in mlp:
                key, sub = jax.random.split(key)
                ws.append(jax.random.normal(sub, (out_ch, last), jnp.float32)
                          * (1.0 / float(last) ** 0.5))
                last = out_ch
            self.weights.append(ws)

    # TODO(synk): grouping (ball query + gather + layout packing) stays plain
    # JAX; a scalar-prefetch gather kernel writing the packed layout directly
    # would remove these activation-sized HBM round trips.
    def _group_feats(self, i, xyz_t, points_t, new_xyz):
        """-> ([3, K, C_in, B*S] float32 grouped features, K)."""
        b = xyz_t.shape[0]
        s = self.npoint
        k = self.nsample_list[i]
        group_idx = query_ball_point(self.radius_list[i], k, xyz_t, new_xyz)
        grouped_xyz = index_points(xyz_t, group_idx) - new_xyz[:, :, None, :]   # [B,S,K,3]
        gxyz = jnp.transpose(grouped_xyz, (0, 3, 1, 2))                         # [B,3,S,K]
        if points_t is not None:
            gidx3 = jnp.broadcast_to(group_idx[:, None], (b, 3, s, k)).reshape(b * 3, s, k)
            gp = index_points(points_t, gidx3)                                  # [B*3,S,K,D]
            d = gp.shape[-1]
            gp = gp.reshape(b, 3, s, k, d)                                      # [B,3,S,K,D]
            feats = jnp.concatenate([gp, gxyz[..., None]], axis=-1)             # [B,3,S,K,D+1]
        else:
            feats = gxyz[..., None]                                             # [B,3,S,K,1]
        c_in = feats.shape[-1]
        feats = jnp.transpose(feats, (1, 3, 4, 0, 2)).reshape(3, k, c_in, b * s)
        return feats, k

    def _mlp_pool(self, xp, ws, denom, k, tbs):
        """Fused conv+QBN+Qrelu chain + final conv+QBN+Qrelu+K-pool (Pallas).

        xp: packed [C_in, nt*3*K*tbs] activation; returns [3, CL, BSp] f32."""
        g = qgram(xp, k, tbs)                                        # [Cin, Cin]
        n_layers = len(ws)
        for j, w in enumerate(ws):
            wq = w.astype(self.act_dtype)                            # explicit MXU dtype
            wf = wq.astype(jnp.float32)
            # per-channel sum of squares of this layer's pre-activation,
            # finished from the input Gram:  diag(w G w^T)
            qss = jnp.einsum('oc,cd,od->o', wf, g, wf,
                             precision=lax.Precision.HIGHEST)
            inv = lax.rsqrt(qss / denom + self.eps)[:, None]         # [Cout, 1]
            inv2 = inv * inv
            if j < n_layers - 1:
                xp, g = qconv_bn_relu_gram(xp, wq, inv, inv2, k, tbs)
            else:
                return qconv_bn_relu_pool(xp, wq, inv, inv2, k, tbs)

    def __call__(self, xyz, points):
        # xyz: [B, 3, N]; points: [B*3, D, N] (3 vector components on the batch axis)
        b = xyz.shape[0]
        s = self.npoint
        bs = b * s
        xyz_t = jnp.transpose(xyz, (0, 2, 1))
        points_t = None if points is None else jnp.transpose(points, (0, 2, 1))
        new_xyz = index_points(xyz_t, farthest_point_sample(xyz_t, s))          # [B,S,3]
        itemsize = jnp.dtype(self.act_dtype).itemsize
        outs = []
        for i in range(len(self.radius_list)):
            feats, k = self._group_feats(i, xyz_t, points_t, new_xyz)
            c_max = max([feats.shape[2]] + [w.shape[0] for w in self.weights[i]])
            _, tbs = _pick_bs_tiling(bs, k, c_max, itemsize)
            xp = pack_activation(feats, tbs, self.act_dtype)
            denom = 3.0 * k * bs
            pooled = self._mlp_pool(xp, self.weights[i], denom, k, tbs)         # [3,CL,BSp]
            cl = self.weights[i][-1].shape[0]
            p = pooled[:, :, :bs].reshape(3, cl, b, s)
            p = jnp.transpose(p, (2, 0, 1, 3)).reshape(b * 3, cl, s)
            outs.append(p)
        return jnp.transpose(new_xyz, (0, 2, 1)), jnp.concatenate(outs, axis=1)


# ----------------------------------------------------------------------------
# pure-JAX reference for kernel validation (all K candidates, no pool)
# ----------------------------------------------------------------------------
def ref_candidates(x, weights, eps=1e-5, act_dtype=jnp.bfloat16):
    """x: [3, K, C, BS] f32 -> [3, K, CL, BS] after the conv+QBN+Qrelu chain.

    Storage/weight quantisation to act_dtype is emulated so the comparison
    isolates the kernel chain (MXU accumulation order) rather than the
    deliberate bf16 storage precision."""
    x = x.astype(jnp.float32)
    for w in weights:
        xq = x.astype(act_dtype).astype(jnp.float32)
        wq = w.astype(act_dtype).astype(jnp.float32)
        y = jnp.einsum('oc,vkcn->vkon', wq, xq, precision=lax.Precision.HIGHEST)
        mean = jnp.mean(y * y, axis=(0, 1, 3), keepdims=True)
        y = y / jnp.sqrt(mean + eps)
        vmod = jnp.sqrt(jnp.sum(y * y, axis=0, keepdims=True))
        x = y * jnp.minimum(vmod, 1.0)
    return x


def _check_pooled(pooled, cand, tol=5e-2):
    """Tie-robust check: each pooled vector matches SOME candidate component-wise
    and its vector norm equals the max candidate norm (robust to near-tie flips)."""
    diff = jnp.max(jnp.abs(pooled[:, None] - cand), axis=0)            # [K, CL, BS]
    ok_match = bool(jnp.all(jnp.min(diff, axis=0) <= tol))
    pn = jnp.sqrt(jnp.sum(pooled * pooled, axis=0))
    cmax = jnp.max(jnp.sqrt(jnp.sum(cand * cand, axis=0)), axis=0)
    ok_norm = bool(jnp.allclose(pn, cmax, atol=tol, rtol=tol))
    return ok_match and ok_norm


# ----------------------------------------------------------------------------
if __name__ == "__main__":
    key = jax.random.PRNGKey(0)
    B, N, D = 2, 64, 4
    npoint = 16
    radius_list = [0.2, 0.4]
    nsample_list = [8, 16]
    mlp_list = [[8, 16], [8, 16]]

    k1, k2, k3 = jax.random.split(key, 3)
    xyz = jax.random.uniform(k1, (B, 3, N), jnp.float32)
    points = jax.random.normal(k2, (B * 3, D, N), jnp.float32)

    module = PointNetSetAbstractionMsgQ(npoint, radius_list, nsample_list, D, mlp_list, k3)

    forward = jax.jit(module.__call__)
    new_xyz_out, new_points = forward(xyz, points)
    jax.block_until_ready((new_xyz_out, new_points))

    assert new_xyz_out.shape == (B, 3, npoint)
    assert new_points.shape == (B * 3, sum(m[-1] for m in mlp_list), npoint)
    assert bool(jnp.all(jnp.isfinite(new_points)))

    # --- validate the fused Pallas MLP(+pool) chain against a pure-JAX reference ---
    xyz_t = jnp.transpose(xyz, (0, 2, 1))
    points_t = jnp.transpose(points, (0, 2, 1))
    new_xyz_r = index_points(xyz_t, farthest_point_sample(xyz_t, npoint))
    bs = B * npoint
    itemsize = jnp.dtype(module.act_dtype).itemsize
    for i in range(len(radius_list)):
        feats_i, K_i = module._group_feats(i, xyz_t, points_t, new_xyz_r)
        c_max = max([feats_i.shape[2]] + [w.shape[0] for w in module.weights[i]])
        _, tbs_i = _pick_bs_tiling(bs, K_i, c_max, itemsize)
        xp_i = pack_activation(feats_i, tbs_i, module.act_dtype)
        pooled_pal = module._mlp_pool(xp_i, module.weights[i], 3.0 * K_i * bs, K_i, tbs_i)
        pooled_pal = pooled_pal[:, :, :bs]
        cand = ref_candidates(feats_i, module.weights[i], act_dtype=module.act_dtype)
        assert _check_pooled(pooled_pal, cand), "fused MLP+pool kernel mismatch (scale %d)" % i

    # --- extra check: exercise the multi-tile (n_tiles = 2) grid path directly ---
    kk, cc, bb, tbs_t = 8, D + 1, 256, 128
    x_t = jax.random.normal(jax.random.fold_in(k3, 7), (3, kk, cc, bb), jnp.float32)
    xp_t = pack_activation(x_t, tbs_t, module.act_dtype)
    pooled_t = module._mlp_pool(xp_t, module.weights[0], 3.0 * kk * bb, kk, tbs_t)
    cand_t = ref_candidates(x_t, module.weights[0], act_dtype=module.act_dtype)
    assert _check_pooled(pooled_t, cand_t), "tiled-grid MLP+pool kernel mismatch"

    print("KERNEL_OK")
</pallas_src>

<mosaic_0001>
module attributes {stable_mosaic.version = 11 : i64} {
  func.func @_apply_gram_kernel(%arg0: i32, %arg1: memref<5x3072xbf16, #tpu.memory_space<vmem>>, %arg2: memref<8x5xbf16, #tpu.memory_space<vmem>>, %arg3: memref<8x1xf32, #tpu.memory_space<vmem>>, %arg4: memref<8x1xf32, #tpu.memory_space<vmem>>, %arg5: memref<8x3072xbf16, #tpu.memory_space<vmem>>, %arg6: memref<1x8x8xf32, #tpu.memory_space<vmem>>) attributes {dimension_semantics = [#tpu.dimension_semantics<parallel>], iteration_bounds = array<i64: 1>, scalar_prefetch = 0 : i64, scratch_operands = 0 : i64, tpu.core_type = #tpu.core_type<tc>, window_params = [{transform_indices = @transform_0, window_bounds = array<i64: 5, 3072>}, {pipeline_mode = #tpu.pipeline_mode<synchronous>, transform_indices = @transform_1, window_bounds = array<i64: 8, 5>}, {pipeline_mode = #tpu.pipeline_mode<synchronous>, transform_indices = @transform_2, window_bounds = array<i64: 8, 1>}, {pipeline_mode = #tpu.pipeline_mode<synchronous>, transform_indices = @transform_3, window_bounds = array<i64: 8, 1>}, {transform_indices = @transform_4, window_bounds = array<i64: 8, 3072>}, {transform_indices = @transform_5, window_bounds = array<i64: 1, 8, 8>}]} {
    %c0 = arith.constant 0 : index
    %c0_0 = arith.constant 0 : index
    %0 = vector.load %arg2[%c0, %c0_0] : memref<8x5xbf16, #tpu.memory_space<vmem>>, vector<8x5xbf16>
    %c0_1 = arith.constant 0 : index
    %c0_2 = arith.constant 0 : index
    %1 = vector.load %arg1[%c0_1, %c0_2] : memref<5x3072xbf16, #tpu.memory_space<vmem>>, vector<5x3072xbf16>
    %cst = arith.constant dense<0.000000e+00> : vector<8x3072xf32>
    %2 = tpu.matmul %0, %1, %cst {dimension_numbers = #tpu.dot_dimension_numbers<[1], [0], [0], [1], [0, 0, 1, 1], [], []>} : vector<8x5xbf16>, vector<5x3072xbf16>, vector<8x3072xf32> -> vector<8x3072xf32>
    %3 = vector.extract_strided_slice %2 {offsets = [0, 0], sizes = [8, 1024], strides = [1, 1]} : vector<8x3072xf32> to vector<8x1024xf32>
    %4 = vector.extract_strided_slice %2 {offsets = [0, 1024], sizes = [8, 1024], strides = [1, 1]} : vector<8x3072xf32> to vector<8x1024xf32>
    %5 = vector.extract_strided_slice %2 {offsets = [0, 2048], sizes = [8, 1024], strides = [1, 1]} : vector<8x3072xf32> to vector<8x1024xf32>
    %6 = arith.mulf %3, %3 : vector<8x1024xf32>
    %7 = arith.mulf %4, %4 : vector<8x1024xf32>
    %8 = arith.addf %6, %7 : vector<8x1024xf32>
    %9 = arith.mulf %5, %5 : vector<8x1024xf32>
    %10 = arith.addf %8, %9 : vector<8x1024xf32>
    %11 = math.sqrt %10 : vector<8x1024xf32>
    %c0_3 = arith.constant 0 : index
    %c0_4 = arith.constant 0 : index
    %12 = vector.load %arg4[%c0_3, %c0_4] : memref<8x1xf32, #tpu.memory_space<vmem>>, vector<8x1xf32>
    %13 = vector.broadcast %12 : vector<8x1xf32> to vector<8x1024xf32>
    %14 = arith.mulf %11, %13 : vector<8x1024xf32>
    %c0_5 = arith.constant 0 : index
    %c0_6 = arith.constant 0 : index
    %15 = vector.load %arg3[%c0_5, %c0_6] : memref<8x1xf32, #tpu.memory_space<vmem>>, vector<8x1xf32>
    %16 = vector.broadcast %15 : vector<8x1xf32> to vector<8x1024xf32>
    %17 = arith.minimumf %14, %16 : vector<8x1024xf32>
    %18 = arith.mulf %3, %17 : vector<8x1024xf32>
    %19 = arith.truncf %18 : vector<8x1024xf32> to vector<8x1024xbf16>
    %20 = arith.mulf %4, %17 : vector<8x1024xf32>
    %21 = arith.truncf %20 : vector<8x1024xf32> to vector<8x1024xbf16>
    %22 = arith.mulf %5, %17 : vector<8x1024xf32>
    %23 = arith.truncf %22 : vector<8x1024xf32> to vector<8x1024xbf16>
    %c0_7 = arith.constant 0 : index
    %c0_8 = arith.constant 0 : index
    %24 = vector.load %arg5[%c0_7, %c0_8] : memref<8x3072xbf16, #tpu.memory_space<vmem>>, vector<8x1024xbf16>
    tpu.vector_store %arg5[%c0_7, %c0_8], %19 {strides = array<i32>} : memref<8x3072xbf16, #tpu.memory_space<vmem>>, vector<8x1024xbf16>,
    %c0_9 = arith.constant 0 : index
    %c1024 = arith.constant 1024 : index
    %25 = vector.load %arg5[%c0_9, %c1024] : memref<8x3072xbf16, #tpu.memory_space<vmem>>, vector<8x1024xbf16>
    tpu.vector_store %arg5[%c0_9, %c1024], %21 {strides = array<i32>} : memref<8x3072xbf16, #tpu.memory_space<vmem>>, vector<8x1024xbf16>,
    %c0_10 = arith.constant 0 : index
    %c2048 = arith.constant 2048 : index
    %26 = vector.load %arg5[%c0_10, %c2048] : memref<8x3072xbf16, #tpu.memory_space<vmem>>, vector<8x1024xbf16>
    tpu.vector_store %arg5[%c0_10, %c2048], %23 {strides = array<i32>} : memref<8x3072xbf16, #tpu.memory_space<vmem>>, vector<8x1024xbf16>,
    %cst_11 = arith.constant dense<0.000000e+00> : vector<8x8xf32>
    %27 = tpu.matmul %19, %19, %cst_11 {dimension_numbers = #tpu.dot_dimension_numbers<[1], [1], [0], [0], [0, 0, 1, 0], [], []>} : vector<8x1024xbf16>, vector<8x1024xbf16>, vector<8x8xf32> -> vector<8x8xf32>
    %cst_12 = arith.constant dense<0.000000e+00> : vector<8x8xf32>
    %28 = tpu.matmul %21, %21, %cst_12 {dimension_numbers = #tpu.dot_dimension_numbers<[1], [1], [0], [0], [0, 0, 1, 0], [], []>} : vector<8x1024xbf16>, vector<8x1024xbf16>, vector<8x8xf32> -> vector<8x8xf32>
    %29 = arith.addf %27, %28 : vector<8x8xf32>
    %cst_13 = arith.constant dense<0.000000e+00> : vector<8x8xf32>
    %30 = tpu.matmul %23, %23, %cst_13 {dimension_numbers = #tpu.dot_dimension_numbers<[1], [1], [0], [0], [0, 0, 1, 0], [], []>} : vector<8x1024xbf16>, vector<8x1024xbf16>, vector<8x8xf32> -> vector<8x8xf32>
    %31 = arith.addf %29, %30 : vector<8x8xf32>
    %c0_14 = arith.constant 0 : index
    %c0_15 = arith.constant 0 : index
    %c0_16 = arith.constant 0 : index
    %32 = vector.load %arg6[%c0_14, %c0_15, %c0_16] : memref<1x8x8xf32, #tpu.memory_space<vmem>>, vector<1x8x8xf32>
    %33 = vector.shape_cast %32 : vector<1x8x8xf32> to vector<8x8xf32>
    %34 = vector.shape_cast %31 : vector<8x8xf32> to vector<1x8x8xf32>
    tpu.vector_store %arg6[%c0_14, %c0_15, %c0_16], %34 {strides = array<i32>} : memref<1x8x8xf32, #tpu.memory_space<vmem>>, vector<1x8x8xf32>,
    return
  }
  func.func @transform_0(%arg0: i32) -> (i32, i32) {
    %c0_i32 = arith.constant 0 : i32
    %c0_i32_0 = arith.constant 0 : i32
    return %c0_i32, %arg0 : i32, i32
  }
  func.func @transform_1(%arg0: i32) -> (i32, i32) {
    %c0_i32 = arith.constant 0 : i32
    %c0_i32_0 = arith.constant 0 : i32
    %c0_i32_1 = arith.constant 0 : i32
    return %c0_i32, %c0_i32_0 : i32, i32
  }
  func.func @transform_2(%arg0: i32) -> (i32, i32) {
    %c0_i32 = arith.constant 0 : i32
    %c0_i32_0 = arith.constant 0 : i32
    %c0_i32_1 = arith.constant 0 : i32
    return %c0_i32, %c0_i32_0 : i32, i32
  }
  func.func @transform_3(%arg0: i32) -> (i32, i32) {
    %c0_i32 = arith.constant 0 : i32
    %c0_i32_0 = arith.constant 0 : i32
    %c0_i32_1 = arith.constant 0 : i32
    return %c0_i32, %c0_i32_0 : i32, i32
  }
  func.func @transform_4(%arg0: i32) -> (i32, i32) {
    %c0_i32 = arith.constant 0 : i32
    %c0_i32_0 = arith.constant 0 : i32
    return %c0_i32, %arg0 : i32, i32
  }
  func.func @transform_5(%arg0: i32) -> (i32, i32, i32) {
    %c0_i32 = arith.constant 0 : i32
    %c0_i32_0 = arith.constant 0 : i32
    %c0_i32_1 = arith.constant 0 : i32
    return %arg0, %c0_i32, %c0_i32_0 : i32, i32, i32
  }
}

module attributes {stable_mosaic.version = 11 : i64} {
  func.func @_gram_kernel(%arg0: i32, %arg1: memref<5x3072xbf16, #tpu.memory_space<vmem>>, %arg2: memref<1x5x5xf32, #tpu.memory_space<vmem>>) attributes {dimension_semantics = [#tpu.dimension_semantics<parallel>], iteration_bounds = array<i64: 1>, scalar_prefetch = 0 : i64, scratch_operands = 0 : i64, tpu.core_type = #tpu.core_type<tc>, window_params = [{transform_indices = @transform_0, window_bounds = array<i64: 5, 3072>}, {transform_indices = @transform_1, window_bounds = array<i64: 1, 5, 5>}]} {
    %c0 = arith.constant 0 : index
    %c0_0 = arith.constant 0 : index
    %0 = vector.load %arg1[%c0, %c0_0] : memref<5x3072xbf16, #tpu.memory_space<vmem>>, vector<5x3072xbf16>
    %cst = arith.constant dense<0.000000e+00> : vector<5x5xf32>
    %1 = tpu.matmul %0, %0, %cst {dimension_numbers = #tpu.dot_dimension_numbers<[1], [1], [0], [0], [0, 0, 1, 0], [], []>} : vector<5x3072xbf16>, vector<5x3072xbf16>, vector<5x5xf32> -> vector<5x5xf32>
    %c0_1 = arith.constant 0 : index
    %c0_2 = arith.constant 0 : index
    %c0_3 = arith.constant 0 : index
    %2 = vector.load %arg2[%c0_1, %c0_2, %c0_3] : memref<1x5x5xf32, #tpu.memory_space<vmem>>, vector<1x5x5xf32>
    %3 = vector.shape_cast %2 : vector<1x5x5xf32> to vector<5x5xf32>
    %4 = vector.shape_cast %1 : vector<5x5xf32> to vector<1x5x5xf32>
    tpu.vector_store %arg2[%c0_1, %c0_2, %c0_3], %4 {strides = array<i32>} : memref<1x5x5xf32, #tpu.memory_space<vmem>>, vector<1x5x5xf32>,
    return
  }
  func.func @transform_0(%arg0: i32) -> (i32, i32) {
    %c0_i32 = arith.constant 0 : i32
    %c0_i32_0 = arith.constant 0 : i32
    return %c0_i32, %arg0 : i32, i32
  }
  func.func @transform_1(%arg0: i32) -> (i32, i32, i32) {
    %c0_i32 = arith.constant 0 : i32
    %c0_i32_0 = arith.constant 0 : i32
    %c0_i32_1 = arith.constant 0 : i32
    return %arg0, %c0_i32, %c0_i32_0 : i32, i32, i32
  }
}

module attributes {stable_mosaic.version = 11 : i64} {
  func.func @_apply_pool_kernel(%arg0: i32, %arg1: memref<8x3072xbf16, #tpu.memory_space<vmem>>, %arg2: memref<16x8xbf16, #tpu.memory_space<vmem>>, %arg3: memref<16x1xf32, #tpu.memory_space<vmem>>, %arg4: memref<16x1xf32, #tpu.memory_space<vmem>>, %arg5: memref<3x16x128xf32, #tpu.memory_space<vmem>>) attributes {dimension_semantics = [#tpu.dimension_semantics<parallel>], iteration_bounds = array<i64: 1>, scalar_prefetch = 0 : i64, scratch_operands = 0 : i64, tpu.core_type = #tpu.core_type<tc>, window_params = [{transform_indices = @transform_0, window_bounds = array<i64: 8, 3072>}, {pipeline_mode = #tpu.pipeline_mode<synchronous>, transform_indices = @transform_1, window_bounds = array<i64: 16, 8>}, {pipeline_mode = #tpu.pipeline_mode<synchronous>, transform_indices = @transform_2, window_bounds = array<i64: 16, 1>}, {pipeline_mode = #tpu.pipeline_mode<synchronous>, transform_indices = @transform_3, window_bounds = array<i64: 16, 1>}, {transform_indices = @transform_4, window_bounds = array<i64: 3, 16, 128>}]} {
    %c0 = arith.constant 0 : index
    %c0_0 = arith.constant 0 : index
    %0 = vector.load %arg2[%c0, %c0_0] : memref<16x8xbf16, #tpu.memory_space<vmem>>, vector<16x8xbf16>
    %c0_1 = arith.constant 0 : index
    %c0_2 = arith.constant 0 : index
    %1 = vector.load %arg1[%c0_1, %c0_2] : memref<8x3072xbf16, #tpu.memory_space<vmem>>, vector<8x3072xbf16>
    %cst = arith.constant dense<0.000000e+00> : vector<16x3072xf32>
    %2 = tpu.matmul %0, %1, %cst {dimension_numbers = #tpu.dot_dimension_numbers<[1], [0], [0], [1], [0, 0, 1, 1], [], []>} : vector<16x8xbf16>, vector<8x3072xbf16>, vector<16x3072xf32> -> vector<16x3072xf32>
    %3 = vector.extract_strided_slice %2 {offsets = [0, 0], sizes = [16, 1024], strides = [1, 1]} : vector<16x3072xf32> to vector<16x1024xf32>
    %4 = vector.extract_strided_slice %2 {offsets = [0, 1024], sizes = [16, 1024], strides = [1, 1]} : vector<16x3072xf32> to vector<16x1024xf32>
    %5 = vector.extract_strided_slice %2 {offsets = [0, 2048], sizes = [16, 1024], strides = [1, 1]} : vector<16x3072xf32> to vector<16x1024xf32>
    %6 = arith.mulf %3, %3 : vector<16x1024xf32>
    %7 = arith.mulf %4, %4 : vector<16x1024xf32>
    %8 = arith.addf %6, %7 : vector<16x1024xf32>
    %9 = arith.mulf %5, %5 : vector<16x1024xf32>
    %10 = arith.addf %8, %9 : vector<16x1024xf32>
    %11 = math.sqrt %10 : vector<16x1024xf32>
    %c0_3 = arith.constant 0 : index
    %c0_4 = arith.constant 0 : index
    %12 = vector.load %arg4[%c0_3, %c0_4] : memref<16x1xf32, #tpu.memory_space<vmem>>, vector<16x1xf32>
    %13 = vector.broadcast %12 : vector<16x1xf32> to vector<16x1024xf32>
    %14 = arith.mulf %11, %13 : vector<16x1024xf32>
    %c0_5 = arith.constant 0 : index
    %c0_6 = arith.constant 0 : index
    %15 = vector.load %arg3[%c0_5, %c0_6] : memref<16x1xf32, #tpu.memory_space<vmem>>, vector<16x1xf32>
    %16 = vector.broadcast %15 : vector<16x1xf32> to vector<16x1024xf32>
    %17 = arith.minimumf %14, %16 : vector<16x1024xf32>
    %18 = arith.mulf %3, %17 : vector<16x1024xf32>
    %19 = arith.mulf %4, %17 : vector<16x1024xf32>
    %20 = arith.mulf %5, %17 : vector<16x1024xf32>
    %21 = vector.extract_strided_slice %10 {offsets = [0, 0], sizes = [16, 128], strides = [1, 1]} : vector<16x1024xf32> to vector<16x128xf32>
    %22 = vector.extract_strided_slice %18 {offsets = [0, 0], sizes = [16, 128], strides = [1, 1]} : vector<16x1024xf32> to vector<16x128xf32>
    %23 = vector.extract_strided_slice %19 {offsets = [0, 0], sizes = [16, 128], strides = [1, 1]} : vector<16x1024xf32> to vector<16x128xf32>
    %24 = vector.extract_strided_slice %20 {offsets = [0, 0], sizes = [16, 128], strides = [1, 1]} : vector<16x1024xf32> to vector<16x128xf32>
    %25 = vector.extract_strided_slice %10 {offsets = [0, 128], sizes = [16, 128], strides = [1, 1]} : vector<16x1024xf32> to vector<16x128xf32>
    %26 = arith.cmpf ogt, %25, %21 : vector<16x128xf32>
    %27 = arith.select %26, %25, %21 : vector<16x128xi1>, vector<16x128xf32>
    %28 = vector.extract_strided_slice %18 {offsets = [0, 128], sizes = [16, 128], strides = [1, 1]} : vector<16x1024xf32> to vector<16x128xf32>
    %29 = arith.select %26, %28, %22 : vector<16x128xi1>, vector<16x128xf32>
    %30 = vector.extract_strided_slice %19 {offsets = [0, 128], sizes = [16, 128], strides = [1, 1]} : vector<16x1024xf32> to vector<16x128xf32>
    %31 = arith.select %26, %30, %23 : vector<16x128xi1>, vector<16x128xf32>
    %32 = vector.extract_strided_slice %20 {offsets = [0, 128], sizes = [16, 128], strides = [1, 1]} : vector<16x1024xf32> to vector<16x128xf32>
    %33 = arith.select %26, %32, %24 : vector<16x128xi1>, vector<16x128xf32>
    %34 = vector.extract_strided_slice %10 {offsets = [0, 256], sizes = [16, 128], strides = [1, 1]} : vector<16x1024xf32> to vector<16x128xf32>
    %35 = arith.cmpf ogt, %34, %27 : vector<16x128xf32>
    %36 = arith.select %35, %34, %27 : vector<16x128xi1>, vector<16x128xf32>
    %37 = vector.extract_strided_slice %18 {offsets = [0, 256], sizes = [16, 128], strides = [1, 1]} : vector<16x1024xf32> to vector<16x128xf32>
    %38 = arith.select %35, %37, %29 : vector<16x128xi1>, vector<16x128xf32>
    %39 = vector.extract_strided_slice %19 {offsets = [0, 256], sizes = [16, 128], strides = [1, 1]} : vector<16x1024xf32> to vector<16x128xf32>
    %40 = arith.select %35, %39, %31 : vector<16x128xi1>, vector<16x128xf32>
    %41 = vector.extract_strided_slice %20 {offsets = [0, 256], sizes = [16, 128], strides = [1, 1]} : vector<16x1024xf32> to vector<16x128xf32>
    %42 = arith.select %35, %41, %33 : vector<16x128xi1>, vector<16x128xf32>
    %43 = vector.extract_strided_slice %10 {offsets = [0, 384], sizes = [16, 128], strides = [1, 1]} : vector<16x1024xf32> to vector<16x128xf32>
    %44 = arith.cmpf ogt, %43, %36 : vector<16x128xf32>
    %45 = arith.select %44, %43, %36 : vector<16x128xi1>, vector<16x128xf32>
    %46 = vector.extract_strided_slice %18 {offsets = [0, 384], sizes = [16, 128], strides = [1, 1]} : vector<16x1024xf32> to vector<16x128xf32>
    %47 = arith.select %44, %46, %38 : vector<16x128xi1>, vector<16x128xf32>
    %48 = vector.extract_strided_slice %19 {offsets = [0, 384], sizes = [16, 128], strides = [1, 1]} : vector<16x1024xf32> to vector<16x128xf32>
    %49 = arith.select %44, %48, %40 : vector<16x128xi1>, vector<16x128xf32>
    %50 = vector.extract_strided_slice %20 {offsets = [0, 384], sizes = [16, 128], strides = [1, 1]} : vector<16x1024xf32> to vector<16x128xf32>
    %51 = arith.select %44, %50, %42 : vector<16x128xi1>, vector<16x128xf32>
    %52 = vector.extract_strided_slice %10 {offsets = [0, 512], sizes = [16, 128], strides = [1, 1]} : vector<16x1024xf32> to vector<16x128xf32>
    %53 = arith.cmpf ogt, %52, %45 : vector<16x128xf32>
    %54 = arith.select %53, %52, %45 : vector<16x128xi1>, vector<16x128xf32>
    %55 = vector.extract_strided_slice %18 {offsets = [0, 512], sizes = [16, 128], strides = [1, 1]} : vector<16x1024xf32> to vector<16x128xf32>
    %56 = arith.select %53, %55, %47 : vector<16x128xi1>, vector<16x128xf32>
    %57 = vector.extract_strided_slice %19 {offsets = [0, 512], sizes = [16, 128], strides = [1, 1]} : vector<16x1024xf32> to vector<16x128xf32>
    %58 = arith.select %53, %57, %49 : vector<16x128xi1>, vector<16x128xf32>
    %59 = vector.extract_strided_slice %20 {offsets = [0, 512], sizes = [16, 128], strides = [1, 1]} : vector<16x1024xf32> to vector<16x128xf32>
    %60 = arith.select %53, %59, %51 : vector<16x128xi1>, vector<16x128xf32>
    %61 = vector.extract_strided_slice %10 {offsets = [0, 640], sizes = [16, 128], strides = [1, 1]} : vector<16x1024xf32> to vector<16x128xf32>
    %62 = arith.cmpf ogt, %61, %54 : vector<16x128xf32>
    %63 = arith.select %62, %61, %54 : vector<16x128xi1>, vector<16x128xf32>
    %64 = vector.extract_strided_slice %18 {offsets = [0, 640], sizes = [16, 128], strides = [1, 1]} : vector<16x1024xf32> to vector<16x128xf32>
    %65 = arith.select %62, %64, %56 : vector<16x128xi1>, vector<16x128xf32>
    %66 = vector.extract_strided_slice %19 {offsets = [0, 640], sizes = [16, 128], strides = [1, 1]} : vector<16x1024xf32> to vector<16x128xf32>
    %67 = arith.select %62, %66, %58 : vector<16x128xi1>, vector<16x128xf32>
    %68 = vector.extract_strided_slice %20 {offsets = [0, 640], sizes = [16, 128], strides = [1, 1]} : vector<16x1024xf32> to vector<16x128xf32>
    %69 = arith.select %62, %68, %60 : vector<16x128xi1>, vector<16x128xf32>
    %70 = vector.extract_strided_slice %10 {offsets = [0, 768], sizes = [16, 128], strides = [1, 1]} : vector<16x1024xf32> to vector<16x128xf32>
    %71 = arith.cmpf ogt, %70, %63 : vector<16x128xf32>
    %72 = arith.select %71, %70, %63 : vector<16x128xi1>, vector<16x128xf32>
    %73 = vector.extract_strided_slice %18 {offsets = [0, 768], sizes = [16, 128], strides = [1, 1]} : vector<16x1024xf32> to vector<16x128xf32>
    %74 = arith.select %71, %73, %65 : vector<16x128xi1>, vector<16x128xf32>
    %75 = vector.extract_strided_slice %19 {offsets = [0, 768], sizes = [16, 128], strides = [1, 1]} : vector<16x1024xf32> to vector<16x128xf32>
    %76 = arith.select %71, %75, %67 : vector<16x128xi1>, vector<16x128xf32>
    %77 = vector.extract_strided_slice %20 {offsets = [0, 768], sizes = [16, 128], strides = [1, 1]} : vector<16x1024xf32> to vector<16x128xf32>
    %78 = arith.select %71, %77, %69 : vector<16x128xi1>, vector<16x128xf32>
    %79 = vector.extract_strided_slice %10 {offsets = [0, 896], sizes = [16, 128], strides = [1, 1]} : vector<16x1024xf32> to vector<16x128xf32>
    %80 = arith.cmpf ogt, %79, %72 : vector<16x128xf32>
    %81 = vector.extract_strided_slice %18 {offsets = [0, 896], sizes = [16, 128], strides = [1, 1]} : vector<16x1024xf32> to vector<16x128xf32>
    %82 = arith.select %80, %81, %74 : vector<16x128xi1>, vector<16x128xf32>
    %83 = vector.extract_strided_slice %19 {offsets = [0, 896], sizes = [16, 128], strides = [1, 1]} : vector<16x1024xf32> to vector<16x128xf32>
    %84 = arith.select %80, %83, %76 : vector<16x128xi1>, vector<16x128xf32>
    %85 = vector.extract_strided_slice %20 {offsets = [0, 896], sizes = [16, 128], strides = [1, 1]} : vector<16x1024xf32> to vector<16x128xf32>
    %86 = arith.select %80, %85, %78 : vector<16x128xi1>, vector<16x128xf32>
    %c0_7 = arith.constant 0 : index
    %c0_8 = arith.constant 0 : index
    %c0_9 = arith.constant 0 : index
    %87 = vector.load %arg5[%c0_7, %c0_8, %c0_9] : memref<3x16x128xf32, #tpu.memory_space<vmem>>, vector<1x16x128xf32>
    %88 = vector.shape_cast %87 : vector<1x16x128xf32> to vector<16x128xf32>
    %89 = vector.shape_cast %82 : vector<16x128xf32> to vector<1x16x128xf32>
    tpu.vector_store %arg5[%c0_7, %c0_8, %c0_9], %89 {strides = array<i32>} : memref<3x16x128xf32, #tpu.memory_space<vmem>>, vector<1x16x128xf32>,
    %c1 = arith.constant 1 : index
    %c0_10 = arith.constant 0 : index
    %c0_11 = arith.constant 0 : index
    %90 = vector.load %arg5[%c1, %c0_10, %c0_11] : memref<3x16x128xf32, #tpu.memory_space<vmem>>, vector<1x16x128xf32>
    %91 = vector.shape_cast %90 : vector<1x16x128xf32> to vector<16x128xf32>
    %92 = vector.shape_cast %84 : vector<16x128xf32> to vector<1x16x128xf32>
    tpu.vector_store %arg5[%c1, %c0_10, %c0_11], %92 {strides = array<i32>} : memref<3x16x128xf32, #tpu.memory_space<vmem>>, vector<1x16x128xf32>,
    %c2 = arith.constant 2 : index
    %c0_12 = arith.constant 0 : index
    %c0_13 = arith.constant 0 : index
    %93 = vector.load %arg5[%c2, %c0_12, %c0_13] : memref<3x16x128xf32, #tpu.memory_space<vmem>>, vector<1x16x128xf32>
    %94 = vector.shape_cast %93 : vector<1x16x128xf32> to vector<16x128xf32>
    %95 = vector.shape_cast %86 : vector<16x128xf32> to vector<1x16x128xf32>
    tpu.vector_store %arg5[%c2, %c0_12, %c0_13], %95 {strides = array<i32>} : memref<3x16x128xf32, #tpu.memory_space<vmem>>, vector<1x16x128xf32>,
    return
  }
  func.func @transform_0(%arg0: i32) -> (i32, i32) {
    %c0_i32 = arith.constant 0 : i32
    %c0_i32_0 = arith.constant 0 : i32
    return %c0_i32, %arg0 : i32, i32
  }
  func.func @transform_1(%arg0: i32) -> (i32, i32) {
    %c0_i32 = arith.constant 0 : i32
    %c0_i32_0 = arith.constant 0 : i32
    %c0_i32_1 = arith.constant 0 : i32
    return %c0_i32, %c0_i32_0 : i32, i32
  }
  func.func @transform_2(%arg0: i32) -> (i32, i32) {
    %c0_i32 = arith.constant 0 : i32
    %c0_i32_0 = arith.constant 0 : i32
    %c0_i32_1 = arith.constant 0 : i32
    return %c0_i32, %c0_i32_0 : i32, i32
  }
  func.func @transform_3(%arg0: i32) -> (i32, i32) {
    %c0_i32 = arith.constant 0 : i32
    %c0_i32_0 = arith.constant 0 : i32
    %c0_i32_1 = arith.constant 0 : i32
    return %c0_i32, %c0_i32_0 : i32, i32
  }
  func.func @transform_4(%arg0: i32) -> (i32, i32, i32) {
    %c0_i32 = arith.constant 0 : i32
    %c0_i32_0 = arith.constant 0 : i32
    %c0_i32_1 = arith.constant 0 : i32
    return %c0_i32, %c0_i32_0, %arg0 : i32, i32, i32
  }
}

module attributes {stable_mosaic.version = 11 : i64} {
  func.func @_gram_kernel(%arg0: i32, %arg1: memref<5x6144xbf16, #tpu.memory_space<vmem>>, %arg2: memref<1x5x5xf32, #tpu.memory_space<vmem>>) attributes {dimension_semantics = [#tpu.dimension_semantics<parallel>], iteration_bounds = array<i64: 1>, scalar_prefetch = 0 : i64, scratch_operands = 0 : i64, tpu.core_type = #tpu.core_type<tc>, window_params = [{transform_indices = @transform_0, window_bounds = array<i64: 5, 6144>}, {transform_indices = @transform_1, window_bounds = array<i64: 1, 5, 5>}]} {
    %c0 = arith.constant 0 : index
    %c0_0 = arith.constant 0 : index
    %0 = vector.load %arg1[%c0, %c0_0] : memref<5x6144xbf16, #tpu.memory_space<vmem>>, vector<5x6144xbf16>
    %cst = arith.constant dense<0.000000e+00> : vector<5x5xf32>
    %1 = tpu.matmul %0, %0, %cst {dimension_numbers = #tpu.dot_dimension_numbers<[1], [1], [0], [0], [0, 0, 1, 0], [], []>} : vector<5x6144xbf16>, vector<5x6144xbf16>, vector<5x5xf32> -> vector<5x5xf32>
    %c0_1 = arith.constant 0 : index
    %c0_2 = arith.constant 0 : index
    %c0_3 = arith.constant 0 : index
    %2 = vector.load %arg2[%c0_1, %c0_2, %c0_3] : memref<1x5x5xf32, #tpu.memory_space<vmem>>, vector<1x5x5xf32>
    %3 = vector.shape_cast %2 : vector<1x5x5xf32> to vector<5x5xf32>
    %4 = vector.shape_cast %1 : vector<5x5xf32> to vector<1x5x5xf32>
    tpu.vector_store %arg2[%c0_1, %c0_2, %c0_3], %4 {strides = array<i32>} : memref<1x5x5xf32, #tpu.memory_space<vmem>>, vector<1x5x5xf32>,
    return
  }
  func.func @transform_0(%arg0: i32) -> (i32, i32) {
    %c0_i32 = arith.constant 0 : i32
    %c0_i32_0 = arith.constant 0 : i32
    return %c0_i32, %arg0 : i32, i32
  }
  func.func @transform_1(%arg0: i32) -> (i32, i32, i32) {
    %c0_i32 = arith.constant 0 : i32
    %c0_i32_0 = arith.constant 0 : i32
    %c0_i32_1 = arith.constant 0 : i32
    return %arg0, %c0_i32, %c0_i32_0 : i32, i32, i32
  }
}

module attributes {stable_mosaic.version = 11 : i64} {
  func.func @_apply_gram_kernel(%arg0: i32, %arg1: memref<5x6144xbf16, #tpu.memory_space<vmem>>, %arg2: memref<8x5xbf16, #tpu.memory_space<vmem>>, %arg3: memref<8x1xf32, #tpu.memory_space<vmem>>, %arg4: memref<8x1xf32, #tpu.memory_space<vmem>>, %arg5: memref<8x6144xbf16, #tpu.memory_space<vmem>>, %arg6: memref<1x8x8xf32, #tpu.memory_space<vmem>>) attributes {dimension_semantics = [#tpu.dimension_semantics<parallel>], iteration_bounds = array<i64: 1>, scalar_prefetch = 0 : i64, scratch_operands = 0 : i64, tpu.core_type = #tpu.core_type<tc>, window_params = [{transform_indices = @transform_0, window_bounds = array<i64: 5, 6144>}, {pipeline_mode = #tpu.pipeline_mode<synchronous>, transform_indices = @transform_1, window_bounds = array<i64: 8, 5>}, {pipeline_mode = #tpu.pipeline_mode<synchronous>, transform_indices = @transform_2, window_bounds = array<i64: 8, 1>}, {pipeline_mode = #tpu.pipeline_mode<synchronous>, transform_indices = @transform_3, window_bounds = array<i64: 8, 1>}, {transform_indices = @transform_4, window_bounds = array<i64: 8, 6144>}, {transform_indices = @transform_5, window_bounds = array<i64: 1, 8, 8>}]} {
    %c0 = arith.constant 0 : index
    %c0_0 = arith.constant 0 : index
    %0 = vector.load %arg2[%c0, %c0_0] : memref<8x5xbf16, #tpu.memory_space<vmem>>, vector<8x5xbf16>
    %c0_1 = arith.constant 0 : index
    %c0_2 = arith.constant 0 : index
    %1 = vector.load %arg1[%c0_1, %c0_2] : memref<5x6144xbf16, #tpu.memory_space<vmem>>, vector<5x6144xbf16>
    %cst = arith.constant dense<0.000000e+00> : vector<8x6144xf32>
    %2 = tpu.matmul %0, %1, %cst {dimension_numbers = #tpu.dot_dimension_numbers<[1], [0], [0], [1], [0, 0, 1, 1], [], []>} : vector<8x5xbf16>, vector<5x6144xbf16>, vector<8x6144xf32> -> vector<8x6144xf32>
    %3 = vector.extract_strided_slice %2 {offsets = [0, 0], sizes = [8, 2048], strides = [1, 1]} : vector<8x6144xf32> to vector<8x2048xf32>
    %4 = vector.extract_strided_slice %2 {offsets = [0, 2048], sizes = [8, 2048], strides = [1, 1]} : vector<8x6144xf32> to vector<8x2048xf32>
    %5 = vector.extract_strided_slice %2 {offsets = [0, 4096], sizes = [8, 2048], strides = [1, 1]} : vector<8x6144xf32> to vector<8x2048xf32>
    %6 = arith.mulf %3, %3 : vector<8x2048xf32>
    %7 = arith.mulf %4, %4 : vector<8x2048xf32>
    %8 = arith.addf %6, %7 : vector<8x2048xf32>
    %9 = arith.mulf %5, %5 : vector<8x2048xf32>
    %10 = arith.addf %8, %9 : vector<8x2048xf32>
    %11 = math.sqrt %10 : vector<8x2048xf32>
    %c0_3 = arith.constant 0 : index
    %c0_4 = arith.constant 0 : index
    %12 = vector.load %arg4[%c0_3, %c0_4] : memref<8x1xf32, #tpu.memory_space<vmem>>, vector<8x1xf32>
    %13 = vector.broadcast %12 : vector<8x1xf32> to vector<8x2048xf32>
    %14 = arith.mulf %11, %13 : vector<8x2048xf32>
    %c0_5 = arith.constant 0 : index
    %c0_6 = arith.constant 0 : index
    %15 = vector.load %arg3[%c0_5, %c0_6] : memref<8x1xf32, #tpu.memory_space<vmem>>, vector<8x1xf32>
    %16 = vector.broadcast %15 : vector<8x1xf32> to vector<8x2048xf32>
    %17 = arith.minimumf %14, %16 : vector<8x2048xf32>
    %18 = arith.mulf %3, %17 : vector<8x2048xf32>
    %19 = arith.truncf %18 : vector<8x2048xf32> to vector<8x2048xbf16>
    %20 = arith.mulf %4, %17 : vector<8x2048xf32>
    %21 = arith.truncf %20 : vector<8x2048xf32> to vector<8x2048xbf16>
    %22 = arith.mulf %5, %17 : vector<8x2048xf32>
    %23 = arith.truncf %22 : vector<8x2048xf32> to vector<8x2048xbf16>
    %c0_7 = arith.constant 0 : index
    %c0_8 = arith.constant 0 : index
    %24 = vector.load %arg5[%c0_7, %c0_8] : memref<8x6144xbf16, #tpu.memory_space<vmem>>, vector<8x2048xbf16>
    tpu.vector_store %arg5[%c0_7, %c0_8], %19 {strides = array<i32>} : memref<8x6144xbf16, #tpu.memory_space<vmem>>, vector<8x2048xbf16>,
    %c0_9 = arith.constant 0 : index
    %c2048 = arith.constant 2048 : index
    %25 = vector.load %arg5[%c0_9, %c2048] : memref<8x6144xbf16, #tpu.memory_space<vmem>>, vector<8x2048xbf16>
    tpu.vector_store %arg5[%c0_9, %c2048], %21 {strides = array<i32>} : memref<8x6144xbf16, #tpu.memory_space<vmem>>, vector<8x2048xbf16>,
    %c0_10 = arith.constant 0 : index
    %c4096 = arith.constant 4096 : index
    %26 = vector.load %arg5[%c0_10, %c4096] : memref<8x6144xbf16, #tpu.memory_space<vmem>>, vector<8x2048xbf16>
    tpu.vector_store %arg5[%c0_10, %c4096], %23 {strides = array<i32>} : memref<8x6144xbf16, #tpu.memory_space<vmem>>, vector<8x2048xbf16>,
    %cst_11 = arith.constant dense<0.000000e+00> : vector<8x8xf32>
    %27 = tpu.matmul %19, %19, %cst_11 {dimension_numbers = #tpu.dot_dimension_numbers<[1], [1], [0], [0], [0, 0, 1, 0], [], []>} : vector<8x2048xbf16>, vector<8x2048xbf16>, vector<8x8xf32> -> vector<8x8xf32>
    %cst_12 = arith.constant dense<0.000000e+00> : vector<8x8xf32>
    %28 = tpu.matmul %21, %21, %cst_12 {dimension_numbers = #tpu.dot_dimension_numbers<[1], [1], [0], [0], [0, 0, 1, 0], [], []>} : vector<8x2048xbf16>, vector<8x2048xbf16>, vector<8x8xf32> -> vector<8x8xf32>
    %29 = arith.addf %27, %28 : vector<8x8xf32>
    %cst_13 = arith.constant dense<0.000000e+00> : vector<8x8xf32>
    %30 = tpu.matmul %23, %23, %cst_13 {dimension_numbers = #tpu.dot_dimension_numbers<[1], [1], [0], [0], [0, 0, 1, 0], [], []>} : vector<8x2048xbf16>, vector<8x2048xbf16>, vector<8x8xf32> -> vector<8x8xf32>
    %31 = arith.addf %29, %30 : vector<8x8xf32>
    %c0_14 = arith.constant 0 : index
    %c0_15 = arith.constant 0 : index
    %c0_16 = arith.constant 0 : index
    %32 = vector.load %arg6[%c0_14, %c0_15, %c0_16] : memref<1x8x8xf32, #tpu.memory_space<vmem>>, vector<1x8x8xf32>
    %33 = vector.shape_cast %32 : vector<1x8x8xf32> to vector<8x8xf32>
    %34 = vector.shape_cast %31 : vector<8x8xf32> to vector<1x8x8xf32>
    tpu.vector_store %arg6[%c0_14, %c0_15, %c0_16], %34 {strides = array<i32>} : memref<1x8x8xf32, #tpu.memory_space<vmem>>, vector<1x8x8xf32>,
    return
  }
  func.func @transform_0(%arg0: i32) -> (i32, i32) {
    %c0_i32 = arith.constant 0 : i32
    %c0_i32_0 = arith.constant 0 : i32
    return %c0_i32, %arg0 : i32, i32
  }
  func.func @transform_1(%arg0: i32) -> (i32, i32) {
    %c0_i32 = arith.constant 0 : i32
    %c0_i32_0 = arith.constant 0 : i32
    %c0_i32_1 = arith.constant 0 : i32
    return %c0_i32, %c0_i32_0 : i32, i32
  }
  func.func @transform_2(%arg0: i32) -> (i32, i32) {
    %c0_i32 = arith.constant 0 : i32
    %c0_i32_0 = arith.constant 0 : i32
    %c0_i32_1 = arith.constant 0 : i32
    return %c0_i32, %c0_i32_0 : i32, i32
  }
  func.func @transform_3(%arg0: i32) -> (i32, i32) {
    %c0_i32 = arith.constant 0 : i32
    %c0_i32_0 = arith.constant 0 : i32
    %c0_i32_1 = arith.constant 0 : i32
    return %c0_i32, %c0_i32_0 : i32, i32
  }
  func.func @transform_4(%arg0: i32) -> (i32, i32) {
    %c0_i32 = arith.constant 0 : i32
    %c0_i32_0 = arith.constant 0 : i32
    return %c0_i32, %arg0 : i32, i32
  }
  func.func @transform_5(%arg0: i32) -> (i32, i32, i32) {
    %c0_i32 = arith.constant 0 : i32
    %c0_i32_0 = arith.constant 0 : i32
    %c0_i32_1 = arith.constant 0 : i32
    return %arg0, %c0_i32, %c0_i32_0 : i32, i32, i32
  }
}

module attributes {stable_mosaic.version = 11 : i64} {
  func.func @_apply_pool_kernel(%arg0: i32, %arg1: memref<8x6144xbf16, #tpu.memory_space<vmem>>, %arg2: memref<16x8xbf16, #tpu.memory_space<vmem>>, %arg3: memref<16x1xf32, #tpu.memory_space<vmem>>, %arg4: memref<16x1xf32, #tpu.memory_space<vmem>>, %arg5: memref<3x16x128xf32, #tpu.memory_space<vmem>>) attributes {dimension_semantics = [#tpu.dimension_semantics<parallel>], iteration_bounds = array<i64: 1>, scalar_prefetch = 0 : i64, scratch_operands = 0 : i64, tpu.core_type = #tpu.core_type<tc>, window_params = [{transform_indices = @transform_0, window_bounds = array<i64: 8, 6144>}, {pipeline_mode = #tpu.pipeline_mode<synchronous>, transform_indices = @transform_1, window_bounds = array<i64: 16, 8>}, {pipeline_mode = #tpu.pipeline_mode<synchronous>, transform_indices = @transform_2, window_bounds = array<i64: 16, 1>}, {pipeline_mode = #tpu.pipeline_mode<synchronous>, transform_indices = @transform_3, window_bounds = array<i64: 16, 1>}, {transform_indices = @transform_4, window_bounds = array<i64: 3, 16, 128>}]} {
    %c0 = arith.constant 0 : index
    %c0_0 = arith.constant 0 : index
    %0 = vector.load %arg2[%c0, %c0_0] : memref<16x8xbf16, #tpu.memory_space<vmem>>, vector<16x8xbf16>
    %c0_1 = arith.constant 0 : index
    %c0_2 = arith.constant 0 : index
    %1 = vector.load %arg1[%c0_1, %c0_2] : memref<8x6144xbf16, #tpu.memory_space<vmem>>, vector<8x6144xbf16>
    %cst = arith.constant dense<0.000000e+00> : vector<16x6144xf32>
    %2 = tpu.matmul %0, %1, %cst {dimension_numbers = #tpu.dot_dimension_numbers<[1], [0], [0], [1], [0, 0, 1, 1], [], []>} : vector<16x8xbf16>, vector<8x6144xbf16>, vector<16x6144xf32> -> vector<16x6144xf32>
    %3 = vector.extract_strided_slice %2 {offsets = [0, 0], sizes = [16, 2048], strides = [1, 1]} : vector<16x6144xf32> to vector<16x2048xf32>
    %4 = vector.extract_strided_slice %2 {offsets = [0, 2048], sizes = [16, 2048], strides = [1, 1]} : vector<16x6144xf32> to vector<16x2048xf32>
    %5 = vector.extract_strided_slice %2 {offsets = [0, 4096], sizes = [16, 2048], strides = [1, 1]} : vector<16x6144xf32> to vector<16x2048xf32>
    %6 = arith.mulf %3, %3 : vector<16x2048xf32>
    %7 = arith.mulf %4, %4 : vector<16x2048xf32>
    %8 = arith.addf %6, %7 : vector<16x2048xf32>
    %9 = arith.mulf %5, %5 : vector<16x2048xf32>
    %10 = arith.addf %8, %9 : vector<16x2048xf32>
    %11 = math.sqrt %10 : vector<16x2048xf32>
    %c0_3 = arith.constant 0 : index
    %c0_4 = arith.constant 0 : index
    %12 = vector.load %arg4[%c0_3, %c0_4] : memref<16x1xf32, #tpu.memory_space<vmem>>, vector<16x1xf32>
    %13 = vector.broadcast %12 : vector<16x1xf32> to vector<16x2048xf32>
    %14 = arith.mulf %11, %13 : vector<16x2048xf32>
    %c0_5 = arith.constant 0 : index
    %c0_6 = arith.constant 0 : index
    %15 = vector.load %arg3[%c0_5, %c0_6] : memref<16x1xf32, #tpu.memory_space<vmem>>, vector<16x1xf32>
    %16 = vector.broadcast %15 : vector<16x1xf32> to vector<16x2048xf32>
    %17 = arith.minimumf %14, %16 : vector<16x2048xf32>
    %18 = arith.mulf %3, %17 : vector<16x2048xf32>
    %19 = arith.mulf %4, %17 : vector<16x2048xf32>
    %20 = arith.mulf %5, %17 : vector<16x2048xf32>
    %21 = vector.extract_strided_slice %10 {offsets = [0, 0], sizes = [16, 128], strides = [1, 1]} : vector<16x2048xf32> to vector<16x128xf32>
    %22 = vector.extract_strided_slice %18 {offsets = [0, 0], sizes = [16, 128], strides = [1, 1]} : vector<16x2048xf32> to vector<16x128xf32>
    %23 = vector.extract_strided_slice %19 {offsets = [0, 0], sizes = [16, 128], strides = [1, 1]} : vector<16x2048xf32> to vector<16x128xf32>
    %24 = vector.extract_strided_slice %20 {offsets = [0, 0], sizes = [16, 128], strides = [1, 1]} : vector<16x2048xf32> to vector<16x128xf32>
    %25 = vector.extract_strided_slice %10 {offsets = [0, 128], sizes = [16, 128], strides = [1, 1]} : vector<16x2048xf32> to vector<16x128xf32>
    %26 = arith.cmpf ogt, %25, %21 : vector<16x128xf32>
    %27 = arith.select %26, %25, %21 : vector<16x128xi1>, vector<16x128xf32>
    %28 = vector.extract_strided_slice %18 {offsets = [0, 128], sizes = [16, 128], strides = [1, 1]} : vector<16x2048xf32> to vector<16x128xf32>
    %29 = arith.select %26, %28, %22 : vector<16x128xi1>, vector<16x128xf32>
    %30 = vector.extract_strided_slice %19 {offsets = [0, 128], sizes = [16, 128], strides = [1, 1]} : vector<16x2048xf32> to vector<16x128xf32>
    %31 = arith.select %26, %30, %23 : vector<16x128xi1>, vector<16x128xf32>
    %32 = vector.extract_strided_slice %20 {offsets = [0, 128], sizes = [16, 128], strides = [1, 1]} : vector<16x2048xf32> to vector<16x128xf32>
    %33 = arith.select %26, %32, %24 : vector<16x128xi1>, vector<16x128xf32>
    %34 = vector.extract_strided_slice %10 {offsets = [0, 256], sizes = [16, 128], strides = [1, 1]} : vector<16x2048xf32> to vector<16x128xf32>
    %35 = arith.cmpf ogt, %34, %27 : vector<16x128xf32>
    %36 = arith.select %35, %34, %27 : vector<16x128xi1>, vector<16x128xf32>
    %37 = vector.extract_strided_slice %18 {offsets = [0, 256], sizes = [16, 128], strides = [1, 1]} : vector<16x2048xf32> to vector<16x128xf32>
    %38 = arith.select %35, %37, %29 : vector<16x128xi1>, vector<16x128xf32>
    %39 = vector.extract_strided_slice %19 {offsets = [0, 256], sizes = [16, 128], strides = [1, 1]} : vector<16x2048xf32> to vector<16x128xf32>
    %40 = arith.select %35, %39, %31 : vector<16x128xi1>, vector<16x128xf32>
    %41 = vector.extract_strided_slice %20 {offsets = [0, 256], sizes = [16, 128], strides = [1, 1]} : vector<16x2048xf32> to vector<16x128xf32>
    %42 = arith.select %35, %41, %33 : vector<16x128xi1>, vector<16x128xf32>
    %43 = vector.extract_strided_slice %10 {offsets = [0, 384], sizes = [16, 128], strides = [1, 1]} : vector<16x2048xf32> to vector<16x128xf32>
    %44 = arith.cmpf ogt, %43, %36 : vector<16x128xf32>
    %45 = arith.select %44, %43, %36 : vector<16x128xi1>, vector<16x128xf32>
    %46 = vector.extract_strided_slice %18 {offsets = [0, 384], sizes = [16, 128], strides = [1, 1]} : vector<16x2048xf32> to vector<16x128xf32>
    %47 = arith.select %44, %46, %38 : vector<16x128xi1>, vector<16x128xf32>
    %48 = vector.extract_strided_slice %19 {offsets = [0, 384], sizes = [16, 128], strides = [1, 1]} : vector<16x2048xf32> to vector<16x128xf32>
    %49 = arith.select %44, %48, %40 : vector<16x128xi1>, vector<16x128xf32>
    %50 = vector.extract_strided_slice %20 {offsets = [0, 384], sizes = [16, 128], strides = [1, 1]} : vector<16x2048xf32> to vector<16x128xf32>
    %51 = arith.select %44, %50, %42 : vector<16x128xi1>, vector<16x128xf32>
    %52 = vector.extract_strided_slice %10 {offsets = [0, 512], sizes = [16, 128], strides = [1, 1]} : vector<16x2048xf32> to vector<16x128xf32>
    %53 = arith.cmpf ogt, %52, %45 : vector<16x128xf32>
    %54 = arith.select %53, %52, %45 : vector<16x128xi1>, vector<16x128xf32>
    %55 = vector.extract_strided_slice %18 {offsets = [0, 512], sizes = [16, 128], strides = [1, 1]} : vector<16x2048xf32> to vector<16x128xf32>
    %56 = arith.select %53, %55, %47 : vector<16x128xi1>, vector<16x128xf32>
    %57 = vector.extract_strided_slice %19 {offsets = [0, 512], sizes = [16, 128], strides = [1, 1]} : vector<16x2048xf32> to vector<16x128xf32>
    %58 = arith.select %53, %57, %49 : vector<16x128xi1>, vector<16x128xf32>
    %59 = vector.extract_strided_slice %20 {offsets = [0, 512], sizes = [16, 128], strides = [1, 1]} : vector<16x2048xf32> to vector<16x128xf32>
    %60 = arith.select %53, %59, %51 : vector<16x128xi1>, vector<16x128xf32>
    %61 = vector.extract_strided_slice %10 {offsets = [0, 640], sizes = [16, 128], strides = [1, 1]} : vector<16x2048xf32> to vector<16x128xf32>
    %62 = arith.cmpf ogt, %61, %54 : vector<16x128xf32>
    %63 = arith.select %62, %61, %54 : vector<16x128xi1>, vector<16x128xf32>
    %64 = vector.extract_strided_slice %18 {offsets = [0, 640], sizes = [16, 128], strides = [1, 1]} : vector<16x2048xf32> to vector<16x128xf32>
    %65 = arith.select %62, %64, %56 : vector<16x128xi1>, vector<16x128xf32>
    %66 = vector.extract_strided_slice %19 {offsets = [0, 640], sizes = [16, 128], strides = [1, 1]} : vector<16x2048xf32> to vector<16x128xf32>
    %67 = arith.select %62, %66, %58 : vector<16x128xi1>, vector<16x128xf32>
    %68 = vector.extract_strided_slice %20 {offsets = [0, 640], sizes = [16, 128], strides = [1, 1]} : vector<16x2048xf32> to vector<16x128xf32>
    %69 = arith.select %62, %68, %60 : vector<16x128xi1>, vector<16x128xf32>
    %70 = vector.extract_strided_slice %10 {offsets = [0, 768], sizes = [16, 128], strides = [1, 1]} : vector<16x2048xf32> to vector<16x128xf32>
    %71 = arith.cmpf ogt, %70, %63 : vector<16x128xf32>
    %72 = arith.select %71, %70, %63 : vector<16x128xi1>, vector<16x128xf32>
    %73 = vector.extract_strided_slice %18 {offsets = [0, 768], sizes = [16, 128], strides = [1, 1]} : vector<16x2048xf32> to vector<16x128xf32>
    %74 = arith.select %71, %73, %65 : vector<16x128xi1>, vector<16x128xf32>
    %75 = vector.extract_strided_slice %19 {offsets = [0, 768], sizes = [16, 128], strides = [1, 1]} : vector<16x2048xf32> to vector<16x128xf32>
    %76 = arith.select %71, %75, %67 : vector<16x128xi1>, vector<16x128xf32>
    %77 = vector.extract_strided_slice %20 {offsets = [0, 768], sizes = [16, 128], strides = [1, 1]} : vector<16x2048xf32> to vector<16x128xf32>
    %78 = arith.select %71, %77, %69 : vector<16x128xi1>, vector<16x128xf32>
    %79 = vector.extract_strided_slice %10 {offsets = [0, 896], sizes = [16, 128], strides = [1, 1]} : vector<16x2048xf32> to vector<16x128xf32>
    %80 = arith.cmpf ogt, %79, %72 : vector<16x128xf32>
    %81 = arith.select %80, %79, %72 : vector<16x128xi1>, vector<16x128xf32>
    %82 = vector.extract_strided_slice %18 {offsets = [0, 896], sizes = [16, 128], strides = [1, 1]} : vector<16x2048xf32> to vector<16x128xf32>
    %83 = arith.select %80, %82, %74 : vector<16x128xi1>, vector<16x128xf32>
    %84 = vector.extract_strided_slice %19 {offsets = [0, 896], sizes = [16, 128], strides = [1, 1]} : vector<16x2048xf32> to vector<16x128xf32>
    %85 = arith.select %80, %84, %76 : vector<16x128xi1>, vector<16x128xf32>
    %86 = vector.extract_strided_slice %20 {offsets = [0, 896], sizes = [16, 128], strides = [1, 1]} : vector<16x2048xf32> to vector<16x128xf32>
    %87 = arith.select %80, %86, %78 : vector<16x128xi1>, vector<16x128xf32>
    %88 = vector.extract_strided_slice %10 {offsets = [0, 1024], sizes = [16, 128], strides = [1, 1]} : vector<16x2048xf32> to vector<16x128xf32>
    %89 = arith.cmpf ogt, %88, %81 : vector<16x128xf32>
    %90 = arith.select %89, %88, %81 : vector<16x128xi1>, vector<16x128xf32>
    %91 = vector.extract_strided_slice %18 {offsets = [0, 1024], sizes = [16, 128], strides = [1, 1]} : vector<16x2048xf32> to vector<16x128xf32>
    %92 = arith.select %89, %91, %83 : vector<16x128xi1>, vector<16x128xf32>
    %93 = vector.extract_strided_slice %19 {offsets = [0, 1024], sizes = [16, 128], strides = [1, 1]} : vector<16x2048xf32> to vector<16x128xf32>
    %94 = arith.select %89, %93, %85 : vector<16x128xi1>, vector<16x128xf32>
    %95 = vector.extract_strided_slice %20 {offsets = [0, 1024], sizes = [16, 128], strides = [1, 1]} : vector<16x2048xf32> to vector<16x128xf32>
    %96 = arith.select %89, %95, %87 : vector<16x128xi1>, vector<16x128xf32>
    %97 = vector.extract_strided_slice %10 {offsets = [0, 1152], sizes = [16, 128], strides = [1, 1]} : vector<16x2048xf32> to vector<16x128xf32>
    %98 = arith.cmpf ogt, %97, %90 : vector<16x128xf32>
    %99 = arith.select %98, %97, %90 : vector<16x128xi1>, vector<16x128xf32>
    %100 = vector.extract_strided_slice %18 {offsets = [0, 1152], sizes = [16, 128], strides = [1, 1]} : vector<16x2048xf32> to vector<16x128xf32>
    %101 = arith.select %98, %100, %92 : vector<16x128xi1>, vector<16x128xf32>
    %102 = vector.extract_strided_slice %19 {offsets = [0, 1152], sizes = [16, 128], strides = [1, 1]} : vector<16x2048xf32> to vector<16x128xf32>
    %103 = arith.select %98, %102, %94 : vector<16x128xi1>, vector<16x128xf32>
    %104 = vector.extract_strided_slice %20 {offsets = [0, 1152], sizes = [16, 128], strides = [1, 1]} : vector<16x2048xf32> to vector<16x128xf32>
    %105 = arith.select %98, %104, %96 : vector<16x128xi1>, vector<16x128xf32>
    %106 = vector.extract_strided_slice %10 {offsets = [0, 1280], sizes = [16, 128], strides = [1, 1]} : vector<16x2048xf32> to vector<16x128xf32>
    %107 = arith.cmpf ogt, %106, %99 : vector<16x128xf32>
    %108 = arith.select %107, %106, %99 : vector<16x128xi1>, vector<16x128xf32>
    %109 = vector.extract_strided_slice %18 {offsets = [0, 1280], sizes = [16, 128], strides = [1, 1]} : vector<16x2048xf32> to vector<16x128xf32>
    %110 = arith.select %107, %109, %101 : vector<16x128xi1>, vector<16x128xf32>
    %111 = vector.extract_strided_slice %19 {offsets = [0, 1280], sizes = [16, 128], strides = [1, 1]} : vector<16x2048xf32> to vector<16x128xf32>
    %112 = arith.select %107, %111, %103 : vector<16x128xi1>, vector<16x128xf32>
    %113 = vector.extract_strided_slice %20 {offsets = [0, 1280], sizes = [16, 128], strides = [1, 1]} : vector<16x2048xf32> to vector<16x128xf32>
    %114 = arith.select %107, %113, %105 : vector<16x128xi1>, vector<16x128xf32>
    %115 = vector.extract_strided_slice %10 {offsets = [0, 1408], sizes = [16, 128], strides = [1, 1]} : vector<16x2048xf32> to vector<16x128xf32>
    %116 = arith.cmpf ogt, %115, %108 : vector<16x128xf32>
    %117 = arith.select %116, %115, %108 : vector<16x128xi1>, vector<16x128xf32>
    %118 = vector.extract_strided_slice %18 {offsets = [0, 1408], sizes = [16, 128], strides = [1, 1]} : vector<16x2048xf32> to vector<16x128xf32>
    %119 = arith.select %116, %118, %110 : vector<16x128xi1>, vector<16x128xf32>
    %120 = vector.extract_strided_slice %19 {offsets = [0, 1408], sizes = [16, 128], strides = [1, 1]} : vector<16x2048xf32> to vector<16x128xf32>
    %121 = arith.select %116, %120, %112 : vector<16x128xi1>, vector<16x128xf32>
    %122 = vector.extract_strided_slice %20 {offsets = [0, 1408], sizes = [16, 128], strides = [1, 1]} : vector<16x2048xf32> to vector<16x128xf32>
    %123 = arith.select %116, %122, %114 : vector<16x128xi1>, vector<16x128xf32>
    %124 = vector.extract_strided_slice %10 {offsets = [0, 1536], sizes = [16, 128], strides = [1, 1]} : vector<16x2048xf32> to vector<16x128xf32>
    %125 = arith.cmpf ogt, %124, %117 : vector<16x128xf32>
    %126 = arith.select %125, %124, %117 : vector<16x128xi1>, vector<16x128xf32>
    %127 = vector.extract_strided_slice %18 {offsets = [0, 1536], sizes = [16, 128], strides = [1, 1]} : vector<16x2048xf32> to vector<16x128xf32>
    %128 = arith.select %125, %127, %119 : vector<16x128xi1>, vector<16x128xf32>
    %129 = vector.extract_strided_slice %19 {offsets = [0, 1536], sizes = [16, 128], strides = [1, 1]} : vector<16x2048xf32> to vector<16x128xf32>
    %130 = arith.select %125, %129, %121 : vector<16x128xi1>, vector<16x128xf32>
    %131 = vector.extract_strided_slice %20 {offsets = [0, 1536], sizes = [16, 128], strides = [1, 1]} : vector<16x2048xf32> to vector<16x128xf32>
    %132 = arith.select %125, %131, %123 : vector<16x128xi1>, vector<16x128xf32>
    %133 = vector.extract_strided_slice %10 {offsets = [0, 1664], sizes = [16, 128], strides = [1, 1]} : vector<16x2048xf32> to vector<16x128xf32>
    %134 = arith.cmpf ogt, %133, %126 : vector<16x128xf32>
    %135 = arith.select %134, %133, %126 : vector<16x128xi1>, vector<16x128xf32>
    %136 = vector.extract_strided_slice %18 {offsets = [0, 1664], sizes = [16, 128], strides = [1, 1]} : vector<16x2048xf32> to vector<16x128xf32>
    %137 = arith.select %134, %136, %128 : vector<16x128xi1>, vector<16x128xf32>
    %138 = vector.extract_strided_slice %19 {offsets = [0, 1664], sizes = [16, 128], strides = [1, 1]} : vector<16x2048xf32> to vector<16x128xf32>
    %139 = arith.select %134, %138, %130 : vector<16x128xi1>, vector<16x128xf32>
    %140 = vector.extract_strided_slice %20 {offsets = [0, 1664], sizes = [16, 128], strides = [1, 1]} : vector<16x2048xf32> to vector<16x128xf32>
    %141 = arith.select %134, %140, %132 : vector<16x128xi1>, vector<16x128xf32>
    %142 = vector.extract_strided_slice %10 {offsets = [0, 1792], sizes = [16, 128], strides = [1, 1]} : vector<16x2048xf32> to vector<16x128xf32>
    %143 = arith.cmpf ogt, %142, %135 : vector<16x128xf32>
    %144 = arith.select %143, %142, %135 : vector<16x128xi1>, vector<16x128xf32>
    %145 = vector.extract_strided_slice %18 {offsets = [0, 1792], sizes = [16, 128], strides = [1, 1]} : vector<16x2048xf32> to vector<16x128xf32>
    %146 = arith.select %143, %145, %137 : vector<16x128xi1>, vector<16x128xf32>
    %147 = vector.extract_strided_slice %19 {offsets = [0, 1792], sizes = [16, 128], strides = [1, 1]} : vector<16x2048xf32> to vector<16x128xf32>
    %148 = arith.select %143, %147, %139 : vector<16x128xi1>, vector<16x128xf32>
    %149 = vector.extract_strided_slice %20 {offsets = [0, 1792], sizes = [16, 128], strides = [1, 1]} : vector<16x2048xf32> to vector<16x128xf32>
    %150 = arith.select %143, %149, %141 : vector<16x128xi1>, vector<16x128xf32>
    %151 = vector.extract_strided_slice %10 {offsets = [0, 1920], sizes = [16, 128], strides = [1, 1]} : vector<16x2048xf32> to vector<16x128xf32>
    %152 = arith.cmpf ogt, %151, %144 : vector<16x128xf32>
    %153 = vector.extract_strided_slice %18 {offsets = [0, 1920], sizes = [16, 128], strides = [1, 1]} : vector<16x2048xf32> to vector<16x128xf32>
    %154 = arith.select %152, %153, %146 : vector<16x128xi1>, vector<16x128xf32>
    %155 = vector.extract_strided_slice %19 {offsets = [0, 1920], sizes = [16, 128], strides = [1, 1]} : vector<16x2048xf32> to vector<16x128xf32>
    %156 = arith.select %152, %155, %148 : vector<16x128xi1>, vector<16x128xf32>
    %157 = vector.extract_strided_slice %20 {offsets = [0, 1920], sizes = [16, 128], strides = [1, 1]} : vector<16x2048xf32> to vector<16x128xf32>
    %158 = arith.select %152, %157, %150 : vector<16x128xi1>, vector<16x128xf32>
    %c0_7 = arith.constant 0 : index
    %c0_8 = arith.constant 0 : index
    %c0_9 = arith.constant 0 : index
    %159 = vector.load %arg5[%c0_7, %c0_8, %c0_9] : memref<3x16x128xf32, #tpu.memory_space<vmem>>, vector<1x16x128xf32>
    %160 = vector.shape_cast %159 : vector<1x16x128xf32> to vector<16x128xf32>
    %161 = vector.shape_cast %154 : vector<16x128xf32> to vector<1x16x128xf32>
    tpu.vector_store %arg5[%c0_7, %c0_8, %c0_9], %161 {strides = array<i32>} : memref<3x16x128xf32, #tpu.memory_space<vmem>>, vector<1x16x128xf32>,
    %c1 = arith.constant 1 : index
    %c0_10 = arith.constant 0 : index
    %c0_11 = arith.constant 0 : index
    %162 = vector.load %arg5[%c1, %c0_10, %c0_11] : memref<3x16x128xf32, #tpu.memory_space<vmem>>, vector<1x16x128xf32>
    %163 = vector.shape_cast %162 : vector<1x16x128xf32> to vector<16x128xf32>
    %164 = vector.shape_cast %156 : vector<16x128xf32> to vector<1x16x128xf32>
    tpu.vector_store %arg5[%c1, %c0_10, %c0_11], %164 {strides = array<i32>} : memref<3x16x128xf32, #tpu.memory_space<vmem>>, vector<1x16x128xf32>,
    %c2 = arith.constant 2 : index
    %c0_12 = arith.constant 0 : index
    %c0_13 = arith.constant 0 : index
    %165 = vector.load %arg5[%c2, %c0_12, %c0_13] : memref<3x16x128xf32, #tpu.memory_space<vmem>>, vector<1x16x128xf32>
    %166 = vector.shape_cast %165 : vector<1x16x128xf32> to vector<16x128xf32>
    %167 = vector.shape_cast %158 : vector<16x128xf32> to vector<1x16x128xf32>
    tpu.vector_store %arg5[%c2, %c0_12, %c0_13], %167 {strides = array<i32>} : memref<3x16x128xf32, #tpu.memory_space<vmem>>, vector<1x16x128xf32>,
    return
  }
  func.func @transform_0(%arg0: i32) -> (i32, i32) {
    %c0_i32 = arith.constant 0 : i32
    %c0_i32_0 = arith.constant 0 : i32
    return %c0_i32, %arg0 : i32, i32
  }
  func.func @transform_1(%arg0: i32) -> (i32, i32) {
    %c0_i32 = arith.constant 0 : i32
    %c0_i32_0 = arith.constant 0 : i32
    %c0_i32_1 = arith.constant 0 : i32
    return %c0_i32, %c0_i32_0 : i32, i32
  }
  func.func @transform_2(%arg0: i32) -> (i32, i32) {
    %c0_i32 = arith.constant 0 : i32
    %c0_i32_0 = arith.constant 0 : i32
    %c0_i32_1 = arith.constant 0 : i32
    return %c0_i32, %c0_i32_0 : i32, i32
  }
  func.func @transform_3(%arg0: i32) -> (i32, i32) {
    %c0_i32 = arith.constant 0 : i32
    %c0_i32_0 = arith.constant 0 : i32
    %c0_i32_1 = arith.constant 0 : i32
    return %c0_i32, %c0_i32_0 : i32, i32
  }
  func.func @transform_4(%arg0: i32) -> (i32, i32, i32) {
    %c0_i32 = arith.constant 0 : i32
    %c0_i32_0 = arith.constant 0 : i32
    %c0_i32_1 = arith.constant 0 : i32
    return %c0_i32, %c0_i32_0, %arg0 : i32, i32, i32
  }
}

</mosaic_0001>

<llo_original>
// kernel: mul.34
$region0: #{mul.34}
  #allocation0 [shape = 's32[1]{0}', space=sflag, size = 0x4, scoped, tag = 'scoped memory for mul.34']
  %s0 = inlined_call_operand.vmem [shape: f32[8,1], index: 0, kind: input, shape index: {}, may-alias: {0,1}]
  %s1 = inlined_call_operand.vmem [shape: f32[8,1], index: 1, kind: input, shape index: {}, may-alias: {0,1}]
  %s2 = inlined_call_operand.vmem [shape: f32[8,1], index: 2, kind: output, shape index: {}]
  %v3 = vld [vmem:[%s0] sm:$0xff]
  %v4 = vld [vmem:[%s1] sm:$0xff]
  %5 = xla_tuple %v3, %v4
  %6 = xla_tuple %5
  %v7 = vmul.f32 %v3, %v4
  %8 = xla_tuple %v7
  %9 = vst [vmem:[%s2] sm:$0xff] %v7

// kernel: a_call__.6
$region0: #{a_call__.6}
  #allocation0 [shape = 'u32[]', space=smem, size = 0x4, offset = 0x4, fixed_abs, tag = 'smem constant byte address 0x4 - core index']
  #allocation1 [shape = 'u32[144,128]{1,0:T(1,128)}', space=vmem, size = 0x12000, scoped, tag = 'internal scratch']
  %s0 = inlined_call_operand.vmem [shape: bf16[5,3072], index: 0, kind: input, shape index: {}]
  %s1 = inlined_call_operand.vmem [shape: f32[1,5,5], index: 1, kind: output, shape index: {}]
  %s2 = sld [smem:[#allocation0]]
  $region14: #{a_call__.6} parent=0
    _
  %s4 = ssub.s32 1, %s2
  %s5 = scalar_select 0, %s4, %s2
  // Predicated region
  $region2: #{a_call__.6} parent=0 // pred_check
    _
  $region3: #{a_call__.6} parent=0 // pred_check_branch
    %7 = sbr.rel (0) target = $region5
  $region4: #{a_call__.6} parent=0 // pred_region
    _
  $region5: #{a_call__.6} parent=0 // pred_fallthru
    _
  %v9 = vld [vmem:[%s0] sm:$0x77]
  %v10 = vld [vmem:[%s0 + $0x8] sm:$0x77]
  %v11 = vld [vmem:[%s0 + $0x10] sm:$0x77]
  %v12 = vld [vmem:[%s0 + $0x18] sm:$0x77]
  %v13 = vld [vmem:[%s0 + $0x20] sm:$0x77]
  %v14 = vld [vmem:[%s0 + $0x28] sm:$0x77]
  %v15 = vld [vmem:[%s0 + $0x30] sm:$0x77]
  %v16 = vld [vmem:[%s0 + $0x38] sm:$0x77]
  %v17 = vld [vmem:[%s0 + $0x40] sm:$0x77]
  %v18 = vld [vmem:[%s0 + $0x48] sm:$0x77]
  %v19 = vld [vmem:[%s0 + $0x50] sm:$0x77]
  %v20 = vld [vmem:[%s0 + $0x58] sm:$0x77]
  %v33 = vunpack.c.l.b16 %v9
  %v34 = vunpack.c.h.b16 %v9
  %v35 = vunpack.c.l.b16 %v10
  %v36 = vunpack.c.h.b16 %v10
  %v37 = vunpack.c.l.b16 %v11
  %v38 = vunpack.c.h.b16 %v11
  %v39 = vunpack.c.l.b16 %v12
  %v40 = vunpack.c.h.b16 %v12
  %v41 = vunpack.c.l.b16 %v13
  %v42 = vunpack.c.h.b16 %v13
  %v43 = vunpack.c.l.b16 %v14
  %v44 = vunpack.c.h.b16 %v14
  %v45 = vunpack.c.l.b16 %v15
  %v46 = vunpack.c.h.b16 %v15
  %v47 = vunpack.c.l.b16 %v16
  %v48 = vunpack.c.h.b16 %v16
  %v49 = vunpack.c.l.b16 %v17
  %v50 = vunpack.c.h.b16 %v17
  %v51 = vunpack.c.l.b16 %v18
  %v52 = vunpack.c.h.b16 %v18
  %v53 = vunpack.c.l.b16 %v19
  %v54 = vunpack.c.h.b16 %v19
  %v55 = vunpack.c.l.b16 %v20
  %v56 = vunpack.c.h.b16 %v20
  %v57 = vpack.c.b16 %v33, %v33
  %v58 = vpack.c.b16 %v34, %v34
  %v59 = vpack.c.b16 %v35, %v35
  %v60 = vpack.c.b16 %v36, %v36
  %v61 = vpack.c.b16 %v37, %v37
  %v62 = vpack.c.b16 %v38, %v38
  %v63 = vpack.c.b16 %v39, %v39
  %v64 = vpack.c.b16 %v40, %v40
  %v65 = vpack.c.b16 %v41, %v41
  %v66 = vpack.c.b16 %v42, %v42
  %v67 = vpack.c.b16 %v43, %v43
  %v68 = vpack.c.b16 %v44, %v44
  %v69 = vpack.c.b16 %v45, %v45
  %v70 = vpack.c.b16 %v46, %v46
  %v71 = vpack.c.b16 %v47, %v47
  %v72 = vpack.c.b16 %v48, %v48
  %v73 = vpack.c.b16 %v49, %v49
  %v74 = vpack.c.b16 %v50, %v50
  %v75 = vpack.c.b16 %v51, %v51
  %v76 = vpack.c.b16 %v52, %v52
  %v77 = vpack.c.b16 %v53, %v53
  %v78 = vpack.c.b16 %v54, %v54
  %v79 = vpack.c.b16 %v55, %v55
  %v80 = vpack.c.b16 %v56, %v56
  %105 = vmatprep.subr.bf16.mxu0 %v58
  %106 = vmatpush1.bf16.xpose.msra.mxu0 %v57
  %107 = vmatprep.subr.bf16.mxu0 0
  %108 = vmatpush1.bf16.xpose.msra.mxu0 0
  %109 = vmatprep.subr.bf16.mxu0 0
  %110 = vmatpush1.bf16.xpose.msra.mxu0 0
  %111 = vmatprep.subr.bf16.mxu0 0
  %112 = vmatpush1.bf16.xpose.msra.mxu0 0
  %113 = vmatprep.subr.bf16.mxu0 0
  %114 = vmatpush1.bf16.xpose.msra.mxu0 0
  %115 = vmatprep.subr.bf16.mxu0 0
  %116 = vmatpush1.bf16.xpose.msra.mxu0 0
  %117 = vmatprep.subr.bf16.mxu0 0
  %118 = vmatpush1.bf16.xpose.msra.mxu0 0
  %119 = vmatprep.subr.bf16.mxu0 0
  %120 = vmatpush1.bf16.xpose.msra.mxu0 0
  %121 = vmatprep.subr.bf16.mxu0 0
  %122 = vmatpush1.bf16.xpose.msra.mxu0 0
  %123 = vmatprep.subr.bf16.mxu0 0
  %124 = vmatpush1.bf16.xpose.msra.mxu0 0
  %125 = vmatprep.subr.bf16.mxu0 0
  %126 = vmatpush1.bf16.xpose.msra.mxu0 0
  %127 = vmatprep.subr.bf16.mxu0 0
  %128 = vmatpush1.bf16.xpose.msra.mxu0 0
  %129 = vmatprep.subr.bf16.mxu0 0
  %130 = vmatpush1.bf16.xpose.msra.mxu0 0
  %131 = vmatprep.subr.bf16.mxu0 0
  %132 = vmatpush1.bf16.xpose.msra.mxu0 0
  %133 = vmatprep.subr.bf16.mxu0 0
  %134 = vmatpush1.bf16.xpose.msra.mxu0 0
  %135 = vmatprep.subr.bf16.mxu0 0
  %136 = vmatpush1.bf16.xpose.msra.mxu0 0
  %137 = vmatprep.mubr.bf16.mxu0 %v58
  %138 = vmatmul.mubr.bf16.gmra.mrb[0].mxu0 %v57
  %v139 = vpop.f32.mrb[0].mxu0
  %v140 = vadd.f32 0.0, %v139
  %v141 = vpop.f32.mrb[0].mxu0
  %v142 = vpop.f32.mrb[0].mxu0
  %v143 = vpop.f32.mrb[0].mxu0
  %144 = vdwg.mxu0
  %145 = vmatprep.subr.bf16.mxu0 %v60
  %146 = vmatpush1.bf16.xpose.msra.mxu0 %v59
  %147 = vmatprep.subr.bf16.mxu0 0
  %148 = vmatpush1.bf16.xpose.msra.mxu0 0
  %149 = vmatprep.subr.bf16.mxu0 0
  %150 = vmatpush1.bf16.xpose.msra.mxu0 0
  %151 = vmatprep.subr.bf16.mxu0 0
  %152 = vmatpush1.bf16.xpose.msra.mxu0 0
  %153 = vmatprep.subr.bf16.mxu0 0
  %154 = vmatpush1.bf16.xpose.msra.mxu0 0
  %155 = vmatprep.subr.bf16.mxu0 0
  %156 = vmatpush1.bf16.xpose.msra.mxu0 0
  %157 = vmatprep.subr.bf16.mxu0 0
  %158 = vmatpush1.bf16.xpose.msra.mxu0 0
  %159 = vmatprep.subr.bf16.mxu0 0
  %160 = vmatpush1.bf16.xpose.msra.mxu0 0
  %161 = vmatprep.subr.bf16.mxu0 0
  %162 = vmatpush1.bf16.xpose.msra.mxu0 0
  %163 = vmatprep.subr.bf16.mxu0 0
  %164 = vmatpush1.bf16.xpose.msra.mxu0 0
  %165 = vmatprep.subr.bf16.mxu0 0
  %166 = vmatpush1.bf16.xpose.msra.mxu0 0
  %167 = vmatprep.subr.bf16.mxu0 0
  %168 = vmatpush1.bf16.xpose.msra.mxu0 0
  %169 = vmatprep.subr.bf16.mxu0 0
  %170 = vmatpush1.bf16.xpose.msra.mxu0 0
  %171 = vmatprep.subr.bf16.mxu0 0
  %172 = vmatpush1.bf16.xpose.msra.mxu0 0
  %173 = vmatprep.subr.bf16.mxu0 0
  %174 = vmatpush1.bf16.xpose.msra.mxu0 0
  %175 = vmatprep.subr.bf16.mxu0 0
  %176 = vmatpush1.bf16.xpose.msra.mxu0 0
  %177 = vmatprep.mubr.bf16.mxu0 %v60
  %178 = vmatmul.mubr.bf16.gmra.mrb[0].mxu0 %v59
  %v179 = vpop.f32.mrb[0].mxu0
  %v180 = vadd.f32 %v140, %v179
  %v181 = vpop.f32.mrb[0].mxu0
  %v182 = vpop.f32.mrb[0].mxu0
  %v183 = vpop.f32.mrb[0].mxu0
  %184 = vdwg.mxu0
  %185 = vmatprep.subr.bf16.mxu0 %v62
  %186 = vmatpush1.bf16.xpose.msra.mxu0 %v61
  %187 = vmatprep.subr.bf16.mxu0 0
  %188 = vmatpush1.bf16.xpose.msra.mxu0 0
  %189 = vmatprep.subr.bf16.mxu0 0
  %190 = vmatpush1.bf16.xpose.msra.mxu0 0
  %191 = vmatprep.subr.bf16.mxu0 0
  %192 = vmatpush1.bf16.xpose.msra.mxu0 0
  %193 = vmatprep.subr.bf16.mxu0 0
  %194 = vmatpush1.bf16.xpose.msra.mxu0 0
  %195 = vmatprep.subr.bf16.mxu0 0
  %196 = vmatpush1.bf16.xpose.msra.mxu0 0
  %197 = vmatprep.subr.bf16.mxu0 0
  %198 = vmatpush1.bf16.xpose.msra.mxu0 0
  %199 = vmatprep.subr.bf16.mxu0 0
  %200 = vmatpush1.bf16.xpose.msra.mxu0 0
  %201 = vmatprep.subr.bf16.mxu0 0
  %202 = vmatpush1.bf16.xpose.msra.mxu0 0
  %203 = vmatprep.subr.bf16.mxu0 0
  %204 = vmatpush1.bf16.xpose.msra.mxu0 0
  %205 = vmatprep.subr.bf16.mxu0 0
  %206 = vmatpush1.bf16.xpose.msra.mxu0 0
  %207 = vmatprep.subr.bf16.mxu0 0
  %208 = vmatpush1.bf16.xpose.msra.mxu0 0
  %209 = vmatprep.subr.bf16.mxu0 0
  %210 = vmatpush1.bf16.xpose.msra.mxu0 0
  %211 = vmatprep.subr.bf16.mxu0 0
  %212 = vmatpush1.bf16.xpose.msra.mxu0 0
  %213 = vmatprep.subr.bf16.mxu0 0
  %214 = vmatpush1.bf16.xpose.msra.mxu0 0
  %215 = vmatprep.subr.bf16.mxu0 0
  %216 = vmatpush1.bf16.xpose.msra.mxu0 0
  %217 = vmatprep.mubr.bf16.mxu0 %v62
  %218 = vmatmul.mubr.bf16.gmra.mrb[0].mxu0 %v61
  %v219 = vpop.f32.mrb[0].mxu0
  %v220 = vadd.f32 %v180, %v219
  %v221 = vpop.f32.mrb[0].mxu0
  %v222 = vpop.f32.mrb[0].mxu0
  %v223 = vpop.f32.mrb[0].mxu0
  %224 = vdwg.mxu0
  %225 = vmatprep.subr.bf16.mxu0 %v64
  %226 = vmatpush1.bf16.xpose.msra.mxu0 %v63
  %227 = vmatprep.subr.bf16.mxu0 0
  %228 = vmatpush1.bf16.xpose.msra.mxu0 0
  %229 = vmatprep.subr.bf16.mxu0 0
  %230 = vmatpush1.bf16.xpose.msra.mxu0 0
  %231 = vmatprep.subr.bf16.mxu0 0
  %232 = vmatpush1.bf16.xpose.msra.mxu0 0
  %233 = vmatprep.subr.bf16.mxu0 0
  %234 = vmatpush1.bf16.xpose.msra.mxu0 0
  %235 = vmatprep.subr.bf16.mxu0 0
  %236 = vmatpush1.bf16.xpose.msra.mxu0 0
  %237 = vmatprep.subr.bf16.mxu0 0
  %238 = vmatpush1.bf16.xpose.msra.mxu0 0
  %239 = vmatprep.subr.bf16.mxu0 0
  %240 = vmatpush1.bf16.xpose.msra.mxu0 0
  %241 = vmatprep.subr.bf16.mxu0 0
  %242 = vmatpush1.bf16.xpose.msra.mxu0 0
  %243 = vmatprep.subr.bf16.mxu0 0
  %244 = vmatpush1.bf16.xpose.msra.mxu0 0
  %245 = vmatprep.subr.bf16.mxu0 0
  %246 = vmatpush1.bf16.xpose.msra.mxu0 0
  %247 = vmatprep.subr.bf16.mxu0 0
  %248 = vmatpush1.bf16.xpose.msra.mxu0 0
  %249 = vmatprep.subr.bf16.mxu0 0
  %250 = vmatpush1.bf16.xpose.msra.mxu0 0
  %251 = vmatprep.subr.bf16.mxu0 0
  %252 = vmatpush1.bf16.xpose.msra.mxu0 0
  %253 = vmatprep.subr.bf16.mxu0 0
  %254 = vmatpush1.bf16.xpose.msra.mxu0 0
  %255 = vmatprep.subr.bf16.mxu0 0
  %256 = vmatpush1.bf16.xpose.msra.mxu0 0
  %257 = vmatprep.mubr.bf16.mxu0 %v64
  %258 = vmatmul.mubr.bf16.gmra.mrb[0].mxu0 %v63
  %v259 = vpop.f32.mrb[0].mxu0
  %v260 = vadd.f32 %v220, %v259
  %v261 = vpop.f32.mrb[0].mxu0
  %v262 = vpop.f32.mrb[0].mxu0
  %v263 = vpop.f32.mrb[0].mxu0
  %264 = vdwg.mxu0
  %265 = vmatprep.subr.bf16.mxu0 %v66
  %266 = vmatpush1.bf16.xpose.msra.mxu0 %v65
  %267 = vmatprep.subr.bf16.mxu0 0
  %268 = vmatpush1.bf16.xpose.msra.mxu0 0
  %269 = vmatprep.subr.bf16.mxu0 0
  %270 = vmatpush1.bf16.xpose.msra.mxu0 0
  %271 = vmatprep.subr.bf16.mxu0 0
  %272 = vmatpush1.bf16.xpose.msra.mxu0 0
  %273 = vmatprep.subr.bf16.mxu0 0
  %274 = vmatpush1.bf16.xpose.msra.mxu0 0
  %275 = vmatprep.subr.bf16.mxu0 0
  %276 = vmatpush1.bf16.xpose.msra.mxu0 0
  %277 = vmatprep.subr.bf16.mxu0 0
  %278 = vmatpush1.bf16.xpose.msra.mxu0 0
  %279 = vmatprep.subr.bf16.mxu0 0
  %280 = vmatpush1.bf16.xpose.msra.mxu0 0
  %281 = vmatprep.subr.bf16.mxu0 0
  %282 = vmatpush1.bf16.xpose.msra.mxu0 0
  %283 = vmatprep.subr.bf16.mxu0 0
  %284 = vmatpush1.bf16.xpose.msra.mxu0 0
  %285 = vmatprep.subr.bf16.mxu0 0
  %286 = vmatpush1.bf16.xpose.msra.mxu0 0
  %287 = vmatprep.subr.bf16.mxu0 0
  %288 = vmatpush1.bf16.xpose.msra.mxu0 0
  %289 = vmatprep.subr.bf16.mxu0 0
  %290 = vmatpush1.bf16.xpose.msra.mxu0 0
  %291 = vmatprep.subr.bf16.mxu0 0
  %292 = vmatpush1.bf16.xpose.msra.mxu0 0
  %293 = vmatprep.subr.bf16.mxu0 0
  %294 = vmatpush1.bf16.xpose.msra.mxu0 0
  %295 = vmatprep.subr.bf16.mxu0 0
  %296 = vmatpush1.bf16.xpose.msra.mxu0 0
  %297 = vmatprep.mubr.bf16.mxu0 %v66
  %298 = vmatmul.mubr.bf16.gmra.mrb[0].mxu0 %v65
  %v299 = vpop.f32.mrb[0].mxu0
  %v300 = vadd.f32 %v260, %v299
  %v301 = vpop.f32.mrb[0].mxu0
  %v302 = vpop.f32.mrb[0].mxu0
  %v303 = vpop.f32.mrb[0].mxu0
  %304 = vdwg.mxu0
  %305 = vmatprep.subr.bf16.mxu0 %v68
  %306 = vmatpush1.bf16.xpose.msra.mxu0 %v67
  %307 = vmatprep.subr.bf16.mxu0 0
  %308 = vmatpush1.bf16.xpose.msra.mxu0 0
  %309 = vmatprep.subr.bf16.mxu0 0
  %310 = vmatpush1.bf16.xpose.msra.mxu0 0
  %311 = vmatprep.subr.bf16.mxu0 0
  %312 = vmatpush1.bf16.xpose.msra.mxu0 0
  %313 = vmatprep.subr.bf16.mxu0 0
  %314 = vmatpush1.bf16.xpose.msra.mxu0 0
  %315 = vmatprep.subr.bf16.mxu0 0
  %316 = vmatpush1.bf16.xpose.msra.mxu0 0
  %317 = vmatprep.subr.bf16.mxu0 0
  %318 = vmatpush1.bf16.xpose.msra.mxu0 0
  %319 = vmatprep.subr.bf16.mxu0 0
  %320 = vmatpush1.bf16.xpose.msra.mxu0 0
  %321 = vmatprep.subr.bf16.mxu0 0
  %322 = vmatpush1.bf16.xpose.msra.mxu0 0
  %323 = vmatprep.subr.bf16.mxu0 0
  %324 = vmatpush1.bf16.xpose.msra.mxu0 0
  %325 = vmatprep.subr.bf16.mxu0 0
  %326 = vmatpush1.bf16.xpose.msra.mxu0 0
  %327 = vmatprep.subr.bf16.mxu0 0
  %328 = vmatpush1.bf16.xpose.msra.mxu0 0
  %329 = vmatprep.subr.bf16.mxu0 0
  %330 = vmatpush1.bf16.xpose.msra.mxu0 0
  %331 = vmatprep.subr.bf16.mxu0 0
  %332 = vmatpush1.bf16.xpose.msra.mxu0 0
  %333 = vmatprep.subr.bf16.mxu0 0
  %334 = vmatpush1.bf16.xpose.msra.mxu0 0
  %335 = vmatprep.subr.bf16.mxu0 0
  %336 = vmatpush1.bf16.xpose.msra.mxu0 0
  %337 = vmatprep.mubr.bf16.mxu0 %v68
  %338 = vmatmul.mubr.bf16.gmra.mrb[0].mxu0 %v67
  %v339 = vpop.f32.mrb[0].mxu0
  %v340 = vadd.f32 %v300, %v339
  %v341 = vpop.f32.mrb[0].mxu0
  %v342 = vpop.f32.mrb[0].mxu0
  %v343 = vpop.f32.mrb[0].mxu0
  %344 = vdwg.mxu0
  %345 = vmatprep.subr.bf16.mxu0 %v70
  %346 = vmatpush1.bf16.xpose.msra.mxu0 %v69
  %347 = vmatprep.subr.bf16.mxu0 0
  %348 = vmatpush1.bf16.xpose.msra.mxu0 0
  %349 = vmatprep.subr.bf16.mxu0 0
  %350 = vmatpush1.bf16.xpose.msra.mxu0 0
  %351 = vmatprep.subr.bf16.mxu0 0
  %352 = vmatpush1.bf16.xpose.msra.mxu0 0
  %353 = vmatprep.subr.bf16.mxu0 0
  %354 = vmatpush1.bf16.xpose.msra.mxu0 0
  %355 = vmatprep.subr.bf16.mxu0 0
  %356 = vmatpush1.bf16.xpose.msra.mxu0 0
  %357 = vmatprep.subr.bf16.mxu0 0
  %358 = vmatpush1.bf16.xpose.msra.mxu0 0
  %359 = vmatprep.subr.bf16.mxu0 0
  %360 = vmatpush1.bf16.xpose.msra.mxu0 0
  %361 = vmatprep.subr.bf16.mxu0 0
  %362 = vmatpush1.bf16.xpose.msra.mxu0 0
  %363 = vmatprep.subr.bf16.mxu0 0
  %364 = vmatpush1.bf16.xpose.msra.mxu0 0
  %365 = vmatprep.subr.bf16.mxu0 0
  %366 = vmatpush1.bf16.xpose.msra.mxu0 0
  %367 = vmatprep.subr.bf16.mxu0 0
  %368 = vmatpush1.bf16.xpose.msra.mxu0 0
  %369 = vmatprep.subr.bf16.mxu0 0
  %370 = vmatpush1.bf16.xpose.msra.mxu0 0
  %371 = vmatprep.subr.bf16.mxu0 0
  %372 = vmatpush1.bf16.xpose.msra.mxu0 0
  %373 = vmatprep.subr.bf16.mxu0 0
  %374 = vmatpush1.bf16.xpose.msra.mxu0 0
  %375 = vmatprep.subr.bf16.mxu0 0
  %376 = vmatpush1.bf16.xpose.msra.mxu0 0
  %377 = vmatprep.mubr.bf16.mxu0 %v70
  %378 = vmatmul.mubr.bf16.gmra.mrb[0].mxu0 %v69
  %v379 = vpop.f32.mrb[0].mxu0
  %v380 = vadd.f32 %v340, %v379
  %v381 = vpop.f32.mrb[0].mxu0
  %v382 = vpop.f32.mrb[0].mxu0
  %v383 = vpop.f32.mrb[0].mxu0
  %384 = vdwg.mxu0
  %385 = vmatprep.subr.bf16.mxu0 %v72
  %386 = vmatpush1.bf16.xpose.msra.mxu0 %v71
  %387 = vmatprep.subr.bf16.mxu0 0
  %388 = vmatpush1.bf16.xpose.msra.mxu0 0
  %389 = vmatprep.subr.bf16.mxu0 0
  %390 = vmatpush1.bf16.xpose.msra.mxu0 0
  %391 = vmatprep.subr.bf16.mxu0 0
  %392 = vmatpush1.bf16.xpose.msra.mxu0 0
  %393 = vmatprep.subr.bf16.mxu0 0
  %394 = vmatpush1.bf16.xpose.msra.mxu0 0
  %395 = vmatprep.subr.bf16.mxu0 0
  %396 = vmatpush1.bf16.xpose.msra.mxu0 0
  %397 = vmatprep.subr.bf16.mxu0 0
  %398 = vmatpush1.bf16.xpose.msra.mxu0 0
  %399 = vmatprep.subr.bf16.mxu0 0
  %400 = vmatpush1.bf16.xpose.msra.mxu0 0
  %401 = vmatprep.subr.bf16.mxu0 0
  %402 = vmatpush1.bf16.xpose.msra.mxu0 0
  %403 = vmatprep.subr.bf16.mxu0 0
  %404 = vmatpush1.bf16.xpose.msra.mxu0 0
  %405 = vmatprep.subr.bf16.mxu0 0
  %406 = vmatpush1.bf16.xpose.msra.mxu0 0
  %407 = vmatprep.subr.bf16.mxu0 0
  %408 = vmatpush1.bf16.xpose.msra.mxu0 0
  %409 = vmatprep.subr.bf16.mxu0 0
  %410 = vmatpush1.bf16.xpose.msra.mxu0 0
  %411 = vmatprep.subr.bf16.mxu0 0
  %412 = vmatpush1.bf16.xpose.msra.mxu0 0
  %413 = vmatprep.subr.bf16.mxu0 0
  %414 = vmatpush1.bf16.xpose.msra.mxu0 0
  %415 = vmatprep.subr.bf16.mxu0 0
  %416 = vmatpush1.bf16.xpose.msra.mxu0 0
  %417 = vmatprep.mubr.bf16.mxu0 %v72
  %418 = vmatmul.mubr.bf16.gmra.mrb[0].mxu0 %v71
  %v419 = vpop.f32.mrb[0].mxu0
  %v420 = vadd.f32 %v380, %v419
  %v421 = vpop.f32.mrb[0].mxu0
  %v422 = vpop.f32.mrb[0].mxu0
  %v423 = vpop.f32.mrb[0].mxu0
  %424 = vdwg.mxu0
  %425 = vmatprep.subr.bf16.mxu0 %v74
  %426 = vmatpush1.bf16.xpose.msra.mxu0 %v73
  %427 = vmatprep.subr.bf16.mxu0 0
  %428 = vmatpush1.bf16.xpose.msra.mxu0 0
  %429 = vmatprep.subr.bf16.mxu0 0
  %430 = vmatpush1.bf16.xpose.msra.mxu0 0
  %431 = vmatprep.subr.bf16.mxu0 0
  %432 = vmatpush1.bf16.xpose.msra.mxu0 0
  %433 = vmatprep.subr.bf16.mxu0 0
  %434 = vmatpush1.bf16.xpose.msra.mxu0 0
  %435 = vmatprep.subr.bf16.mxu0 0
  %436 = vmatpush1.bf16.xpose.msra.mxu0 0
  %437 = vmatprep.subr.bf16.mxu0 0
  %438 = vmatpush1.bf16.xpose.msra.mxu0 0
  %439 = vmatprep.subr.bf16.mxu0 0
  %440 = vmatpush1.bf16.xpose.msra.mxu0 0
  %441 = vmatprep.subr.bf16.mxu0 0
  %442 = vmatpush1.bf16.xpose.msra.mxu0 0
  %443 = vmatprep.subr.bf16.mxu0 0
  %444 = vmatpush1.bf16.xpose.msra.mxu0 0
  %445 = vmatprep.subr.bf16.mxu0 0
  %446 = vmatpush1.bf16.xpose.msra.mxu0 0
  %447 = vmatprep.subr.bf16.mxu0 0
  %448 = vmatpush1.bf16.xpose.msra.mxu0 0
  %449 = vmatprep.subr.bf16.mxu0 0
  %450 = vmatpush1.bf16.xpose.msra.mxu0 0
  %451 = vmatprep.subr.bf16.mxu0 0
  %452 = vmatpush1.bf16.xpose.msra.mxu0 0
  %453 = vmatprep.subr.bf16.mxu0 0
  %454 = vmatpush1.bf16.xpose.msra.mxu0 0
  %455 = vmatprep.subr.bf16.mxu0 0
  %456 = vmatpush1.bf16.xpose.msra.mxu0 0
  %457 = vmatprep.mubr.bf16.mxu0 %v74
  %458 = vmatmul.mubr.bf16.gmra.mrb[0].mxu0 %v73
  %v459 = vpop.f32.mrb[0].mxu0
  %v460 = vadd.f32 %v420, %v459
  %v461 = vpop.f32.mrb[0].mxu0
  %v462 = vpop.f32.mrb[0].mxu0
  %v463 = vpop.f32.mrb[0].mxu0
  %464 = vdwg.mxu0
  %465 = vmatprep.subr.bf16.mxu0 %v76
  %466 = vmatpush1.bf16.xpose.msra.mxu0 %v75
  %467 = vmatprep.subr.bf16.mxu0 0
  %468 = vmatpush1.bf16.xpose.msra.mxu0 0
  %469 = vmatprep.subr.bf16.mxu0 0
  %470 = vmatpush1.bf16.xpose.msra.mxu0 0
  %471 = vmatprep.subr.bf16.mxu0 0
  %472 = vmatpush1.bf16.xpose.msra.mxu0 0
  %473 = vmatprep.subr.bf16.mxu0 0
  %474 = vmatpush1.bf16.xpose.msra.mxu0 0
  %475 = vmatprep.subr.bf16.mxu0 0
  %476 = vmatpush1.bf16.xpose.msra.mxu0 0
  %477 = vmatprep.subr.bf16.mxu0 0
  %478 = vmatpush1.bf16.xpose.msra.mxu0 0
  %479 = vmatprep.subr.bf16.mxu0 0
  %480 = vmatpush1.bf16.xpose.msra.mxu0 0
  %481 = vmatprep.subr.bf16.mxu0 0
  %482 = vmatpush1.bf16.xpose.msra.mxu0 0
  %483 = vmatprep.subr.bf16.mxu0 0
  %484 = vmatpush1.bf16.xpose.msra.mxu0 0
  %485 = vmatprep.subr.bf16.mxu0 0
  %486 = vmatpush1.bf16.xpose.msra.mxu0 0
  %487 = vmatprep.subr.bf16.mxu0 0
  %488 = vmatpush1.bf16.xpose.msra.mxu0 0
  %489 = vmatprep.subr.bf16.mxu0 0
  %490 = vmatpush1.bf16.xpose.msra.mxu0 0
  %491 = vmatprep.subr.bf16.mxu0 0
  %492 = vmatpush1.bf16.xpose.msra.mxu0 0
  %493 = vmatprep.subr.bf16.mxu0 0
  %494 = vmatpush1.bf16.xpose.msra.mxu0 0
  %495 = vmatprep.subr.bf16.mxu0 0
  %496 = vmatpush1.bf16.xpose.msra.mxu0 0
  %497 = vmatprep.mubr.bf16.mxu0 %v76
  %498 = vmatmul.mubr.bf16.gmra.mrb[0].mxu0 %v75
  %v499 = vpop.f32.mrb[0].mxu0
  %v500 = vadd.f32 %v460, %v499
  %v501 = vpop.f32.mrb[0].mxu0
  %v502 = vpop.f32.mrb[0].mxu0
  %v503 = vpop.f32.mrb[0].mxu0
  %504 = vdwg.mxu0
  %505 = vmatprep.subr.bf16.mxu0 %v78
  %506 = vmatpush1.bf16.xpose.msra.mxu0 %v77
  %507 = vmatprep.subr.bf16.mxu0 0
  %508 = vmatpush1.bf16.xpose.msra.mxu0 0
  %509 = vmatprep.subr.bf16.mxu0 0
  %510 = vmatpush1.bf16.xpose.msra.mxu0 0
  %511 = vmatprep.subr.bf16.mxu0 0
  %512 = vmatpush1.bf16.xpose.msra.mxu0 0
  %513 = vmatprep.subr.bf16.mxu0 0
  %514 = vmatpush1.bf16.xpose.msra.mxu0 0
  %515 = vmatprep.subr.bf16.mxu0 0
  %516 = vmatpush1.bf16.xpose.msra.mxu0 0
  %517 = vmatprep.subr.bf16.mxu0 0
  %518 = vmatpush1.bf16.xpose.msra.mxu0 0
  %519 = vmatprep.subr.bf16.mxu0 0
  %520 = vmatpush1.bf16.xpose.msra.mxu0 0
  %521 = vmatprep.subr.bf16.mxu0 0
  %522 = vmatpush1.bf16.xpose.msra.mxu0 0
  %523 = vmatprep.subr.bf16.mxu0 0
  %524 = vmatpush1.bf16.xpose.msra.mxu0 0
  %525 = vmatprep.subr.bf16.mxu0 0
  %526 = vmatpush1.bf16.xpose.msra.mxu0 0
  %527 = vmatprep.subr.bf16.mxu0 0
  %528 = vmatpush1.bf16.xpose.msra.mxu0 0
  %529 = vmatprep.subr.bf16.mxu0 0
  %530 = vmatpush1.bf16.xpose.msra.mxu0 0
  %531 = vmatprep.subr.bf16.mxu0 0
  %532 = vmatpush1.bf16.xpose.msra.mxu0 0
  %533 = vmatprep.subr.bf16.mxu0 0
  %534 = vmatpush1.bf16.xpose.msra.mxu0 0
  %535 = vmatprep.subr.bf16.mxu0 0
  %536 = vmatpush1.bf16.xpose.msra.mxu0 0
  %537 = vmatprep.mubr.bf16.mxu0 %v78
  %538 = vmatmul.mubr.bf16.gmra.mrb[0].mxu0 %v77
  %v539 = vpop.f32.mrb[0].mxu0
  %v540 = vadd.f32 %v500, %v539
  %v541 = vpop.f32.mrb[0].mxu0
  %v542 = vpop.f32.mrb[0].mxu0
  %v543 = vpop.f32.mrb[0].mxu0
  %544 = vdwg.mxu0
  %545 = vmatprep.subr.bf16.mxu0 %v80
  %546 = vmatpush1.bf16.xpose.msra.mxu0 %v79
  %547 = vmatprep.subr.bf16.mxu0 0
  %548 = vmatpush1.bf16.xpose.msra.mxu0 0
  %549 = vmatprep.subr.bf16.mxu0 0
  %550 = vmatpush1.bf16.xpose.msra.mxu0 0
  %551 = vmatprep.subr.bf16.mxu0 0
  %552 = vmatpush1.bf16.xpose.msra.mxu0 0
  %553 = vmatprep.subr.bf16.mxu0 0
  %554 = vmatpush1.bf16.xpose.msra.mxu0 0
  %555 = vmatprep.subr.bf16.mxu0 0
  %556 = vmatpush1.bf16.xpose.msra.mxu0 0
  %557 = vmatprep.subr.bf16.mxu0 0
  %558 = vmatpush1.bf16.xpose.msra.mxu0 0
  %559 = vmatprep.subr.bf16.mxu0 0
  %560 = vmatpush1.bf16.xpose.msra.mxu0 0
  %561 = vmatprep.subr.bf16.mxu0 0
  %562 = vmatpush1.bf16.xpose.msra.mxu0 0
  %563 = vmatprep.subr.bf16.mxu0 0
  %564 = vmatpush1.bf16.xpose.msra.mxu0 0
  %565 = vmatprep.subr.bf16.mxu0 0
  %566 = vmatpush1.bf16.xpose.msra.mxu0 0
  %567 = vmatprep.subr.bf16.mxu0 0
  %568 = vmatpush1.bf16.xpose.msra.mxu0 0
  %569 = vmatprep.subr.bf16.mxu0 0
  %570 = vmatpush1.bf16.xpose.msra.mxu0 0
  %571 = vmatprep.subr.bf16.mxu0 0
  %572 = vmatpush1.bf16.xpose.msra.mxu0 0
  %573 = vmatprep.subr.bf16.mxu0 0
  %574 = vmatpush1.bf16.xpose.msra.mxu0 0
  %575 = vmatprep.subr.bf16.mxu0 0
  %576 = vmatpush1.bf16.xpose.msra.mxu0 0
  %577 = vmatprep.mubr.bf16.mxu0 %v80
  %578 = vmatmul.mubr.bf16.gmra.mrb[0].mxu0 %v79
  %v579 = vpop.f32.mrb[0].mxu0
  %v580 = vadd.f32 %v540, %v579
  %v581 = vpop.f32.mrb[0].mxu0
  %v582 = vpop.f32.mrb[0].mxu0
  %v583 = vpop.f32.mrb[0].mxu0
  %584 = vdwg.mxu0
  %vm585 = vcmask 36864
  %586 = vst.msk [vmem:[%s1] sm:$0x1f] %vm585, %v580
  // Predicated region
  $region6: #{a_call__.6} parent=0 // pred_check
    _
  $region7: #{a_call__.6} parent=0 // pred_check_branch
    %588 = sbr.rel (0) target = $region9
  $region8: #{a_call__.6} parent=0 // pred_region
    _
  $region9: #{a_call__.6} parent=0 // pred_fallthru
    _
  // Predicated region
  $region10: #{a_call__.6} parent=0 // pred_check
    _
  $region11: #{a_call__.6} parent=0 // pred_check_branch
    %590 = sbr.rel (0) target = $region13
  $region12: #{a_call__.6} parent=0 // pred_region
    _
  $region13: #{a_call__.6} parent=0 // pred_fallthru
    _

// kernel: a_call__.7
$region0: #{a_call__.7}
  #allocation0 [shape = 'u32[]', space=smem, size = 0x4, offset = 0x4, fixed_abs, tag = 'smem constant byte address 0x4 - core index']
  #allocation1 [shape = 'u32[144,128]{1,0:T(1,128)}', space=vmem, size = 0x12000, scoped, tag = 'internal scratch']
  %s0 = inlined_call_operand.vmem [shape: bf16[5,3072], index: 0, kind: input, shape index: {}]
  %s1 = inlined_call_operand.vmem [shape: bf16[8,5], index: 1, kind: input, shape index: {}]
  %s2 = inlined_call_operand.vmem [shape: f32[8,1], index: 2, kind: input, shape index: {}]
  %s3 = inlined_call_operand.vmem [shape: f32[8,1], index: 3, kind: input, shape index: {}]
  %s4 = inlined_call_operand.vmem [shape: bf16[8,3072], index: 4, kind: output, shape index: {0}]
  %s5 = inlined_call_operand.vmem [shape: f32[1,8,8], index: 5, kind: output, shape index: {1}]
  %6 = xla_tuple %s4, %s5
  %s7 = sld [smem:[#allocation0]]
  $region34: #{a_call__.7} parent=0
    _
  %s9 = ssub.s32 1, %s7
  %s10 = scalar_select 0, %s9, %s7
  // Predicated region
  $region2: #{a_call__.7} parent=0 // pred_check
    _
  $region3: #{a_call__.7} parent=0 // pred_check_branch
    %12 = sbr.rel (0) target = $region5
  $region4: #{a_call__.7} parent=0 // pred_region
    _
  $region5: #{a_call__.7} parent=0 // pred_fallthru
    _
  // Predicated region
  $region6: #{a_call__.7} parent=0 // pred_check
    _
  $region7: #{a_call__.7} parent=0 // pred_check_branch
    %14 = sbr.rel (0) target = $region9
  $region8: #{a_call__.7} parent=0 // pred_region
    _
  $region9: #{a_call__.7} parent=0 // pred_fallthru
    _
  // Predicated region
  $region10: #{a_call__.7} parent=0 // pred_check
    _
  $region11: #{a_call__.7} parent=0 // pred_check_branch
    %16 = sbr.rel (0) target = $region13
  $region12: #{a_call__.7} parent=0 // pred_region
    _
  $region13: #{a_call__.7} parent=0 // pred_fallthru
    _
  // Predicated region
  $region14: #{a_call__.7} parent=0 // pred_check
    _
  $region15: #{a_call__.7} parent=0 // pred_check_branch
    %18 = sbr.rel (0) target = $region17
  $region16: #{a_call__.7} parent=0 // pred_region
    _
  $region17: #{a_call__.7} parent=0 // pred_fallthru
    _
  %v20 = vld [vmem:[%s1] sm:$0xf]
  %v21 = vld [vmem:[%s0] sm:$0x77]
  %v22 = vld [vmem:[%s0 + $0x8] sm:$0x77]
  %v23 = vld [vmem:[%s0 + $0x10] sm:$0x77]
  %v24 = vld [vmem:[%s0 + $0x18] sm:$0x77]
  %v25 = vld [vmem:[%s0 + $0x20] sm:$0x77]
  %v26 = vld [vmem:[%s0 + $0x28] sm:$0x77]
  %v27 = vld [vmem:[%s0 + $0x30] sm:$0x77]
  %v28 = vld [vmem:[%s0 + $0x38] sm:$0x77]
  %v29 = vld [vmem:[%s0 + $0x40] sm:$0x77]
  %v30 = vld [vmem:[%s0 + $0x48] sm:$0x77]
  %v31 = vld [vmem:[%s0 + $0x50] sm:$0x77]
  %v32 = vld [vmem:[%s0 + $0x58] sm:$0x77]
  %v45 = vunpack.c.l.b16 %v21
  %v46 = vunpack.c.h.b16 %v21
  %v47 = vunpack.c.l.b16 %v22
  %v48 = vunpack.c.h.b16 %v22
  %v49 = vunpack.c.l.b16 %v23
  %v50 = vunpack.c.h.b16 %v23
  %v51 = vunpack.c.l.b16 %v24
  %v52 = vunpack.c.h.b16 %v24
  %v53 = vunpack.c.l.b16 %v25
  %v54 = vunpack.c.h.b16 %v25
  %v55 = vunpack.c.l.b16 %v26
  %v56 = vunpack.c.h.b16 %v26
  %v57 = vunpack.c.l.b16 %v27
  %v58 = vunpack.c.h.b16 %v27
  %v59 = vunpack.c.l.b16 %v28
  %v60 = vunpack.c.h.b16 %v28
  %v61 = vunpack.c.l.b16 %v29
  %v62 = vunpack.c.h.b16 %v29
  %v63 = vunpack.c.l.b16 %v30
  %v64 = vunpack.c.h.b16 %v30
  %v65 = vunpack.c.l.b16 %v31
  %v66 = vunpack.c.h.b16 %v31
  %v67 = vunpack.c.l.b16 %v32
  %v68 = vunpack.c.h.b16 %v32
  %v69 = vpack.c.b16 %v45, %v45
  %v70 = vpack.c.b16 %v46, %v46
  %v71 = vpack.c.b16 %v47, %v47
  %v72 = vpack.c.b16 %v48, %v48
  %v73 = vpack.c.b16 %v49, %v49
  %v74 = vpack.c.b16 %v50, %v50
  %v75 = vpack.c.b16 %v51, %v51
  %v76 = vpack.c.b16 %v52, %v52
  %v77 = vpack.c.b16 %v53, %v53
  %v78 = vpack.c.b16 %v54, %v54
  %v79 = vpack.c.b16 %v55, %v55
  %v80 = vpack.c.b16 %v56, %v56
  %v81 = vpack.c.b16 %v57, %v57
  %v82 = vpack.c.b16 %v58, %v58
  %v83 = vpack.c.b16 %v59, %v59
  %v84 = vpack.c.b16 %v60, %v60
  %v85 = vpack.c.b16 %v61, %v61
  %v86 = vpack.c.b16 %v62, %v62
  %v87 = vpack.c.b16 %v63, %v63
  %v88 = vpack.c.b16 %v64, %v64
  %v89 = vpack.c.b16 %v65, %v65
  %v90 = vpack.c.b16 %v66, %v66
  %v91 = vpack.c.b16 %v67, %v67
  %v92 = vpack.c.b16 %v68, %v68
  %vm93 = vcmask 39936
  %v95 = vsel %vm93, %v20, 0
  %vm97 = vcmask 1041408
  %vm98 = vcmask 1042432
  %v99 = vsel %vm97, 4294967295, 65535
  %v100 = vsel %vm98, %v99, 0
  %v102 = vand.u32 %v69, %v100
  %v105 = vand.u32 %v70, %v100
  %v108 = vand.u32 %v71, %v100
  %v111 = vand.u32 %v72, %v100
  %v114 = vand.u32 %v73, %v100
  %v117 = vand.u32 %v74, %v100
  %v120 = vand.u32 %v75, %v100
  %v123 = vand.u32 %v76, %v100
  %v126 = vand.u32 %v77, %v100
  %v129 = vand.u32 %v78, %v100
  %v132 = vand.u32 %v79, %v100
  %v135 = vand.u32 %v80, %v100
  %v138 = vand.u32 %v81, %v100
  %v141 = vand.u32 %v82, %v100
  %v144 = vand.u32 %v83, %v100
  %v147 = vand.u32 %v84, %v100
  %v150 = vand.u32 %v85, %v100
  %v153 = vand.u32 %v86, %v100
  %v156 = vand.u32 %v87, %v100
  %v159 = vand.u32 %v88, %v100
  %v162 = vand.u32 %v89, %v100
  %v165 = vand.u32 %v90, %v100
  %v168 = vand.u32 %v91, %v100
  %v171 = vand.u32 %v92, %v100
  %173 = vmatprep.subr.bf16.mxu0 %v105
  %174 = vmatpush1.bf16.msra.mxu0 %v102
  %175 = vmatprep.subr.bf16.mxu0 0
  %176 = vmatpush1.bf16.msra.mxu0 0
  %177 = vmatprep.subr.bf16.mxu0 0
  %178 = vmatpush1.bf16.msra.mxu0 0
  %179 = vmatprep.subr.bf16.mxu0 0
  %180 = vmatpush1.bf16.msra.mxu0 0
  %181 = vmatprep.subr.bf16.mxu0 0
  %182 = vmatpush1.bf16.msra.mxu0 0
  %183 = vmatprep.subr.bf16.mxu0 0
  %184 = vmatpush1.bf16.msra.mxu0 0
  %185 = vmatprep.subr.bf16.mxu0 0
  %186 = vmatpush1.bf16.msra.mxu0 0
  %187 = vmatprep.subr.bf16.mxu0 0
  %188 = vmatpush1.bf16.msra.mxu0 0
  %189 = vmatprep.subr.bf16.mxu0 0
  %190 = vmatpush1.bf16.msra.mxu0 0
  %191 = vmatprep.subr.bf16.mxu0 0
  %192 = vmatpush1.bf16.msra.mxu0 0
  %193 = vmatprep.subr.bf16.mxu0 0
  %194 = vmatpush1.bf16.msra.mxu0 0
  %195 = vmatprep.subr.bf16.mxu0 0
  %196 = vmatpush1.bf16.msra.mxu0 0
  %197 = vmatprep.subr.bf16.mxu0 0
  %198 = vmatpush1.bf16.msra.mxu0 0
  %199 = vmatprep.subr.bf16.mxu0 0
  %200 = vmatpush1.bf16.msra.mxu0 0
  %201 = vmatprep.subr.bf16.mxu0 0
  %202 = vmatpush1.bf16.msra.mxu0 0
  %203 = vmatprep.subr.bf16.mxu0 0
  %204 = vmatpush1.bf16.msra.mxu0 0
  %205 = vmatprep.mubr.bf16.mxu0 0
  %206 = vmatmul.mubr.bf16.gmra.mrb[0].mxu0 %v95
  %v207 = vpop.f32.mrb[0].mxu0
  %v208 = vadd.f32 0.0, %v207
  %v209 = vpop.f32.mrb[0].mxu0
  %v210 = vadd.f32 0.0, %v209
  %v211 = vpop.f32.mrb[0].mxu0
  %v212 = vpop.f32.mrb[0].mxu0
  %213 = vdwg.mxu0
  %214 = vmatprep.subr.bf16.mxu0 %v111
  %215 = vmatpush1.bf16.msra.mxu0 %v108
  %216 = vmatprep.subr.bf16.mxu0 0
  %217 = vmatpush1.bf16.msra.mxu0 0
  %218 = vmatprep.subr.bf16.mxu0 0
  %219 = vmatpush1.bf16.msra.mxu0 0
  %220 = vmatprep.subr.bf16.mxu0 0
  %221 = vmatpush1.bf16.msra.mxu0 0
  %222 = vmatprep.subr.bf16.mxu0 0
  %223 = vmatpush1.bf16.msra.mxu0 0
  %224 = vmatprep.subr.bf16.mxu0 0
  %225 = vmatpush1.bf16.msra.mxu0 0
  %226 = vmatprep.subr.bf16.mxu0 0
  %227 = vmatpush1.bf16.msra.mxu0 0
  %228 = vmatprep.subr.bf16.mxu0 0
  %229 = vmatpush1.bf16.msra.mxu0 0
  %230 = vmatprep.subr.bf16.mxu0 0
  %231 = vmatpush1.bf16.msra.mxu0 0
  %232 = vmatprep.subr.bf16.mxu0 0
  %233 = vmatpush1.bf16.msra.mxu0 0
  %234 = vmatprep.subr.bf16.mxu0 0
  %235 = vmatpush1.bf16.msra.mxu0 0
  %236 = vmatprep.subr.bf16.mxu0 0
  %237 = vmatpush1.bf16.msra.mxu0 0
  %238 = vmatprep.subr.bf16.mxu0 0
  %239 = vmatpush1.bf16.msra.mxu0 0
  %240 = vmatprep.subr.bf16.mxu0 0
  %241 = vmatpush1.bf16.msra.mxu0 0
  %242 = vmatprep.subr.bf16.mxu0 0
  %243 = vmatpush1.bf16.msra.mxu0 0
  %244 = vmatprep.subr.bf16.mxu0 0
  %245 = vmatpush1.bf16.msra.mxu0 0
  %246 = vmatprep.mubr.bf16.mxu0 0
  %247 = vmatmul.mubr.bf16.gmra.mrb[0].mxu0 %v95
  %v248 = vpop.f32.mrb[0].mxu0
  %v249 = vadd.f32 0.0, %v248
  %v250 = vpop.f32.mrb[0].mxu0
  %v251 = vadd.f32 0.0, %v250
  %v252 = vpop.f32.mrb[0].mxu0
  %v253 = vpop.f32.mrb[0].mxu0
  %254 = vdwg.mxu0
  %255 = vmatprep.subr.bf16.mxu0 %v117
  %256 = vmatpush1.bf16.msra.mxu0 %v114
  %257 = vmatprep.subr.bf16.mxu0 0
  %258 = vmatpush1.bf16.msra.mxu0 0
  %259 = vmatprep.subr.bf16.mxu0 0
  %260 = vmatpush1.bf16.msra.mxu0 0
  %261 = vmatprep.subr.bf16.mxu0 0
  %262 = vmatpush1.bf16.msra.mxu0 0
  %263 = vmatprep.subr.bf16.mxu0 0
  %264 = vmatpush1.bf16.msra.mxu0 0
  %265 = vmatprep.subr.bf16.mxu0 0
  %266 = vmatpush1.bf16.msra.mxu0 0
  %267 = vmatprep.subr.bf16.mxu0 0
  %268 = vmatpush1.bf16.msra.mxu0 0
  %269 = vmatprep.subr.bf16.mxu0 0
  %270 = vmatpush1.bf16.msra.mxu0 0
  %271 = vmatprep.subr.bf16.mxu0 0
  %272 = vmatpush1.bf16.msra.mxu0 0
  %273 = vmatprep.subr.bf16.mxu0 0
  %274 = vmatpush1.bf16.msra.mxu0 0
  %275 = vmatprep.subr.bf16.mxu0 0
  %276 = vmatpush1.bf16.msra.mxu0 0
  %277 = vmatprep.subr.bf16.mxu0 0
  %278 = vmatpush1.bf16.msra.mxu0 0
  %279 = vmatprep.subr.bf16.mxu0 0
  %280 = vmatpush1.bf16.msra.mxu0 0
  %281 = vmatprep.subr.bf16.mxu0 0
  %282 = vmatpush1.bf16.msra.mxu0 0
  %283 = vmatprep.subr.bf16.mxu0 0
  %284 = vmatpush1.bf16.msra.mxu0 0
  %285 = vmatprep.subr.bf16.mxu0 0
  %286 = vmatpush1.bf16.msra.mxu0 0
  %287 = vmatprep.mubr.bf16.mxu0 0
  %288 = vmatmul.mubr.bf16.gmra.mrb[0].mxu0 %v95
  %v289 = vpop.f32.mrb[0].mxu0
  %v290 = vadd.f32 0.0, %v289
  %v291 = vpop.f32.mrb[0].mxu0
  %v292 = vadd.f32 0.0, %v291
  %v293 = vpop.f32.mrb[0].mxu0
  %v294 = vpop.f32.mrb[0].mxu0
  %295 = vdwg.mxu0
  %296 = vmatprep.subr.bf16.mxu0 %v123
  %297 = vmatpush1.bf16.msra.mxu0 %v120
  %298 = vmatprep.subr.bf16.mxu0 0
  %299 = vmatpush1.bf16.msra.mxu0 0
  %300 = vmatprep.subr.bf16.mxu0 0
  %301 = vmatpush1.bf16.msra.mxu0 0
  %302 = vmatprep.subr.bf16.mxu0 0
  %303 = vmatpush1.bf16.msra.mxu0 0
  %304 = vmatprep.subr.bf16.mxu0 0
  %305 = vmatpush1.bf16.msra.mxu0 0
  %306 = vmatprep.subr.bf16.mxu0 0
  %307 = vmatpush1.bf16.msra.mxu0 0
  %308 = vmatprep.subr.bf16.mxu0 0
  %309 = vmatpush1.bf16.msra.mxu0 0
  %310 = vmatprep.subr.bf16.mxu0 0
  %311 = vmatpush1.bf16.msra.mxu0 0
  %312 = vmatprep.subr.bf16.mxu0 0
  %313 = vmatpush1.bf16.msra.mxu0 0
  %314 = vmatprep.subr.bf16.mxu0 0
  %315 = vmatpush1.bf16.msra.mxu0 0
  %316 = vmatprep.subr.bf16.mxu0 0
  %317 = vmatpush1.bf16.msra.mxu0 0
  %318 = vmatprep.subr.bf16.mxu0 0
  %319 = vmatpush1.bf16.msra.mxu0 0
  %320 = vmatprep.subr.bf16.mxu0 0
  %321 = vmatpush1.bf16.msra.mxu0 0
  %322 = vmatprep.subr.bf16.mxu0 0
  %323 = vmatpush1.bf16.msra.mxu0 0
  %324 = vmatprep.subr.bf16.mxu0 0
  %325 = vmatpush1.bf16.msra.mxu0 0
  %326 = vmatprep.subr.bf16.mxu0 0
  %327 = vmatpush1.bf16.msra.mxu0 0
  %328 = vmatprep.mubr.bf16.mxu0 0
  %329 = vmatmul.mubr.bf16.gmra.mrb[0].mxu0 %v95
  %v330 = vpop.f32.mrb[0].mxu0
  %v331 = vadd.f32 0.0, %v330
  %v332 = vpop.f32.mrb[0].mxu0
  %v333 = vadd.f32 0.0, %v332
  %v334 = vpop.f32.mrb[0].mxu0
  %v335 = vpop.f32.mrb[0].mxu0
  %336 = vdwg.mxu0
  %337 = vmatprep.subr.bf16.mxu0 %v129
  %338 = vmatpush1.bf16.msra.mxu0 %v126
  %339 = vmatprep.subr.bf16.mxu0 0
  %340 = vmatpush1.bf16.msra.mxu0 0
  %341 = vmatprep.subr.bf16.mxu0 0
  %342 = vmatpush1.bf16.msra.mxu0 0
  %343 = vmatprep.subr.bf16.mxu0 0
  %344 = vmatpush1.bf16.msra.mxu0 0
  %345 = vmatprep.subr.bf16.mxu0 0
  %346 = vmatpush1.bf16.msra.mxu0 0
  %347 = vmatprep.subr.bf16.mxu0 0
  %348 = vmatpush1.bf16.msra.mxu0 0
  %349 = vmatprep.subr.bf16.mxu0 0
  %350 = vmatpush1.bf16.msra.mxu0 0
  %351 = vmatprep.subr.bf16.mxu0 0
  %352 = vmatpush1.bf16.msra.mxu0 0
  %353 = vmatprep.subr.bf16.mxu0 0
  %354 = vmatpush1.bf16.msra.mxu0 0
  %355 = vmatprep.subr.bf16.mxu0 0
  %356 = vmatpush1.bf16.msra.mxu0 0
  %357 = vmatprep.subr.bf16.mxu0 0
  %358 = vmatpush1.bf16.msra.mxu0 0
  %359 = vmatprep.subr.bf16.mxu0 0
  %360 = vmatpush1.bf16.msra.mxu0 0
  %361 = vmatprep.subr.bf16.mxu0 0
  %362 = vmatpush1.bf16.msra.mxu0 0
  %363 = vmatprep.subr.bf16.mxu0 0
  %364 = vmatpush1.bf16.msra.mxu0 0
  %365 = vmatprep.subr.bf16.mxu0 0
  %366 = vmatpush1.bf16.msra.mxu0 0
  %367 = vmatprep.subr.bf16.mxu0 0
  %368 = vmatpush1.bf16.msra.mxu0 0
  %369 = vmatprep.mubr.bf16.mxu0 0
  %370 = vmatmul.mubr.bf16.gmra.mrb[0].mxu0 %v95
  %v371 = vpop.f32.mrb[0].mxu0
  %v372 = vadd.f32 0.0, %v371
  %v373 = vpop.f32.mrb[0].mxu0
  %v374 = vadd.f32 0.0, %v373
  %v375 = vpop.f32.mrb[0].mxu0
  %v376 = vpop.f32.mrb[0].mxu0
  %377 = vdwg.mxu0
  %378 = vmatprep.subr.bf16.mxu0 %v135
  %379 = vmatpush1.bf16.msra.mxu0 %v132
  %380 = vmatprep.subr.bf16.mxu0 0
  %381 = vmatpush1.bf16.msra.mxu0 0
  %382 = vmatprep.subr.bf16.mxu0 0
  %383 = vmatpush1.bf16.msra.mxu0 0
  %384 = vmatprep.subr.bf16.mxu0 0
  %385 = vmatpush1.bf16.msra.mxu0 0
  %386 = vmatprep.subr.bf16.mxu0 0
  %387 = vmatpush1.bf16.msra.mxu0 0
  %388 = vmatprep.subr.bf16.mxu0 0
  %389 = vmatpush1.bf16.msra.mxu0 0
  %390 = vmatprep.subr.bf16.mxu0 0
  %391 = vmatpush1.bf16.msra.mxu0 0
  %392 = vmatprep.subr.bf16.mxu0 0
  %393 = vmatpush1.bf16.msra.mxu0 0
  %394 = vmatprep.subr.bf16.mxu0 0
  %395 = vmatpush1.bf16.msra.mxu0 0
  %396 = vmatprep.subr.bf16.mxu0 0
  %397 = vmatpush1.bf16.msra.mxu0 0
  %398 = vmatprep.subr.bf16.mxu0 0
  %399 = vmatpush1.bf16.msra.mxu0 0
  %400 = vmatprep.subr.bf16.mxu0 0
  %401 = vmatpush1.bf16.msra.mxu0 0
  %402 = vmatprep.subr.bf16.mxu0 0
  %403 = vmatpush1.bf16.msra.mxu0 0
  %404 = vmatprep.subr.bf16.mxu0 0
  %405 = vmatpush1.bf16.msra.mxu0 0
  %406 = vmatprep.subr.bf16.mxu0 0
  %407 = vmatpush1.bf16.msra.mxu0 0
  %408 = vmatprep.subr.bf16.mxu0 0
  %409 = vmatpush1.bf16.msra.mxu0 0
  %410 = vmatprep.mubr.bf16.mxu0 0
  %411 = vmatmul.mubr.bf16.gmra.mrb[0].mxu0 %v95
  %v412 = vpop.f32.mrb[0].mxu0
  %v413 = vadd.f32 0.0, %v412
  %v414 = vpop.f32.mrb[0].mxu0
  %v415 = vadd.f32 0.0, %v414
  %v416 = vpop.f32.mrb[0].mxu0
  %v417 = vpop.f32.mrb[0].mxu0
  %418 = vdwg.mxu0
  %419 = vmatprep.subr.bf16.mxu0 %v141
  %420 = vmatpush1.bf16.msra.mxu0 %v138
  %421 = vmatprep.subr.bf16.mxu0 0
  %422 = vmatpush1.bf16.msra.mxu0 0
  %423 = vmatprep.subr.bf16.mxu0 0
  %424 = vmatpush1.bf16.msra.mxu0 0
  %425 = vmatprep.subr.bf16.mxu0 0
  %426 = vmatpush1.bf16.msra.mxu0 0
  %427 = vmatprep.subr.bf16.mxu0 0
  %428 = vmatpush1.bf16.msra.mxu0 0
  %429 = vmatprep.subr.bf16.mxu0 0
  %430 = vmatpush1.bf16.msra.mxu0 0
  %431 = vmatprep.subr.bf16.mxu0 0
  %432 = vmatpush1.bf16.msra.mxu0 0
  %433 = vmatprep.subr.bf16.mxu0 0
  %434 = vmatpush1.bf16.msra.mxu0 0
  %435 = vmatprep.subr.bf16.mxu0 0
  %436 = vmatpush1.bf16.msra.mxu0 0
  %437 = vmatprep.subr.bf16.mxu0 0
  %438 = vmatpush1.bf16.msra.mxu0 0
  %439 = vmatprep.subr.bf16.mxu0 0
  %440 = vmatpush1.bf16.msra.mxu0 0
  %441 = vmatprep.subr.bf16.mxu0 0
  %442 = vmatpush1.bf16.msra.mxu0 0
  %443 = vmatprep.subr.bf16.mxu0 0
  %444 = vmatpush1.bf16.msra.mxu0 0
  %445 = vmatprep.subr.bf16.mxu0 0
  %446 = vmatpush1.bf16.msra.mxu0 0
  %447 = vmatprep.subr.bf16.mxu0 0
  %448 = vmatpush1.bf16.msra.mxu0 0
  %449 = vmatprep.subr.bf16.mxu0 0
  %450 = vmatpush1.bf16.msra.mxu0 0
  %451 = vmatprep.mubr.bf16.mxu0 0
  %452 = vmatmul.mubr.bf16.gmra.mrb[0].mxu0 %v95
  %v453 = vpop.f32.mrb[0].mxu0
  %v454 = vadd.f32 0.0, %v453
  %v455 = vpop.f32.mrb[0].mxu0
  %v456 = vadd.f32 0.0, %v455
  %v457 = vpop.f32.mrb[0].mxu0
  %v458 = vpop.f32.mrb[0].mxu0
  %459 = vdwg.mxu0
  %460 = vmatprep.subr.bf16.mxu0 %v147
  %461 = vmatpush1.bf16.msra.mxu0 %v144
  %462 = vmatprep.subr.bf16.mxu0 0
  %463 = vmatpush1.bf16.msra.mxu0 0
  %464 = vmatprep.subr.bf16.mxu0 0
  %465 = vmatpush1.bf16.msra.mxu0 0
  %466 = vmatprep.subr.bf16.mxu0 0
  %467 = vmatpush1.bf16.msra.mxu0 0
  %468 = vmatprep.subr.bf16.mxu0 0
  %469 = vmatpush1.bf16.msra.mxu0 0
  %470 = vmatprep.subr.bf16.mxu0 0
  %471 = vmatpush1.bf16.msra.mxu0 0
  %472 = vmatprep.subr.bf16.mxu0 0
  %473 = vmatpush1.bf16.msra.mxu0 0
  %474 = vmatprep.subr.bf16.mxu0 0
  %475 = vmatpush1.bf16.msra.mxu0 0
  %476 = vmatprep.subr.bf16.mxu0 0
  %477 = vmatpush1.bf16.msra.mxu0 0
  %478 = vmatprep.subr.bf16.mxu0 0
  %479 = vmatpush1.bf16.msra.mxu0 0
  %480 = vmatprep.subr.bf16.mxu0 0
  %481 = vmatpush1.bf16.msra.mxu0 0
  %482 = vmatprep.subr.bf16.mxu0 0
  %483 = vmatpush1.bf16.msra.mxu0 0
  %484 = vmatprep.subr.bf16.mxu0 0
  %485 = vmatpush1.bf16.msra.mxu0 0
  %486 = vmatprep.subr.bf16.mxu0 0
  %487 = vmatpush1.bf16.msra.mxu0 0
  %488 = vmatprep.subr.bf16.mxu0 0
  %489 = vmatpush1.bf16.msra.mxu0 0
  %490 = vmatprep.subr.bf16.mxu0 0
  %491 = vmatpush1.bf16.msra.mxu0 0
  %492 = vmatprep.mubr.bf16.mxu0 0
  %493 = vmatmul.mubr.bf16.gmra.mrb[0].mxu0 %v95
  %v494 = vpop.f32.mrb[0].mxu0
  %v495 = vadd.f32 0.0, %v494
  %v496 = vpop.f32.mrb[0].mxu0
  %v497 = vadd.f32 0.0, %v496
  %v498 = vpop.f32.mrb[0].mxu0
  %v499 = vpop.f32.mrb[0].mxu0
  %500 = vdwg.mxu0
  %501 = vmatprep.subr.bf16.mxu0 %v153
  %502 = vmatpush1.bf16.msra.mxu0 %v150
  %503 = vmatprep.subr.bf16.mxu0 0
  %504 = vmatpush1.bf16.msra.mxu0 0
  %505 = vmatprep.subr.bf16.mxu0 0
  %506 = vmatpush1.bf16.msra.mxu0 0
  %507 = vmatprep.subr.bf16.mxu0 0
  %508 = vmatpush1.bf16.msra.mxu0 0
  %509 = vmatprep.subr.bf16.mxu0 0
  %510 = vmatpush1.bf16.msra.mxu0 0
  %511 = vmatprep.subr.bf16.mxu0 0
  %512 = vmatpush1.bf16.msra.mxu0 0
  %513 = vmatprep.subr.bf16.mxu0 0
  %514 = vmatpush1.bf16.msra.mxu0 0
  %515 = vmatprep.subr.bf16.mxu0 0
  %516 = vmatpush1.bf16.msra.mxu0 0
  %517 = vmatprep.subr.bf16.mxu0 0
  %518 = vmatpush1.bf16.msra.mxu0 0
  %519 = vmatprep.subr.bf16.mxu0 0
  %520 = vmatpush1.bf16.msra.mxu0 0
  %521 = vmatprep.subr.bf16.mxu0 0
  %522 = vmatpush1.bf16.msra.mxu0 0
  %523 = vmatprep.subr.bf16.mxu0 0
  %524 = vmatpush1.bf16.msra.mxu0 0
  %525 = vmatprep.subr.bf16.mxu0 0
  %526 = vmatpush1.bf16.msra.mxu0 0
  %527 = vmatprep.subr.bf16.mxu0 0
  %528 = vmatpush1.bf16.msra.mxu0 0
  %529 = vmatprep.subr.bf16.mxu0 0
  %530 = vmatpush1.bf16.msra.mxu0 0
  %531 = vmatprep.subr.bf16.mxu0 0
  %532 = vmatpush1.bf16.msra.mxu0 0
  %533 = vmatprep.mubr.bf16.mxu0 0
  %534 = vmatmul.mubr.bf16.gmra.mrb[0].mxu0 %v95
  %v535 = vpop.f32.mrb[0].mxu0
  %v536 = vadd.f32 0.0, %v535
  %v537 = vpop.f32.mrb[0].mxu0
  %v538 = vadd.f32 0.0, %v537
  %v539 = vpop.f32.mrb[0].mxu0
  %v540 = vpop.f32.mrb[0].mxu0
  %541 = vdwg.mxu0
  %542 = vmatprep.subr.bf16.mxu0 %v159
  %543 = vmatpush1.bf16.msra.mxu0 %v156
  %544 = vmatprep.subr.bf16.mxu0 0
  %545 = vmatpush1.bf16.msra.mxu0 0
  %546 = vmatprep.subr.bf16.mxu0 0
  %547 = vmatpush1.bf16.msra.mxu0 0
  %548 = vmatprep.subr.bf16.mxu0 0
  %549 = vmatpush1.bf16.msra.mxu0 0
  %550 = vmatprep.subr.bf16.mxu0 0
  %551 = vmatpush1.bf16.msra.mxu0 0
  %552 = vmatprep.subr.bf16.mxu0 0
  %553 = vmatpush1.bf16.msra.mxu0 0
  %554 = vmatprep.subr.bf16.mxu0 0
  %555 = vmatpush1.bf16.msra.mxu0 0
  %556 = vmatprep.subr.bf16.mxu0 0
  %557 = vmatpush1.bf16.msra.mxu0 0
  %558 = vmatprep.subr.bf16.mxu0 0
  %559 = vmatpush1.bf16.msra.mxu0 0
  %560 = vmatprep.subr.bf16.mxu0 0
  %561 = vmatpush1.bf16.msra.mxu0 0
  %562 = vmatprep.subr.bf16.mxu0 0
  %563 = vmatpush1.bf16.msra.mxu0 0
  %564 = vmatprep.subr.bf16.mxu0 0
  %565 = vmatpush1.bf16.msra.mxu0 0
  %566 = vmatprep.subr.bf16.mxu0 0
  %567 = vmatpush1.bf16.msra.mxu0 0
  %568 = vmatprep.subr.bf16.mxu0 0
  %569 = vmatpush1.bf16.msra.mxu0 0
  %570 = vmatprep.subr.bf16.mxu0 0
  %571 = vmatpush1.bf16.msra.mxu0 0
  %572 = vmatprep.subr.bf16.mxu0 0
  %573 = vmatpush1.bf16.msra.mxu0 0
  %574 = vmatprep.mubr.bf16.mxu0 0
  %575 = vmatmul.mubr.bf16.gmra.mrb[0].mxu0 %v95
  %v576 = vpop.f32.mrb[0].mxu0
  %v577 = vadd.f32 0.0, %v576
  %v578 = vpop.f32.mrb[0].mxu0
  %v579 = vadd.f32 0.0, %v578
  %v580 = vpop.f32.mrb[0].mxu0
  %v581 = vpop.f32.mrb[0].mxu0
  %582 = vdwg.mxu0
  %583 = vmatprep.subr.bf16.mxu0 %v165
  %584 = vmatpush1.bf16.msra.mxu0 %v162
  %585 = vmatprep.subr.bf16.mxu0 0
  %586 = vmatpush1.bf16.msra.mxu0 0
  %587 = vmatprep.subr.bf16.mxu0 0
  %588 = vmatpush1.bf16.msra.mxu0 0
  %589 = vmatprep.subr.bf16.mxu0 0
  %590 = vmatpush1.bf16.msra.mxu0 0
  %591 = vmatprep.subr.bf16.mxu0 0
  %592 = vmatpush1.bf16.msra.mxu0 0
  %593 = vmatprep.subr.bf16.mxu0 0
  %594 = vmatpush1.bf16.msra.mxu0 0
  %595 = vmatprep.subr.bf16.mxu0 0
  %596 = vmatpush1.bf16.msra.mxu0 0
  %597 = vmatprep.subr.bf16.mxu0 0
  %598 = vmatpush1.bf16.msra.mxu0 0
  %599 = vmatprep.subr.bf16.mxu0 0
  %600 = vmatpush1.bf16.msra.mxu0 0
  %601 = vmatprep.subr.bf16.mxu0 0
  %602 = vmatpush1.bf16.msra.mxu0 0
  %603 = vmatprep.subr.bf16.mxu0 0
  %604 = vmatpush1.bf16.msra.mxu0 0
  %605 = vmatprep.subr.bf16.mxu0 0
  %606 = vmatpush1.bf16.msra.mxu0 0
  %607 = vmatprep.subr.bf16.mxu0 0
  %608 = vmatpush1.bf16.msra.mxu0 0
  %609 = vmatprep.subr.bf16.mxu0 0
  %610 = vmatpush1.bf16.msra.mxu0 0
  %611 = vmatprep.subr.bf16.mxu0 0
  %612 = vmatpush1.bf16.msra.mxu0 0
  %613 = vmatprep.subr.bf16.mxu0 0
  %614 = vmatpush1.bf16.msra.mxu0 0
  %615 = vmatprep.mubr.bf16.mxu0 0
  %616 = vmatmul.mubr.bf16.gmra.mrb[0].mxu0 %v95
  %v617 = vpop.f32.mrb[0].mxu0
  %v618 = vadd.f32 0.0, %v617
  %v619 = vpop.f32.mrb[0].mxu0
  %v620 = vadd.f32 0.0, %v619
  %v621 = vpop.f32.mrb[0].mxu0
  %v622 = vpop.f32.mrb[0].mxu0
  %623 = vdwg.mxu0
  %624 = vmatprep.subr.bf16.mxu0 %v171
  %625 = vmatpush1.bf16.msra.mxu0 %v168
  %626 = vmatprep.subr.bf16.mxu0 0
  %627 = vmatpush1.bf16.msra.mxu0 0
  %628 = vmatprep.subr.bf16.mxu0 0
  %629 = vmatpush1.bf16.msra.mxu0 0
  %630 = vmatprep.subr.bf16.mxu0 0
  %631 = vmatpush1.bf16.msra.mxu0 0
  %632 = vmatprep.subr.bf16.mxu0 0
  %633 = vmatpush1.bf16.msra.mxu0 0
  %634 = vmatprep.subr.bf16.mxu0 0
  %635 = vmatpush1.bf16.msra.mxu0 0
  %636 = vmatprep.subr.bf16.mxu0 0
  %637 = vmatpush1.bf16.msra.mxu0 0
  %638 = vmatprep.subr.bf16.mxu0 0
  %639 = vmatpush1.bf16.msra.mxu0 0
  %640 = vmatprep.subr.bf16.mxu0 0
  %641 = vmatpush1.bf16.msra.mxu0 0
  %642 = vmatprep.subr.bf16.mxu0 0
  %643 = vmatpush1.bf16.msra.mxu0 0
  %644 = vmatprep.subr.bf16.mxu0 0
  %645 = vmatpush1.bf16.msra.mxu0 0
  %646 = vmatprep.subr.bf16.mxu0 0
  %647 = vmatpush1.bf16.msra.mxu0 0
  %648 = vmatprep.subr.bf16.mxu0 0
  %649 = vmatpush1.bf16.msra.mxu0 0
  %650 = vmatprep.subr.bf16.mxu0 0
  %651 = vmatpush1.bf16.msra.mxu0 0
  %652 = vmatprep.subr.bf16.mxu0 0
  %653 = vmatpush1.bf16.msra.mxu0 0
  %654 = vmatprep.subr.bf16.mxu0 0
  %655 = vmatpush1.bf16.msra.mxu0 0
  %656 = vmatprep.mubr.bf16.mxu0 0
  %657 = vmatmul.mubr.bf16.gmra.mrb[0].mxu0 %v95
  %v658 = vpop.f32.mrb[0].mxu0
  %v659 = vadd.f32 0.0, %v658
  %v660 = vpop.f32.mrb[0].mxu0
  %v661 = vadd.f32 0.0, %v660
  %v662 = vpop.f32.mrb[0].mxu0
  %v663 = vpop.f32.mrb[0].mxu0
  %664 = vdwg.mxu0
  %v665 = vmul.f32 %v208, %v208
  %v666 = vmul.f32 %v210, %v210
  %v667 = vmul.f32 %v249, %v249
  %v668 = vmul.f32 %v251, %v251
  %v669 = vmul.f32 %v290, %v290
  %v670 = vmul.f32 %v292, %v292
  %v671 = vmul.f32 %v331, %v331
  %v672 = vmul.f32 %v333, %v333
  %v673 = vmul.f32 %v372, %v372
  %v674 = vmul.f32 %v374, %v374
  %v675 = vmul.f32 %v413, %v413
  %v676 = vmul.f32 %v415, %v415
  %v677 = vmul.f32 %v454, %v454
  %v678 = vmul.f32 %v456, %v456
  %v679 = vmul.f32 %v495, %v495
  %v680 = vmul.f32 %v497, %v497
  %v681 = vadd.f32 %v665, %v673
  %v682 = vadd.f32 %v666, %v674
  %v683 = vadd.f32 %v667, %v675
  %v684 = vadd.f32 %v668, %v676
  %v685 = vadd.f32 %v669, %v677
  %v686 = vadd.f32 %v670, %v678
  %v687 = vadd.f32 %v671, %v679
  %v688 = vadd.f32 %v672, %v680
  %v689 = vmul.f32 %v536, %v536
  %v690 = vmul.f32 %v538, %v538
  %v691 = vmul.f32 %v577, %v577
  %v692 = vmul.f32 %v579, %v579
  %v693 = vmul.f32 %v618, %v618
  %v694 = vmul.f32 %v620, %v620
  %v695 = vmul.f32 %v659, %v659
  %v696 = vmul.f32 %v661, %v661
  %v697 = vadd.f32 %v681, %v689
  %v698 = vadd.f32 %v682, %v690
  %v699 = vadd.f32 %v683, %v691
  %v700 = vadd.f32 %v684, %v692
  %v701 = vadd.f32 %v685, %v693
  %v702 = vadd.f32 %v686, %v694
  %v703 = vadd.f32 %v687, %v695
  %v704 = vadd.f32 %v688, %v696
  %v705 = vrsqrt.pop %v697
  %v706 = vmul.f32 %v697, %v705
  %vm707 = vcmp.eq.f32.partialorder %v697, inf
  %v708 = vsel %vm707, %v697, %v706
  %vm709 = vcmp.eq.f32.partialorder %v697, 0.0
  %v710 = vand.u32 %v697, 2147483648
  %v711 = vsel %vm709, %v710, %v708
  %v712 = vrsqrt.pop %v698
  %v713 = vmul.f32 %v698, %v712
  %vm714 = vcmp.eq.f32.partialorder %v698, inf
  %v715 = vsel %vm714, %v698, %v713
  %vm716 = vcmp.eq.f32.partialorder %v698, 0.0
  %v717 = vand.u32 %v698, 2147483648
  %v718 = vsel %vm716, %v717, %v715
  %v719 = vrsqrt.pop %v699
  %v720 = vmul.f32 %v699, %v719
  %vm721 = vcmp.eq.f32.partialorder %v699, inf
  %v722 = vsel %vm721, %v699, %v720
  %vm723 = vcmp.eq.f32.partialorder %v699, 0.0
  %v724 = vand.u32 %v699, 2147483648
  %v725 = vsel %vm723, %v724, %v722
  %v726 = vrsqrt.pop %v700
  %v727 = vmul.f32 %v700, %v726
  %vm728 = vcmp.eq.f32.partialorder %v700, inf
  %v729 = vsel %vm728, %v700, %v727
  %vm730 = vcmp.eq.f32.partialorder %v700, 0.0
  %v731 = vand.u32 %v700, 2147483648
  %v732 = vsel %vm730, %v731, %v729
  %v733 = vrsqrt.pop %v701
  %v734 = vmul.f32 %v701, %v733
  %vm735 = vcmp.eq.f32.partialorder %v701, inf
  %v736 = vsel %vm735, %v701, %v734
  %vm737 = vcmp.eq.f32.partialorder %v701, 0.0
  %v738 = vand.u32 %v701, 2147483648
  %v739 = vsel %vm737, %v738, %v736
  %v740 = vrsqrt.pop %v702
  %v741 = vmul.f32 %v702, %v740
  %vm742 = vcmp.eq.f32.partialorder %v702, inf
  %v743 = vsel %vm742, %v702, %v741
  %vm744 = vcmp.eq.f32.partialorder %v702, 0.0
  %v745 = vand.u32 %v702, 2147483648
  %v746 = vsel %vm744, %v745, %v743
  %v747 = vrsqrt.pop %v703
  %v748 = vmul.f32 %v703, %v747
  %vm749 = vcmp.eq.f32.partialorder %v703, inf
  %v750 = vsel %vm749, %v703, %v748
  %vm751 = vcmp.eq.f32.partialorder %v703, 0.0
  %v752 = vand.u32 %v703, 2147483648
  %v753 = vsel %vm751, %v752, %v750
  %v754 = vrsqrt.pop %v704
  %v755 = vmul.f32 %v704, %v754
  %vm756 = vcmp.eq.f32.partialorder %v704, inf
  %v757 = vsel %vm756, %v704, %v755
  %vm758 = vcmp.eq.f32.partialorder %v704, 0.0
  %v759 = vand.u32 %v704, 2147483648
  %v760 = vsel %vm758, %v759, %v757
  %v761 = vld [vmem:[%s3] sm:$0xff]
  %763 = vset.pattern.permute.xlu0 0
  %764 = vperm.xlu0 %763, %v761
  %v765 = vpop.permute.xlu0 %764
  %v767 = vmul.f32 %v711, %v765
  %v768 = vmul.f32 %v718, %v765
  %v769 = vmul.f32 %v725, %v765
  %v770 = vmul.f32 %v732, %v765
  %v771 = vmul.f32 %v739, %v765
  %v772 = vmul.f32 %v746, %v765
  %v773 = vmul.f32 %v753, %v765
  %v774 = vmul.f32 %v760, %v765
  %v775 = vld [vmem:[%s2] sm:$0xff]
  %777 = vset.pattern.permute.xlu0 0
  %778 = vperm.xlu0 %777, %v775
  %v779 = vpop.permute.xlu0 %778
  %v781 = vmin.f32 %v767, %v779
  %v782 = vmin.f32 %v768, %v779
  %v783 = vmin.f32 %v769, %v779
  %v784 = vmin.f32 %v770, %v779
  %v785 = vmin.f32 %v771, %v779
  %v786 = vmin.f32 %v772, %v779
  %v787 = vmin.f32 %v773, %v779
  %v788 = vmin.f32 %v774, %v779
  %v789 = vmul.f32 %v208, %v781
  %v790 = vmul.f32 %v210, %v782
  %v791 = vmul.f32 %v249, %v783
  %v792 = vmul.f32 %v251, %v784
  %v793 = vmul.f32 %v290, %v785
  %v794 = vmul.f32 %v292, %v786
  %v795 = vmul.f32 %v331, %v787
  %v796 = vmul.f32 %v333, %v788
  %v797 = vpack.c.bf16 %v789, %v789
  %v798 = vpack.c.bf16 %v790, %v790
  %v799 = vpack.c.bf16 %v791, %v791
  %v800 = vpack.c.bf16 %v792, %v792
  %v801 = vpack.c.bf16 %v793, %v793
  %v802 = vpack.c.bf16 %v794, %v794
  %v803 = vpack.c.bf16 %v795, %v795
  %v804 = vpack.c.bf16 %v796, %v796
  %v805 = vmul.f32 %v372, %v781
  %v806 = vmul.f32 %v374, %v782
  %v807 = vmul.f32 %v413, %v783
  %v808 = vmul.f32 %v415, %v784
  %v809 = vmul.f32 %v454, %v785
  %v810 = vmul.f32 %v456, %v786
  %v811 = vmul.f32 %v495, %v787
  %v812 = vmul.f32 %v497, %v788
  %v813 = vpack.c.bf16 %v805, %v805
  %v814 = vpack.c.bf16 %v806, %v806
  %v815 = vpack.c.bf16 %v807, %v807
  %v816 = vpack.c.bf16 %v808, %v808
  %v817 = vpack.c.bf16 %v809, %v809
  %v818 = vpack.c.bf16 %v810, %v810
  %v819 = vpack.c.bf16 %v811, %v811
  %v820 = vpack.c.bf16 %v812, %v812
  %v821 = vmul.f32 %v536, %v781
  %v822 = vmul.f32 %v538, %v782
  %v823 = vmul.f32 %v577, %v783
  %v824 = vmul.f32 %v579, %v784
  %v825 = vmul.f32 %v618, %v785
  %v826 = vmul.f32 %v620, %v786
  %v827 = vmul.f32 %v659, %v787
  %v828 = vmul.f32 %v661, %v788
  %v829 = vpack.c.bf16 %v821, %v821
  %v830 = vpack.c.bf16 %v822, %v822
  %v831 = vpack.c.bf16 %v823, %v823
  %v832 = vpack.c.bf16 %v824, %v824
  %v833 = vpack.c.bf16 %v825, %v825
  %v834 = vpack.c.bf16 %v826, %v826
  %v835 = vpack.c.bf16 %v827, %v827
  %v836 = vpack.c.bf16 %v828, %v828
  %v845 = vunpack.c.l.b16 %v797
  %v846 = vunpack.c.l.b16 %v798
  %v847 = vunpack.c.l.b16 %v799
  %v848 = vunpack.c.l.b16 %v800
  %v849 = vunpack.c.l.b16 %v801
  %v850 = vunpack.c.l.b16 %v802
  %v851 = vunpack.c.l.b16 %v803
  %v852 = vunpack.c.l.b16 %v804
  %v853 = vpack.c.b16 %v846, %v845
  %v854 = vpack.c.b16 %v848, %v847
  %v855 = vpack.c.b16 %v850, %v849
  %v856 = vpack.c.b16 %v852, %v851
  %861 = vst [vmem:[%s4] sm:$0xff] %v853
  %862 = vst [vmem:[%s4 + $0x8] sm:$0xff] %v854
  %863 = vst [vmem:[%s4 + $0x10] sm:$0xff] %v855
  %864 = vst [vmem:[%s4 + $0x18] sm:$0xff] %v856
  %v873 = vunpack.c.l.b16 %v813
  %v874 = vunpack.c.l.b16 %v814
  %v875 = vunpack.c.l.b16 %v815
  %v876 = vunpack.c.l.b16 %v816
  %v877 = vunpack.c.l.b16 %v817
  %v878 = vunpack.c.l.b16 %v818
  %v879 = vunpack.c.l.b16 %v819
  %v880 = vunpack.c.l.b16 %v820
  %v881 = vpack.c.b16 %v874, %v873
  %v882 = vpack.c.b16 %v876, %v875
  %v883 = vpack.c.b16 %v878, %v877
  %v884 = vpack.c.b16 %v880, %v879
  %889 = vst [vmem:[%s4 + $0x20] sm:$0xff] %v881
  %890 = vst [vmem:[%s4 + $0x28] sm:$0xff] %v882
  %891 = vst [vmem:[%s4 + $0x30] sm:$0xff] %v883
  %892 = vst [vmem:[%s4 + $0x38] sm:$0xff] %v884
  %v901 = vunpack.c.l.b16 %v829
  %v902 = vunpack.c.l.b16 %v830
  %v903 = vunpack.c.l.b16 %v831
  %v904 = vunpack.c.l.b16 %v832
  %v905 = vunpack.c.l.b16 %v833
  %v906 = vunpack.c.l.b16 %v834
  %v907 = vunpack.c.l.b16 %v835
  %v908 = vunpack.c.l.b16 %v836
  %v909 = vpack.c.b16 %v902, %v901
  %v910 = vpack.c.b16 %v904, %v903
  %v911 = vpack.c.b16 %v906, %v905
  %v912 = vpack.c.b16 %v908, %v907
  %917 = vst [vmem:[%s4 + $0x40] sm:$0xff] %v909
  %918 = vst [vmem:[%s4 + $0x48] sm:$0xff] %v910
  %919 = vst [vmem:[%s4 + $0x50] sm:$0xff] %v911
  %920 = vst [vmem:[%s4 + $0x58] sm:$0xff] %v912
  %921 = vmatprep.subr.bf16.mxu0 %v814
  %922 = vmatpush1.bf16.xpose.msra.mxu0 %v813
  %923 = vmatprep.subr.bf16.mxu0 0
  %924 = vmatpush1.bf16.xpose.msra.mxu0 0
  %925 = vmatprep.subr.bf16.mxu0 0
  %926 = vmatpush1.bf16.xpose.msra.mxu0 0
  %927 = vmatprep.subr.bf16.mxu0 0
  %928 = vmatpush1.bf16.xpose.msra.mxu0 0
  %929 = vmatprep.subr.bf16.mxu0 0
  %930 = vmatpush1.bf16.xpose.msra.mxu0 0
  %931 = vmatprep.subr.bf16.mxu0 0
  %932 = vmatpush1.bf16.xpose.msra.mxu0 0
  %933 = vmatprep.subr.bf16.mxu0 0
  %934 = vmatpush1.bf16.xpose.msra.mxu0 0
  %935 = vmatprep.subr.bf16.mxu0 0
  %936 = vmatpush1.bf16.xpose.msra.mxu0 0
  %937 = vmatprep.subr.bf16.mxu0 0
  %938 = vmatpush1.bf16.xpose.msra.mxu0 0
  %939 = vmatprep.subr.bf16.mxu0 0
  %940 = vmatpush1.bf16.xpose.msra.mxu0 0
  %941 = vmatprep.subr.bf16.mxu0 0
  %942 = vmatpush1.bf16.xpose.msra.mxu0 0
  %943 = vmatprep.subr.bf16.mxu0 0
  %944 = vmatpush1.bf16.xpose.msra.mxu0 0
  %945 = vmatprep.subr.bf16.mxu0 0
  %946 = vmatpush1.bf16.xpose.msra.mxu0 0
  %947 = vmatprep.subr.bf16.mxu0 0
  %948 = vmatpush1.bf16.xpose.msra.mxu0 0
  %949 = vmatprep.subr.bf16.mxu0 0
  %950 = vmatpush1.bf16.xpose.msra.mxu0 0
  %951 = vmatprep.subr.bf16.mxu0 0
  %952 = vmatpush1.bf16.xpose.msra.mxu0 0
  %953 = vmatprep.mubr.bf16.mxu0 %v814
  %954 = vmatmul.mubr.bf16.gmra.mrb[0].mxu0 %v813
  %v955 = vpop.f32.mrb[0].mxu0
  %v956 = vadd.f32 0.0, %v955
  %v957 = vpop.f32.mrb[0].mxu0
  %v958 = vpop.f32.mrb[0].mxu0
  %v959 = vpop.f32.mrb[0].mxu0
  %960 = vdwg.mxu0
  %961 = vmatprep.subr.bf16.mxu0 %v816
  %962 = vmatpush1.bf16.xpose.msra.mxu0 %v815
  %963 = vmatprep.subr.bf16.mxu0 0
  %964 = vmatpush1.bf16.xpose.msra.mxu0 0
  %965 = vmatprep.subr.bf16.mxu0 0
  %966 = vmatpush1.bf16.xpose.msra.mxu0 0
  %967 = vmatprep.subr.bf16.mxu0 0
  %968 = vmatpush1.bf16.xpose.msra.mxu0 0
  %969 = vmatprep.subr.bf16.mxu0 0
  %970 = vmatpush1.bf16.xpose.msra.mxu0 0
  %971 = vmatprep.subr.bf16.mxu0 0
  %972 = vmatpush1.bf16.xpose.msra.mxu0 0
  %973 = vmatprep.subr.bf16.mxu0 0
  %974 = vmatpush1.bf16.xpose.msra.mxu0 0
  %975 = vmatprep.subr.bf16.mxu0 0
  %976 = vmatpush1.bf16.xpose.msra.mxu0 0
  %977 = vmatprep.subr.bf16.mxu0 0
  %978 = vmatpush1.bf16.xpose.msra.mxu0 0
  %979 = vmatprep.subr.bf16.mxu0 0
  %980 = vmatpush1.bf16.xpose.msra.mxu0 0
  %981 = vmatprep.subr.bf16.mxu0 0
  %982 = vmatpush1.bf16.xpose.msra.mxu0 0
  %983 = vmatprep.subr.bf16.mxu0 0
  %984 = vmatpush1.bf16.xpose.msra.mxu0 0
  %985 = vmatprep.subr.bf16.mxu0 0
  %986 = vmatpush1.bf16.xpose.msra.mxu0 0
  %987 = vmatprep.subr.bf16.mxu0 0
  %988 = vmatpush1.bf16.xpose.msra.mxu0 0
  %989 = vmatprep.subr.bf16.mxu0 0
  %990 = vmatpush1.bf16.xpose.msra.mxu0 0
  %991 = vmatprep.subr.bf16.mxu0 0
  %992 = vmatpush1.bf16.xpose.msra.mxu0 0
  %993 = vmatprep.mubr.bf16.mxu0 %v816
  %994 = vmatmul.mubr.bf16.gmra.mrb[0].mxu0 %v815
  %v995 = vpop.f32.mrb[0].mxu0
  %v996 = vadd.f32 %v956, %v995
  %v997 = vpop.f32.mrb[0].mxu0
  %v998 = vpop.f32.mrb[0].mxu0
  %v999 = vpop.f32.mrb[0].mxu0
  %1000 = vdwg.mxu0
  %1001 = vmatprep.subr.bf16.mxu0 %v818
  %1002 = vmatpush1.bf16.xpose.msra.mxu0 %v817
  %1003 = vmatprep.subr.bf16.mxu0 0
  %1004 = vmatpush1.bf16.xpose.msra.mxu0 0
  %1005 = vmatprep.subr.bf16.mxu0 0
  %1006 = vmatpush1.bf16.xpose.msra.mxu0 0
  %1007 = vmatprep.subr.bf16.mxu0 0
  %1008 = vmatpush1.bf16.xpose.msra.mxu0 0
  %1009 = vmatprep.subr.bf16.mxu0 0
  %1010 = vmatpush1.bf16.xpose.msra.mxu0 0
  %1011 = vmatprep.subr.bf16.mxu0 0
  %1012 = vmatpush1.bf16.xpose.msra.mxu0 0
  %1013 = vmatprep.subr.bf16.mxu0 0
  %1014 = vmatpush1.bf16.xpose.msra.mxu0 0
  %1015 = vmatprep.subr.bf16.mxu0 0
  %1016 = vmatpush1.bf16.xpose.msra.mxu0 0
  %1017 = vmatprep.subr.bf16.mxu0 0
  %1018 = vmatpush1.bf16.xpose.msra.mxu0 0
  %1019 = vmatprep.subr.bf16.mxu0 0
  %1020 = vmatpush1.bf16.xpose.msra.mxu0 0
  %1021 = vmatprep.subr.bf16.mxu0 0
  %1022 = vmatpush1.bf16.xpose.msra.mxu0 0
  %1023 = vmatprep.subr.bf16.mxu0 0
  %1024 = vmatpush1.bf16.xpose.msra.mxu0 0
  %1025 = vmatprep.subr.bf16.mxu0 0
  %1026 = vmatpush1.bf16.xpose.msra.mxu0 0
  %1027 = vmatprep.subr.bf16.mxu0 0
  %1028 = vmatpush1.bf16.xpose.msra.mxu0 0
  %1029 = vmatprep.subr.bf16.mxu0 0
  %1030 = vmatpush1.bf16.xpose.msra.mxu0 0
  %1031 = vmatprep.subr.bf16.mxu0 0
  %1032 = vmatpush1.bf16.xpose.msra.mxu0 0
  %1033 = vmatprep.mubr.bf16.mxu0 %v818
  %1034 = vmatmul.mubr.bf16.gmra.mrb[0].mxu0 %v817
  %v1035 = vpop.f32.mrb[0].mxu0
  %v1036 = vadd.f32 %v996, %v1035
  %v1037 = vpop.f32.mrb[0].mxu0
  %v1038 = vpop.f32.mrb[0].mxu0
  %v1039 = vpop.f32.mrb[0].mxu0
  %1040 = vdwg.mxu0
  %1041 = vmatprep.subr.bf16.mxu0 %v820
  %1042 = vmatpush1.bf16.xpose.msra.mxu0 %v819
  %1043 = vmatprep.subr.bf16.mxu0 0
  %1044 = vmatpush1.bf16.xpose.msra.mxu0 0
  %1045 = vmatprep.subr.bf16.mxu0 0
  %1046 = vmatpush1.bf16.xpose.msra.mxu0 0
  %1047 = vmatprep.subr.bf16.mxu0 0
  %1048 = vmatpush1.bf16.xpose.msra.mxu0 0
  %1049 = vmatprep.subr.bf16.mxu0 0
  %1050 = vmatpush1.bf16.xpose.msra.mxu0 0
  %1051 = vmatprep.subr.bf16.mxu0 0
  %1052 = vmatpush1.bf16.xpose.msra.mxu0 0
  %1053 = vmatprep.subr.bf16.mxu0 0
  %1054 = vmatpush1.bf16.xpose.msra.mxu0 0
  %1055 = vmatprep.subr.bf16.mxu0 0
  %1056 = vmatpush1.bf16.xpose.msra.mxu0 0
  %1057 = vmatprep.subr.bf16.mxu0 0
  %1058 = vmatpush1.bf16.xpose.msra.mxu0 0
  %1059 = vmatprep.subr.bf16.mxu0 0
  %1060 = vmatpush1.bf16.xpose.msra.mxu0 0
  %1061 = vmatprep.subr.bf16.mxu0 0
  %1062 = vmatpush1.bf16.xpose.msra.mxu0 0
  %1063 = vmatprep.subr.bf16.mxu0 0
  %1064 = vmatpush1.bf16.xpose.msra.mxu0 0
  %1065 = vmatprep.subr.bf16.mxu0 0
  %1066 = vmatpush1.bf16.xpose.msra.mxu0 0
  %1067 = vmatprep.subr.bf16.mxu0 0
  %1068 = vmatpush1.bf16.xpose.msra.mxu0 0
  %1069 = vmatprep.subr.bf16.mxu0 0
  %1070 = vmatpush1.bf16.xpose.msra.mxu0 0
  %1071 = vmatprep.subr.bf16.mxu0 0
  %1072 = vmatpush1.bf16.xpose.msra.mxu0 0
  %1073 = vmatprep.mubr.bf16.mxu0 %v820
  %1074 = vmatmul.mubr.bf16.gmra.mrb[0].mxu0 %v819
  %v1075 = vpop.f32.mrb[0].mxu0
  %v1076 = vadd.f32 %v1036, %v1075
  %v1077 = vpop.f32.mrb[0].mxu0
  %v1078 = vpop.f32.mrb[0].mxu0
  %v1079 = vpop.f32.mrb[0].mxu0
  %1080 = vdwg.mxu0
  %1081 = vmatprep.subr.bf16.mxu0 %v798
  %1082 = vmatpush1.bf16.xpose.msra.mxu0 %v797
  %1083 = vmatprep.subr.bf16.mxu0 0
  %1084 = vmatpush1.bf16.xpose.msra.mxu0 0
  %1085 = vmatprep.subr.bf16.mxu0 0
  %1086 = vmatpush1.bf16.xpose.msra.mxu0 0
  %1087 = vmatprep.subr.bf16.mxu0 0
  %1088 = vmatpush1.bf16.xpose.msra.mxu0 0
  %1089 = vmatprep.subr.bf16.mxu0 0
  %1090 = vmatpush1.bf16.xpose.msra.mxu0 0
  %1091 = vmatprep.subr.bf16.mxu0 0
  %1092 = vmatpush1.bf16.xpose.msra.mxu0 0
  %1093 = vmatprep.subr.bf16.mxu0 0
  %1094 = vmatpush1.bf16.xpose.msra.mxu0 0
  %1095 = vmatprep.subr.bf16.mxu0 0
  %1096 = vmatpush1.bf16.xpose.msra.mxu0 0
  %1097 = vmatprep.subr.bf16.mxu0 0
  %1098 = vmatpush1.bf16.xpose.msra.mxu0 0
  %1099 = vmatprep.subr.bf16.mxu0 0
  %1100 = vmatpush1.bf16.xpose.msra.mxu0 0
  %1101 = vmatprep.subr.bf16.mxu0 0
  %1102 = vmatpush1.bf16.xpose.msra.mxu0 0
  %1103 = vmatprep.subr.bf16.mxu0 0
  %1104 = vmatpush1.bf16.xpose.msra.mxu0 0
  %1105 = vmatprep.subr.bf16.mxu0 0
  %1106 = vmatpush1.bf16.xpose.msra.mxu0 0
  %1107 = vmatprep.subr.bf16.mxu0 0
  %1108 = vmatpush1.bf16.xpose.msra.mxu0 0
  %1109 = vmatprep.subr.bf16.mxu0 0
  %1110 = vmatpush1.bf16.xpose.msra.mxu0 0
  %1111 = vmatprep.subr.bf16.mxu0 0
  %1112 = vmatpush1.bf16.xpose.msra.mxu0 0
  %1113 = vmatprep.mubr.bf16.mxu0 %v798
  %1114 = vmatmul.mubr.bf16.gmra.mrb[0].mxu0 %v797
  %v1115 = vpop.f32.mrb[0].mxu0
  %v1116 = vadd.f32 %v1076, %v1115
  %v1117 = vpop.f32.mrb[0].mxu0
  %v1118 = vpop.f32.mrb[0].mxu0
  %v1119 = vpop.f32.mrb[0].mxu0
  %1120 = vdwg.mxu0
  %1121 = vmatprep.subr.bf16.mxu0 %v800
  %1122 = vmatpush1.bf16.xpose.msra.mxu0 %v799
  %1123 = vmatprep.subr.bf16.mxu0 0
  %1124 = vmatpush1.bf16.xpose.msra.mxu0 0
  %1125 = vmatprep.subr.bf16.mxu0 0
  %1126 = vmatpush1.bf16.xpose.msra.mxu0 0
  %1127 = vmatprep.subr.bf16.mxu0 0
  %1128 = vmatpush1.bf16.xpose.msra.mxu0 0
  %1129 = vmatprep.subr.bf16.mxu0 0
  %1130 = vmatpush1.bf16.xpose.msra.mxu0 0
  %1131 = vmatprep.subr.bf16.mxu0 0
  %1132 = vmatpush1.bf16.xpose.msra.mxu0 0
  %1133 = vmatprep.subr.bf16.mxu0 0
  %1134 = vmatpush1.bf16.xpose.msra.mxu0 0
  %1135 = vmatprep.subr.bf16.mxu0 0
  %1136 = vmatpush1.bf16.xpose.msra.mxu0 0
  %1137 = vmatprep.subr.bf16.mxu0 0
  %1138 = vmatpush1.bf16.xpose.msra.mxu0 0
  %1139 = vmatprep.subr.bf16.mxu0 0
  %1140 = vmatpush1.bf16.xpose.msra.mxu0 0
  %1141 = vmatprep.subr.bf16.mxu0 0
  %1142 = vmatpush1.bf16.xpose.msra.mxu0 0
  %1143 = vmatprep.subr.bf16.mxu0 0
  %1144 = vmatpush1.bf16.xpose.msra.mxu0 0
  %1145 = vmatprep.subr.bf16.mxu0 0
  %1146 = vmatpush1.bf16.xpose.msra.mxu0 0
  %1147 = vmatprep.subr.bf16.mxu0 0
  %1148 = vmatpush1.bf16.xpose.msra.mxu0 0
  %1149 = vmatprep.subr.bf16.mxu0 0
  %1150 = vmatpush1.bf16.xpose.msra.mxu0 0
  %1151 = vmatprep.subr.bf16.mxu0 0
  %1152 = vmatpush1.bf16.xpose.msra.mxu0 0
  %1153 = vmatprep.mubr.bf16.mxu0 %v800
  %1154 = vmatmul.mubr.bf16.gmra.mrb[0].mxu0 %v799
  %v1155 = vpop.f32.mrb[0].mxu0
  %v1156 = vadd.f32 %v1116, %v1155
  %v1157 = vpop.f32.mrb[0].mxu0
  %v1158 = vpop.f32.mrb[0].mxu0
  %v1159 = vpop.f32.mrb[0].mxu0
  %1160 = vdwg.mxu0
  %1161 = vmatprep.subr.bf16.mxu0 %v802
  %1162 = vmatpush1.bf16.xpose.msra.mxu0 %v801
  %1163 = vmatprep.subr.bf16.mxu0 0
  %1164 = vmatpush1.bf16.xpose.msra.mxu0 0
  %1165 = vmatprep.subr.bf16.mxu0 0
  %1166 = vmatpush1.bf16.xpose.msra.mxu0 0
  %1167 = vmatprep.subr.bf16.mxu0 0
  %1168 = vmatpush1.bf16.xpose.msra.mxu0 0
  %1169 = vmatprep.subr.bf16.mxu0 0
  %1170 = vmatpush1.bf16.xpose.msra.mxu0 0
  %1171 = vmatprep.subr.bf16.mxu0 0
  %1172 = vmatpush1.bf16.xpose.msra.mxu0 0
  %1173 = vmatprep.subr.bf16.mxu0 0
  %1174 = vmatpush1.bf16.xpose.msra.mxu0 0
  %1175 = vmatprep.subr.bf16.mxu0 0
  %1176 = vmatpush1.bf16.xpose.msra.mxu0 0
  %1177 = vmatprep.subr.bf16.mxu0 0
  %1178 = vmatpush1.bf16.xpose.msra.mxu0 0
  %1179 = vmatprep.subr.bf16.mxu0 0
  %1180 = vmatpush1.bf16.xpose.msra.mxu0 0
  %1181 = vmatprep.subr.bf16.mxu0 0
  %1182 = vmatpush1.bf16.xpose.msra.mxu0 0
  %1183 = vmatprep.subr.bf16.mxu0 0
  %1184 = vmatpush1.bf16.xpose.msra.mxu0 0
  %1185 = vmatprep.subr.bf16.mxu0 0
  %1186 = vmatpush1.bf16.xpose.msra.mxu0 0
  %1187 = vmatprep.subr.bf16.mxu0 0
  %1188 = vmatpush1.bf16.xpose.msra.mxu0 0
  %1189 = vmatprep.subr.bf16.mxu0 0
  %1190 = vmatpush1.bf16.xpose.msra.mxu0 0
  %1191 = vmatprep.subr.bf16.mxu0 0
  %1192 = vmatpush1.bf16.xpose.msra.mxu0 0
  %1193 = vmatprep.mubr.bf16.mxu0 %v802
  %1194 = vmatmul.mubr.bf16.gmra.mrb[0].mxu0 %v801
  %v1195 = vpop.f32.mrb[0].mxu0
  %v1196 = vadd.f32 %v1156, %v1195
  %v1197 = vpop.f32.mrb[0].mxu0
  %v1198 = vpop.f32.mrb[0].mxu0
  %v1199 = vpop.f32.mrb[0].mxu0
  %1200 = vdwg.mxu0
  %1201 = vmatprep.subr.bf16.mxu0 %v804
  %1202 = vmatpush1.bf16.xpose.msra.mxu0 %v803
  %1203 = vmatprep.subr.bf16.mxu0 0
  %1204 = vmatpush1.bf16.xpose.msra.mxu0 0
  %1205 = vmatprep.subr.bf16.mxu0 0
  %1206 = vmatpush1.bf16.xpose.msra.mxu0 0
  %1207 = vmatprep.subr.bf16.mxu0 0
  %1208 = vmatpush1.bf16.xpose.msra.mxu0 0
  %1209 = vmatprep.subr.bf16.mxu0 0
  %1210 = vmatpush1.bf16.xpose.msra.mxu0 0
  %1211 = vmatprep.subr.bf16.mxu0 0
  %1212 = vmatpush1.bf16.xpose.msra.mxu0 0
  %1213 = vmatprep.subr.bf16.mxu0 0
  %1214 = vmatpush1.bf16.xpose.msra.mxu0 0
  %1215 = vmatprep.subr.bf16.mxu0 0
  %1216 = vmatpush1.bf16.xpose.msra.mxu0 0
  %1217 = vmatprep.subr.bf16.mxu0 0
  %1218 = vmatpush1.bf16.xpose.msra.mxu0 0
  %1219 = vmatprep.subr.bf16.mxu0 0
  %1220 = vmatpush1.bf16.xpose.msra.mxu0 0
  %1221 = vmatprep.subr.bf16.mxu0 0
  %1222 = vmatpush1.bf16.xpose.msra.mxu0 0
  %1223 = vmatprep.subr.bf16.mxu0 0
  %1224 = vmatpush1.bf16.xpose.msra.mxu0 0
  %1225 = vmatprep.subr.bf16.mxu0 0
  %1226 = vmatpush1.bf16.xpose.msra.mxu0 0
  %1227 = vmatprep.subr.bf16.mxu0 0
  %1228 = vmatpush1.bf16.xpose.msra.mxu0 0
  %1229 = vmatprep.subr.bf16.mxu0 0
  %1230 = vmatpush1.bf16.xpose.msra.mxu0 0
  %1231 = vmatprep.subr.bf16.mxu0 0
  %1232 = vmatpush1.bf16.xpose.msra.mxu0 0
  %1233 = vmatprep.mubr.bf16.mxu0 %v804
  %1234 = vmatmul.mubr.bf16.gmra.mrb[0].mxu0 %v803
  %v1235 = vpop.f32.mrb[0].mxu0
  %v1236 = vadd.f32 %v1196, %v1235
  %v1237 = vpop.f32.mrb[0].mxu0
  %v1238 = vpop.f32.mrb[0].mxu0
  %v1239 = vpop.f32.mrb[0].mxu0
  %1240 = vdwg.mxu0
  %1241 = vmatprep.subr.bf16.mxu0 %v830
  %1242 = vmatpush1.bf16.xpose.msra.mxu0 %v829
  %1243 = vmatprep.subr.bf16.mxu0 0
  %1244 = vmatpush1.bf16.xpose.msra.mxu0 0
  %1245 = vmatprep.subr.bf16.mxu0 0
  %1246 = vmatpush1.bf16.xpose.msra.mxu0 0
  %1247 = vmatprep.subr.bf16.mxu0 0
  %1248 = vmatpush1.bf16.xpose.msra.mxu0 0
  %1249 = vmatprep.subr.bf16.mxu0 0
  %1250 = vmatpush1.bf16.xpose.msra.mxu0 0
  %1251 = vmatprep.subr.bf16.mxu0 0
  %1252 = vmatpush1.bf16.xpose.msra.mxu0 0
  %1253 = vmatprep.subr.bf16.mxu0 0
  %1254 = vmatpush1.bf16.xpose.msra.mxu0 0
  %1255 = vmatprep.subr.bf16.mxu0 0
  %1256 = vmatpush1.bf16.xpose.msra.mxu0 0
  %1257 = vmatprep.subr.bf16.mxu0 0
  %1258 = vmatpush1.bf16.xpose.msra.mxu0 0
  %1259 = vmatprep.subr.bf16.mxu0 0
  %1260 = vmatpush1.bf16.xpose.msra.mxu0 0
  %1261 = vmatprep.subr.bf16.mxu0 0
  %1262 = vmatpush1.bf16.xpose.msra.mxu0 0
  %1263 = vmatprep.subr.bf16.mxu0 0
  %1264 = vmatpush1.bf16.xpose.msra.mxu0 0
  %1265 = vmatprep.subr.bf16.mxu0 0
  %1266 = vmatpush1.bf16.xpose.msra.mxu0 0
  %1267 = vmatprep.subr.bf16.mxu0 0
  %1268 = vmatpush1.bf16.xpose.msra.mxu0 0
  %1269 = vmatprep.subr.bf16.mxu0 0
  %1270 = vmatpush1.bf16.xpose.msra.mxu0 0
  %1271 = vmatprep.subr.bf16.mxu0 0
  %1272 = vmatpush1.bf16.xpose.msra.mxu0 0
  %1273 = vmatprep.mubr.bf16.mxu0 %v830
  %1274 = vmatmul.mubr.bf16.gmra.mrb[0].mxu0 %v829
  %v1275 = vpop.f32.mrb[0].mxu0
  %v1276 = vadd.f32 0.0, %v1275
  %v1277 = vpop.f32.mrb[0].mxu0
  %v1278 = vpop.f32.mrb[0].mxu0
  %v1279 = vpop.f32.mrb[0].mxu0
  %1280 = vdwg.mxu0
  %1281 = vmatprep.subr.bf16.mxu0 %v832
  %1282 = vmatpush1.bf16.xpose.msra.mxu0 %v831
  %1283 = vmatprep.subr.bf16.mxu0 0
  %1284 = vmatpush1.bf16.xpose.msra.mxu0 0
  %1285 = vmatprep.subr.bf16.mxu0 0
  %1286 = vmatpush1.bf16.xpose.msra.mxu0 0
  %1287 = vmatprep.subr.bf16.mxu0 0
  %1288 = vmatpush1.bf16.xpose.msra.mxu0 0
  %1289 = vmatprep.subr.bf16.mxu0 0
  %1290 = vmatpush1.bf16.xpose.msra.mxu0 0
  %1291 = vmatprep.subr.bf16.mxu0 0
  %1292 = vmatpush1.bf16.xpose.msra.mxu0 0
  %1293 = vmatprep.subr.bf16.mxu0 0
  %1294 = vmatpush1.bf16.xpose.msra.mxu0 0
  %1295 = vmatprep.subr.bf16.mxu0 0
  %1296 = vmatpush1.bf16.xpose.msra.mxu0 0
  %1297 = vmatprep.subr.bf16.mxu0 0
  %1298 = vmatpush1.bf16.xpose.msra.mxu0 0
  %1299 = vmatprep.subr.bf16.mxu0 0
  %1300 = vmatpush1.bf16.xpose.msra.mxu0 0
  %1301 = vmatprep.subr.bf16.mxu0 0
  %1302 = vmatpush1.bf16.xpose.msra.mxu0 0
  %1303 = vmatprep.subr.bf16.mxu0 0
  %1304 = vmatpush1.bf16.xpose.msra.mxu0 0
  %1305 = vmatprep.subr.bf16.mxu0 0
  %1306 = vmatpush1.bf16.xpose.msra.mxu0 0
  %1307 = vmatprep.subr.bf16.mxu0 0
  %1308 = vmatpush1.bf16.xpose.msra.mxu0 0
  %1309 = vmatprep.subr.bf16.mxu0 0
  %1310 = vmatpush1.bf16.xpose.msra.mxu0 0
  %1311 = vmatprep.subr.bf16.mxu0 0
  %1312 = vmatpush1.bf16.xpose.msra.mxu0 0
  %1313 = vmatprep.mubr.bf16.mxu0 %v832
  %1314 = vmatmul.mubr.bf16.gmra.mrb[0].mxu0 %v831
  %v1315 = vpop.f32.mrb[0].mxu0
  %v1316 = vadd.f32 %v1276, %v1315
  %v1317 = vpop.f32.mrb[0].mxu0
  %v1318 = vpop.f32.mrb[0].mxu0
  %v1319 = vpop.f32.mrb[0].mxu0
  %1320 = vdwg.mxu0
  %1321 = vmatprep.subr.bf16.mxu0 %v834
  %1322 = vmatpush1.bf16.xpose.msra.mxu0 %v833
  %1323 = vmatprep.subr.bf16.mxu0 0
  %1324 = vmatpush1.bf16.xpose.msra.mxu0 0
  %1325 = vmatprep.subr.bf16.mxu0 0
  %1326 = vmatpush1.bf16.xpose.msra.mxu0 0
  %1327 = vmatprep.subr.bf16.mxu0 0
  %1328 = vmatpush1.bf16.xpose.msra.mxu0 0
  %1329 = vmatprep.subr.bf16.mxu0 0
  %1330 = vmatpush1.bf16.xpose.msra.mxu0 0
  %1331 = vmatprep.subr.bf16.mxu0 0
  %1332 = vmatpush1.bf16.xpose.msra.mxu0 0
  %1333 = vmatprep.subr.bf16.mxu0 0
  %1334 = vmatpush1.bf16.xpose.msra.mxu0 0
  %1335 = vmatprep.subr.bf16.mxu0 0
  %1336 = vmatpush1.bf16.xpose.msra.mxu0 0
  %1337 = vmatprep.subr.bf16.mxu0 0
  %1338 = vmatpush1.bf16.xpose.msra.mxu0 0
  %1339 = vmatprep.subr.bf16.mxu0 0
  %1340 = vmatpush1.bf16.xpose.msra.mxu0 0
  %1341 = vmatprep.subr.bf16.mxu0 0
  %1342 = vmatpush1.bf16.xpose.msra.mxu0 0
  %1343 = vmatprep.subr.bf16.mxu0 0
  %1344 = vmatpush1.bf16.xpose.msra.mxu0 0
  %1345 = vmatprep.subr.bf16.mxu0 0
  %1346 = vmatpush1.bf16.xpose.msra.mxu0 0
  %1347 = vmatprep.subr.bf16.mxu0 0
  %1348 = vmatpush1.bf16.xpose.msra.mxu0 0
  %1349 = vmatprep.subr.bf16.mxu0 0
  %1350 = vmatpush1.bf16.xpose.msra.mxu0 0
  %1351 = vmatprep.subr.bf16.mxu0 0
  %1352 = vmatpush1.bf16.xpose.msra.mxu0 0
  %1353 = vmatprep.mubr.bf16.mxu0 %v834
  %1354 = vmatmul.mubr.bf16.gmra.mrb[0].mxu0 %v833
  %v1355 = vpop.f32.mrb[0].mxu0
  %v1356 = vadd.f32 %v1316, %v1355
  %v1357 = vpop.f32.mrb[0].mxu0
  %v1358 = vpop.f32.mrb[0].mxu0
  %v1359 = vpop.f32.mrb[0].mxu0
  %1360 = vdwg.mxu0
  %1361 = vmatprep.subr.bf16.mxu0 %v836
  %1362 = vmatpush1.bf16.xpose.msra.mxu0 %v835
  %1363 = vmatprep.subr.bf16.mxu0 0
  %1364 = vmatpush1.bf16.xpose.msra.mxu0 0
  %1365 = vmatprep.subr.bf16.mxu0 0
  %1366 = vmatpush1.bf16.xpose.msra.mxu0 0
  %1367 = vmatprep.subr.bf16.mxu0 0
  %1368 = vmatpush1.bf16.xpose.msra.mxu0 0
  %1369 = vmatprep.subr.bf16.mxu0 0
  %1370 = vmatpush1.bf16.xpose.msra.mxu0 0
  %1371 = vmatprep.subr.bf16.mxu0 0
  %1372 = vmatpush1.bf16.xpose.msra.mxu0 0
  %1373 = vmatprep.subr.bf16.mxu0 0
  %1374 = vmatpush1.bf16.xpose.msra.mxu0 0
  %1375 = vmatprep.subr.bf16.mxu0 0
  %1376 = vmatpush1.bf16.xpose.msra.mxu0 0
  %1377 = vmatprep.subr.bf16.mxu0 0
  %1378 = vmatpush1.bf16.xpose.msra.mxu0 0
  %1379 = vmatprep.subr.bf16.mxu0 0
  %1380 = vmatpush1.bf16.xpose.msra.mxu0 0
  %1381 = vmatprep.subr.bf16.mxu0 0
  %1382 = vmatpush1.bf16.xpose.msra.mxu0 0
  %1383 = vmatprep.subr.bf16.mxu0 0
  %1384 = vmatpush1.bf16.xpose.msra.mxu0 0
  %1385 = vmatprep.subr.bf16.mxu0 0
  %1386 = vmatpush1.bf16.xpose.msra.mxu0 0
  %1387 = vmatprep.subr.bf16.mxu0 0
  %1388 = vmatpush1.bf16.xpose.msra.mxu0 0
  %1389 = vmatprep.subr.bf16.mxu0 0
  %1390 = vmatpush1.bf16.xpose.msra.mxu0 0
  %1391 = vmatprep.subr.bf16.mxu0 0
  %1392 = vmatpush1.bf16.xpose.msra.mxu0 0
  %1393 = vmatprep.mubr.bf16.mxu0 %v836
  %1394 = vmatmul.mubr.bf16.gmra.mrb[0].mxu0 %v835
  %v1395 = vpop.f32.mrb[0].mxu0
  %v1396 = vadd.f32 %v1356, %v1395
  %v1397 = vpop.f32.mrb[0].mxu0
  %v1398 = vpop.f32.mrb[0].mxu0
  %v1399 = vpop.f32.mrb[0].mxu0
  %1400 = vdwg.mxu0
  %v1401 = vadd.f32 %v1236, %v1396
  %vm1402 = vcmask 64512
  %1403 = vst.msk [vmem:[%s5] sm:$0xff] %vm1402, %v1401
  // Predicated region
  $region18: #{a_call__.7} parent=0 // pred_check
    _
  $region19: #{a_call__.7} parent=0 // pred_check_branch
    %1405 = sbr.rel (0) target = $region21
  $region20: #{a_call__.7} parent=0 // pred_region
    _
  $region21: #{a_call__.7} parent=0 // pred_fallthru
    _
  // Predicated region
  $region22: #{a_call__.7} parent=0 // pred_check
    _
  $region23: #{a_call__.7} parent=0 // pred_check_branch
    %1407 = sbr.rel (0) target = $region25
  $region24: #{a_call__.7} parent=0 // pred_region
    _
  $region25: #{a_call__.7} parent=0 // pred_fallthru
    _
  // Predicated region
  $region26: #{a_call__.7} parent=0 // pred_check
    _
  $region27: #{a_call__.7} parent=0 // pred_check_branch
    %1409 = sbr.rel (0) target = $region29
  $region28: #{a_call__.7} parent=0 // pred_region
    _
  $region29: #{a_call__.7} parent=0 // pred_fallthru
    _
  // Predicated region
  $region30: #{a_call__.7} parent=0 // pred_check
    _
  $region31: #{a_call__.7} parent=0 // pred_check_branch
    %1411 = sbr.rel (0) target = $region33
  $region32: #{a_call__.7} parent=0 // pred_region
    _
  $region33: #{a_call__.7} parent=0 // pred_fallthru
    _

// kernel: a_call__.8
$region0: #{a_call__.8}
  #allocation0 [shape = 'u32[]', space=smem, size = 0x4, offset = 0x4, fixed_abs, tag = 'smem constant byte address 0x4 - core index']
  #allocation1 [shape = 'u32[144,128]{1,0:T(1,128)}', space=vmem, size = 0x12000, scoped, tag = 'internal scratch']
  %s0 = inlined_call_operand.vmem [shape: bf16[8,3072], index: 0, kind: input, shape index: {}]
  %s1 = inlined_call_operand.vmem [shape: bf16[16,8], index: 1, kind: input, shape index: {}]
  %s2 = inlined_call_operand.vmem [shape: f32[16,1], index: 2, kind: input, shape index: {}]
  %s3 = inlined_call_operand.vmem [shape: f32[16,1], index: 3, kind: input, shape index: {}]
  %s4 = inlined_call_operand.vmem [shape: f32[3,16,128], index: 4, kind: output, shape index: {}]
  %s5 = sld [smem:[#allocation0]]
  $region26: #{a_call__.8} parent=0
    _
  %s7 = ssub.s32 1, %s5
  %s8 = scalar_select 0, %s7, %s5
  // Predicated region
  $region2: #{a_call__.8} parent=0 // pred_check
    _
  $region3: #{a_call__.8} parent=0 // pred_check_branch
    %10 = sbr.rel (0) target = $region5
  $region4: #{a_call__.8} parent=0 // pred_region
    _
  $region5: #{a_call__.8} parent=0 // pred_fallthru
    _
  // Predicated region
  $region6: #{a_call__.8} parent=0 // pred_check
    _
  $region7: #{a_call__.8} parent=0 // pred_check_branch
    %12 = sbr.rel (0) target = $region9
  $region8: #{a_call__.8} parent=0 // pred_region
    _
  $region9: #{a_call__.8} parent=0 // pred_fallthru
    _
  // Predicated region
  $region10: #{a_call__.8} parent=0 // pred_check
    _
  $region11: #{a_call__.8} parent=0 // pred_check_branch
    %14 = sbr.rel (0) target = $region13
  $region12: #{a_call__.8} parent=0 // pred_region
    _
  $region13: #{a_call__.8} parent=0 // pred_fallthru
    _
  // Predicated region
  $region14: #{a_call__.8} parent=0 // pred_check
    _
  $region15: #{a_call__.8} parent=0 // pred_check_branch
    %16 = sbr.rel (0) target = $region17
  $region16: #{a_call__.8} parent=0 // pred_region
    _
  $region17: #{a_call__.8} parent=0 // pred_fallthru
    _
  %v18 = vld [vmem:[%s1] sm:$0xf]
  %v19 = vld [vmem:[%s1 + $0x4] sm:$0xf]
  %v20 = vld [vmem:[%s0] sm:$0xff]
  %v21 = vld [vmem:[%s0 + $0x8] sm:$0xff]
  %v22 = vld [vmem:[%s0 + $0x10] sm:$0xff]
  %v23 = vld [vmem:[%s0 + $0x18] sm:$0xff]
  %v24 = vld [vmem:[%s0 + $0x20] sm:$0xff]
  %v25 = vld [vmem:[%s0 + $0x28] sm:$0xff]
  %v26 = vld [vmem:[%s0 + $0x30] sm:$0xff]
  %v27 = vld [vmem:[%s0 + $0x38] sm:$0xff]
  %v28 = vld [vmem:[%s0 + $0x40] sm:$0xff]
  %v29 = vld [vmem:[%s0 + $0x48] sm:$0xff]
  %v30 = vld [vmem:[%s0 + $0x50] sm:$0xff]
  %v31 = vld [vmem:[%s0 + $0x58] sm:$0xff]
  %v34 = vunpack.c.l.b16 %v18
  %v35 = vunpack.c.l.b16 %v19
  %v36 = vpack.c.b16 %v35, %v34
  %v49 = vunpack.c.l.b16 %v20
  %v50 = vunpack.c.h.b16 %v20
  %v51 = vunpack.c.l.b16 %v21
  %v52 = vunpack.c.h.b16 %v21
  %v53 = vunpack.c.l.b16 %v22
  %v54 = vunpack.c.h.b16 %v22
  %v55 = vunpack.c.l.b16 %v23
  %v56 = vunpack.c.h.b16 %v23
  %v57 = vunpack.c.l.b16 %v24
  %v58 = vunpack.c.h.b16 %v24
  %v59 = vunpack.c.l.b16 %v25
  %v60 = vunpack.c.h.b16 %v25
  %v61 = vunpack.c.l.b16 %v26
  %v62 = vunpack.c.h.b16 %v26
  %v63 = vunpack.c.l.b16 %v27
  %v64 = vunpack.c.h.b16 %v27
  %v65 = vunpack.c.l.b16 %v28
  %v66 = vunpack.c.h.b16 %v28
  %v67 = vunpack.c.l.b16 %v29
  %v68 = vunpack.c.h.b16 %v29
  %v69 = vunpack.c.l.b16 %v30
  %v70 = vunpack.c.h.b16 %v30
  %v71 = vunpack.c.l.b16 %v31
  %v72 = vunpack.c.h.b16 %v31
  %v73 = vpack.c.b16 %v49, %v49
  %v74 = vpack.c.b16 %v50, %v50
  %v75 = vpack.c.b16 %v51, %v51
  %v76 = vpack.c.b16 %v52, %v52
  %v77 = vpack.c.b16 %v53, %v53
  %v78 = vpack.c.b16 %v54, %v54
  %v79 = vpack.c.b16 %v55, %v55
  %v80 = vpack.c.b16 %v56, %v56
  %v81 = vpack.c.b16 %v57, %v57
  %v82 = vpack.c.b16 %v58, %v58
  %v83 = vpack.c.b16 %v59, %v59
  %v84 = vpack.c.b16 %v60, %v60
  %v85 = vpack.c.b16 %v61, %v61
  %v86 = vpack.c.b16 %v62, %v62
  %v87 = vpack.c.b16 %v63, %v63
  %v88 = vpack.c.b16 %v64, %v64
  %v89 = vpack.c.b16 %v65, %v65
  %v90 = vpack.c.b16 %v66, %v66
  %v91 = vpack.c.b16 %v67, %v67
  %v92 = vpack.c.b16 %v68, %v68
  %v93 = vpack.c.b16 %v69, %v69
  %v94 = vpack.c.b16 %v70, %v70
  %v95 = vpack.c.b16 %v71, %v71
  %v96 = vpack.c.b16 %v72, %v72
  %vm97 = vcmask 64512
  %v99 = vsel %vm97, %v36, 0
  %vm101 = vcmask 1043456
  %v103 = vsel %vm101, %v73, 0
  %v106 = vsel %vm101, %v74, 0
  %v109 = vsel %vm101, %v75, 0
  %v112 = vsel %vm101, %v76, 0
  %v115 = vsel %vm101, %v77, 0
  %v118 = vsel %vm101, %v78, 0
  %v121 = vsel %vm101, %v79, 0
  %v124 = vsel %vm101, %v80, 0
  %v127 = vsel %vm101, %v81, 0
  %v130 = vsel %vm101, %v82, 0
  %v133 = vsel %vm101, %v83, 0
  %v136 = vsel %vm101, %v84, 0
  %v139 = vsel %vm101, %v85, 0
  %v142 = vsel %vm101, %v86, 0
  %v145 = vsel %vm101, %v87, 0
  %v148 = vsel %vm101, %v88, 0
  %v151 = vsel %vm101, %v89, 0
  %v154 = vsel %vm101, %v90, 0
  %v157 = vsel %vm101, %v91, 0
  %v160 = vsel %vm101, %v92, 0
  %v163 = vsel %vm101, %v93, 0
  %v166 = vsel %vm101, %v94, 0
  %v169 = vsel %vm101, %v95, 0
  %v172 = vsel %vm101, %v96, 0
  %174 = vmatprep.subr.bf16.mxu0 %v106
  %175 = vmatpush1.bf16.msra.mxu0 %v103
  %176 = vmatprep.subr.bf16.mxu0 0
  %177 = vmatpush1.bf16.msra.mxu0 0
  %178 = vmatprep.subr.bf16.mxu0 0
  %179 = vmatpush1.bf16.msra.mxu0 0
  %180 = vmatprep.subr.bf16.mxu0 0
  %181 = vmatpush1.bf16.msra.mxu0 0
  %182 = vmatprep.subr.bf16.mxu0 0
  %183 = vmatpush1.bf16.msra.mxu0 0
  %184 = vmatprep.subr.bf16.mxu0 0
  %185 = vmatpush1.bf16.msra.mxu0 0
  %186 = vmatprep.subr.bf16.mxu0 0
  %187 = vmatpush1.bf16.msra.mxu0 0
  %188 = vmatprep.subr.bf16.mxu0 0
  %189 = vmatpush1.bf16.msra.mxu0 0
  %190 = vmatprep.subr.bf16.mxu0 0
  %191 = vmatpush1.bf16.msra.mxu0 0
  %192 = vmatprep.subr.bf16.mxu0 0
  %193 = vmatpush1.bf16.msra.mxu0 0
  %194 = vmatprep.subr.bf16.mxu0 0
  %195 = vmatpush1.bf16.msra.mxu0 0
  %196 = vmatprep.subr.bf16.mxu0 0
  %197 = vmatpush1.bf16.msra.mxu0 0
  %198 = vmatprep.subr.bf16.mxu0 0
  %199 = vmatpush1.bf16.msra.mxu0 0
  %200 = vmatprep.subr.bf16.mxu0 0
  %201 = vmatpush1.bf16.msra.mxu0 0
  %202 = vmatprep.subr.bf16.mxu0 0
  %203 = vmatpush1.bf16.msra.mxu0 0
  %204 = vmatprep.subr.bf16.mxu0 0
  %205 = vmatpush1.bf16.msra.mxu0 0
  %206 = vmatprep.mubr.bf16.mxu0 0
  %207 = vmatmul.mubr.bf16.gmra.mrb[0].mxu0 %v99
  %v208 = vpop.f32.mrb[0].mxu0
  %v209 = vadd.f32 0.0, %v208
  %v210 = vpop.f32.mrb[0].mxu0
  %v211 = vadd.f32 0.0, %v210
  %v212 = vpop.f32.mrb[0].mxu0
  %v213 = vadd.f32 0.0, %v212
  %v214 = vpop.f32.mrb[0].mxu0
  %v215 = vadd.f32 0.0, %v214
  %216 = vdwg.mxu0
  %217 = vmatprep.subr.bf16.mxu0 %v112
  %218 = vmatpush1.bf16.msra.mxu0 %v109
  %219 = vmatprep.subr.bf16.mxu0 0
  %220 = vmatpush1.bf16.msra.mxu0 0
  %221 = vmatprep.subr.bf16.mxu0 0
  %222 = vmatpush1.bf16.msra.mxu0 0
  %223 = vmatprep.subr.bf16.mxu0 0
  %224 = vmatpush1.bf16.msra.mxu0 0
  %225 = vmatprep.subr.bf16.mxu0 0
  %226 = vmatpush1.bf16.msra.mxu0 0
  %227 = vmatprep.subr.bf16.mxu0 0
  %228 = vmatpush1.bf16.msra.mxu0 0
  %229 = vmatprep.subr.bf16.mxu0 0
  %230 = vmatpush1.bf16.msra.mxu0 0
  %231 = vmatprep.subr.bf16.mxu0 0
  %232 = vmatpush1.bf16.msra.mxu0 0
  %233 = vmatprep.subr.bf16.mxu0 0
  %234 = vmatpush1.bf16.msra.mxu0 0
  %235 = vmatprep.subr.bf16.mxu0 0
  %236 = vmatpush1.bf16.msra.mxu0 0
  %237 = vmatprep.subr.bf16.mxu0 0
  %238 = vmatpush1.bf16.msra.mxu0 0
  %239 = vmatprep.subr.bf16.mxu0 0
  %240 = vmatpush1.bf16.msra.mxu0 0
  %241 = vmatprep.subr.bf16.mxu0 0
  %242 = vmatpush1.bf16.msra.mxu0 0
  %243 = vmatprep.subr.bf16.mxu0 0
  %244 = vmatpush1.bf16.msra.mxu0 0
  %245 = vmatprep.subr.bf16.mxu0 0
  %246 = vmatpush1.bf16.msra.mxu0 0
  %247 = vmatprep.subr.bf16.mxu0 0
  %248 = vmatpush1.bf16.msra.mxu0 0
  %249 = vmatprep.mubr.bf16.mxu0 0
  %250 = vmatmul.mubr.bf16.gmra.mrb[0].mxu0 %v99
  %v251 = vpop.f32.mrb[0].mxu0
  %v252 = vadd.f32 0.0, %v251
  %v253 = vpop.f32.mrb[0].mxu0
  %v254 = vadd.f32 0.0, %v253
  %v255 = vpop.f32.mrb[0].mxu0
  %v256 = vadd.f32 0.0, %v255
  %v257 = vpop.f32.mrb[0].mxu0
  %v258 = vadd.f32 0.0, %v257
  %259 = vdwg.mxu0
  %260 = vmatprep.subr.bf16.mxu0 %v118
  %261 = vmatpush1.bf16.msra.mxu0 %v115
  %262 = vmatprep.subr.bf16.mxu0 0
  %263 = vmatpush1.bf16.msra.mxu0 0
  %264 = vmatprep.subr.bf16.mxu0 0
  %265 = vmatpush1.bf16.msra.mxu0 0
  %266 = vmatprep.subr.bf16.mxu0 0
  %267 = vmatpush1.bf16.msra.mxu0 0
  %268 = vmatprep.subr.bf16.mxu0 0
  %269 = vmatpush1.bf16.msra.mxu0 0
  %270 = vmatprep.subr.bf16.mxu0 0
  %271 = vmatpush1.bf16.msra.mxu0 0
  %272 = vmatprep.subr.bf16.mxu0 0
  %273 = vmatpush1.bf16.msra.mxu0 0
  %274 = vmatprep.subr.bf16.mxu0 0
  %275 = vmatpush1.bf16.msra.mxu0 0
  %276 = vmatprep.subr.bf16.mxu0 0
  %277 = vmatpush1.bf16.msra.mxu0 0
  %278 = vmatprep.subr.bf16.mxu0 0
  %279 = vmatpush1.bf16.msra.mxu0 0
  %280 = vmatprep.subr.bf16.mxu0 0
  %281 = vmatpush1.bf16.msra.mxu0 0
  %282 = vmatprep.subr.bf16.mxu0 0
  %283 = vmatpush1.bf16.msra.mxu0 0
  %284 = vmatprep.subr.bf16.mxu0 0
  %285 = vmatpush1.bf16.msra.mxu0 0
  %286 = vmatprep.subr.bf16.mxu0 0
  %287 = vmatpush1.bf16.msra.mxu0 0
  %288 = vmatprep.subr.bf16.mxu0 0
  %289 = vmatpush1.bf16.msra.mxu0 0
  %290 = vmatprep.subr.bf16.mxu0 0
  %291 = vmatpush1.bf16.msra.mxu0 0
  %292 = vmatprep.mubr.bf16.mxu0 0
  %293 = vmatmul.mubr.bf16.gmra.mrb[0].mxu0 %v99
  %v294 = vpop.f32.mrb[0].mxu0
  %v295 = vadd.f32 0.0, %v294
  %v296 = vpop.f32.mrb[0].mxu0
  %v297 = vadd.f32 0.0, %v296
  %v298 = vpop.f32.mrb[0].mxu0
  %v299 = vadd.f32 0.0, %v298
  %v300 = vpop.f32.mrb[0].mxu0
  %v301 = vadd.f32 0.0, %v300
  %302 = vdwg.mxu0
  %303 = vmatprep.subr.bf16.mxu0 %v124
  %304 = vmatpush1.bf16.msra.mxu0 %v121
  %305 = vmatprep.subr.bf16.mxu0 0
  %306 = vmatpush1.bf16.msra.mxu0 0
  %307 = vmatprep.subr.bf16.mxu0 0
  %308 = vmatpush1.bf16.msra.mxu0 0
  %309 = vmatprep.subr.bf16.mxu0 0
  %310 = vmatpush1.bf16.msra.mxu0 0
  %311 = vmatprep.subr.bf16.mxu0 0
  %312 = vmatpush1.bf16.msra.mxu0 0
  %313 = vmatprep.subr.bf16.mxu0 0
  %314 = vmatpush1.bf16.msra.mxu0 0
  %315 = vmatprep.subr.bf16.mxu0 0
  %316 = vmatpush1.bf16.msra.mxu0 0
  %317 = vmatprep.subr.bf16.mxu0 0
  %318 = vmatpush1.bf16.msra.mxu0 0
  %319 = vmatprep.subr.bf16.mxu0 0
  %320 = vmatpush1.bf16.msra.mxu0 0
  %321 = vmatprep.subr.bf16.mxu0 0
  %322 = vmatpush1.bf16.msra.mxu0 0
  %323 = vmatprep.subr.bf16.mxu0 0
  %324 = vmatpush1.bf16.msra.mxu0 0
  %325 = vmatprep.subr.bf16.mxu0 0
  %326 = vmatpush1.bf16.msra.mxu0 0
  %327 = vmatprep.subr.bf16.mxu0 0
  %328 = vmatpush1.bf16.msra.mxu0 0
  %329 = vmatprep.subr.bf16.mxu0 0
  %330 = vmatpush1.bf16.msra.mxu0 0
  %331 = vmatprep.subr.bf16.mxu0 0
  %332 = vmatpush1.bf16.msra.mxu0 0
  %333 = vmatprep.subr.bf16.mxu0 0
  %334 = vmatpush1.bf16.msra.mxu0 0
  %335 = vmatprep.mubr.bf16.mxu0 0
  %336 = vmatmul.mubr.bf16.gmra.mrb[0].mxu0 %v99
  %v337 = vpop.f32.mrb[0].mxu0
  %v338 = vadd.f32 0.0, %v337
  %v339 = vpop.f32.mrb[0].mxu0
  %v340 = vadd.f32 0.0, %v339
  %v341 = vpop.f32.mrb[0].mxu0
  %v342 = vadd.f32 0.0, %v341
  %v343 = vpop.f32.mrb[0].mxu0
  %v344 = vadd.f32 0.0, %v343
  %345 = vdwg.mxu0
  %346 = vmatprep.subr.bf16.mxu0 %v130
  %347 = vmatpush1.bf16.msra.mxu0 %v127
  %348 = vmatprep.subr.bf16.mxu0 0
  %349 = vmatpush1.bf16.msra.mxu0 0
  %350 = vmatprep.subr.bf16.mxu0 0
  %351 = vmatpush1.bf16.msra.mxu0 0
  %352 = vmatprep.subr.bf16.mxu0 0
  %353 = vmatpush1.bf16.msra.mxu0 0
  %354 = vmatprep.subr.bf16.mxu0 0
  %355 = vmatpush1.bf16.msra.mxu0 0
  %356 = vmatprep.subr.bf16.mxu0 0
  %357 = vmatpush1.bf16.msra.mxu0 0
  %358 = vmatprep.subr.bf16.mxu0 0
  %359 = vmatpush1.bf16.msra.mxu0 0
  %360 = vmatprep.subr.bf16.mxu0 0
  %361 = vmatpush1.bf16.msra.mxu0 0
  %362 = vmatprep.subr.bf16.mxu0 0
  %363 = vmatpush1.bf16.msra.mxu0 0
  %364 = vmatprep.subr.bf16.mxu0 0
  %365 = vmatpush1.bf16.msra.mxu0 0
  %366 = vmatprep.subr.bf16.mxu0 0
  %367 = vmatpush1.bf16.msra.mxu0 0
  %368 = vmatprep.subr.bf16.mxu0 0
  %369 = vmatpush1.bf16.msra.mxu0 0
  %370 = vmatprep.subr.bf16.mxu0 0
  %371 = vmatpush1.bf16.msra.mxu0 0
  %372 = vmatprep.subr.bf16.mxu0 0
  %373 = vmatpush1.bf16.msra.mxu0 0
  %374 = vmatprep.subr.bf16.mxu0 0
  %375 = vmatpush1.bf16.msra.mxu0 0
  %376 = vmatprep.subr.bf16.mxu0 0
  %377 = vmatpush1.bf16.msra.mxu0 0
  %378 = vmatprep.mubr.bf16.mxu0 0
  %379 = vmatmul.mubr.bf16.gmra.mrb[0].mxu0 %v99
  %v380 = vpop.f32.mrb[0].mxu0
  %v381 = vadd.f32 0.0, %v380
  %v382 = vpop.f32.mrb[0].mxu0
  %v383 = vadd.f32 0.0, %v382
  %v384 = vpop.f32.mrb[0].mxu0
  %v385 = vadd.f32 0.0, %v384
  %v386 = vpop.f32.mrb[0].mxu0
  %v387 = vadd.f32 0.0, %v386
  %388 = vdwg.mxu0
  %389 = vmatprep.subr.bf16.mxu0 %v136
  %390 = vmatpush1.bf16.msra.mxu0 %v133
  %391 = vmatprep.subr.bf16.mxu0 0
  %392 = vmatpush1.bf16.msra.mxu0 0
  %393 = vmatprep.subr.bf16.mxu0 0
  %394 = vmatpush1.bf16.msra.mxu0 0
  %395 = vmatprep.subr.bf16.mxu0 0
  %396 = vmatpush1.bf16.msra.mxu0 0
  %397 = vmatprep.subr.bf16.mxu0 0
  %398 = vmatpush1.bf16.msra.mxu0 0
  %399 = vmatprep.subr.bf16.mxu0 0
  %400 = vmatpush1.bf16.msra.mxu0 0
  %401 = vmatprep.subr.bf16.mxu0 0
  %402 = vmatpush1.bf16.msra.mxu0 0
  %403 = vmatprep.subr.bf16.mxu0 0
  %404 = vmatpush1.bf16.msra.mxu0 0
  %405 = vmatprep.subr.bf16.mxu0 0
  %406 = vmatpush1.bf16.msra.mxu0 0
  %407 = vmatprep.subr.bf16.mxu0 0
  %408 = vmatpush1.bf16.msra.mxu0 0
  %409 = vmatprep.subr.bf16.mxu0 0
  %410 = vmatpush1.bf16.msra.mxu0 0
  %411 = vmatprep.subr.bf16.mxu0 0
  %412 = vmatpush1.bf16.msra.mxu0 0
  %413 = vmatprep.subr.bf16.mxu0 0
  %414 = vmatpush1.bf16.msra.mxu0 0
  %415 = vmatprep.subr.bf16.mxu0 0
  %416 = vmatpush1.bf16.msra.mxu0 0
  %417 = vmatprep.subr.bf16.mxu0 0
  %418 = vmatpush1.bf16.msra.mxu0 0
  %419 = vmatprep.subr.bf16.mxu0 0
  %420 = vmatpush1.bf16.msra.mxu0 0
  %421 = vmatprep.mubr.bf16.mxu0 0
  %422 = vmatmul.mubr.bf16.gmra.mrb[0].mxu0 %v99
  %v423 = vpop.f32.mrb[0].mxu0
  %v424 = vadd.f32 0.0, %v423
  %v425 = vpop.f32.mrb[0].mxu0
  %v426 = vadd.f32 0.0, %v425
  %v427 = vpop.f32.mrb[0].mxu0
  %v428 = vadd.f32 0.0, %v427
  %v429 = vpop.f32.mrb[0].mxu0
  %v430 = vadd.f32 0.0, %v429
  %431 = vdwg.mxu0
  %432 = vmatprep.subr.bf16.mxu0 %v142
  %433 = vmatpush1.bf16.msra.mxu0 %v139
  %434 = vmatprep.subr.bf16.mxu0 0
  %435 = vmatpush1.bf16.msra.mxu0 0
  %436 = vmatprep.subr.bf16.mxu0 0
  %437 = vmatpush1.bf16.msra.mxu0 0
  %438 = vmatprep.subr.bf16.mxu0 0
  %439 = vmatpush1.bf16.msra.mxu0 0
  %440 = vmatprep.subr.bf16.mxu0 0
  %441 = vmatpush1.bf16.msra.mxu0 0
  %442 = vmatprep.subr.bf16.mxu0 0
  %443 = vmatpush1.bf16.msra.mxu0 0
  %444 = vmatprep.subr.bf16.mxu0 0
  %445 = vmatpush1.bf16.msra.mxu0 0
  %446 = vmatprep.subr.bf16.mxu0 0
  %447 = vmatpush1.bf16.msra.mxu0 0
  %448 = vmatprep.subr.bf16.mxu0 0
  %449 = vmatpush1.bf16.msra.mxu0 0
  %450 = vmatprep.subr.bf16.mxu0 0
  %451 = vmatpush1.bf16.msra.mxu0 0
  %452 = vmatprep.subr.bf16.mxu0 0
  %453 = vmatpush1.bf16.msra.mxu0 0
  %454 = vmatprep.subr.bf16.mxu0 0
  %455 = vmatpush1.bf16.msra.mxu0 0
  %456 = vmatprep.subr.bf16.mxu0 0
  %457 = vmatpush1.bf16.msra.mxu0 0
  %458 = vmatprep.subr.bf16.mxu0 0
  %459 = vmatpush1.bf16.msra.mxu0 0
  %460 = vmatprep.subr.bf16.mxu0 0
  %461 = vmatpush1.bf16.msra.mxu0 0
  %462 = vmatprep.subr.bf16.mxu0 0
  %463 = vmatpush1.bf16.msra.mxu0 0
  %464 = vmatprep.mubr.bf16.mxu0 0
  %465 = vmatmul.mubr.bf16.gmra.mrb[0].mxu0 %v99
  %v466 = vpop.f32.mrb[0].mxu0
  %v467 = vadd.f32 0.0, %v466
  %v468 = vpop.f32.mrb[0].mxu0
  %v469 = vadd.f32 0.0, %v468
  %v470 = vpop.f32.mrb[0].mxu0
  %v471 = vadd.f32 0.0, %v470
  %v472 = vpop.f32.mrb[0].mxu0
  %v473 = vadd.f32 0.0, %v472
  %474 = vdwg.mxu0
  %475 = vmatprep.subr.bf16.mxu0 %v148
  %476 = vmatpush1.bf16.msra.mxu0 %v145
  %477 = vmatprep.subr.bf16.mxu0 0
  %478 = vmatpush1.bf16.msra.mxu0 0
  %479 = vmatprep.subr.bf16.mxu0 0
  %480 = vmatpush1.bf16.msra.mxu0 0
  %481 = vmatprep.subr.bf16.mxu0 0
  %482 = vmatpush1.bf16.msra.mxu0 0
  %483 = vmatprep.subr.bf16.mxu0 0
  %484 = vmatpush1.bf16.msra.mxu0 0
  %485 = vmatprep.subr.bf16.mxu0 0
  %486 = vmatpush1.bf16.msra.mxu0 0
  %487 = vmatprep.subr.bf16.mxu0 0
  %488 = vmatpush1.bf16.msra.mxu0 0
  %489 = vmatprep.subr.bf16.mxu0 0
  %490 = vmatpush1.bf16.msra.mxu0 0
  %491 = vmatprep.subr.bf16.mxu0 0
  %492 = vmatpush1.bf16.msra.mxu0 0
  %493 = vmatprep.subr.bf16.mxu0 0
  %494 = vmatpush1.bf16.msra.mxu0 0
  %495 = vmatprep.subr.bf16.mxu0 0
  %496 = vmatpush1.bf16.msra.mxu0 0
  %497 = vmatprep.subr.bf16.mxu0 0
  %498 = vmatpush1.bf16.msra.mxu0 0
  %499 = vmatprep.subr.bf16.mxu0 0
  %500 = vmatpush1.bf16.msra.mxu0 0
  %501 = vmatprep.subr.bf16.mxu0 0
  %502 = vmatpush1.bf16.msra.mxu0 0
  %503 = vmatprep.subr.bf16.mxu0 0
  %504 = vmatpush1.bf16.msra.mxu0 0
  %505 = vmatprep.subr.bf16.mxu0 0
  %506 = vmatpush1.bf16.msra.mxu0 0
  %507 = vmatprep.mubr.bf16.mxu0 0
  %508 = vmatmul.mubr.bf16.gmra.mrb[0].mxu0 %v99
  %v509 = vpop.f32.mrb[0].mxu0
  %v510 = vadd.f32 0.0, %v509
  %v511 = vpop.f32.mrb[0].mxu0
  %v512 = vadd.f32 0.0, %v511
  %v513 = vpop.f32.mrb[0].mxu0
  %v514 = vadd.f32 0.0, %v513
  %v515 = vpop.f32.mrb[0].mxu0
  %v516 = vadd.f32 0.0, %v515
  %517 = vdwg.mxu0
  %518 = vmatprep.subr.bf16.mxu0 %v154
  %519 = vmatpush1.bf16.msra.mxu0 %v151
  %520 = vmatprep.subr.bf16.mxu0 0
  %521 = vmatpush1.bf16.msra.mxu0 0
  %522 = vmatprep.subr.bf16.mxu0 0
  %523 = vmatpush1.bf16.msra.mxu0 0
  %524 = vmatprep.subr.bf16.mxu0 0
  %525 = vmatpush1.bf16.msra.mxu0 0
  %526 = vmatprep.subr.bf16.mxu0 0
  %527 = vmatpush1.bf16.msra.mxu0 0
  %528 = vmatprep.subr.bf16.mxu0 0
  %529 = vmatpush1.bf16.msra.mxu0 0
  %530 = vmatprep.subr.bf16.mxu0 0
  %531 = vmatpush1.bf16.msra.mxu0 0
  %532 = vmatprep.subr.bf16.mxu0 0
  %533 = vmatpush1.bf16.msra.mxu0 0
  %534 = vmatprep.subr.bf16.mxu0 0
  %535 = vmatpush1.bf16.msra.mxu0 0
  %536 = vmatprep.subr.bf16.mxu0 0
  %537 = vmatpush1.bf16.msra.mxu0 0
  %538 = vmatprep.subr.bf16.mxu0 0
  %539 = vmatpush1.bf16.msra.mxu0 0
  %540 = vmatprep.subr.bf16.mxu0 0
  %541 = vmatpush1.bf16.msra.mxu0 0
  %542 = vmatprep.subr.bf16.mxu0 0
  %543 = vmatpush1.bf16.msra.mxu0 0
  %544 = vmatprep.subr.bf16.mxu0 0
  %545 = vmatpush1.bf16.msra.mxu0 0
  %546 = vmatprep.subr.bf16.mxu0 0
  %547 = vmatpush1.bf16.msra.mxu0 0
  %548 = vmatprep.subr.bf16.mxu0 0
  %549 = vmatpush1.bf16.msra.mxu0 0
  %550 = vmatprep.mubr.bf16.mxu0 0
  %551 = vmatmul.mubr.bf16.gmra.mrb[0].mxu0 %v99
  %v552 = vpop.f32.mrb[0].mxu0
  %v553 = vadd.f32 0.0, %v552
  %v554 = vpop.f32.mrb[0].mxu0
  %v555 = vadd.f32 0.0, %v554
  %v556 = vpop.f32.mrb[0].mxu0
  %v557 = vadd.f32 0.0, %v556
  %v558 = vpop.f32.mrb[0].mxu0
  %v559 = vadd.f32 0.0, %v558
  %560 = vdwg.mxu0
  %561 = vmatprep.subr.bf16.mxu0 %v160
  %562 = vmatpush1.bf16.msra.mxu0 %v157
  %563 = vmatprep.subr.bf16.mxu0 0
  %564 = vmatpush1.bf16.msra.mxu0 0
  %565 = vmatprep.subr.bf16.mxu0 0
  %566 = vmatpush1.bf16.msra.mxu0 0
  %567 = vmatprep.subr.bf16.mxu0 0
  %568 = vmatpush1.bf16.msra.mxu0 0
  %569 = vmatprep.subr.bf16.mxu0 0
  %570 = vmatpush1.bf16.msra.mxu0 0
  %571 = vmatprep.subr.bf16.mxu0 0
  %572 = vmatpush1.bf16.msra.mxu0 0
  %573 = vmatprep.subr.bf16.mxu0 0
  %574 = vmatpush1.bf16.msra.mxu0 0
  %575 = vmatprep.subr.bf16.mxu0 0
  %576 = vmatpush1.bf16.msra.mxu0 0
  %577 = vmatprep.subr.bf16.mxu0 0
  %578 = vmatpush1.bf16.msra.mxu0 0
  %579 = vmatprep.subr.bf16.mxu0 0
  %580 = vmatpush1.bf16.msra.mxu0 0
  %581 = vmatprep.subr.bf16.mxu0 0
  %582 = vmatpush1.bf16.msra.mxu0 0
  %583 = vmatprep.subr.bf16.mxu0 0
  %584 = vmatpush1.bf16.msra.mxu0 0
  %585 = vmatprep.subr.bf16.mxu0 0
  %586 = vmatpush1.bf16.msra.mxu0 0
  %587 = vmatprep.subr.bf16.mxu0 0
  %588 = vmatpush1.bf16.msra.mxu0 0
  %589 = vmatprep.subr.bf16.mxu0 0
  %590 = vmatpush1.bf16.msra.mxu0 0
  %591 = vmatprep.subr.bf16.mxu0 0
  %592 = vmatpush1.bf16.msra.mxu0 0
  %593 = vmatprep.mubr.bf16.mxu0 0
  %594 = vmatmul.mubr.bf16.gmra.mrb[0].mxu0 %v99
  %v595 = vpop.f32.mrb[0].mxu0
  %v596 = vadd.f32 0.0, %v595
  %v597 = vpop.f32.mrb[0].mxu0
  %v598 = vadd.f32 0.0, %v597
  %v599 = vpop.f32.mrb[0].mxu0
  %v600 = vadd.f32 0.0, %v599
  %v601 = vpop.f32.mrb[0].mxu0
  %v602 = vadd.f32 0.0, %v601
  %603 = vdwg.mxu0
  %604 = vmatprep.subr.bf16.mxu0 %v166
  %605 = vmatpush1.bf16.msra.mxu0 %v163
  %606 = vmatprep.subr.bf16.mxu0 0
  %607 = vmatpush1.bf16.msra.mxu0 0
  %608 = vmatprep.subr.bf16.mxu0 0
  %609 = vmatpush1.bf16.msra.mxu0 0
  %610 = vmatprep.subr.bf16.mxu0 0
  %611 = vmatpush1.bf16.msra.mxu0 0
  %612 = vmatprep.subr.bf16.mxu0 0
  %613 = vmatpush1.bf16.msra.mxu0 0
  %614 = vmatprep.subr.bf16.mxu0 0
  %615 = vmatpush1.bf16.msra.mxu0 0
  %616 = vmatprep.subr.bf16.mxu0 0
  %617 = vmatpush1.bf16.msra.mxu0 0
  %618 = vmatprep.subr.bf16.mxu0 0
  %619 = vmatpush1.bf16.msra.mxu0 0
  %620 = vmatprep.subr.bf16.mxu0 0
  %621 = vmatpush1.bf16.msra.mxu0 0
  %622 = vmatprep.subr.bf16.mxu0 0
  %623 = vmatpush1.bf16.msra.mxu0 0
  %624 = vmatprep.subr.bf16.mxu0 0
  %625 = vmatpush1.bf16.msra.mxu0 0
  %626 = vmatprep.subr.bf16.mxu0 0
  %627 = vmatpush1.bf16.msra.mxu0 0
  %628 = vmatprep.subr.bf16.mxu0 0
  %629 = vmatpush1.bf16.msra.mxu0 0
  %630 = vmatprep.subr.bf16.mxu0 0
  %631 = vmatpush1.bf16.msra.mxu0 0
  %632 = vmatprep.subr.bf16.mxu0 0
  %633 = vmatpush1.bf16.msra.mxu0 0
  %634 = vmatprep.subr.bf16.mxu0 0
  %635 = vmatpush1.bf16.msra.mxu0 0
  %636 = vmatprep.mubr.bf16.mxu0 0
  %637 = vmatmul.mubr.bf16.gmra.mrb[0].mxu0 %v99
  %v638 = vpop.f32.mrb[0].mxu0
  %v639 = vadd.f32 0.0, %v638
  %v640 = vpop.f32.mrb[0].mxu0
  %v641 = vadd.f32 0.0, %v640
  %v642 = vpop.f32.mrb[0].mxu0
  %v643 = vadd.f32 0.0, %v642
  %v644 = vpop.f32.mrb[0].mxu0
  %v645 = vadd.f32 0.0, %v644
  %646 = vdwg.mxu0
  %647 = vmatprep.subr.bf16.mxu0 %v172
  %648 = vmatpush1.bf16.msra.mxu0 %v169
  %649 = vmatprep.subr.bf16.mxu0 0
  %650 = vmatpush1.bf16.msra.mxu0 0
  %651 = vmatprep.subr.bf16.mxu0 0
  %652 = vmatpush1.bf16.msra.mxu0 0
  %653 = vmatprep.subr.bf16.mxu0 0
  %654 = vmatpush1.bf16.msra.mxu0 0
  %655 = vmatprep.subr.bf16.mxu0 0
  %656 = vmatpush1.bf16.msra.mxu0 0
  %657 = vmatprep.subr.bf16.mxu0 0
  %658 = vmatpush1.bf16.msra.mxu0 0
  %659 = vmatprep.subr.bf16.mxu0 0
  %660 = vmatpush1.bf16.msra.mxu0 0
  %661 = vmatprep.subr.bf16.mxu0 0
  %662 = vmatpush1.bf16.msra.mxu0 0
  %663 = vmatprep.subr.bf16.mxu0 0
  %664 = vmatpush1.bf16.msra.mxu0 0
  %665 = vmatprep.subr.bf16.mxu0 0
  %666 = vmatpush1.bf16.msra.mxu0 0
  %667 = vmatprep.subr.bf16.mxu0 0
  %668 = vmatpush1.bf16.msra.mxu0 0
  %669 = vmatprep.subr.bf16.mxu0 0
  %670 = vmatpush1.bf16.msra.mxu0 0
  %671 = vmatprep.subr.bf16.mxu0 0
  %672 = vmatpush1.bf16.msra.mxu0 0
  %673 = vmatprep.subr.bf16.mxu0 0
  %674 = vmatpush1.bf16.msra.mxu0 0
  %675 = vmatprep.subr.bf16.mxu0 0
  %676 = vmatpush1.bf16.msra.mxu0 0
  %677 = vmatprep.subr.bf16.mxu0 0
  %678 = vmatpush1.bf16.msra.mxu0 0
  %679 = vmatprep.mubr.bf16.mxu0 0
  %680 = vmatmul.mubr.bf16.gmra.mrb[0].mxu0 %v99
  %v681 = vpop.f32.mrb[0].mxu0
  %v682 = vadd.f32 0.0, %v681
  %v683 = vpop.f32.mrb[0].mxu0
  %v684 = vadd.f32 0.0, %v683
  %v685 = vpop.f32.mrb[0].mxu0
  %v686 = vadd.f32 0.0, %v685
  %v687 = vpop.f32.mrb[0].mxu0
  %v688 = vadd.f32 0.0, %v687
  %689 = vdwg.mxu0
  %v690 = vmul.f32 %v209, %v209
  %v691 = vmul.f32 %v211, %v211
  %v692 = vmul.f32 %v252, %v252
  %v693 = vmul.f32 %v254, %v254
  %v694 = vmul.f32 %v295, %v295
  %v695 = vmul.f32 %v297, %v297
  %v696 = vmul.f32 %v338, %v338
  %v697 = vmul.f32 %v340, %v340
  %v698 = vmul.f32 %v213, %v213
  %v699 = vmul.f32 %v215, %v215
  %v700 = vmul.f32 %v256, %v256
  %v701 = vmul.f32 %v258, %v258
  %v702 = vmul.f32 %v299, %v299
  %v703 = vmul.f32 %v301, %v301
  %v704 = vmul.f32 %v342, %v342
  %v705 = vmul.f32 %v344, %v344
  %v706 = vmul.f32 %v381, %v381
  %v707 = vmul.f32 %v383, %v383
  %v708 = vmul.f32 %v424, %v424
  %v709 = vmul.f32 %v426, %v426
  %v710 = vmul.f32 %v467, %v467
  %v711 = vmul.f32 %v469, %v469
  %v712 = vmul.f32 %v510, %v510
  %v713 = vmul.f32 %v512, %v512
  %v714 = vmul.f32 %v385, %v385
  %v715 = vmul.f32 %v387, %v387
  %v716 = vmul.f32 %v428, %v428
  %v717 = vmul.f32 %v430, %v430
  %v718 = vmul.f32 %v471, %v471
  %v719 = vmul.f32 %v473, %v473
  %v720 = vmul.f32 %v514, %v514
  %v721 = vmul.f32 %v516, %v516
  %v722 = vadd.f32 %v690, %v706
  %v723 = vadd.f32 %v691, %v707
  %v724 = vadd.f32 %v692, %v708
  %v725 = vadd.f32 %v693, %v709
  %v726 = vadd.f32 %v694, %v710
  %v727 = vadd.f32 %v695, %v711
  %v728 = vadd.f32 %v696, %v712
  %v729 = vadd.f32 %v697, %v713
  %v730 = vadd.f32 %v698, %v714
  %v731 = vadd.f32 %v699, %v715
  %v732 = vadd.f32 %v700, %v716
  %v733 = vadd.f32 %v701, %v717
  %v734 = vadd.f32 %v702, %v718
  %v735 = vadd.f32 %v703, %v719
  %v736 = vadd.f32 %v704, %v720
  %v737 = vadd.f32 %v705, %v721
  %v738 = vmul.f32 %v553, %v553
  %v739 = vmul.f32 %v555, %v555
  %v740 = vmul.f32 %v596, %v596
  %v741 = vmul.f32 %v598, %v598
  %v742 = vmul.f32 %v639, %v639
  %v743 = vmul.f32 %v641, %v641
  %v744 = vmul.f32 %v682, %v682
  %v745 = vmul.f32 %v684, %v684
  %v746 = vmul.f32 %v557, %v557
  %v747 = vmul.f32 %v559, %v559
  %v748 = vmul.f32 %v600, %v600
  %v749 = vmul.f32 %v602, %v602
  %v750 = vmul.f32 %v643, %v643
  %v751 = vmul.f32 %v645, %v645
  %v752 = vmul.f32 %v686, %v686
  %v753 = vmul.f32 %v688, %v688
  %v754 = vadd.f32 %v722, %v738
  %v755 = vadd.f32 %v723, %v739
  %v756 = vadd.f32 %v724, %v740
  %v757 = vadd.f32 %v725, %v741
  %v758 = vadd.f32 %v726, %v742
  %v759 = vadd.f32 %v727, %v743
  %v760 = vadd.f32 %v728, %v744
  %v761 = vadd.f32 %v729, %v745
  %v762 = vadd.f32 %v730, %v746
  %v763 = vadd.f32 %v731, %v747
  %v764 = vadd.f32 %v732, %v748
  %v765 = vadd.f32 %v733, %v749
  %v766 = vadd.f32 %v734, %v750
  %v767 = vadd.f32 %v735, %v751
  %v768 = vadd.f32 %v736, %v752
  %v769 = vadd.f32 %v737, %v753
  %v770 = vrsqrt.pop %v754
  %v771 = vmul.f32 %v754, %v770
  %vm772 = vcmp.eq.f32.partialorder %v754, inf
  %v773 = vsel %vm772, %v754, %v771
  %vm774 = vcmp.eq.f32.partialorder %v754, 0.0
  %v775 = vand.u32 %v754, 2147483648
  %v776 = vsel %vm774, %v775, %v773
  %v777 = vrsqrt.pop %v755
  %v778 = vmul.f32 %v755, %v777
  %vm779 = vcmp.eq.f32.partialorder %v755, inf
  %v780 = vsel %vm779, %v755, %v778
  %vm781 = vcmp.eq.f32.partialorder %v755, 0.0
  %v782 = vand.u32 %v755, 2147483648
  %v783 = vsel %vm781, %v782, %v780
  %v784 = vrsqrt.pop %v756
  %v785 = vmul.f32 %v756, %v784
  %vm786 = vcmp.eq.f32.partialorder %v756, inf
  %v787 = vsel %vm786, %v756, %v785
  %vm788 = vcmp.eq.f32.partialorder %v756, 0.0
  %v789 = vand.u32 %v756, 2147483648
  %v790 = vsel %vm788, %v789, %v787
  %v791 = vrsqrt.pop %v757
  %v792 = vmul.f32 %v757, %v791
  %vm793 = vcmp.eq.f32.partialorder %v757, inf
  %v794 = vsel %vm793, %v757, %v792
  %vm795 = vcmp.eq.f32.partialorder %v757, 0.0
  %v796 = vand.u32 %v757, 2147483648
  %v797 = vsel %vm795, %v796, %v794
  %v798 = vrsqrt.pop %v758
  %v799 = vmul.f32 %v758, %v798
  %vm800 = vcmp.eq.f32.partialorder %v758, inf
  %v801 = vsel %vm800, %v758, %v799
  %vm802 = vcmp.eq.f32.partialorder %v758, 0.0
  %v803 = vand.u32 %v758, 2147483648
  %v804 = vsel %vm802, %v803, %v801
  %v805 = vrsqrt.pop %v759
  %v806 = vmul.f32 %v759, %v805
  %vm807 = vcmp.eq.f32.partialorder %v759, inf
  %v808 = vsel %vm807, %v759, %v806
  %vm809 = vcmp.eq.f32.partialorder %v759, 0.0
  %v810 = vand.u32 %v759, 2147483648
  %v811 = vsel %vm809, %v810, %v808
  %v812 = vrsqrt.pop %v760
  %v813 = vmul.f32 %v760, %v812
  %vm814 = vcmp.eq.f32.partialorder %v760, inf
  %v815 = vsel %vm814, %v760, %v813
  %vm816 = vcmp.eq.f32.partialorder %v760, 0.0
  %v817 = vand.u32 %v760, 2147483648
  %v818 = vsel %vm816, %v817, %v815
  %v819 = vrsqrt.pop %v761
  %v820 = vmul.f32 %v761, %v819
  %vm821 = vcmp.eq.f32.partialorder %v761, inf
  %v822 = vsel %vm821, %v761, %v820
  %vm823 = vcmp.eq.f32.partialorder %v761, 0.0
  %v824 = vand.u32 %v761, 2147483648
  %v825 = vsel %vm823, %v824, %v822
  %v826 = vrsqrt.pop %v762
  %v827 = vmul.f32 %v762, %v826
  %vm828 = vcmp.eq.f32.partialorder %v762, inf
  %v829 = vsel %vm828, %v762, %v827
  %vm830 = vcmp.eq.f32.partialorder %v762, 0.0
  %v831 = vand.u32 %v762, 2147483648
  %v832 = vsel %vm830, %v831, %v829
  %v833 = vrsqrt.pop %v763
  %v834 = vmul.f32 %v763, %v833
  %vm835 = vcmp.eq.f32.partialorder %v763, inf
  %v836 = vsel %vm835, %v763, %v834
  %vm837 = vcmp.eq.f32.partialorder %v763, 0.0
  %v838 = vand.u32 %v763, 2147483648
  %v839 = vsel %vm837, %v838, %v836
  %v840 = vrsqrt.pop %v764
  %v841 = vmul.f32 %v764, %v840
  %vm842 = vcmp.eq.f32.partialorder %v764, inf
  %v843 = vsel %vm842, %v764, %v841
  %vm844 = vcmp.eq.f32.partialorder %v764, 0.0
  %v845 = vand.u32 %v764, 2147483648
  %v846 = vsel %vm844, %v845, %v843
  %v847 = vrsqrt.pop %v765
  %v848 = vmul.f32 %v765, %v847
  %vm849 = vcmp.eq.f32.partialorder %v765, inf
  %v850 = vsel %vm849, %v765, %v848
  %vm851 = vcmp.eq.f32.partialorder %v765, 0.0
  %v852 = vand.u32 %v765, 2147483648
  %v853 = vsel %vm851, %v852, %v850
  %v854 = vrsqrt.pop %v766
  %v855 = vmul.f32 %v766, %v854
  %vm856 = vcmp.eq.f32.partialorder %v766, inf
  %v857 = vsel %vm856, %v766, %v855
  %vm858 = vcmp.eq.f32.partialorder %v766, 0.0
  %v859 = vand.u32 %v766, 2147483648
  %v860 = vsel %vm858, %v859, %v857
  %v861 = vrsqrt.pop %v767
  %v862 = vmul.f32 %v767, %v861
  %vm863 = vcmp.eq.f32.partialorder %v767, inf
  %v864 = vsel %vm863, %v767, %v862
  %vm865 = vcmp.eq.f32.partialorder %v767, 0.0
  %v866 = vand.u32 %v767, 2147483648
  %v867 = vsel %vm865, %v866, %v864
  %v868 = vrsqrt.pop %v768
  %v869 = vmul.f32 %v768, %v868
  %vm870 = vcmp.eq.f32.partialorder %v768, inf
  %v871 = vsel %vm870, %v768, %v869
  %vm872 = vcmp.eq.f32.partialorder %v768, 0.0
  %v873 = vand.u32 %v768, 2147483648
  %v874 = vsel %vm872, %v873, %v871
  %v875 = vrsqrt.pop %v769
  %v876 = vmul.f32 %v769, %v875
  %vm877 = vcmp.eq.f32.partialorder %v769, inf
  %v878 = vsel %vm877, %v769, %v876
  %vm879 = vcmp.eq.f32.partialorder %v769, 0.0
  %v880 = vand.u32 %v769, 2147483648
  %v881 = vsel %vm879, %v880, %v878
  %v882 = vld [vmem:[%s3] sm:$0xff]
  %v883 = vld [vmem:[%s3 + $0x8] sm:$0xff]
  %885 = vset.pattern.permute.xlu0 0
  %886 = vperm.xlu0 %885, %v882
  %v887 = vpop.permute.xlu0 %886
  %890 = vset.pattern.permute.xlu0 0
  %891 = vperm.xlu0 %890, %v883
  %v892 = vpop.permute.xlu0 %891
  %v894 = vmul.f32 %v776, %v887
  %v895 = vmul.f32 %v783, %v887
  %v896 = vmul.f32 %v790, %v887
  %v897 = vmul.f32 %v797, %v887
  %v898 = vmul.f32 %v804, %v887
  %v899 = vmul.f32 %v811, %v887
  %v900 = vmul.f32 %v818, %v887
  %v901 = vmul.f32 %v825, %v887
  %v902 = vmul.f32 %v832, %v892
  %v903 = vmul.f32 %v839, %v892
  %v904 = vmul.f32 %v846, %v892
  %v905 = vmul.f32 %v853, %v892
  %v906 = vmul.f32 %v860, %v892
  %v907 = vmul.f32 %v867, %v892
  %v908 = vmul.f32 %v874, %v892
  %v909 = vmul.f32 %v881, %v892
  %v910 = vld [vmem:[%s2] sm:$0xff]
  %v911 = vld [vmem:[%s2 + $0x8] sm:$0xff]
  %913 = vset.pattern.permute.xlu0 0
  %914 = vperm.xlu0 %913, %v910
  %v915 = vpop.permute.xlu0 %914
  %918 = vset.pattern.permute.xlu0 0
  %919 = vperm.xlu0 %918, %v911
  %v920 = vpop.permute.xlu0 %919
  %v922 = vmin.f32 %v894, %v915
  %v923 = vmin.f32 %v895, %v915
  %v924 = vmin.f32 %v896, %v915
  %v925 = vmin.f32 %v897, %v915
  %v926 = vmin.f32 %v898, %v915
  %v927 = vmin.f32 %v899, %v915
  %v928 = vmin.f32 %v900, %v915
  %v929 = vmin.f32 %v901, %v915
  %v930 = vmin.f32 %v902, %v920
  %v931 = vmin.f32 %v903, %v920
  %v932 = vmin.f32 %v904, %v920
  %v933 = vmin.f32 %v905, %v920
  %v934 = vmin.f32 %v906, %v920
  %v935 = vmin.f32 %v907, %v920
  %v936 = vmin.f32 %v908, %v920
  %v937 = vmin.f32 %v909, %v920
  %v938 = vmul.f32 %v209, %v922
  %v939 = vmul.f32 %v211, %v923
  %v940 = vmul.f32 %v252, %v924
  %v941 = vmul.f32 %v254, %v925
  %v942 = vmul.f32 %v295, %v926
  %v943 = vmul.f32 %v297, %v927
  %v944 = vmul.f32 %v338, %v928
  %v945 = vmul.f32 %v340, %v929
  %v946 = vmul.f32 %v213, %v930
  %v947 = vmul.f32 %v215, %v931
  %v948 = vmul.f32 %v256, %v932
  %v949 = vmul.f32 %v258, %v933
  %v950 = vmul.f32 %v299, %v934
  %v951 = vmul.f32 %v301, %v935
  %v952 = vmul.f32 %v342, %v936
  %v953 = vmul.f32 %v344, %v937
  %v954 = vmul.f32 %v381, %v922
  %v955 = vmul.f32 %v383, %v923
  %v956 = vmul.f32 %v424, %v924
  %v957 = vmul.f32 %v426, %v925
  %v958 = vmul.f32 %v467, %v926
  %v959 = vmul.f32 %v469, %v927
  %v960 = vmul.f32 %v510, %v928
  %v961 = vmul.f32 %v512, %v929
  %v962 = vmul.f32 %v385, %v930
  %v963 = vmul.f32 %v387, %v931
  %v964 = vmul.f32 %v428, %v932
  %v965 = vmul.f32 %v430, %v933
  %v966 = vmul.f32 %v471, %v934
  %v967 = vmul.f32 %v473, %v935
  %v968 = vmul.f32 %v514, %v936
  %v969 = vmul.f32 %v516, %v937
  %v970 = vmul.f32 %v553, %v922
  %v971 = vmul.f32 %v555, %v923
  %v972 = vmul.f32 %v596, %v924
  %v973 = vmul.f32 %v598, %v925
  %v974 = vmul.f32 %v639, %v926
  %v975 = vmul.f32 %v641, %v927
  %v976 = vmul.f32 %v682, %v928
  %v977 = vmul.f32 %v684, %v929
  %v978 = vmul.f32 %v557, %v930
  %v979 = vmul.f32 %v559, %v931
  %v980 = vmul.f32 %v600, %v932
  %v981 = vmul.f32 %v602, %v933
  %v982 = vmul.f32 %v643, %v934
  %v983 = vmul.f32 %v645, %v935
  %v984 = vmul.f32 %v686, %v936
  %v985 = vmul.f32 %v688, %v937
  %vm986 = vcmp.gt.f32.partialorder %v755, %v754
  %vm987 = vcmp.gt.f32.partialorder %v763, %v762
  %v988 = vsel %vm986, %v755, %v754
  %v989 = vsel %vm987, %v763, %v762
  %v990 = vsel %vm986, %v939, %v938
  %v991 = vsel %vm987, %v947, %v946
  %v992 = vsel %vm986, %v955, %v954
  %v993 = vsel %vm987, %v963, %v962
  %v994 = vsel %vm986, %v971, %v970
  %v995 = vsel %vm987, %v979, %v978
  %vm996 = vcmp.gt.f32.partialorder %v756, %v988
  %vm997 = vcmp.gt.f32.partialorder %v764, %v989
  %v998 = vsel %vm996, %v756, %v988
  %v999 = vsel %vm997, %v764, %v989
  %v1000 = vsel %vm996, %v940, %v990
  %v1001 = vsel %vm997, %v948, %v991
  %v1002 = vsel %vm996, %v956, %v992
  %v1003 = vsel %vm997, %v964, %v993
  %v1004 = vsel %vm996, %v972, %v994
  %v1005 = vsel %vm997, %v980, %v995
  %vm1006 = vcmp.gt.f32.partialorder %v757, %v998
  %vm1007 = vcmp.gt.f32.partialorder %v765, %v999
  %v1008 = vsel %vm1006, %v757, %v998
  %v1009 = vsel %vm1007, %v765, %v999
  %v1010 = vsel %vm1006, %v941, %v1000
  %v1011 = vsel %vm1007, %v949, %v1001
  %v1012 = vsel %vm1006, %v957, %v1002
  %v1013 = vsel %vm1007, %v965, %v1003
  %v1014 = vsel %vm1006, %v973, %v1004
  %v1015 = vsel %vm1007, %v981, %v1005
  %vm1016 = vcmp.gt.f32.partialorder %v758, %v1008
  %vm1017 = vcmp.gt.f32.partialorder %v766, %v1009
  %v1018 = vsel %vm1016, %v758, %v1008
  %v1019 = vsel %vm1017, %v766, %v1009
  %v1020 = vsel %vm1016, %v942, %v1010
  %v1021 = vsel %vm1017, %v950, %v1011
  %v1022 = vsel %vm1016, %v958, %v1012
  %v1023 = vsel %vm1017, %v966, %v1013
  %v1024 = vsel %vm1016, %v974, %v1014
  %v1025 = vsel %vm1017, %v982, %v1015
  %vm1026 = vcmp.gt.f32.partialorder %v759, %v1018
  %vm1027 = vcmp.gt.f32.partialorder %v767, %v1019
  %v1028 = vsel %vm1026, %v759, %v1018
  %v1029 = vsel %vm1027, %v767, %v1019
  %v1030 = vsel %vm1026, %v943, %v1020
  %v1031 = vsel %vm1027, %v951, %v1021
  %v1032 = vsel %vm1026, %v959, %v1022
  %v1033 = vsel %vm1027, %v967, %v1023
  %v1034 = vsel %vm1026, %v975, %v1024
  %v1035 = vsel %vm1027, %v983, %v1025
  %vm1036 = vcmp.gt.f32.partialorder %v760, %v1028
  %vm1037 = vcmp.gt.f32.partialorder %v768, %v1029
  %v1038 = vsel %vm1036, %v760, %v1028
  %v1039 = vsel %vm1037, %v768, %v1029
  %v1040 = vsel %vm1036, %v944, %v1030
  %v1041 = vsel %vm1037, %v952, %v1031
  %v1042 = vsel %vm1036, %v960, %v1032
  %v1043 = vsel %vm1037, %v968, %v1033
  %v1044 = vsel %vm1036, %v976, %v1034
  %v1045 = vsel %vm1037, %v984, %v1035
  %vm1046 = vcmp.gt.f32.partialorder %v761, %v1038
  %vm1047 = vcmp.gt.f32.partialorder %v769, %v1039
  %v1048 = vsel %vm1046, %v945, %v1040
  %v1049 = vsel %vm1047, %v953, %v1041
  %v1050 = vsel %vm1046, %v961, %v1042
  %v1051 = vsel %vm1047, %v969, %v1043
  %v1052 = vsel %vm1046, %v977, %v1044
  %v1053 = vsel %vm1047, %v985, %v1045
  %1054 = vst [vmem:[%s4] sm:$0xff] %v1048
  %1055 = vst [vmem:[%s4 + $0x8] sm:$0xff] %v1049
  %s1056 = scalar_lea.vmem %s4, 16
  %1057 = vst [vmem:[%s1056] sm:$0xff] %v1050
  %1058 = vst [vmem:[%s1056 + $0x8] sm:$0xff] %v1051
  %s1059 = scalar_lea.vmem %s4, 32
  %1060 = vst [vmem:[%s1059] sm:$0xff] %v1052
  %1061 = vst [vmem:[%s1059 + $0x8] sm:$0xff] %v1053
  // Predicated region
  $region18: #{a_call__.8} parent=0 // pred_check
    _
  $region19: #{a_call__.8} parent=0 // pred_check_branch
    %1063 = sbr.rel (0) target = $region21
  $region20: #{a_call__.8} parent=0 // pred_region
    _
  $region21: #{a_call__.8} parent=0 // pred_fallthru
    _
  // Predicated region
  $region22: #{a_call__.8} parent=0 // pred_check
    _
  $region23: #{a_call__.8} parent=0 // pred_check_branch
    %1065 = sbr.rel (0) target = $region25
  $region24: #{a_call__.8} parent=0 // pred_region
    _
  $region25: #{a_call__.8} parent=0 // pred_fallthru
    _

// kernel: a_call__.9
$region0: #{a_call__.9}
  #allocation0 [shape = 'u32[]', space=smem, size = 0x4, offset = 0x4, fixed_abs, tag = 'smem constant byte address 0x4 - core index']
  #allocation1 [shape = 'u32[144,128]{1,0:T(1,128)}', space=vmem, size = 0x12000, scoped, tag = 'internal scratch']
  %s0 = inlined_call_operand.vmem [shape: bf16[5,6144], index: 0, kind: input, shape index: {}]
  %s1 = inlined_call_operand.vmem [shape: f32[1,5,5], index: 1, kind: output, shape index: {}]
  %s2 = sld [smem:[#allocation0]]
  $region14: #{a_call__.9} parent=0
    _
  %s4 = ssub.s32 1, %s2
  %s5 = scalar_select 0, %s4, %s2
  // Predicated region
  $region2: #{a_call__.9} parent=0 // pred_check
    _
  $region3: #{a_call__.9} parent=0 // pred_check_branch
    %7 = sbr.rel (0) target = $region5
  $region4: #{a_call__.9} parent=0 // pred_region
    _
  $region5: #{a_call__.9} parent=0 // pred_fallthru
    _
  %v9 = vld [vmem:[%s0] sm:$0x77]
  %v10 = vld [vmem:[%s0 + $0x8] sm:$0x77]
  %v11 = vld [vmem:[%s0 + $0x10] sm:$0x77]
  %v12 = vld [vmem:[%s0 + $0x18] sm:$0x77]
  %v13 = vld [vmem:[%s0 + $0x20] sm:$0x77]
  %v14 = vld [vmem:[%s0 + $0x28] sm:$0x77]
  %v15 = vld [vmem:[%s0 + $0x30] sm:$0x77]
  %v16 = vld [vmem:[%s0 + $0x38] sm:$0x77]
  %v17 = vld [vmem:[%s0 + $0x40] sm:$0x77]
  %v18 = vld [vmem:[%s0 + $0x48] sm:$0x77]
  %v19 = vld [vmem:[%s0 + $0x50] sm:$0x77]
  %v20 = vld [vmem:[%s0 + $0x58] sm:$0x77]
  %v21 = vld [vmem:[%s0 + $0x60] sm:$0x77]
  %v22 = vld [vmem:[%s0 + $0x68] sm:$0x77]
  %v23 = vld [vmem:[%s0 + $0x70] sm:$0x77]
  %v24 = vld [vmem:[%s0 + $0x78] sm:$0x77]
  %v25 = vld [vmem:[%s0 + $0x80] sm:$0x77]
  %v26 = vld [vmem:[%s0 + $0x88] sm:$0x77]
  %v27 = vld [vmem:[%s0 + $0x90] sm:$0x77]
  %v28 = vld [vmem:[%s0 + $0x98] sm:$0x77]
  %v29 = vld [vmem:[%s0 + $0xa0] sm:$0x77]
  %v30 = vld [vmem:[%s0 + $0xa8] sm:$0x77]
  %v31 = vld [vmem:[%s0 + $0xb0] sm:$0x77]
  %v32 = vld [vmem:[%s0 + $0xb8] sm:$0x77]
  %v57 = vunpack.c.l.b16 %v9
  %v58 = vunpack.c.h.b16 %v9
  %v59 = vunpack.c.l.b16 %v10
  %v60 = vunpack.c.h.b16 %v10
  %v61 = vunpack.c.l.b16 %v11
  %v62 = vunpack.c.h.b16 %v11
  %v63 = vunpack.c.l.b16 %v12
  %v64 = vunpack.c.h.b16 %v12
  %v65 = vunpack.c.l.b16 %v13
  %v66 = vunpack.c.h.b16 %v13
  %v67 = vunpack.c.l.b16 %v14
  %v68 = vunpack.c.h.b16 %v14
  %v69 = vunpack.c.l.b16 %v15
  %v70 = vunpack.c.h.b16 %v15
  %v71 = vunpack.c.l.b16 %v16
  %v72 = vunpack.c.h.b16 %v16
  %v73 = vunpack.c.l.b16 %v17
  %v74 = vunpack.c.h.b16 %v17
  %v75 = vunpack.c.l.b16 %v18
  %v76 = vunpack.c.h.b16 %v18
  %v77 = vunpack.c.l.b16 %v19
  %v78 = vunpack.c.h.b16 %v19
  %v79 = vunpack.c.l.b16 %v20
  %v80 = vunpack.c.h.b16 %v20
  %v81 = vunpack.c.l.b16 %v21
  %v82 = vunpack.c.h.b16 %v21
  %v83 = vunpack.c.l.b16 %v22
  %v84 = vunpack.c.h.b16 %v22
  %v85 = vunpack.c.l.b16 %v23
  %v86 = vunpack.c.h.b16 %v23
  %v87 = vunpack.c.l.b16 %v24
  %v88 = vunpack.c.h.b16 %v24
  %v89 = vunpack.c.l.b16 %v25
  %v90 = vunpack.c.h.b16 %v25
  %v91 = vunpack.c.l.b16 %v26
  %v92 = vunpack.c.h.b16 %v26
  %v93 = vunpack.c.l.b16 %v27
  %v94 = vunpack.c.h.b16 %v27
  %v95 = vunpack.c.l.b16 %v28
  %v96 = vunpack.c.h.b16 %v28
  %v97 = vunpack.c.l.b16 %v29
  %v98 = vunpack.c.h.b16 %v29
  %v99 = vunpack.c.l.b16 %v30
  %v100 = vunpack.c.h.b16 %v30
  %v101 = vunpack.c.l.b16 %v31
  %v102 = vunpack.c.h.b16 %v31
  %v103 = vunpack.c.l.b16 %v32
  %v104 = vunpack.c.h.b16 %v32
  %v105 = vpack.c.b16 %v57, %v57
  %v106 = vpack.c.b16 %v58, %v58
  %v107 = vpack.c.b16 %v59, %v59
  %v108 = vpack.c.b16 %v60, %v60
  %v109 = vpack.c.b16 %v61, %v61
  %v110 = vpack.c.b16 %v62, %v62
  %v111 = vpack.c.b16 %v63, %v63
  %v112 = vpack.c.b16 %v64, %v64
  %v113 = vpack.c.b16 %v65, %v65
  %v114 = vpack.c.b16 %v66, %v66
  %v115 = vpack.c.b16 %v67, %v67
  %v116 = vpack.c.b16 %v68, %v68
  %v117 = vpack.c.b16 %v69, %v69
  %v118 = vpack.c.b16 %v70, %v70
  %v119 = vpack.c.b16 %v71, %v71
  %v120 = vpack.c.b16 %v72, %v72
  %v121 = vpack.c.b16 %v73, %v73
  %v122 = vpack.c.b16 %v74, %v74
  %v123 = vpack.c.b16 %v75, %v75
  %v124 = vpack.c.b16 %v76, %v76
  %v125 = vpack.c.b16 %v77, %v77
  %v126 = vpack.c.b16 %v78, %v78
  %v127 = vpack.c.b16 %v79, %v79
  %v128 = vpack.c.b16 %v80, %v80
  %v129 = vpack.c.b16 %v81, %v81
  %v130 = vpack.c.b16 %v82, %v82
  %v131 = vpack.c.b16 %v83, %v83
  %v132 = vpack.c.b16 %v84, %v84
  %v133 = vpack.c.b16 %v85, %v85
  %v134 = vpack.c.b16 %v86, %v86
  %v135 = vpack.c.b16 %v87, %v87
  %v136 = vpack.c.b16 %v88, %v88
  %v137 = vpack.c.b16 %v89, %v89
  %v138 = vpack.c.b16 %v90, %v90
  %v139 = vpack.c.b16 %v91, %v91
  %v140 = vpack.c.b16 %v92, %v92
  %v141 = vpack.c.b16 %v93, %v93
  %v142 = vpack.c.b16 %v94, %v94
  %v143 = vpack.c.b16 %v95, %v95
  %v144 = vpack.c.b16 %v96, %v96
  %v145 = vpack.c.b16 %v97, %v97
  %v146 = vpack.c.b16 %v98, %v98
  %v147 = vpack.c.b16 %v99, %v99
  %v148 = vpack.c.b16 %v100, %v100
  %v149 = vpack.c.b16 %v101, %v101
  %v150 = vpack.c.b16 %v102, %v102
  %v151 = vpack.c.b16 %v103, %v103
  %v152 = vpack.c.b16 %v104, %v104
  %201 = vmatprep.subr.bf16.mxu0 %v106
  %202 = vmatpush1.bf16.xpose.msra.mxu0 %v105
  %203 = vmatprep.subr.bf16.mxu0 0
  %204 = vmatpush1.bf16.xpose.msra.mxu0 0
  %205 = vmatprep.subr.bf16.mxu0 0
  %206 = vmatpush1.bf16.xpose.msra.mxu0 0
  %207 = vmatprep.subr.bf16.mxu0 0
  %208 = vmatpush1.bf16.xpose.msra.mxu0 0
  %209 = vmatprep.subr.bf16.mxu0 0
  %210 = vmatpush1.bf16.xpose.msra.mxu0 0
  %211 = vmatprep.subr.bf16.mxu0 0
  %212 = vmatpush1.bf16.xpose.msra.mxu0 0
  %213 = vmatprep.subr.bf16.mxu0 0
  %214 = vmatpush1.bf16.xpose.msra.mxu0 0
  %215 = vmatprep.subr.bf16.mxu0 0
  %216 = vmatpush1.bf16.xpose.msra.mxu0 0
  %217 = vmatprep.subr.bf16.mxu0 0
  %218 = vmatpush1.bf16.xpose.msra.mxu0 0
  %219 = vmatprep.subr.bf16.mxu0 0
  %220 = vmatpush1.bf16.xpose.msra.mxu0 0
  %221 = vmatprep.subr.bf16.mxu0 0
  %222 = vmatpush1.bf16.xpose.msra.mxu0 0
  %223 = vmatprep.subr.bf16.mxu0 0
  %224 = vmatpush1.bf16.xpose.msra.mxu0 0
  %225 = vmatprep.subr.bf16.mxu0 0
  %226 = vmatpush1.bf16.xpose.msra.mxu0 0
  %227 = vmatprep.subr.bf16.mxu0 0
  %228 = vmatpush1.bf16.xpose.msra.mxu0 0
  %229 = vmatprep.subr.bf16.mxu0 0
  %230 = vmatpush1.bf16.xpose.msra.mxu0 0
  %231 = vmatprep.subr.bf16.mxu0 0
  %232 = vmatpush1.bf16.xpose.msra.mxu0 0
  %233 = vmatprep.mubr.bf16.mxu0 %v106
  %234 = vmatmul.mubr.bf16.gmra.mrb[0].mxu0 %v105
  %v235 = vpop.f32.mrb[0].mxu0
  %v236 = vadd.f32 0.0, %v235
  %v237 = vpop.f32.mrb[0].mxu0
  %v238 = vpop.f32.mrb[0].mxu0
  %v239 = vpop.f32.mrb[0].mxu0
  %240 = vdwg.mxu0
  %241 = vmatprep.subr.bf16.mxu0 %v108
  %242 = vmatpush1.bf16.xpose.msra.mxu0 %v107
  %243 = vmatprep.subr.bf16.mxu0 0
  %244 = vmatpush1.bf16.xpose.msra.mxu0 0
  %245 = vmatprep.subr.bf16.mxu0 0
  %246 = vmatpush1.bf16.xpose.msra.mxu0 0
  %247 = vmatprep.subr.bf16.mxu0 0
  %248 = vmatpush1.bf16.xpose.msra.mxu0 0
  %249 = vmatprep.subr.bf16.mxu0 0
  %250 = vmatpush1.bf16.xpose.msra.mxu0 0
  %251 = vmatprep.subr.bf16.mxu0 0
  %252 = vmatpush1.bf16.xpose.msra.mxu0 0
  %253 = vmatprep.subr.bf16.mxu0 0
  %254 = vmatpush1.bf16.xpose.msra.mxu0 0
  %255 = vmatprep.subr.bf16.mxu0 0
  %256 = vmatpush1.bf16.xpose.msra.mxu0 0
  %257 = vmatprep.subr.bf16.mxu0 0
  %258 = vmatpush1.bf16.xpose.msra.mxu0 0
  %259 = vmatprep.subr.bf16.mxu0 0
  %260 = vmatpush1.bf16.xpose.msra.mxu0 0
  %261 = vmatprep.subr.bf16.mxu0 0
  %262 = vmatpush1.bf16.xpose.msra.mxu0 0
  %263 = vmatprep.subr.bf16.mxu0 0
  %264 = vmatpush1.bf16.xpose.msra.mxu0 0
  %265 = vmatprep.subr.bf16.mxu0 0
  %266 = vmatpush1.bf16.xpose.msra.mxu0 0
  %267 = vmatprep.subr.bf16.mxu0 0
  %268 = vmatpush1.bf16.xpose.msra.mxu0 0
  %269 = vmatprep.subr.bf16.mxu0 0
  %270 = vmatpush1.bf16.xpose.msra.mxu0 0
  %271 = vmatprep.subr.bf16.mxu0 0
  %272 = vmatpush1.bf16.xpose.msra.mxu0 0
  %273 = vmatprep.mubr.bf16.mxu0 %v108
  %274 = vmatmul.mubr.bf16.gmra.mrb[0].mxu0 %v107
  %v275 = vpop.f32.mrb[0].mxu0
  %v276 = vadd.f32 %v236, %v275
  %v277 = vpop.f32.mrb[0].mxu0
  %v278 = vpop.f32.mrb[0].mxu0
  %v279 = vpop.f32.mrb[0].mxu0
  %280 = vdwg.mxu0
  %281 = vmatprep.subr.bf16.mxu0 %v110
  %282 = vmatpush1.bf16.xpose.msra.mxu0 %v109
  %283 = vmatprep.subr.bf16.mxu0 0
  %284 = vmatpush1.bf16.xpose.msra.mxu0 0
  %285 = vmatprep.subr.bf16.mxu0 0
  %286 = vmatpush1.bf16.xpose.msra.mxu0 0
  %287 = vmatprep.subr.bf16.mxu0 0
  %288 = vmatpush1.bf16.xpose.msra.mxu0 0
  %289 = vmatprep.subr.bf16.mxu0 0
  %290 = vmatpush1.bf16.xpose.msra.mxu0 0
  %291 = vmatprep.subr.bf16.mxu0 0
  %292 = vmatpush1.bf16.xpose.msra.mxu0 0
  %293 = vmatprep.subr.bf16.mxu0 0
  %294 = vmatpush1.bf16.xpose.msra.mxu0 0
  %295 = vmatprep.subr.bf16.mxu0 0
  %296 = vmatpush1.bf16.xpose.msra.mxu0 0
  %297 = vmatprep.subr.bf16.mxu0 0
  %298 = vmatpush1.bf16.xpose.msra.mxu0 0
  %299 = vmatprep.subr.bf16.mxu0 0
  %300 = vmatpush1.bf16.xpose.msra.mxu0 0
  %301 = vmatprep.subr.bf16.mxu0 0
  %302 = vmatpush1.bf16.xpose.msra.mxu0 0
  %303 = vmatprep.subr.bf16.mxu0 0
  %304 = vmatpush1.bf16.xpose.msra.mxu0 0
  %305 = vmatprep.subr.bf16.mxu0 0
  %306 = vmatpush1.bf16.xpose.msra.mxu0 0
  %307 = vmatprep.subr.bf16.mxu0 0
  %308 = vmatpush1.bf16.xpose.msra.mxu0 0
  %309 = vmatprep.subr.bf16.mxu0 0
  %310 = vmatpush1.bf16.xpose.msra.mxu0 0
  %311 = vmatprep.subr.bf16.mxu0 0
  %312 = vmatpush1.bf16.xpose.msra.mxu0 0
  %313 = vmatprep.mubr.bf16.mxu0 %v110
  %314 = vmatmul.mubr.bf16.gmra.mrb[0].mxu0 %v109
  %v315 = vpop.f32.mrb[0].mxu0
  %v316 = vadd.f32 %v276, %v315
  %v317 = vpop.f32.mrb[0].mxu0
  %v318 = vpop.f32.mrb[0].mxu0
  %v319 = vpop.f32.mrb[0].mxu0
  %320 = vdwg.mxu0
  %321 = vmatprep.subr.bf16.mxu0 %v112
  %322 = vmatpush1.bf16.xpose.msra.mxu0 %v111
  %323 = vmatprep.subr.bf16.mxu0 0
  %324 = vmatpush1.bf16.xpose.msra.mxu0 0
  %325 = vmatprep.subr.bf16.mxu0 0
  %326 = vmatpush1.bf16.xpose.msra.mxu0 0
  %327 = vmatprep.subr.bf16.mxu0 0
  %328 = vmatpush1.bf16.xpose.msra.mxu0 0
  %329 = vmatprep.subr.bf16.mxu0 0
  %330 = vmatpush1.bf16.xpose.msra.mxu0 0
  %331 = vmatprep.subr.bf16.mxu0 0
  %332 = vmatpush1.bf16.xpose.msra.mxu0 0
  %333 = vmatprep.subr.bf16.mxu0 0
  %334 = vmatpush1.bf16.xpose.msra.mxu0 0
  %335 = vmatprep.subr.bf16.mxu0 0
  %336 = vmatpush1.bf16.xpose.msra.mxu0 0
  %337 = vmatprep.subr.bf16.mxu0 0
  %338 = vmatpush1.bf16.xpose.msra.mxu0 0
  %339 = vmatprep.subr.bf16.mxu0 0
  %340 = vmatpush1.bf16.xpose.msra.mxu0 0
  %341 = vmatprep.subr.bf16.mxu0 0
  %342 = vmatpush1.bf16.xpose.msra.mxu0 0
  %343 = vmatprep.subr.bf16.mxu0 0
  %344 = vmatpush1.bf16.xpose.msra.mxu0 0
  %345 = vmatprep.subr.bf16.mxu0 0
  %346 = vmatpush1.bf16.xpose.msra.mxu0 0
  %347 = vmatprep.subr.bf16.mxu0 0
  %348 = vmatpush1.bf16.xpose.msra.mxu0 0
  %349 = vmatprep.subr.bf16.mxu0 0
  %350 = vmatpush1.bf16.xpose.msra.mxu0 0
  %351 = vmatprep.subr.bf16.mxu0 0
  %352 = vmatpush1.bf16.xpose.msra.mxu0 0
  %353 = vmatprep.mubr.bf16.mxu0 %v112
  %354 = vmatmul.mubr.bf16.gmra.mrb[0].mxu0 %v111
  %v355 = vpop.f32.mrb[0].mxu0
  %v356 = vadd.f32 %v316, %v355
  %v357 = vpop.f32.mrb[0].mxu0
  %v358 = vpop.f32.mrb[0].mxu0
  %v359 = vpop.f32.mrb[0].mxu0
  %360 = vdwg.mxu0
  %361 = vmatprep.subr.bf16.mxu0 %v114
  %362 = vmatpush1.bf16.xpose.msra.mxu0 %v113
  %363 = vmatprep.subr.bf16.mxu0 0
  %364 = vmatpush1.bf16.xpose.msra.mxu0 0
  %365 = vmatprep.subr.bf16.mxu0 0
  %366 = vmatpush1.bf16.xpose.msra.mxu0 0
  %367 = vmatprep.subr.bf16.mxu0 0
  %368 = vmatpush1.bf16.xpose.msra.mxu0 0
  %369 = vmatprep.subr.bf16.mxu0 0
  %370 = vmatpush1.bf16.xpose.msra.mxu0 0
  %371 = vmatprep.subr.bf16.mxu0 0
  %372 = vmatpush1.bf16.xpose.msra.mxu0 0
  %373 = vmatprep.subr.bf16.mxu0 0
  %374 = vmatpush1.bf16.xpose.msra.mxu0 0
  %375 = vmatprep.subr.bf16.mxu0 0
  %376 = vmatpush1.bf16.xpose.msra.mxu0 0
  %377 = vmatprep.subr.bf16.mxu0 0
  %378 = vmatpush1.bf16.xpose.msra.mxu0 0
  %379 = vmatprep.subr.bf16.mxu0 0
  %380 = vmatpush1.bf16.xpose.msra.mxu0 0
  %381 = vmatprep.subr.bf16.mxu0 0
  %382 = vmatpush1.bf16.xpose.msra.mxu0 0
  %383 = vmatprep.subr.bf16.mxu0 0
  %384 = vmatpush1.bf16.xpose.msra.mxu0 0
  %385 = vmatprep.subr.bf16.mxu0 0
  %386 = vmatpush1.bf16.xpose.msra.mxu0 0
  %387 = vmatprep.subr.bf16.mxu0 0
  %388 = vmatpush1.bf16.xpose.msra.mxu0 0
  %389 = vmatprep.subr.bf16.mxu0 0
  %390 = vmatpush1.bf16.xpose.msra.mxu0 0
  %391 = vmatprep.subr.bf16.mxu0 0
  %392 = vmatpush1.bf16.xpose.msra.mxu0 0
  %393 = vmatprep.mubr.bf16.mxu0 %v114
  %394 = vmatmul.mubr.bf16.gmra.mrb[0].mxu0 %v113
  %v395 = vpop.f32.mrb[0].mxu0
  %v396 = vadd.f32 %v356, %v395
  %v397 = vpop.f32.mrb[0].mxu0
  %v398 = vpop.f32.mrb[0].mxu0
  %v399 = vpop.f32.mrb[0].mxu0
  %400 = vdwg.mxu0
  %401 = vmatprep.subr.bf16.mxu0 %v116
  %402 = vmatpush1.bf16.xpose.msra.mxu0 %v115
  %403 = vmatprep.subr.bf16.mxu0 0
  %404 = vmatpush1.bf16.xpose.msra.mxu0 0
  %405 = vmatprep.subr.bf16.mxu0 0
  %406 = vmatpush1.bf16.xpose.msra.mxu0 0
  %407 = vmatprep.subr.bf16.mxu0 0
  %408 = vmatpush1.bf16.xpose.msra.mxu0 0
  %409 = vmatprep.subr.bf16.mxu0 0
  %410 = vmatpush1.bf16.xpose.msra.mxu0 0
  %411 = vmatprep.subr.bf16.mxu0 0
  %412 = vmatpush1.bf16.xpose.msra.mxu0 0
  %413 = vmatprep.subr.bf16.mxu0 0
  %414 = vmatpush1.bf16.xpose.msra.mxu0 0
  %415 = vmatprep.subr.bf16.mxu0 0
  %416 = vmatpush1.bf16.xpose.msra.mxu0 0
  %417 = vmatprep.subr.bf16.mxu0 0
  %418 = vmatpush1.bf16.xpose.msra.mxu0 0
  %419 = vmatprep.subr.bf16.mxu0 0
  %420 = vmatpush1.bf16.xpose.msra.mxu0 0
  %421 = vmatprep.subr.bf16.mxu0 0
  %422 = vmatpush1.bf16.xpose.msra.mxu0 0
  %423 = vmatprep.subr.bf16.mxu0 0
  %424 = vmatpush1.bf16.xpose.msra.mxu0 0
  %425 = vmatprep.subr.bf16.mxu0 0
  %426 = vmatpush1.bf16.xpose.msra.mxu0 0
  %427 = vmatprep.subr.bf16.mxu0 0
  %428 = vmatpush1.bf16.xpose.msra.mxu0 0
  %429 = vmatprep.subr.bf16.mxu0 0
  %430 = vmatpush1.bf16.xpose.msra.mxu0 0
  %431 = vmatprep.subr.bf16.mxu0 0
  %432 = vmatpush1.bf16.xpose.msra.mxu0 0
  %433 = vmatprep.mubr.bf16.mxu0 %v116
  %434 = vmatmul.mubr.bf16.gmra.mrb[0].mxu0 %v115
  %v435 = vpop.f32.mrb[0].mxu0
  %v436 = vadd.f32 %v396, %v435
  %v437 = vpop.f32.mrb[0].mxu0
  %v438 = vpop.f32.mrb[0].mxu0
  %v439 = vpop.f32.mrb[0].mxu0
  %440 = vdwg.mxu0
  %441 = vmatprep.subr.bf16.mxu0 %v118
  %442 = vmatpush1.bf16.xpose.msra.mxu0 %v117
  %443 = vmatprep.subr.bf16.mxu0 0
  %444 = vmatpush1.bf16.xpose.msra.mxu0 0
  %445 = vmatprep.subr.bf16.mxu0 0
  %446 = vmatpush1.bf16.xpose.msra.mxu0 0
  %447 = vmatprep.subr.bf16.mxu0 0
  %448 = vmatpush1.bf16.xpose.msra.mxu0 0
  %449 = vmatprep.subr.bf16.mxu0 0
  %450 = vmatpush1.bf16.xpose.msra.mxu0 0
  %451 = vmatprep.subr.bf16.mxu0 0
  %452 = vmatpush1.bf16.xpose.msra.mxu0 0
  %453 = vmatprep.subr.bf16.mxu0 0
  %454 = vmatpush1.bf16.xpose.msra.mxu0 0
  %455 = vmatprep.subr.bf16.mxu0 0
  %456 = vmatpush1.bf16.xpose.msra.mxu0 0
  %457 = vmatprep.subr.bf16.mxu0 0
  %458 = vmatpush1.bf16.xpose.msra.mxu0 0
  %459 = vmatprep.subr.bf16.mxu0 0
  %460 = vmatpush1.bf16.xpose.msra.mxu0 0
  %461 = vmatprep.subr.bf16.mxu0 0
  %462 = vmatpush1.bf16.xpose.msra.mxu0 0
  %463 = vmatprep.subr.bf16.mxu0 0
  %464 = vmatpush1.bf16.xpose.msra.mxu0 0
  %465 = vmatprep.subr.bf16.mxu0 0
  %466 = vmatpush1.bf16.xpose.msra.mxu0 0
  %467 = vmatprep.subr.bf16.mxu0 0
  %468 = vmatpush1.bf16.xpose.msra.mxu0 0
  %469 = vmatprep.subr.bf16.mxu0 0
  %470 = vmatpush1.bf16.xpose.msra.mxu0 0
  %471 = vmatprep.subr.bf16.mxu0 0
  %472 = vmatpush1.bf16.xpose.msra.mxu0 0
  %473 = vmatprep.mubr.bf16.mxu0 %v118
  %474 = vmatmul.mubr.bf16.gmra.mrb[0].mxu0 %v117
  %v475 = vpop.f32.mrb[0].mxu0
  %v476 = vadd.f32 %v436, %v475
  %v477 = vpop.f32.mrb[0].mxu0
  %v478 = vpop.f32.mrb[0].mxu0
  %v479 = vpop.f32.mrb[0].mxu0
  %480 = vdwg.mxu0
  %481 = vmatprep.subr.bf16.mxu0 %v120
  %482 = vmatpush1.bf16.xpose.msra.mxu0 %v119
  %483 = vmatprep.subr.bf16.mxu0 0
  %484 = vmatpush1.bf16.xpose.msra.mxu0 0
  %485 = vmatprep.subr.bf16.mxu0 0
  %486 = vmatpush1.bf16.xpose.msra.mxu0 0
  %487 = vmatprep.subr.bf16.mxu0 0
  %488 = vmatpush1.bf16.xpose.msra.mxu0 0
  %489 = vmatprep.subr.bf16.mxu0 0
  %490 = vmatpush1.bf16.xpose.msra.mxu0 0
  %491 = vmatprep.subr.bf16.mxu0 0
  %492 = vmatpush1.bf16.xpose.msra.mxu0 0
  %493 = vmatprep.subr.bf16.mxu0 0
  %494 = vmatpush1.bf16.xpose.msra.mxu0 0
  %495 = vmatprep.subr.bf16.mxu0 0
  %496 = vmatpush1.bf16.xpose.msra.mxu0 0
  %497 = vmatprep.subr.bf16.mxu0 0
  %498 = vmatpush1.bf16.xpose.msra.mxu0 0
  %499 = vmatprep.subr.bf16.mxu0 0
  %500 = vmatpush1.bf16.xpose.msra.mxu0 0
  %501 = vmatprep.subr.bf16.mxu0 0
  %502 = vmatpush1.bf16.xpose.msra.mxu0 0
  %503 = vmatprep.subr.bf16.mxu0 0
  %504 = vmatpush1.bf16.xpose.msra.mxu0 0
  %505 = vmatprep.subr.bf16.mxu0 0
  %506 = vmatpush1.bf16.xpose.msra.mxu0 0
  %507 = vmatprep.subr.bf16.mxu0 0
  %508 = vmatpush1.bf16.xpose.msra.mxu0 0
  %509 = vmatprep.subr.bf16.mxu0 0
  %510 = vmatpush1.bf16.xpose.msra.mxu0 0
  %511 = vmatprep.subr.bf16.mxu0 0
  %512 = vmatpush1.bf16.xpose.msra.mxu0 0
  %513 = vmatprep.mubr.bf16.mxu0 %v120
  %514 = vmatmul.mubr.bf16.gmra.mrb[0].mxu0 %v119
  %v515 = vpop.f32.mrb[0].mxu0
  %v516 = vadd.f32 %v476, %v515
  %v517 = vpop.f32.mrb[0].mxu0
  %v518 = vpop.f32.mrb[0].mxu0
  %v519 = vpop.f32.mrb[0].mxu0
  %520 = vdwg.mxu0
  %521 = vmatprep.subr.bf16.mxu0 %v122
  %522 = vmatpush1.bf16.xpose.msra.mxu0 %v121
  %523 = vmatprep.subr.bf16.mxu0 0
  %524 = vmatpush1.bf16.xpose.msra.mxu0 0
  %525 = vmatprep.subr.bf16.mxu0 0
  %526 = vmatpush1.bf16.xpose.msra.mxu0 0
  %527 = vmatprep.subr.bf16.mxu0 0
  %528 = vmatpush1.bf16.xpose.msra.mxu0 0
  %529 = vmatprep.subr.bf16.mxu0 0
  %530 = vmatpush1.bf16.xpose.msra.mxu0 0
  %531 = vmatprep.subr.bf16.mxu0 0
  %532 = vmatpush1.bf16.xpose.msra.mxu0 0
  %533 = vmatprep.subr.bf16.mxu0 0
  %534 = vmatpush1.bf16.xpose.msra.mxu0 0
  %535 = vmatprep.subr.bf16.mxu0 0
  %536 = vmatpush1.bf16.xpose.msra.mxu0 0
  %537 = vmatprep.subr.bf16.mxu0 0
  %538 = vmatpush1.bf16.xpose.msra.mxu0 0
  %539 = vmatprep.subr.bf16.mxu0 0
  %540 = vmatpush1.bf16.xpose.msra.mxu0 0
  %541 = vmatprep.subr.bf16.mxu0 0
  %542 = vmatpush1.bf16.xpose.msra.mxu0 0
  %543 = vmatprep.subr.bf16.mxu0 0
  %544 = vmatpush1.bf16.xpose.msra.mxu0 0
  %545 = vmatprep.subr.bf16.mxu0 0
  %546 = vmatpush1.bf16.xpose.msra.mxu0 0
  %547 = vmatprep.subr.bf16.mxu0 0
  %548 = vmatpush1.bf16.xpose.msra.mxu0 0
  %549 = vmatprep.subr.bf16.mxu0 0
  %550 = vmatpush1.bf16.xpose.msra.mxu0 0
  %551 = vmatprep.subr.bf16.mxu0 0
  %552 = vmatpush1.bf16.xpose.msra.mxu0 0
  %553 = vmatprep.mubr.bf16.mxu0 %v122
  %554 = vmatmul.mubr.bf16.gmra.mrb[0].mxu0 %v121
  %v555 = vpop.f32.mrb[0].mxu0
  %v556 = vadd.f32 %v516, %v555
  %v557 = vpop.f32.mrb[0].mxu0
  %v558 = vpop.f32.mrb[0].mxu0
  %v559 = vpop.f32.mrb[0].mxu0
  %560 = vdwg.mxu0
  %561 = vmatprep.subr.bf16.mxu0 %v124
  %562 = vmatpush1.bf16.xpose.msra.mxu0 %v123
  %563 = vmatprep.subr.bf16.mxu0 0
  %564 = vmatpush1.bf16.xpose.msra.mxu0 0
  %565 = vmatprep.subr.bf16.mxu0 0
  %566 = vmatpush1.bf16.xpose.msra.mxu0 0
  %567 = vmatprep.subr.bf16.mxu0 0
  %568 = vmatpush1.bf16.xpose.msra.mxu0 0
  %569 = vmatprep.subr.bf16.mxu0 0
  %570 = vmatpush1.bf16.xpose.msra.mxu0 0
  %571 = vmatprep.subr.bf16.mxu0 0
  %572 = vmatpush1.bf16.xpose.msra.mxu0 0
  %573 = vmatprep.subr.bf16.mxu0 0
  %574 = vmatpush1.bf16.xpose.msra.mxu0 0
  %575 = vmatprep.subr.bf16.mxu0 0
  %576 = vmatpush1.bf16.xpose.msra.mxu0 0
  %577 = vmatprep.subr.bf16.mxu0 0
  %578 = vmatpush1.bf16.xpose.msra.mxu0 0
  %579 = vmatprep.subr.bf16.mxu0 0
  %580 = vmatpush1.bf16.xpose.msra.mxu0 0
  %581 = vmatprep.subr.bf16.mxu0 0
  %582 = vmatpush1.bf16.xpose.msra.mxu0 0
  %583 = vmatprep.subr.bf16.mxu0 0
  %584 = vmatpush1.bf16.xpose.msra.mxu0 0
  %585 = vmatprep.subr.bf16.mxu0 0
  %586 = vmatpush1.bf16.xpose.msra.mxu0 0
  %587 = vmatprep.subr.bf16.mxu0 0
  %588 = vmatpush1.bf16.xpose.msra.mxu0 0
  %589 = vmatprep.subr.bf16.mxu0 0
  %590 = vmatpush1.bf16.xpose.msra.mxu0 0
  %591 = vmatprep.subr.bf16.mxu0 0
  %592 = vmatpush1.bf16.xpose.msra.mxu0 0
  %593 = vmatprep.mubr.bf16.mxu0 %v124
  %594 = vmatmul.mubr.bf16.gmra.mrb[0].mxu0 %v123
  %v595 = vpop.f32.mrb[0].mxu0
  %v596 = vadd.f32 %v556, %v595
  %v597 = vpop.f32.mrb[0].mxu0
  %v598 = vpop.f32.mrb[0].mxu0
  %v599 = vpop.f32.mrb[0].mxu0
  %600 = vdwg.mxu0
  %601 = vmatprep.subr.bf16.mxu0 %v126
  %602 = vmatpush1.bf16.xpose.msra.mxu0 %v125
  %603 = vmatprep.subr.bf16.mxu0 0
  %604 = vmatpush1.bf16.xpose.msra.mxu0 0
  %605 = vmatprep.subr.bf16.mxu0 0
  %606 = vmatpush1.bf16.xpose.msra.mxu0 0
  %607 = vmatprep.subr.bf16.mxu0 0
  %608 = vmatpush1.bf16.xpose.msra.mxu0 0
  %609 = vmatprep.subr.bf16.mxu0 0
  %610 = vmatpush1.bf16.xpose.msra.mxu0 0
  %611 = vmatprep.subr.bf16.mxu0 0
  %612 = vmatpush1.bf16.xpose.msra.mxu0 0
  %613 = vmatprep.subr.bf16.mxu0 0
  %614 = vmatpush1.bf16.xpose.msra.mxu0 0
  %615 = vmatprep.subr.bf16.mxu0 0
  %616 = vmatpush1.bf16.xpose.msra.mxu0 0
  %617 = vmatprep.subr.bf16.mxu0 0
  %618 = vmatpush1.bf16.xpose.msra.mxu0 0
  %619 = vmatprep.subr.bf16.mxu0 0
  %620 = vmatpush1.bf16.xpose.msra.mxu0 0
  %621 = vmatprep.subr.bf16.mxu0 0
  %622 = vmatpush1.bf16.xpose.msra.mxu0 0
  %623 = vmatprep.subr.bf16.mxu0 0
  %624 = vmatpush1.bf16.xpose.msra.mxu0 0
  %625 = vmatprep.subr.bf16.mxu0 0
  %626 = vmatpush1.bf16.xpose.msra.mxu0 0
  %627 = vmatprep.subr.bf16.mxu0 0
  %628 = vmatpush1.bf16.xpose.msra.mxu0 0
  %629 = vmatprep.subr.bf16.mxu0 0
  %630 = vmatpush1.bf16.xpose.msra.mxu0 0
  %631 = vmatprep.subr.bf16.mxu0 0
  %632 = vmatpush1.bf16.xpose.msra.mxu0 0
  %633 = vmatprep.mubr.bf16.mxu0 %v126
  %634 = vmatmul.mubr.bf16.gmra.mrb[0].mxu0 %v125
  %v635 = vpop.f32.mrb[0].mxu0
  %v636 = vadd.f32 %v596, %v635
  %v637 = vpop.f32.mrb[0].mxu0
  %v638 = vpop.f32.mrb[0].mxu0
  %v639 = vpop.f32.mrb[0].mxu0
  %640 = vdwg.mxu0
  %641 = vmatprep.subr.bf16.mxu0 %v128
  %642 = vmatpush1.bf16.xpose.msra.mxu0 %v127
  %643 = vmatprep.subr.bf16.mxu0 0
  %644 = vmatpush1.bf16.xpose.msra.mxu0 0
  %645 = vmatprep.subr.bf16.mxu0 0
  %646 = vmatpush1.bf16.xpose.msra.mxu0 0
  %647 = vmatprep.subr.bf16.mxu0 0
  %648 = vmatpush1.bf16.xpose.msra.mxu0 0
  %649 = vmatprep.subr.bf16.mxu0 0
  %650 = vmatpush1.bf16.xpose.msra.mxu0 0
  %651 = vmatprep.subr.bf16.mxu0 0
  %652 = vmatpush1.bf16.xpose.msra.mxu0 0
  %653 = vmatprep.subr.bf16.mxu0 0
  %654 = vmatpush1.bf16.xpose.msra.mxu0 0
  %655 = vmatprep.subr.bf16.mxu0 0
  %656 = vmatpush1.bf16.xpose.msra.mxu0 0
  %657 = vmatprep.subr.bf16.mxu0 0
  %658 = vmatpush1.bf16.xpose.msra.mxu0 0
  %659 = vmatprep.subr.bf16.mxu0 0
  %660 = vmatpush1.bf16.xpose.msra.mxu0 0
  %661 = vmatprep.subr.bf16.mxu0 0
  %662 = vmatpush1.bf16.xpose.msra.mxu0 0
  %663 = vmatprep.subr.bf16.mxu0 0
  %664 = vmatpush1.bf16.xpose.msra.mxu0 0
  %665 = vmatprep.subr.bf16.mxu0 0
  %666 = vmatpush1.bf16.xpose.msra.mxu0 0
  %667 = vmatprep.subr.bf16.mxu0 0
  %668 = vmatpush1.bf16.xpose.msra.mxu0 0
  %669 = vmatprep.subr.bf16.mxu0 0
  %670 = vmatpush1.bf16.xpose.msra.mxu0 0
  %671 = vmatprep.subr.bf16.mxu0 0
  %672 = vmatpush1.bf16.xpose.msra.mxu0 0
  %673 = vmatprep.mubr.bf16.mxu0 %v128
  %674 = vmatmul.mubr.bf16.gmra.mrb[0].mxu0 %v127
  %v675 = vpop.f32.mrb[0].mxu0
  %v676 = vadd.f32 %v636, %v675
  %v677 = vpop.f32.mrb[0].mxu0
  %v678 = vpop.f32.mrb[0].mxu0
  %v679 = vpop.f32.mrb[0].mxu0
  %680 = vdwg.mxu0
  %681 = vmatprep.subr.bf16.mxu0 %v130
  %682 = vmatpush1.bf16.xpose.msra.mxu0 %v129
  %683 = vmatprep.subr.bf16.mxu0 0
  %684 = vmatpush1.bf16.xpose.msra.mxu0 0
  %685 = vmatprep.subr.bf16.mxu0 0
  %686 = vmatpush1.bf16.xpose.msra.mxu0 0
  %687 = vmatprep.subr.bf16.mxu0 0
  %688 = vmatpush1.bf16.xpose.msra.mxu0 0
  %689 = vmatprep.subr.bf16.mxu0 0
  %690 = vmatpush1.bf16.xpose.msra.mxu0 0
  %691 = vmatprep.subr.bf16.mxu0 0
  %692 = vmatpush1.bf16.xpose.msra.mxu0 0
  %693 = vmatprep.subr.bf16.mxu0 0
  %694 = vmatpush1.bf16.xpose.msra.mxu0 0
  %695 = vmatprep.subr.bf16.mxu0 0
  %696 = vmatpush1.bf16.xpose.msra.mxu0 0
  %697 = vmatprep.subr.bf16.mxu0 0
  %698 = vmatpush1.bf16.xpose.msra.mxu0 0
  %699 = vmatprep.subr.bf16.mxu0 0
  %700 = vmatpush1.bf16.xpose.msra.mxu0 0
  %701 = vmatprep.subr.bf16.mxu0 0
  %702 = vmatpush1.bf16.xpose.msra.mxu0 0
  %703 = vmatprep.subr.bf16.mxu0 0
  %704 = vmatpush1.bf16.xpose.msra.mxu0 0
  %705 = vmatprep.subr.bf16.mxu0 0
  %706 = vmatpush1.bf16.xpose.msra.mxu0 0
  %707 = vmatprep.subr.bf16.mxu0 0
  %708 = vmatpush1.bf16.xpose.msra.mxu0 0
  %709 = vmatprep.subr.bf16.mxu0 0
  %710 = vmatpush1.bf16.xpose.msra.mxu0 0
  %711 = vmatprep.subr.bf16.mxu0 0
  %712 = vmatpush1.bf16.xpose.msra.mxu0 0
  %713 = vmatprep.mubr.bf16.mxu0 %v130
  %714 = vmatmul.mubr.bf16.gmra.mrb[0].mxu0 %v129
  %v715 = vpop.f32.mrb[0].mxu0
  %v716 = vadd.f32 %v676, %v715
  %v717 = vpop.f32.mrb[0].mxu0
  %v718 = vpop.f32.mrb[0].mxu0
  %v719 = vpop.f32.mrb[0].mxu0
  %720 = vdwg.mxu0
  %721 = vmatprep.subr.bf16.mxu0 %v132
  %722 = vmatpush1.bf16.xpose.msra.mxu0 %v131
  %723 = vmatprep.subr.bf16.mxu0 0
  %724 = vmatpush1.bf16.xpose.msra.mxu0 0
  %725 = vmatprep.subr.bf16.mxu0 0
  %726 = vmatpush1.bf16.xpose.msra.mxu0 0
  %727 = vmatprep.subr.bf16.mxu0 0
  %728 = vmatpush1.bf16.xpose.msra.mxu0 0
  %729 = vmatprep.subr.bf16.mxu0 0
  %730 = vmatpush1.bf16.xpose.msra.mxu0 0
  %731 = vmatprep.subr.bf16.mxu0 0
  %732 = vmatpush1.bf16.xpose.msra.mxu0 0
  %733 = vmatprep.subr.bf16.mxu0 0
  %734 = vmatpush1.bf16.xpose.msra.mxu0 0
  %735 = vmatprep.subr.bf16.mxu0 0
  %736 = vmatpush1.bf16.xpose.msra.mxu0 0
  %737 = vmatprep.subr.bf16.mxu0 0
  %738 = vmatpush1.bf16.xpose.msra.mxu0 0
  %739 = vmatprep.subr.bf16.mxu0 0
  %740 = vmatpush1.bf16.xpose.msra.mxu0 0
  %741 = vmatprep.subr.bf16.mxu0 0
  %742 = vmatpush1.bf16.xpose.msra.mxu0 0
  %743 = vmatprep.subr.bf16.mxu0 0
  %744 = vmatpush1.bf16.xpose.msra.mxu0 0
  %745 = vmatprep.subr.bf16.mxu0 0
  %746 = vmatpush1.bf16.xpose.msra.mxu0 0
  %747 = vmatprep.subr.bf16.mxu0 0
  %748 = vmatpush1.bf16.xpose.msra.mxu0 0
  %749 = vmatprep.subr.bf16.mxu0 0
  %750 = vmatpush1.bf16.xpose.msra.mxu0 0
  %751 = vmatprep.subr.bf16.mxu0 0
  %752 = vmatpush1.bf16.xpose.msra.mxu0 0
  %753 = vmatprep.mubr.bf16.mxu0 %v132
  %754 = vmatmul.mubr.bf16.gmra.mrb[0].mxu0 %v131
  %v755 = vpop.f32.mrb[0].mxu0
  %v756 = vadd.f32 %v716, %v755
  %v757 = vpop.f32.mrb[0].mxu0
  %v758 = vpop.f32.mrb[0].mxu0
  %v759 = vpop.f32.mrb[0].mxu0
  %760 = vdwg.mxu0
  %761 = vmatprep.subr.bf16.mxu0 %v134
  %762 = vmatpush1.bf16.xpose.msra.mxu0 %v133
  %763 = vmatprep.subr.bf16.mxu0 0
  %764 = vmatpush1.bf16.xpose.msra.mxu0 0
  %765 = vmatprep.subr.bf16.mxu0 0
  %766 = vmatpush1.bf16.xpose.msra.mxu0 0
  %767 = vmatprep.subr.bf16.mxu0 0
  %768 = vmatpush1.bf16.xpose.msra.mxu0 0
  %769 = vmatprep.subr.bf16.mxu0 0
  %770 = vmatpush1.bf16.xpose.msra.mxu0 0
  %771 = vmatprep.subr.bf16.mxu0 0
  %772 = vmatpush1.bf16.xpose.msra.mxu0 0
  %773 = vmatprep.subr.bf16.mxu0 0
  %774 = vmatpush1.bf16.xpose.msra.mxu0 0
  %775 = vmatprep.subr.bf16.mxu0 0
  %776 = vmatpush1.bf16.xpose.msra.mxu0 0
  %777 = vmatprep.subr.bf16.mxu0 0
  %778 = vmatpush1.bf16.xpose.msra.mxu0 0
  %779 = vmatprep.subr.bf16.mxu0 0
  %780 = vmatpush1.bf16.xpose.msra.mxu0 0
  %781 = vmatprep.subr.bf16.mxu0 0
  %782 = vmatpush1.bf16.xpose.msra.mxu0 0
  %783 = vmatprep.subr.bf16.mxu0 0
  %784 = vmatpush1.bf16.xpose.msra.mxu0 0
  %785 = vmatprep.subr.bf16.mxu0 0
  %786 = vmatpush1.bf16.xpose.msra.mxu0 0
  %787 = vmatprep.subr.bf16.mxu0 0
  %788 = vmatpush1.bf16.xpose.msra.mxu0 0
  %789 = vmatprep.subr.bf16.mxu0 0
  %790 = vmatpush1.bf16.xpose.msra.mxu0 0
  %791 = vmatprep.subr.bf16.mxu0 0
  %792 = vmatpush1.bf16.xpose.msra.mxu0 0
  %793 = vmatprep.mubr.bf16.mxu0 %v134
  %794 = vmatmul.mubr.bf16.gmra.mrb[0].mxu0 %v133
  %v795 = vpop.f32.mrb[0].mxu0
  %v796 = vadd.f32 %v756, %v795
  %v797 = vpop.f32.mrb[0].mxu0
  %v798 = vpop.f32.mrb[0].mxu0
  %v799 = vpop.f32.mrb[0].mxu0
  %800 = vdwg.mxu0
  %801 = vmatprep.subr.bf16.mxu0 %v136
  %802 = vmatpush1.bf16.xpose.msra.mxu0 %v135
  %803 = vmatprep.subr.bf16.mxu0 0
  %804 = vmatpush1.bf16.xpose.msra.mxu0 0
  %805 = vmatprep.subr.bf16.mxu0 0
  %806 = vmatpush1.bf16.xpose.msra.mxu0 0
  %807 = vmatprep.subr.bf16.mxu0 0
  %808 = vmatpush1.bf16.xpose.msra.mxu0 0
  %809 = vmatprep.subr.bf16.mxu0 0
  %810 = vmatpush1.bf16.xpose.msra.mxu0 0
  %811 = vmatprep.subr.bf16.mxu0 0
  %812 = vmatpush1.bf16.xpose.msra.mxu0 0
  %813 = vmatprep.subr.bf16.mxu0 0
  %814 = vmatpush1.bf16.xpose.msra.mxu0 0
  %815 = vmatprep.subr.bf16.mxu0 0
  %816 = vmatpush1.bf16.xpose.msra.mxu0 0
  %817 = vmatprep.subr.bf16.mxu0 0
  %818 = vmatpush1.bf16.xpose.msra.mxu0 0
  %819 = vmatprep.subr.bf16.mxu0 0
  %820 = vmatpush1.bf16.xpose.msra.mxu0 0
  %821 = vmatprep.subr.bf16.mxu0 0
  %822 = vmatpush1.bf16.xpose.msra.mxu0 0
  %823 = vmatprep.subr.bf16.mxu0 0
  %824 = vmatpush1.bf16.xpose.msra.mxu0 0
  %825 = vmatprep.subr.bf16.mxu0 0
  %826 = vmatpush1.bf16.xpose.msra.mxu0 0
  %827 = vmatprep.subr.bf16.mxu0 0
  %828 = vmatpush1.bf16.xpose.msra.mxu0 0
  %829 = vmatprep.subr.bf16.mxu0 0
  %830 = vmatpush1.bf16.xpose.msra.mxu0 0
  %831 = vmatprep.subr.bf16.mxu0 0
  %832 = vmatpush1.bf16.xpose.msra.mxu0 0
  %833 = vmatprep.mubr.bf16.mxu0 %v136
  %834 = vmatmul.mubr.bf16.gmra.mrb[0].mxu0 %v135
  %v835 = vpop.f32.mrb[0].mxu0
  %v836 = vadd.f32 %v796, %v835
  %v837 = vpop.f32.mrb[0].mxu0
  %v838 = vpop.f32.mrb[0].mxu0
  %v839 = vpop.f32.mrb[0].mxu0
  %840 = vdwg.mxu0
  %841 = vmatprep.subr.bf16.mxu0 %v138
  %842 = vmatpush1.bf16.xpose.msra.mxu0 %v137
  %843 = vmatprep.subr.bf16.mxu0 0
  %844 = vmatpush1.bf16.xpose.msra.mxu0 0
  %845 = vmatprep.subr.bf16.mxu0 0
  %846 = vmatpush1.bf16.xpose.msra.mxu0 0
  %847 = vmatprep.subr.bf16.mxu0 0
  %848 = vmatpush1.bf16.xpose.msra.mxu0 0
  %849 = vmatprep.subr.bf16.mxu0 0
  %850 = vmatpush1.bf16.xpose.msra.mxu0 0
  %851 = vmatprep.subr.bf16.mxu0 0
  %852 = vmatpush1.bf16.xpose.msra.mxu0 0
  %853 = vmatprep.subr.bf16.mxu0 0
  %854 = vmatpush1.bf16.xpose.msra.mxu0 0
  %855 = vmatprep.subr.bf16.mxu0 0
  %856 = vmatpush1.bf16.xpose.msra.mxu0 0
  %857 = vmatprep.subr.bf16.mxu0 0
  %858 = vmatpush1.bf16.xpose.msra.mxu0 0
  %859 = vmatprep.subr.bf16.mxu0 0
  %860 = vmatpush1.bf16.xpose.msra.mxu0 0
  %861 = vmatprep.subr.bf16.mxu0 0
  %862 = vmatpush1.bf16.xpose.msra.mxu0 0
  %863 = vmatprep.subr.bf16.mxu0 0
  %864 = vmatpush1.bf16.xpose.msra.mxu0 0
  %865 = vmatprep.subr.bf16.mxu0 0
  %866 = vmatpush1.bf16.xpose.msra.mxu0 0
  %867 = vmatprep.subr.bf16.mxu0 0
  %868 = vmatpush1.bf16.xpose.msra.mxu0 0
  %869 = vmatprep.subr.bf16.mxu0 0
  %870 = vmatpush1.bf16.xpose.msra.mxu0 0
  %871 = vmatprep.subr.bf16.mxu0 0
  %872 = vmatpush1.bf16.xpose.msra.mxu0 0
  %873 = vmatprep.mubr.bf16.mxu0 %v138
  %874 = vmatmul.mubr.bf16.gmra.mrb[0].mxu0 %v137
  %v875 = vpop.f32.mrb[0].mxu0
  %v876 = vadd.f32 %v836, %v875
  %v877 = vpop.f32.mrb[0].mxu0
  %v878 = vpop.f32.mrb[0].mxu0
  %v879 = vpop.f32.mrb[0].mxu0
  %880 = vdwg.mxu0
  %881 = vmatprep.subr.bf16.mxu0 %v140
  %882 = vmatpush1.bf16.xpose.msra.mxu0 %v139
  %883 = vmatprep.subr.bf16.mxu0 0
  %884 = vmatpush1.bf16.xpose.msra.mxu0 0
  %885 = vmatprep.subr.bf16.mxu0 0
  %886 = vmatpush1.bf16.xpose.msra.mxu0 0
  %887 = vmatprep.subr.bf16.mxu0 0
  %888 = vmatpush1.bf16.xpose.msra.mxu0 0
  %889 = vmatprep.subr.bf16.mxu0 0
  %890 = vmatpush1.bf16.xpose.msra.mxu0 0
  %891 = vmatprep.subr.bf16.mxu0 0
  %892 = vmatpush1.bf16.xpose.msra.mxu0 0
  %893 = vmatprep.subr.bf16.mxu0 0
  %894 = vmatpush1.bf16.xpose.msra.mxu0 0
  %895 = vmatprep.subr.bf16.mxu0 0
  %896 = vmatpush1.bf16.xpose.msra.mxu0 0
  %897 = vmatprep.subr.bf16.mxu0 0
  %898 = vmatpush1.bf16.xpose.msra.mxu0 0
  %899 = vmatprep.subr.bf16.mxu0 0
  %900 = vmatpush1.bf16.xpose.msra.mxu0 0
  %901 = vmatprep.subr.bf16.mxu0 0
  %902 = vmatpush1.bf16.xpose.msra.mxu0 0
  %903 = vmatprep.subr.bf16.mxu0 0
  %904 = vmatpush1.bf16.xpose.msra.mxu0 0
  %905 = vmatprep.subr.bf16.mxu0 0
  %906 = vmatpush1.bf16.xpose.msra.mxu0 0
  %907 = vmatprep.subr.bf16.mxu0 0
  %908 = vmatpush1.bf16.xpose.msra.mxu0 0
  %909 = vmatprep.subr.bf16.mxu0 0
  %910 = vmatpush1.bf16.xpose.msra.mxu0 0
  %911 = vmatprep.subr.bf16.mxu0 0
  %912 = vmatpush1.bf16.xpose.msra.mxu0 0
  %913 = vmatprep.mubr.bf16.mxu0 %v140
  %914 = vmatmul.mubr.bf16.gmra.mrb[0].mxu0 %v139
  %v915 = vpop.f32.mrb[0].mxu0
  %v916 = vadd.f32 %v876, %v915
  %v917 = vpop.f32.mrb[0].mxu0
  %v918 = vpop.f32.mrb[0].mxu0
  %v919 = vpop.f32.mrb[0].mxu0
  %920 = vdwg.mxu0
  %921 = vmatprep.subr.bf16.mxu0 %v142
  %922 = vmatpush1.bf16.xpose.msra.mxu0 %v141
  %923 = vmatprep.subr.bf16.mxu0 0
  %924 = vmatpush1.bf16.xpose.msra.mxu0 0
  %925 = vmatprep.subr.bf16.mxu0 0
  %926 = vmatpush1.bf16.xpose.msra.mxu0 0
  %927 = vmatprep.subr.bf16.mxu0 0
  %928 = vmatpush1.bf16.xpose.msra.mxu0 0
  %929 = vmatprep.subr.bf16.mxu0 0
  %930 = vmatpush1.bf16.xpose.msra.mxu0 0
  %931 = vmatprep.subr.bf16.mxu0 0
  %932 = vmatpush1.bf16.xpose.msra.mxu0 0
  %933 = vmatprep.subr.bf16.mxu0 0
  %934 = vmatpush1.bf16.xpose.msra.mxu0 0
  %935 = vmatprep.subr.bf16.mxu0 0
  %936 = vmatpush1.bf16.xpose.msra.mxu0 0
  %937 = vmatprep.subr.bf16.mxu0 0
  %938 = vmatpush1.bf16.xpose.msra.mxu0 0
  %939 = vmatprep.subr.bf16.mxu0 0
  %940 = vmatpush1.bf16.xpose.msra.mxu0 0
  %941 = vmatprep.subr.bf16.mxu0 0
  %942 = vmatpush1.bf16.xpose.msra.mxu0 0
  %943 = vmatprep.subr.bf16.mxu0 0
  %944 = vmatpush1.bf16.xpose.msra.mxu0 0
  %945 = vmatprep.subr.bf16.mxu0 0
  %946 = vmatpush1.bf16.xpose.msra.mxu0 0
  %947 = vmatprep.subr.bf16.mxu0 0
  %948 = vmatpush1.bf16.xpose.msra.mxu0 0
  %949 = vmatprep.subr.bf16.mxu0 0
  %950 = vmatpush1.bf16.xpose.msra.mxu0 0
  %951 = vmatprep.subr.bf16.mxu0 0
  %952 = vmatpush1.bf16.xpose.msra.mxu0 0
  %953 = vmatprep.mubr.bf16.mxu0 %v142
  %954 = vmatmul.mubr.bf16.gmra.mrb[0].mxu0 %v141
  %v955 = vpop.f32.mrb[0].mxu0
  %v956 = vadd.f32 %v916, %v955
  %v957 = vpop.f32.mrb[0].mxu0
  %v958 = vpop.f32.mrb[0].mxu0
  %v959 = vpop.f32.mrb[0].mxu0
  %960 = vdwg.mxu0
  %961 = vmatprep.subr.bf16.mxu0 %v144
  %962 = vmatpush1.bf16.xpose.msra.mxu0 %v143
  %963 = vmatprep.subr.bf16.mxu0 0
  %964 = vmatpush1.bf16.xpose.msra.mxu0 0
  %965 = vmatprep.subr.bf16.mxu0 0
  %966 = vmatpush1.bf16.xpose.msra.mxu0 0
  %967 = vmatprep.subr.bf16.mxu0 0
  %968 = vmatpush1.bf16.xpose.msra.mxu0 0
  %969 = vmatprep.subr.bf16.mxu0 0
  %970 = vmatpush1.bf16.xpose.msra.mxu0 0
  %971 = vmatprep.subr.bf16.mxu0 0
  %972 = vmatpush1.bf16.xpose.msra.mxu0 0
  %973 = vmatprep.subr.bf16.mxu0 0
  %974 = vmatpush1.bf16.xpose.msra.mxu0 0
  %975 = vmatprep.subr.bf16.mxu0 0
  %976 = vmatpush1.bf16.xpose.msra.mxu0 0
  %977 = vmatprep.subr.bf16.mxu0 0
  %978 = vmatpush1.bf16.xpose.msra.mxu0 0
  %979 = vmatprep.subr.bf16.mxu0 0
  %980 = vmatpush1.bf16.xpose.msra.mxu0 0
  %981 = vmatprep.subr.bf16.mxu0 0
  %982 = vmatpush1.bf16.xpose.msra.mxu0 0
  %983 = vmatprep.subr.bf16.mxu0 0
  %984 = vmatpush1.bf16.xpose.msra.mxu0 0
  %985 = vmatprep.subr.bf16.mxu0 0
  %986 = vmatpush1.bf16.xpose.msra.mxu0 0
  %987 = vmatprep.subr.bf16.mxu0 0
  %988 = vmatpush1.bf16.xpose.msra.mxu0 0
  %989 = vmatprep.subr.bf16.mxu0 0
  %990 = vmatpush1.bf16.xpose.msra.mxu0 0
  %991 = vmatprep.subr.bf16.mxu0 0
  %992 = vmatpush1.bf16.xpose.msra.mxu0 0
  %993 = vmatprep.mubr.bf16.mxu0 %v144
  %994 = vmatmul.mubr.bf16.gmra.mrb[0].mxu0 %v143
  %v995 = vpop.f32.mrb[0].mxu0
  %v996 = vadd.f32 %v956, %v995
  %v997 = vpop.f32.mrb[0].mxu0
  %v998 = vpop.f32.mrb[0].mxu0
  %v999 = vpop.f32.mrb[0].mxu0
  %1000 = vdwg.mxu0
  %1001 = vmatprep.subr.bf16.mxu0 %v146
  %1002 = vmatpush1.bf16.xpose.msra.mxu0 %v145
  %1003 = vmatprep.subr.bf16.mxu0 0
  %1004 = vmatpush1.bf16.xpose.msra.mxu0 0
  %1005 = vmatprep.subr.bf16.mxu0 0
  %1006 = vmatpush1.bf16.xpose.msra.mxu0 0
  %1007 = vmatprep.subr.bf16.mxu0 0
  %1008 = vmatpush1.bf16.xpose.msra.mxu0 0
  %1009 = vmatprep.subr.bf16.mxu0 0
  %1010 = vmatpush1.bf16.xpose.msra.mxu0 0
  %1011 = vmatprep.subr.bf16.mxu0 0
  %1012 = vmatpush1.bf16.xpose.msra.mxu0 0
  %1013 = vmatprep.subr.bf16.mxu0 0
  %1014 = vmatpush1.bf16.xpose.msra.mxu0 0
  %1015 = vmatprep.subr.bf16.mxu0 0
  %1016 = vmatpush1.bf16.xpose.msra.mxu0 0
  %1017 = vmatprep.subr.bf16.mxu0 0
  %1018 = vmatpush1.bf16.xpose.msra.mxu0 0
  %1019 = vmatprep.subr.bf16.mxu0 0
  %1020 = vmatpush1.bf16.xpose.msra.mxu0 0
  %1021 = vmatprep.subr.bf16.mxu0 0
  %1022 = vmatpush1.bf16.xpose.msra.mxu0 0
  %1023 = vmatprep.subr.bf16.mxu0 0
  %1024 = vmatpush1.bf16.xpose.msra.mxu0 0
  %1025 = vmatprep.subr.bf16.mxu0 0
  %1026 = vmatpush1.bf16.xpose.msra.mxu0 0
  %1027 = vmatprep.subr.bf16.mxu0 0
  %1028 = vmatpush1.bf16.xpose.msra.mxu0 0
  %1029 = vmatprep.subr.bf16.mxu0 0
  %1030 = vmatpush1.bf16.xpose.msra.mxu0 0
  %1031 = vmatprep.subr.bf16.mxu0 0
  %1032 = vmatpush1.bf16.xpose.msra.mxu0 0
  %1033 = vmatprep.mubr.bf16.mxu0 %v146
  %1034 = vmatmul.mubr.bf16.gmra.mrb[0].mxu0 %v145
  %v1035 = vpop.f32.mrb[0].mxu0
  %v1036 = vadd.f32 %v996, %v1035
  %v1037 = vpop.f32.mrb[0].mxu0
  %v1038 = vpop.f32.mrb[0].mxu0
  %v1039 = vpop.f32.mrb[0].mxu0
  %1040 = vdwg.mxu0
  %1041 = vmatprep.subr.bf16.mxu0 %v148
  %1042 = vmatpush1.bf16.xpose.msra.mxu0 %v147
  %1043 = vmatprep.subr.bf16.mxu0 0
  %1044 = vmatpush1.bf16.xpose.msra.mxu0 0
  %1045 = vmatprep.subr.bf16.mxu0 0
  %1046 = vmatpush1.bf16.xpose.msra.mxu0 0
  %1047 = vmatprep.subr.bf16.mxu0 0
  %1048 = vmatpush1.bf16.xpose.msra.mxu0 0
  %1049 = vmatprep.subr.bf16.mxu0 0
  %1050 = vmatpush1.bf16.xpose.msra.mxu0 0
  %1051 = vmatprep.subr.bf16.mxu0 0
  %1052 = vmatpush1.bf16.xpose.msra.mxu0 0
  %1053 = vmatprep.subr.bf16.mxu0 0
  %1054 = vmatpush1.bf16.xpose.msra.mxu0 0
  %1055 = vmatprep.subr.bf16.mxu0 0
  %1056 = vmatpush1.bf16.xpose.msra.mxu0 0
  %1057 = vmatprep.subr.bf16.mxu0 0
  %1058 = vmatpush1.bf16.xpose.msra.mxu0 0
  %1059 = vmatprep.subr.bf16.mxu0 0
  %1060 = vmatpush1.bf16.xpose.msra.mxu0 0
  %1061 = vmatprep.subr.bf16.mxu0 0
  %1062 = vmatpush1.bf16.xpose.msra.mxu0 0
  %1063 = vmatprep.subr.bf16.mxu0 0
  %1064 = vmatpush1.bf16.xpose.msra.mxu0 0
  %1065 = vmatprep.subr.bf16.mxu0 0
  %1066 = vmatpush1.bf16.xpose.msra.mxu0 0
  %1067 = vmatprep.subr.bf16.mxu0 0
  %1068 = vmatpush1.bf16.xpose.msra.mxu0 0
  %1069 = vmatprep.subr.bf16.mxu0 0
  %1070 = vmatpush1.bf16.xpose.msra.mxu0 0
  %1071 = vmatprep.subr.bf16.mxu0 0
  %1072 = vmatpush1.bf16.xpose.msra.mxu0 0
  %1073 = vmatprep.mubr.bf16.mxu0 %v148
  %1074 = vmatmul.mubr.bf16.gmra.mrb[0].mxu0 %v147
  %v1075 = vpop.f32.mrb[0].mxu0
  %v1076 = vadd.f32 %v1036, %v1075
  %v1077 = vpop.f32.mrb[0].mxu0
  %v1078 = vpop.f32.mrb[0].mxu0
  %v1079 = vpop.f32.mrb[0].mxu0
  %1080 = vdwg.mxu0
  %1081 = vmatprep.subr.bf16.mxu0 %v150
  %1082 = vmatpush1.bf16.xpose.msra.mxu0 %v149
  %1083 = vmatprep.subr.bf16.mxu0 0
  %1084 = vmatpush1.bf16.xpose.msra.mxu0 0
  %1085 = vmatprep.subr.bf16.mxu0 0
  %1086 = vmatpush1.bf16.xpose.msra.mxu0 0
  %1087 = vmatprep.subr.bf16.mxu0 0
  %1088 = vmatpush1.bf16.xpose.msra.mxu0 0
  %1089 = vmatprep.subr.bf16.mxu0 0
  %1090 = vmatpush1.bf16.xpose.msra.mxu0 0
  %1091 = vmatprep.subr.bf16.mxu0 0
  %1092 = vmatpush1.bf16.xpose.msra.mxu0 0
  %1093 = vmatprep.subr.bf16.mxu0 0
  %1094 = vmatpush1.bf16.xpose.msra.mxu0 0
  %1095 = vmatprep.subr.bf16.mxu0 0
  %1096 = vmatpush1.bf16.xpose.msra.mxu0 0
  %1097 = vmatprep.subr.bf16.mxu0 0
  %1098 = vmatpush1.bf16.xpose.msra.mxu0 0
  %1099 = vmatprep.subr.bf16.mxu0 0
  %1100 = vmatpush1.bf16.xpose.msra.mxu0 0
  %1101 = vmatprep.subr.bf16.mxu0 0
  %1102 = vmatpush1.bf16.xpose.msra.mxu0 0
  %1103 = vmatprep.subr.bf16.mxu0 0
  %1104 = vmatpush1.bf16.xpose.msra.mxu0 0
  %1105 = vmatprep.subr.bf16.mxu0 0
  %1106 = vmatpush1.bf16.xpose.msra.mxu0 0
  %1107 = vmatprep.subr.bf16.mxu0 0
  %1108 = vmatpush1.bf16.xpose.msra.mxu0 0
  %1109 = vmatprep.subr.bf16.mxu0 0
  %1110 = vmatpush1.bf16.xpose.msra.mxu0 0
  %1111 = vmatprep.subr.bf16.mxu0 0
  %1112 = vmatpush1.bf16.xpose.msra.mxu0 0
  %1113 = vmatprep.mubr.bf16.mxu0 %v150
  %1114 = vmatmul.mubr.bf16.gmra.mrb[0].mxu0 %v149
  %v1115 = vpop.f32.mrb[0].mxu0
  %v1116 = vadd.f32 %v1076, %v1115
  %v1117 = vpop.f32.mrb[0].mxu0
  %v1118 = vpop.f32.mrb[0].mxu0
  %v1119 = vpop.f32.mrb[0].mxu0
  %1120 = vdwg.mxu0
  %1121 = vmatprep.subr.bf16.mxu0 %v152
  %1122 = vmatpush1.bf16.xpose.msra.mxu0 %v151
  %1123 = vmatprep.subr.bf16.mxu0 0
  %1124 = vmatpush1.bf16.xpose.msra.mxu0 0
  %1125 = vmatprep.subr.bf16.mxu0 0
  %1126 = vmatpush1.bf16.xpose.msra.mxu0 0
  %1127 = vmatprep.subr.bf16.mxu0 0
  %1128 = vmatpush1.bf16.xpose.msra.mxu0 0
  %1129 = vmatprep.subr.bf16.mxu0 0
  %1130 = vmatpush1.bf16.xpose.msra.mxu0 0
  %1131 = vmatprep.subr.bf16.mxu0 0
  %1132 = vmatpush1.bf16.xpose.msra.mxu0 0
  %1133 = vmatprep.subr.bf16.mxu0 0
  %1134 = vmatpush1.bf16.xpose.msra.mxu0 0
  %1135 = vmatprep.subr.bf16.mxu0 0
  %1136 = vmatpush1.bf16.xpose.msra.mxu0 0
  %1137 = vmatprep.subr.bf16.mxu0 0
  %1138 = vmatpush1.bf16.xpose.msra.mxu0 0
  %1139 = vmatprep.subr.bf16.mxu0 0
  %1140 = vmatpush1.bf16.xpose.msra.mxu0 0
  %1141 = vmatprep.subr.bf16.mxu0 0
  %1142 = vmatpush1.bf16.xpose.msra.mxu0 0
  %1143 = vmatprep.subr.bf16.mxu0 0
  %1144 = vmatpush1.bf16.xpose.msra.mxu0 0
  %1145 = vmatprep.subr.bf16.mxu0 0
  %1146 = vmatpush1.bf16.xpose.msra.mxu0 0
  %1147 = vmatprep.subr.bf16.mxu0 0
  %1148 = vmatpush1.bf16.xpose.msra.mxu0 0
  %1149 = vmatprep.subr.bf16.mxu0 0
  %1150 = vmatpush1.bf16.xpose.msra.mxu0 0
  %1151 = vmatprep.subr.bf16.mxu0 0
  %1152 = vmatpush1.bf16.xpose.msra.mxu0 0
  %1153 = vmatprep.mubr.bf16.mxu0 %v152
  %1154 = vmatmul.mubr.bf16.gmra.mrb[0].mxu0 %v151
  %v1155 = vpop.f32.mrb[0].mxu0
  %v1156 = vadd.f32 %v1116, %v1155
  %v1157 = vpop.f32.mrb[0].mxu0
  %v1158 = vpop.f32.mrb[0].mxu0
  %v1159 = vpop.f32.mrb[0].mxu0
  %1160 = vdwg.mxu0
  %vm1161 = vcmask 36864
  %1162 = vst.msk [vmem:[%s1] sm:$0x1f] %vm1161, %v1156
  // Predicated region
  $region6: #{a_call__.9} parent=0 // pred_check
    _
  $region7: #{a_call__.9} parent=0 // pred_check_branch
    %1164 = sbr.rel (0) target = $region9
  $region8: #{a_call__.9} parent=0 // pred_region
    _
  $region9: #{a_call__.9} parent=0 // pred_fallthru
    _
  // Predicated region
  $region10: #{a_call__.9} parent=0 // pred_check
    _
  $region11: #{a_call__.9} parent=0 // pred_check_branch
    %1166 = sbr.rel (0) target = $region13
  $region12: #{a_call__.9} parent=0 // pred_region
    _
  $region13: #{a_call__.9} parent=0 // pred_fallthru
    _

// kernel: a_call__.10
$region0: #{a_call__.10}
  #allocation0 [shape = 'u32[]', space=smem, size = 0x4, offset = 0x4, fixed_abs, tag = 'smem constant byte address 0x4 - core index']
  #allocation1 [shape = 'u32[144,128]{1,0:T(1,128)}', space=vmem, size = 0x12000, scoped, tag = 'internal scratch']
  %s0 = inlined_call_operand.vmem [shape: bf16[5,6144], index: 0, kind: input, shape index: {}]
  %s1 = inlined_call_operand.vmem [shape: bf16[8,5], index: 1, kind: input, shape index: {}]
  %s2 = inlined_call_operand.vmem [shape: f32[8,1], index: 2, kind: input, shape index: {}]
  %s3 = inlined_call_operand.vmem [shape: f32[8,1], index: 3, kind: input, shape index: {}]
  %s4 = inlined_call_operand.vmem [shape: bf16[8,6144], index: 4, kind: output, shape index: {0}]
  %s5 = inlined_call_operand.vmem [shape: f32[1,8,8], index: 5, kind: output, shape index: {1}]
  %6 = xla_tuple %s4, %s5
  %s7 = sld [smem:[#allocation0]]
  $region34: #{a_call__.10} parent=0
    _
  %s9 = ssub.s32 1, %s7
  %s10 = scalar_select 0, %s9, %s7
  // Predicated region
  $region2: #{a_call__.10} parent=0 // pred_check
    _
  $region3: #{a_call__.10} parent=0 // pred_check_branch
    %12 = sbr.rel (0) target = $region5
  $region4: #{a_call__.10} parent=0 // pred_region
    _
  $region5: #{a_call__.10} parent=0 // pred_fallthru
    _
  // Predicated region
  $region6: #{a_call__.10} parent=0 // pred_check
    _
  $region7: #{a_call__.10} parent=0 // pred_check_branch
    %14 = sbr.rel (0) target = $region9
  $region8: #{a_call__.10} parent=0 // pred_region
    _
  $region9: #{a_call__.10} parent=0 // pred_fallthru
    _
  // Predicated region
  $region10: #{a_call__.10} parent=0 // pred_check
    _
  $region11: #{a_call__.10} parent=0 // pred_check_branch
    %16 = sbr.rel (0) target = $region13
  $region12: #{a_call__.10} parent=0 // pred_region
    _
  $region13: #{a_call__.10} parent=0 // pred_fallthru
    _
  // Predicated region
  $region14: #{a_call__.10} parent=0 // pred_check
    _
  $region15: #{a_call__.10} parent=0 // pred_check_branch
    %18 = sbr.rel (0) target = $region17
  $region16: #{a_call__.10} parent=0 // pred_region
    _
  $region17: #{a_call__.10} parent=0 // pred_fallthru
    _
  %v20 = vld [vmem:[%s1] sm:$0xf]
  %v21 = vld [vmem:[%s0] sm:$0x77]
  %v22 = vld [vmem:[%s0 + $0x8] sm:$0x77]
  %v23 = vld [vmem:[%s0 + $0x10] sm:$0x77]
  %v24 = vld [vmem:[%s0 + $0x18] sm:$0x77]
  %v25 = vld [vmem:[%s0 + $0x20] sm:$0x77]
  %v26 = vld [vmem:[%s0 + $0x28] sm:$0x77]
  %v27 = vld [vmem:[%s0 + $0x30] sm:$0x77]
  %v28 = vld [vmem:[%s0 + $0x38] sm:$0x77]
  %v29 = vld [vmem:[%s0 + $0x40] sm:$0x77]
  %v30 = vld [vmem:[%s0 + $0x48] sm:$0x77]
  %v31 = vld [vmem:[%s0 + $0x50] sm:$0x77]
  %v32 = vld [vmem:[%s0 + $0x58] sm:$0x77]
  %v33 = vld [vmem:[%s0 + $0x60] sm:$0x77]
  %v34 = vld [vmem:[%s0 + $0x68] sm:$0x77]
  %v35 = vld [vmem:[%s0 + $0x70] sm:$0x77]
  %v36 = vld [vmem:[%s0 + $0x78] sm:$0x77]
  %v37 = vld [vmem:[%s0 + $0x80] sm:$0x77]
  %v38 = vld [vmem:[%s0 + $0x88] sm:$0x77]
  %v39 = vld [vmem:[%s0 + $0x90] sm:$0x77]
  %v40 = vld [vmem:[%s0 + $0x98] sm:$0x77]
  %v41 = vld [vmem:[%s0 + $0xa0] sm:$0x77]
  %v42 = vld [vmem:[%s0 + $0xa8] sm:$0x77]
  %v43 = vld [vmem:[%s0 + $0xb0] sm:$0x77]
  %v44 = vld [vmem:[%s0 + $0xb8] sm:$0x77]
  %v69 = vunpack.c.l.b16 %v21
  %v70 = vunpack.c.h.b16 %v21
  %v71 = vunpack.c.l.b16 %v22
  %v72 = vunpack.c.h.b16 %v22
  %v73 = vunpack.c.l.b16 %v23
  %v74 = vunpack.c.h.b16 %v23
  %v75 = vunpack.c.l.b16 %v24
  %v76 = vunpack.c.h.b16 %v24
  %v77 = vunpack.c.l.b16 %v25
  %v78 = vunpack.c.h.b16 %v25
  %v79 = vunpack.c.l.b16 %v26
  %v80 = vunpack.c.h.b16 %v26
  %v81 = vunpack.c.l.b16 %v27
  %v82 = vunpack.c.h.b16 %v27
  %v83 = vunpack.c.l.b16 %v28
  %v84 = vunpack.c.h.b16 %v28
  %v85 = vunpack.c.l.b16 %v29
  %v86 = vunpack.c.h.b16 %v29
  %v87 = vunpack.c.l.b16 %v30
  %v88 = vunpack.c.h.b16 %v30
  %v89 = vunpack.c.l.b16 %v31
  %v90 = vunpack.c.h.b16 %v31
  %v91 = vunpack.c.l.b16 %v32
  %v92 = vunpack.c.h.b16 %v32
  %v93 = vunpack.c.l.b16 %v33
  %v94 = vunpack.c.h.b16 %v33
  %v95 = vunpack.c.l.b16 %v34
  %v96 = vunpack.c.h.b16 %v34
  %v97 = vunpack.c.l.b16 %v35
  %v98 = vunpack.c.h.b16 %v35
  %v99 = vunpack.c.l.b16 %v36
  %v100 = vunpack.c.h.b16 %v36
  %v101 = vunpack.c.l.b16 %v37
  %v102 = vunpack.c.h.b16 %v37
  %v103 = vunpack.c.l.b16 %v38
  %v104 = vunpack.c.h.b16 %v38
  %v105 = vunpack.c.l.b16 %v39
  %v106 = vunpack.c.h.b16 %v39
  %v107 = vunpack.c.l.b16 %v40
  %v108 = vunpack.c.h.b16 %v40
  %v109 = vunpack.c.l.b16 %v41
  %v110 = vunpack.c.h.b16 %v41
  %v111 = vunpack.c.l.b16 %v42
  %v112 = vunpack.c.h.b16 %v42
  %v113 = vunpack.c.l.b16 %v43
  %v114 = vunpack.c.h.b16 %v43
  %v115 = vunpack.c.l.b16 %v44
  %v116 = vunpack.c.h.b16 %v44
  %v117 = vpack.c.b16 %v69, %v69
  %v118 = vpack.c.b16 %v70, %v70
  %v119 = vpack.c.b16 %v71, %v71
  %v120 = vpack.c.b16 %v72, %v72
  %v121 = vpack.c.b16 %v73, %v73
  %v122 = vpack.c.b16 %v74, %v74
  %v123 = vpack.c.b16 %v75, %v75
  %v124 = vpack.c.b16 %v76, %v76
  %v125 = vpack.c.b16 %v77, %v77
  %v126 = vpack.c.b16 %v78, %v78
  %v127 = vpack.c.b16 %v79, %v79
  %v128 = vpack.c.b16 %v80, %v80
  %v129 = vpack.c.b16 %v81, %v81
  %v130 = vpack.c.b16 %v82, %v82
  %v131 = vpack.c.b16 %v83, %v83
  %v132 = vpack.c.b16 %v84, %v84
  %v133 = vpack.c.b16 %v85, %v85
  %v134 = vpack.c.b16 %v86, %v86
  %v135 = vpack.c.b16 %v87, %v87
  %v136 = vpack.c.b16 %v88, %v88
  %v137 = vpack.c.b16 %v89, %v89
  %v138 = vpack.c.b16 %v90, %v90
  %v139 = vpack.c.b16 %v91, %v91
  %v140 = vpack.c.b16 %v92, %v92
  %v141 = vpack.c.b16 %v93, %v93
  %v142 = vpack.c.b16 %v94, %v94
  %v143 = vpack.c.b16 %v95, %v95
  %v144 = vpack.c.b16 %v96, %v96
  %v145 = vpack.c.b16 %v97, %v97
  %v146 = vpack.c.b16 %v98, %v98
  %v147 = vpack.c.b16 %v99, %v99
  %v148 = vpack.c.b16 %v100, %v100
  %v149 = vpack.c.b16 %v101, %v101
  %v150 = vpack.c.b16 %v102, %v102
  %v151 = vpack.c.b16 %v103, %v103
  %v152 = vpack.c.b16 %v104, %v104
  %v153 = vpack.c.b16 %v105, %v105
  %v154 = vpack.c.b16 %v106, %v106
  %v155 = vpack.c.b16 %v107, %v107
  %v156 = vpack.c.b16 %v108, %v108
  %v157 = vpack.c.b16 %v109, %v109
  %v158 = vpack.c.b16 %v110, %v110
  %v159 = vpack.c.b16 %v111, %v111
  %v160 = vpack.c.b16 %v112, %v112
  %v161 = vpack.c.b16 %v113, %v113
  %v162 = vpack.c.b16 %v114, %v114
  %v163 = vpack.c.b16 %v115, %v115
  %v164 = vpack.c.b16 %v116, %v116
  %vm165 = vcmask 39936
  %v167 = vsel %vm165, %v20, 0
  %vm169 = vcmask 1041408
  %vm170 = vcmask 1042432
  %v171 = vsel %vm169, 4294967295, 65535
  %v172 = vsel %vm170, %v171, 0
  %v174 = vand.u32 %v117, %v172
  %v177 = vand.u32 %v118, %v172
  %v180 = vand.u32 %v119, %v172
  %v183 = vand.u32 %v120, %v172
  %v186 = vand.u32 %v121, %v172
  %v189 = vand.u32 %v122, %v172
  %v192 = vand.u32 %v123, %v172
  %v195 = vand.u32 %v124, %v172
  %v198 = vand.u32 %v125, %v172
  %v201 = vand.u32 %v126, %v172
  %v204 = vand.u32 %v127, %v172
  %v207 = vand.u32 %v128, %v172
  %v210 = vand.u32 %v129, %v172
  %v213 = vand.u32 %v130, %v172
  %v216 = vand.u32 %v131, %v172
  %v219 = vand.u32 %v132, %v172
  %v222 = vand.u32 %v133, %v172
  %v225 = vand.u32 %v134, %v172
  %v228 = vand.u32 %v135, %v172
  %v231 = vand.u32 %v136, %v172
  %v234 = vand.u32 %v137, %v172
  %v237 = vand.u32 %v138, %v172
  %v240 = vand.u32 %v139, %v172
  %v243 = vand.u32 %v140, %v172
  %v246 = vand.u32 %v141, %v172
  %v249 = vand.u32 %v142, %v172
  %v252 = vand.u32 %v143, %v172
  %v255 = vand.u32 %v144, %v172
  %v258 = vand.u32 %v145, %v172
  %v261 = vand.u32 %v146, %v172
  %v264 = vand.u32 %v147, %v172
  %v267 = vand.u32 %v148, %v172
  %v270 = vand.u32 %v149, %v172
  %v273 = vand.u32 %v150, %v172
  %v276 = vand.u32 %v151, %v172
  %v279 = vand.u32 %v152, %v172
  %v282 = vand.u32 %v153, %v172
  %v285 = vand.u32 %v154, %v172
  %v288 = vand.u32 %v155, %v172
  %v291 = vand.u32 %v156, %v172
  %v294 = vand.u32 %v157, %v172
  %v297 = vand.u32 %v158, %v172
  %v300 = vand.u32 %v159, %v172
  %v303 = vand.u32 %v160, %v172
  %v306 = vand.u32 %v161, %v172
  %v309 = vand.u32 %v162, %v172
  %v312 = vand.u32 %v163, %v172
  %v315 = vand.u32 %v164, %v172
  %317 = vmatprep.subr.bf16.mxu0 %v177
  %318 = vmatpush1.bf16.msra.mxu0 %v174
  %319 = vmatprep.subr.bf16.mxu0 0
  %320 = vmatpush1.bf16.msra.mxu0 0
  %321 = vmatprep.subr.bf16.mxu0 0
  %322 = vmatpush1.bf16.msra.mxu0 0
  %323 = vmatprep.subr.bf16.mxu0 0
  %324 = vmatpush1.bf16.msra.mxu0 0
  %325 = vmatprep.subr.bf16.mxu0 0
  %326 = vmatpush1.bf16.msra.mxu0 0
  %327 = vmatprep.subr.bf16.mxu0 0
  %328 = vmatpush1.bf16.msra.mxu0 0
  %329 = vmatprep.subr.bf16.mxu0 0
  %330 = vmatpush1.bf16.msra.mxu0 0
  %331 = vmatprep.subr.bf16.mxu0 0
  %332 = vmatpush1.bf16.msra.mxu0 0
  %333 = vmatprep.subr.bf16.mxu0 0
  %334 = vmatpush1.bf16.msra.mxu0 0
  %335 = vmatprep.subr.bf16.mxu0 0
  %336 = vmatpush1.bf16.msra.mxu0 0
  %337 = vmatprep.subr.bf16.mxu0 0
  %338 = vmatpush1.bf16.msra.mxu0 0
  %339 = vmatprep.subr.bf16.mxu0 0
  %340 = vmatpush1.bf16.msra.mxu0 0
  %341 = vmatprep.subr.bf16.mxu0 0
  %342 = vmatpush1.bf16.msra.mxu0 0
  %343 = vmatprep.subr.bf16.mxu0 0
  %344 = vmatpush1.bf16.msra.mxu0 0
  %345 = vmatprep.subr.bf16.mxu0 0
  %346 = vmatpush1.bf16.msra.mxu0 0
  %347 = vmatprep.subr.bf16.mxu0 0
  %348 = vmatpush1.bf16.msra.mxu0 0
  %349 = vmatprep.mubr.bf16.mxu0 0
  %350 = vmatmul.mubr.bf16.gmra.mrb[0].mxu0 %v167
  %v351 = vpop.f32.mrb[0].mxu0
  %v352 = vadd.f32 0.0, %v351
  %v353 = vpop.f32.mrb[0].mxu0
  %v354 = vadd.f32 0.0, %v353
  %v355 = vpop.f32.mrb[0].mxu0
  %v356 = vpop.f32.mrb[0].mxu0
  %357 = vdwg.mxu0
  %358 = vmatprep.subr.bf16.mxu0 %v183
  %359 = vmatpush1.bf16.msra.mxu0 %v180
  %360 = vmatprep.subr.bf16.mxu0 0
  %361 = vmatpush1.bf16.msra.mxu0 0
  %362 = vmatprep.subr.bf16.mxu0 0
  %363 = vmatpush1.bf16.msra.mxu0 0
  %364 = vmatprep.subr.bf16.mxu0 0
  %365 = vmatpush1.bf16.msra.mxu0 0
  %366 = vmatprep.subr.bf16.mxu0 0
  %367 = vmatpush1.bf16.msra.mxu0 0
  %368 = vmatprep.subr.bf16.mxu0 0
  %369 = vmatpush1.bf16.msra.mxu0 0
  %370 = vmatprep.subr.bf16.mxu0 0
  %371 = vmatpush1.bf16.msra.mxu0 0
  %372 = vmatprep.subr.bf16.mxu0 0
  %373 = vmatpush1.bf16.msra.mxu0 0
  %374 = vmatprep.subr.bf16.mxu0 0
  %375 = vmatpush1.bf16.msra.mxu0 0
  %376 = vmatprep.subr.bf16.mxu0 0
  %377 = vmatpush1.bf16.msra.mxu0 0
  %378 = vmatprep.subr.bf16.mxu0 0
  %379 = vmatpush1.bf16.msra.mxu0 0
  %380 = vmatprep.subr.bf16.mxu0 0
  %381 = vmatpush1.bf16.msra.mxu0 0
  %382 = vmatprep.subr.bf16.mxu0 0
  %383 = vmatpush1.bf16.msra.mxu0 0
  %384 = vmatprep.subr.bf16.mxu0 0
  %385 = vmatpush1.bf16.msra.mxu0 0
  %386 = vmatprep.subr.bf16.mxu0 0
  %387 = vmatpush1.bf16.msra.mxu0 0
  %388 = vmatprep.subr.bf16.mxu0 0
  %389 = vmatpush1.bf16.msra.mxu0 0
  %390 = vmatprep.mubr.bf16.mxu0 0
  %391 = vmatmul.mubr.bf16.gmra.mrb[0].mxu0 %v167
  %v392 = vpop.f32.mrb[0].mxu0
  %v393 = vadd.f32 0.0, %v392
  %v394 = vpop.f32.mrb[0].mxu0
  %v395 = vadd.f32 0.0, %v394
  %v396 = vpop.f32.mrb[0].mxu0
  %v397 = vpop.f32.mrb[0].mxu0
  %398 = vdwg.mxu0
  %399 = vmatprep.subr.bf16.mxu0 %v189
  %400 = vmatpush1.bf16.msra.mxu0 %v186
  %401 = vmatprep.subr.bf16.mxu0 0
  %402 = vmatpush1.bf16.msra.mxu0 0
  %403 = vmatprep.subr.bf16.mxu0 0
  %404 = vmatpush1.bf16.msra.mxu0 0
  %405 = vmatprep.subr.bf16.mxu0 0
  %406 = vmatpush1.bf16.msra.mxu0 0
  %407 = vmatprep.subr.bf16.mxu0 0
  %408 = vmatpush1.bf16.msra.mxu0 0
  %409 = vmatprep.subr.bf16.mxu0 0
  %410 = vmatpush1.bf16.msra.mxu0 0
  %411 = vmatprep.subr.bf16.mxu0 0
  %412 = vmatpush1.bf16.msra.mxu0 0
  %413 = vmatprep.subr.bf16.mxu0 0
  %414 = vmatpush1.bf16.msra.mxu0 0
  %415 = vmatprep.subr.bf16.mxu0 0
  %416 = vmatpush1.bf16.msra.mxu0 0
  %417 = vmatprep.subr.bf16.mxu0 0
  %418 = vmatpush1.bf16.msra.mxu0 0
  %419 = vmatprep.subr.bf16.mxu0 0
  %420 = vmatpush1.bf16.msra.mxu0 0
  %421 = vmatprep.subr.bf16.mxu0 0
  %422 = vmatpush1.bf16.msra.mxu0 0
  %423 = vmatprep.subr.bf16.mxu0 0
  %424 = vmatpush1.bf16.msra.mxu0 0
  %425 = vmatprep.subr.bf16.mxu0 0
  %426 = vmatpush1.bf16.msra.mxu0 0
  %427 = vmatprep.subr.bf16.mxu0 0
  %428 = vmatpush1.bf16.msra.mxu0 0
  %429 = vmatprep.subr.bf16.mxu0 0
  %430 = vmatpush1.bf16.msra.mxu0 0
  %431 = vmatprep.mubr.bf16.mxu0 0
  %432 = vmatmul.mubr.bf16.gmra.mrb[0].mxu0 %v167
  %v433 = vpop.f32.mrb[0].mxu0
  %v434 = vadd.f32 0.0, %v433
  %v435 = vpop.f32.mrb[0].mxu0
  %v436 = vadd.f32 0.0, %v435
  %v437 = vpop.f32.mrb[0].mxu0
  %v438 = vpop.f32.mrb[0].mxu0
  %439 = vdwg.mxu0
  %440 = vmatprep.subr.bf16.mxu0 %v195
  %441 = vmatpush1.bf16.msra.mxu0 %v192
  %442 = vmatprep.subr.bf16.mxu0 0
  %443 = vmatpush1.bf16.msra.mxu0 0
  %444 = vmatprep.subr.bf16.mxu0 0
  %445 = vmatpush1.bf16.msra.mxu0 0
  %446 = vmatprep.subr.bf16.mxu0 0
  %447 = vmatpush1.bf16.msra.mxu0 0
  %448 = vmatprep.subr.bf16.mxu0 0
  %449 = vmatpush1.bf16.msra.mxu0 0
  %450 = vmatprep.subr.bf16.mxu0 0
  %451 = vmatpush1.bf16.msra.mxu0 0
  %452 = vmatprep.subr.bf16.mxu0 0
  %453 = vmatpush1.bf16.msra.mxu0 0
  %454 = vmatprep.subr.bf16.mxu0 0
  %455 = vmatpush1.bf16.msra.mxu0 0
  %456 = vmatprep.subr.bf16.mxu0 0
  %457 = vmatpush1.bf16.msra.mxu0 0
  %458 = vmatprep.subr.bf16.mxu0 0
  %459 = vmatpush1.bf16.msra.mxu0 0
  %460 = vmatprep.subr.bf16.mxu0 0
  %461 = vmatpush1.bf16.msra.mxu0 0
  %462 = vmatprep.subr.bf16.mxu0 0
  %463 = vmatpush1.bf16.msra.mxu0 0
  %464 = vmatprep.subr.bf16.mxu0 0
  %465 = vmatpush1.bf16.msra.mxu0 0
  %466 = vmatprep.subr.bf16.mxu0 0
  %467 = vmatpush1.bf16.msra.mxu0 0
  %468 = vmatprep.subr.bf16.mxu0 0
  %469 = vmatpush1.bf16.msra.mxu0 0
  %470 = vmatprep.subr.bf16.mxu0 0
  %471 = vmatpush1.bf16.msra.mxu0 0
  %472 = vmatprep.mubr.bf16.mxu0 0
  %473 = vmatmul.mubr.bf16.gmra.mrb[0].mxu0 %v167
  %v474 = vpop.f32.mrb[0].mxu0
  %v475 = vadd.f32 0.0, %v474
  %v476 = vpop.f32.mrb[0].mxu0
  %v477 = vadd.f32 0.0, %v476
  %v478 = vpop.f32.mrb[0].mxu0
  %v479 = vpop.f32.mrb[0].mxu0
  %480 = vdwg.mxu0
  %481 = vmatprep.subr.bf16.mxu0 %v201
  %482 = vmatpush1.bf16.msra.mxu0 %v198
  %483 = vmatprep.subr.bf16.mxu0 0
  %484 = vmatpush1.bf16.msra.mxu0 0
  %485 = vmatprep.subr.bf16.mxu0 0
  %486 = vmatpush1.bf16.msra.mxu0 0
  %487 = vmatprep.subr.bf16.mxu0 0
  %488 = vmatpush1.bf16.msra.mxu0 0
  %489 = vmatprep.subr.bf16.mxu0 0
  %490 = vmatpush1.bf16.msra.mxu0 0
  %491 = vmatprep.subr.bf16.mxu0 0
  %492 = vmatpush1.bf16.msra.mxu0 0
  %493 = vmatprep.subr.bf16.mxu0 0
  %494 = vmatpush1.bf16.msra.mxu0 0
  %495 = vmatprep.subr.bf16.mxu0 0
  %496 = vmatpush1.bf16.msra.mxu0 0
  %497 = vmatprep.subr.bf16.mxu0 0
  %498 = vmatpush1.bf16.msra.mxu0 0
  %499 = vmatprep.subr.bf16.mxu0 0
  %500 = vmatpush1.bf16.msra.mxu0 0
  %501 = vmatprep.subr.bf16.mxu0 0
  %502 = vmatpush1.bf16.msra.mxu0 0
  %503 = vmatprep.subr.bf16.mxu0 0
  %504 = vmatpush1.bf16.msra.mxu0 0
  %505 = vmatprep.subr.bf16.mxu0 0
  %506 = vmatpush1.bf16.msra.mxu0 0
  %507 = vmatprep.subr.bf16.mxu0 0
  %508 = vmatpush1.bf16.msra.mxu0 0
  %509 = vmatprep.subr.bf16.mxu0 0
  %510 = vmatpush1.bf16.msra.mxu0 0
  %511 = vmatprep.subr.bf16.mxu0 0
  %512 = vmatpush1.bf16.msra.mxu0 0
  %513 = vmatprep.mubr.bf16.mxu0 0
  %514 = vmatmul.mubr.bf16.gmra.mrb[0].mxu0 %v167
  %v515 = vpop.f32.mrb[0].mxu0
  %v516 = vadd.f32 0.0, %v515
  %v517 = vpop.f32.mrb[0].mxu0
  %v518 = vadd.f32 0.0, %v517
  %v519 = vpop.f32.mrb[0].mxu0
  %v520 = vpop.f32.mrb[0].mxu0
  %521 = vdwg.mxu0
  %522 = vmatprep.subr.bf16.mxu0 %v207
  %523 = vmatpush1.bf16.msra.mxu0 %v204
  %524 = vmatprep.subr.bf16.mxu0 0
  %525 = vmatpush1.bf16.msra.mxu0 0
  %526 = vmatprep.subr.bf16.mxu0 0
  %527 = vmatpush1.bf16.msra.mxu0 0
  %528 = vmatprep.subr.bf16.mxu0 0
  %529 = vmatpush1.bf16.msra.mxu0 0
  %530 = vmatprep.subr.bf16.mxu0 0
  %531 = vmatpush1.bf16.msra.mxu0 0
  %532 = vmatprep.subr.bf16.mxu0 0
  %533 = vmatpush1.bf16.msra.mxu0 0
  %534 = vmatprep.subr.bf16.mxu0 0
  %535 = vmatpush1.bf16.msra.mxu0 0
  %536 = vmatprep.subr.bf16.mxu0 0
  %537 = vmatpush1.bf16.msra.mxu0 0
  %538 = vmatprep.subr.bf16.mxu0 0
  %539 = vmatpush1.bf16.msra.mxu0 0
  %540 = vmatprep.subr.bf16.mxu0 0
  %541 = vmatpush1.bf16.msra.mxu0 0
  %542 = vmatprep.subr.bf16.mxu0 0
  %543 = vmatpush1.bf16.msra.mxu0 0
  %544 = vmatprep.subr.bf16.mxu0 0
  %545 = vmatpush1.bf16.msra.mxu0 0
  %546 = vmatprep.subr.bf16.mxu0 0
  %547 = vmatpush1.bf16.msra.mxu0 0
  %548 = vmatprep.subr.bf16.mxu0 0
  %549 = vmatpush1.bf16.msra.mxu0 0
  %550 = vmatprep.subr.bf16.mxu0 0
  %551 = vmatpush1.bf16.msra.mxu0 0
  %552 = vmatprep.subr.bf16.mxu0 0
  %553 = vmatpush1.bf16.msra.mxu0 0
  %554 = vmatprep.mubr.bf16.mxu0 0
  %555 = vmatmul.mubr.bf16.gmra.mrb[0].mxu0 %v167
  %v556 = vpop.f32.mrb[0].mxu0
  %v557 = vadd.f32 0.0, %v556
  %v558 = vpop.f32.mrb[0].mxu0
  %v559 = vadd.f32 0.0, %v558
  %v560 = vpop.f32.mrb[0].mxu0
  %v561 = vpop.f32.mrb[0].mxu0
  %562 = vdwg.mxu0
  %563 = vmatprep.subr.bf16.mxu0 %v213
  %564 = vmatpush1.bf16.msra.mxu0 %v210
  %565 = vmatprep.subr.bf16.mxu0 0
  %566 = vmatpush1.bf16.msra.mxu0 0
  %567 = vmatprep.subr.bf16.mxu0 0
  %568 = vmatpush1.bf16.msra.mxu0 0
  %569 = vmatprep.subr.bf16.mxu0 0
  %570 = vmatpush1.bf16.msra.mxu0 0
  %571 = vmatprep.subr.bf16.mxu0 0
  %572 = vmatpush1.bf16.msra.mxu0 0
  %573 = vmatprep.subr.bf16.mxu0 0
  %574 = vmatpush1.bf16.msra.mxu0 0
  %575 = vmatprep.subr.bf16.mxu0 0
  %576 = vmatpush1.bf16.msra.mxu0 0
  %577 = vmatprep.subr.bf16.mxu0 0
  %578 = vmatpush1.bf16.msra.mxu0 0
  %579 = vmatprep.subr.bf16.mxu0 0
  %580 = vmatpush1.bf16.msra.mxu0 0
  %581 = vmatprep.subr.bf16.mxu0 0
  %582 = vmatpush1.bf16.msra.mxu0 0
  %583 = vmatprep.subr.bf16.mxu0 0
  %584 = vmatpush1.bf16.msra.mxu0 0
  %585 = vmatprep.subr.bf16.mxu0 0
  %586 = vmatpush1.bf16.msra.mxu0 0
  %587 = vmatprep.subr.bf16.mxu0 0
  %588 = vmatpush1.bf16.msra.mxu0 0
  %589 = vmatprep.subr.bf16.mxu0 0
  %590 = vmatpush1.bf16.msra.mxu0 0
  %591 = vmatprep.subr.bf16.mxu0 0
  %592 = vmatpush1.bf16.msra.mxu0 0
  %593 = vmatprep.subr.bf16.mxu0 0
  %594 = vmatpush1.bf16.msra.mxu0 0
  %595 = vmatprep.mubr.bf16.mxu0 0
  %596 = vmatmul.mubr.bf16.gmra.mrb[0].mxu0 %v167
  %v597 = vpop.f32.mrb[0].mxu0
  %v598 = vadd.f32 0.0, %v597
  %v599 = vpop.f32.mrb[0].mxu0
  %v600 = vadd.f32 0.0, %v599
  %v601 = vpop.f32.mrb[0].mxu0
  %v602 = vpop.f32.mrb[0].mxu0
  %603 = vdwg.mxu0
  %604 = vmatprep.subr.bf16.mxu0 %v219
  %605 = vmatpush1.bf16.msra.mxu0 %v216
  %606 = vmatprep.subr.bf16.mxu0 0
  %607 = vmatpush1.bf16.msra.mxu0 0
  %608 = vmatprep.subr.bf16.mxu0 0
  %609 = vmatpush1.bf16.msra.mxu0 0
  %610 = vmatprep.subr.bf16.mxu0 0
  %611 = vmatpush1.bf16.msra.mxu0 0
  %612 = vmatprep.subr.bf16.mxu0 0
  %613 = vmatpush1.bf16.msra.mxu0 0
  %614 = vmatprep.subr.bf16.mxu0 0
  %615 = vmatpush1.bf16.msra.mxu0 0
  %616 = vmatprep.subr.bf16.mxu0 0
  %617 = vmatpush1.bf16.msra.mxu0 0
  %618 = vmatprep.subr.bf16.mxu0 0
  %619 = vmatpush1.bf16.msra.mxu0 0
  %620 = vmatprep.subr.bf16.mxu0 0
  %621 = vmatpush1.bf16.msra.mxu0 0
  %622 = vmatprep.subr.bf16.mxu0 0
  %623 = vmatpush1.bf16.msra.mxu0 0
  %624 = vmatprep.subr.bf16.mxu0 0
  %625 = vmatpush1.bf16.msra.mxu0 0
  %626 = vmatprep.subr.bf16.mxu0 0
  %627 = vmatpush1.bf16.msra.mxu0 0
  %628 = vmatprep.subr.bf16.mxu0 0
  %629 = vmatpush1.bf16.msra.mxu0 0
  %630 = vmatprep.subr.bf16.mxu0 0
  %631 = vmatpush1.bf16.msra.mxu0 0
  %632 = vmatprep.subr.bf16.mxu0 0
  %633 = vmatpush1.bf16.msra.mxu0 0
  %634 = vmatprep.subr.bf16.mxu0 0
  %635 = vmatpush1.bf16.msra.mxu0 0
  %636 = vmatprep.mubr.bf16.mxu0 0
  %637 = vmatmul.mubr.bf16.gmra.mrb[0].mxu0 %v167
  %v638 = vpop.f32.mrb[0].mxu0
  %v639 = vadd.f32 0.0, %v638
  %v640 = vpop.f32.mrb[0].mxu0
  %v641 = vadd.f32 0.0, %v640
  %v642 = vpop.f32.mrb[0].mxu0
  %v643 = vpop.f32.mrb[0].mxu0
  %644 = vdwg.mxu0
  %645 = vmatprep.subr.bf16.mxu0 %v225
  %646 = vmatpush1.bf16.msra.mxu0 %v222
  %647 = vmatprep.subr.bf16.mxu0 0
  %648 = vmatpush1.bf16.msra.mxu0 0
  %649 = vmatprep.subr.bf16.mxu0 0
  %650 = vmatpush1.bf16.msra.mxu0 0
  %651 = vmatprep.subr.bf16.mxu0 0
  %652 = vmatpush1.bf16.msra.mxu0 0
  %653 = vmatprep.subr.bf16.mxu0 0
  %654 = vmatpush1.bf16.msra.mxu0 0
  %655 = vmatprep.subr.bf16.mxu0 0
  %656 = vmatpush1.bf16.msra.mxu0 0
  %657 = vmatprep.subr.bf16.mxu0 0
  %658 = vmatpush1.bf16.msra.mxu0 0
  %659 = vmatprep.subr.bf16.mxu0 0
  %660 = vmatpush1.bf16.msra.mxu0 0
  %661 = vmatprep.subr.bf16.mxu0 0
  %662 = vmatpush1.bf16.msra.mxu0 0
  %663 = vmatprep.subr.bf16.mxu0 0
  %664 = vmatpush1.bf16.msra.mxu0 0
  %665 = vmatprep.subr.bf16.mxu0 0
  %666 = vmatpush1.bf16.msra.mxu0 0
  %667 = vmatprep.subr.bf16.mxu0 0
  %668 = vmatpush1.bf16.msra.mxu0 0
  %669 = vmatprep.subr.bf16.mxu0 0
  %670 = vmatpush1.bf16.msra.mxu0 0
  %671 = vmatprep.subr.bf16.mxu0 0
  %672 = vmatpush1.bf16.msra.mxu0 0
  %673 = vmatprep.subr.bf16.mxu0 0
  %674 = vmatpush1.bf16.msra.mxu0 0
  %675 = vmatprep.subr.bf16.mxu0 0
  %676 = vmatpush1.bf16.msra.mxu0 0
  %677 = vmatprep.mubr.bf16.mxu0 0
  %678 = vmatmul.mubr.bf16.gmra.mrb[0].mxu0 %v167
  %v679 = vpop.f32.mrb[0].mxu0
  %v680 = vadd.f32 0.0, %v679
  %v681 = vpop.f32.mrb[0].mxu0
  %v682 = vadd.f32 0.0, %v681
  %v683 = vpop.f32.mrb[0].mxu0
  %v684 = vpop.f32.mrb[0].mxu0
  %685 = vdwg.mxu0
  %686 = vmatprep.subr.bf16.mxu0 %v231
  %687 = vmatpush1.bf16.msra.mxu0 %v228
  %688 = vmatprep.subr.bf16.mxu0 0
  %689 = vmatpush1.bf16.msra.mxu0 0
  %690 = vmatprep.subr.bf16.mxu0 0
  %691 = vmatpush1.bf16.msra.mxu0 0
  %692 = vmatprep.subr.bf16.mxu0 0
  %693 = vmatpush1.bf16.msra.mxu0 0
  %694 = vmatprep.subr.bf16.mxu0 0
  %695 = vmatpush1.bf16.msra.mxu0 0
  %696 = vmatprep.subr.bf16.mxu0 0
  %697 = vmatpush1.bf16.msra.mxu0 0
  %698 = vmatprep.subr.bf16.mxu0 0
  %699 = vmatpush1.bf16.msra.mxu0 0
  %700 = vmatprep.subr.bf16.mxu0 0
  %701 = vmatpush1.bf16.msra.mxu0 0
  %702 = vmatprep.subr.bf16.mxu0 0
  %703 = vmatpush1.bf16.msra.mxu0 0
  %704 = vmatprep.subr.bf16.mxu0 0
  %705 = vmatpush1.bf16.msra.mxu0 0
  %706 = vmatprep.subr.bf16.mxu0 0
  %707 = vmatpush1.bf16.msra.mxu0 0
  %708 = vmatprep.subr.bf16.mxu0 0
  %709 = vmatpush1.bf16.msra.mxu0 0
  %710 = vmatprep.subr.bf16.mxu0 0
  %711 = vmatpush1.bf16.msra.mxu0 0
  %712 = vmatprep.subr.bf16.mxu0 0
  %713 = vmatpush1.bf16.msra.mxu0 0
  %714 = vmatprep.subr.bf16.mxu0 0
  %715 = vmatpush1.bf16.msra.mxu0 0
  %716 = vmatprep.subr.bf16.mxu0 0
  %717 = vmatpush1.bf16.msra.mxu0 0
  %718 = vmatprep.mubr.bf16.mxu0 0
  %719 = vmatmul.mubr.bf16.gmra.mrb[0].mxu0 %v167
  %v720 = vpop.f32.mrb[0].mxu0
  %v721 = vadd.f32 0.0, %v720
  %v722 = vpop.f32.mrb[0].mxu0
  %v723 = vadd.f32 0.0, %v722
  %v724 = vpop.f32.mrb[0].mxu0
  %v725 = vpop.f32.mrb[0].mxu0
  %726 = vdwg.mxu0
  %727 = vmatprep.subr.bf16.mxu0 %v237
  %728 = vmatpush1.bf16.msra.mxu0 %v234
  %729 = vmatprep.subr.bf16.mxu0 0
  %730 = vmatpush1.bf16.msra.mxu0 0
  %731 = vmatprep.subr.bf16.mxu0 0
  %732 = vmatpush1.bf16.msra.mxu0 0
  %733 = vmatprep.subr.bf16.mxu0 0
  %734 = vmatpush1.bf16.msra.mxu0 0
  %735 = vmatprep.subr.bf16.mxu0 0
  %736 = vmatpush1.bf16.msra.mxu0 0
  %737 = vmatprep.subr.bf16.mxu0 0
  %738 = vmatpush1.bf16.msra.mxu0 0
  %739 = vmatprep.subr.bf16.mxu0 0
  %740 = vmatpush1.bf16.msra.mxu0 0
  %741 = vmatprep.subr.bf16.mxu0 0
  %742 = vmatpush1.bf16.msra.mxu0 0
  %743 = vmatprep.subr.bf16.mxu0 0
  %744 = vmatpush1.bf16.msra.mxu0 0
  %745 = vmatprep.subr.bf16.mxu0 0
  %746 = vmatpush1.bf16.msra.mxu0 0
  %747 = vmatprep.subr.bf16.mxu0 0
  %748 = vmatpush1.bf16.msra.mxu0 0
  %749 = vmatprep.subr.bf16.mxu0 0
  %750 = vmatpush1.bf16.msra.mxu0 0
  %751 = vmatprep.subr.bf16.mxu0 0
  %752 = vmatpush1.bf16.msra.mxu0 0
  %753 = vmatprep.subr.bf16.mxu0 0
  %754 = vmatpush1.bf16.msra.mxu0 0
  %755 = vmatprep.subr.bf16.mxu0 0
  %756 = vmatpush1.bf16.msra.mxu0 0
  %757 = vmatprep.subr.bf16.mxu0 0
  %758 = vmatpush1.bf16.msra.mxu0 0
  %759 = vmatprep.mubr.bf16.mxu0 0
  %760 = vmatmul.mubr.bf16.gmra.mrb[0].mxu0 %v167
  %v761 = vpop.f32.mrb[0].mxu0
  %v762 = vadd.f32 0.0, %v761
  %v763 = vpop.f32.mrb[0].mxu0
  %v764 = vadd.f32 0.0, %v763
  %v765 = vpop.f32.mrb[0].mxu0
  %v766 = vpop.f32.mrb[0].mxu0
  %767 = vdwg.mxu0
  %768 = vmatprep.subr.bf16.mxu0 %v243
  %769 = vmatpush1.bf16.msra.mxu0 %v240
  %770 = vmatprep.subr.bf16.mxu0 0
  %771 = vmatpush1.bf16.msra.mxu0 0
  %772 = vmatprep.subr.bf16.mxu0 0
  %773 = vmatpush1.bf16.msra.mxu0 0
  %774 = vmatprep.subr.bf16.mxu0 0
  %775 = vmatpush1.bf16.msra.mxu0 0
  %776 = vmatprep.subr.bf16.mxu0 0
  %777 = vmatpush1.bf16.msra.mxu0 0
  %778 = vmatprep.subr.bf16.mxu0 0
  %779 = vmatpush1.bf16.msra.mxu0 0
  %780 = vmatprep.subr.bf16.mxu0 0
  %781 = vmatpush1.bf16.msra.mxu0 0
  %782 = vmatprep.subr.bf16.mxu0 0
  %783 = vmatpush1.bf16.msra.mxu0 0
  %784 = vmatprep.subr.bf16.mxu0 0
  %785 = vmatpush1.bf16.msra.mxu0 0
  %786 = vmatprep.subr.bf16.mxu0 0
  %787 = vmatpush1.bf16.msra.mxu0 0
  %788 = vmatprep.subr.bf16.mxu0 0
  %789 = vmatpush1.bf16.msra.mxu0 0
  %790 = vmatprep.subr.bf16.mxu0 0
  %791 = vmatpush1.bf16.msra.mxu0 0
  %792 = vmatprep.subr.bf16.mxu0 0
  %793 = vmatpush1.bf16.msra.mxu0 0
  %794 = vmatprep.subr.bf16.mxu0 0
  %795 = vmatpush1.bf16.msra.mxu0 0
  %796 = vmatprep.subr.bf16.mxu0 0
  %797 = vmatpush1.bf16.msra.mxu0 0
  %798 = vmatprep.subr.bf16.mxu0 0
  %799 = vmatpush1.bf16.msra.mxu0 0
  %800 = vmatprep.mubr.bf16.mxu0 0
  %801 = vmatmul.mubr.bf16.gmra.mrb[0].mxu0 %v167
  %v802 = vpop.f32.mrb[0].mxu0
  %v803 = vadd.f32 0.0, %v802
  %v804 = vpop.f32.mrb[0].mxu0
  %v805 = vadd.f32 0.0, %v804
  %v806 = vpop.f32.mrb[0].mxu0
  %v807 = vpop.f32.mrb[0].mxu0
  %808 = vdwg.mxu0
  %809 = vmatprep.subr.bf16.mxu0 %v249
  %810 = vmatpush1.bf16.msra.mxu0 %v246
  %811 = vmatprep.subr.bf16.mxu0 0
  %812 = vmatpush1.bf16.msra.mxu0 0
  %813 = vmatprep.subr.bf16.mxu0 0
  %814 = vmatpush1.bf16.msra.mxu0 0
  %815 = vmatprep.subr.bf16.mxu0 0
  %816 = vmatpush1.bf16.msra.mxu0 0
  %817 = vmatprep.subr.bf16.mxu0 0
  %818 = vmatpush1.bf16.msra.mxu0 0
  %819 = vmatprep.subr.bf16.mxu0 0
  %820 = vmatpush1.bf16.msra.mxu0 0
  %821 = vmatprep.subr.bf16.mxu0 0
  %822 = vmatpush1.bf16.msra.mxu0 0
  %823 = vmatprep.subr.bf16.mxu0 0
  %824 = vmatpush1.bf16.msra.mxu0 0
  %825 = vmatprep.subr.bf16.mxu0 0
  %826 = vmatpush1.bf16.msra.mxu0 0
  %827 = vmatprep.subr.bf16.mxu0 0
  %828 = vmatpush1.bf16.msra.mxu0 0
  %829 = vmatprep.subr.bf16.mxu0 0
  %830 = vmatpush1.bf16.msra.mxu0 0
  %831 = vmatprep.subr.bf16.mxu0 0
  %832 = vmatpush1.bf16.msra.mxu0 0
  %833 = vmatprep.subr.bf16.mxu0 0
  %834 = vmatpush1.bf16.msra.mxu0 0
  %835 = vmatprep.subr.bf16.mxu0 0
  %836 = vmatpush1.bf16.msra.mxu0 0
  %837 = vmatprep.subr.bf16.mxu0 0
  %838 = vmatpush1.bf16.msra.mxu0 0
  %839 = vmatprep.subr.bf16.mxu0 0
  %840 = vmatpush1.bf16.msra.mxu0 0
  %841 = vmatprep.mubr.bf16.mxu0 0
  %842 = vmatmul.mubr.bf16.gmra.mrb[0].mxu0 %v167
  %v843 = vpop.f32.mrb[0].mxu0
  %v844 = vadd.f32 0.0, %v843
  %v845 = vpop.f32.mrb[0].mxu0
  %v846 = vadd.f32 0.0, %v845
  %v847 = vpop.f32.mrb[0].mxu0
  %v848 = vpop.f32.mrb[0].mxu0
  %849 = vdwg.mxu0
  %850 = vmatprep.subr.bf16.mxu0 %v255
  %851 = vmatpush1.bf16.msra.mxu0 %v252
  %852 = vmatprep.subr.bf16.mxu0 0
  %853 = vmatpush1.bf16.msra.mxu0 0
  %854 = vmatprep.subr.bf16.mxu0 0
  %855 = vmatpush1.bf16.msra.mxu0 0
  %856 = vmatprep.subr.bf16.mxu0 0
  %857 = vmatpush1.bf16.msra.mxu0 0
  %858 = vmatprep.subr.bf16.mxu0 0
  %859 = vmatpush1.bf16.msra.mxu0 0
  %860 = vmatprep.subr.bf16.mxu0 0
  %861 = vmatpush1.bf16.msra.mxu0 0
  %862 = vmatprep.subr.bf16.mxu0 0
  %863 = vmatpush1.bf16.msra.mxu0 0
  %864 = vmatprep.subr.bf16.mxu0 0
  %865 = vmatpush1.bf16.msra.mxu0 0
  %866 = vmatprep.subr.bf16.mxu0 0
  %867 = vmatpush1.bf16.msra.mxu0 0
  %868 = vmatprep.subr.bf16.mxu0 0
  %869 = vmatpush1.bf16.msra.mxu0 0
  %870 = vmatprep.subr.bf16.mxu0 0
  %871 = vmatpush1.bf16.msra.mxu0 0
  %872 = vmatprep.subr.bf16.mxu0 0
  %873 = vmatpush1.bf16.msra.mxu0 0
  %874 = vmatprep.subr.bf16.mxu0 0
  %875 = vmatpush1.bf16.msra.mxu0 0
  %876 = vmatprep.subr.bf16.mxu0 0
  %877 = vmatpush1.bf16.msra.mxu0 0
  %878 = vmatprep.subr.bf16.mxu0 0
  %879 = vmatpush1.bf16.msra.mxu0 0
  %880 = vmatprep.subr.bf16.mxu0 0
  %881 = vmatpush1.bf16.msra.mxu0 0
  %882 = vmatprep.mubr.bf16.mxu0 0
  %883 = vmatmul.mubr.bf16.gmra.mrb[0].mxu0 %v167
  %v884 = vpop.f32.mrb[0].mxu0
  %v885 = vadd.f32 0.0, %v884
  %v886 = vpop.f32.mrb[0].mxu0
  %v887 = vadd.f32 0.0, %v886
  %v888 = vpop.f32.mrb[0].mxu0
  %v889 = vpop.f32.mrb[0].mxu0
  %890 = vdwg.mxu0
  %891 = vmatprep.subr.bf16.mxu0 %v261
  %892 = vmatpush1.bf16.msra.mxu0 %v258
  %893 = vmatprep.subr.bf16.mxu0 0
  %894 = vmatpush1.bf16.msra.mxu0 0
  %895 = vmatprep.subr.bf16.mxu0 0
  %896 = vmatpush1.bf16.msra.mxu0 0
  %897 = vmatprep.subr.bf16.mxu0 0
  %898 = vmatpush1.bf16.msra.mxu0 0
  %899 = vmatprep.subr.bf16.mxu0 0
  %900 = vmatpush1.bf16.msra.mxu0 0
  %901 = vmatprep.subr.bf16.mxu0 0
  %902 = vmatpush1.bf16.msra.mxu0 0
  %903 = vmatprep.subr.bf16.mxu0 0
  %904 = vmatpush1.bf16.msra.mxu0 0
  %905 = vmatprep.subr.bf16.mxu0 0
  %906 = vmatpush1.bf16.msra.mxu0 0
  %907 = vmatprep.subr.bf16.mxu0 0
  %908 = vmatpush1.bf16.msra.mxu0 0
  %909 = vmatprep.subr.bf16.mxu0 0
  %910 = vmatpush1.bf16.msra.mxu0 0
  %911 = vmatprep.subr.bf16.mxu0 0
  %912 = vmatpush1.bf16.msra.mxu0 0
  %913 = vmatprep.subr.bf16.mxu0 0
  %914 = vmatpush1.bf16.msra.mxu0 0
  %915 = vmatprep.subr.bf16.mxu0 0
  %916 = vmatpush1.bf16.msra.mxu0 0
  %917 = vmatprep.subr.bf16.mxu0 0
  %918 = vmatpush1.bf16.msra.mxu0 0
  %919 = vmatprep.subr.bf16.mxu0 0
  %920 = vmatpush1.bf16.msra.mxu0 0
  %921 = vmatprep.subr.bf16.mxu0 0
  %922 = vmatpush1.bf16.msra.mxu0 0
  %923 = vmatprep.mubr.bf16.mxu0 0
  %924 = vmatmul.mubr.bf16.gmra.mrb[0].mxu0 %v167
  %v925 = vpop.f32.mrb[0].mxu0
  %v926 = vadd.f32 0.0, %v925
  %v927 = vpop.f32.mrb[0].mxu0
  %v928 = vadd.f32 0.0, %v927
  %v929 = vpop.f32.mrb[0].mxu0
  %v930 = vpop.f32.mrb[0].mxu0
  %931 = vdwg.mxu0
  %932 = vmatprep.subr.bf16.mxu0 %v267
  %933 = vmatpush1.bf16.msra.mxu0 %v264
  %934 = vmatprep.subr.bf16.mxu0 0
  %935 = vmatpush1.bf16.msra.mxu0 0
  %936 = vmatprep.subr.bf16.mxu0 0
  %937 = vmatpush1.bf16.msra.mxu0 0
  %938 = vmatprep.subr.bf16.mxu0 0
  %939 = vmatpush1.bf16.msra.mxu0 0
  %940 = vmatprep.subr.bf16.mxu0 0
  %941 = vmatpush1.bf16.msra.mxu0 0
  %942 = vmatprep.subr.bf16.mxu0 0
  %943 = vmatpush1.bf16.msra.mxu0 0
  %944 = vmatprep.subr.bf16.mxu0 0
  %945 = vmatpush1.bf16.msra.mxu0 0
  %946 = vmatprep.subr.bf16.mxu0 0
  %947 = vmatpush1.bf16.msra.mxu0 0
  %948 = vmatprep.subr.bf16.mxu0 0
  %949 = vmatpush1.bf16.msra.mxu0 0
  %950 = vmatprep.subr.bf16.mxu0 0
  %951 = vmatpush1.bf16.msra.mxu0 0
  %952 = vmatprep.subr.bf16.mxu0 0
  %953 = vmatpush1.bf16.msra.mxu0 0
  %954 = vmatprep.subr.bf16.mxu0 0
  %955 = vmatpush1.bf16.msra.mxu0 0
  %956 = vmatprep.subr.bf16.mxu0 0
  %957 = vmatpush1.bf16.msra.mxu0 0
  %958 = vmatprep.subr.bf16.mxu0 0
  %959 = vmatpush1.bf16.msra.mxu0 0
  %960 = vmatprep.subr.bf16.mxu0 0
  %961 = vmatpush1.bf16.msra.mxu0 0
  %962 = vmatprep.subr.bf16.mxu0 0
  %963 = vmatpush1.bf16.msra.mxu0 0
  %964 = vmatprep.mubr.bf16.mxu0 0
  %965 = vmatmul.mubr.bf16.gmra.mrb[0].mxu0 %v167
  %v966 = vpop.f32.mrb[0].mxu0
  %v967 = vadd.f32 0.0, %v966
  %v968 = vpop.f32.mrb[0].mxu0
  %v969 = vadd.f32 0.0, %v968
  %v970 = vpop.f32.mrb[0].mxu0
  %v971 = vpop.f32.mrb[0].mxu0
  %972 = vdwg.mxu0
  %973 = vmatprep.subr.bf16.mxu0 %v273
  %974 = vmatpush1.bf16.msra.mxu0 %v270
  %975 = vmatprep.subr.bf16.mxu0 0
  %976 = vmatpush1.bf16.msra.mxu0 0
  %977 = vmatprep.subr.bf16.mxu0 0
  %978 = vmatpush1.bf16.msra.mxu0 0
  %979 = vmatprep.subr.bf16.mxu0 0
  %980 = vmatpush1.bf16.msra.mxu0 0
  %981 = vmatprep.subr.bf16.mxu0 0
  %982 = vmatpush1.bf16.msra.mxu0 0
  %983 = vmatprep.subr.bf16.mxu0 0
  %984 = vmatpush1.bf16.msra.mxu0 0
  %985 = vmatprep.subr.bf16.mxu0 0
  %986 = vmatpush1.bf16.msra.mxu0 0
  %987 = vmatprep.subr.bf16.mxu0 0
  %988 = vmatpush1.bf16.msra.mxu0 0
  %989 = vmatprep.subr.bf16.mxu0 0
  %990 = vmatpush1.bf16.msra.mxu0 0
  %991 = vmatprep.subr.bf16.mxu0 0
  %992 = vmatpush1.bf16.msra.mxu0 0
  %993 = vmatprep.subr.bf16.mxu0 0
  %994 = vmatpush1.bf16.msra.mxu0 0
  %995 = vmatprep.subr.bf16.mxu0 0
  %996 = vmatpush1.bf16.msra.mxu0 0
  %997 = vmatprep.subr.bf16.mxu0 0
  %998 = vmatpush1.bf16.msra.mxu0 0
  %999 = vmatprep.subr.bf16.mxu0 0
  %1000 = vmatpush1.bf16.msra.mxu0 0
  %1001 = vmatprep.subr.bf16.mxu0 0
  %1002 = vmatpush1.bf16.msra.mxu0 0
  %1003 = vmatprep.subr.bf16.mxu0 0
  %1004 = vmatpush1.bf16.msra.mxu0 0
  %1005 = vmatprep.mubr.bf16.mxu0 0
  %1006 = vmatmul.mubr.bf16.gmra.mrb[0].mxu0 %v167
  %v1007 = vpop.f32.mrb[0].mxu0
  %v1008 = vadd.f32 0.0, %v1007
  %v1009 = vpop.f32.mrb[0].mxu0
  %v1010 = vadd.f32 0.0, %v1009
  %v1011 = vpop.f32.mrb[0].mxu0
  %v1012 = vpop.f32.mrb[0].mxu0
  %1013 = vdwg.mxu0
  %1014 = vmatprep.subr.bf16.mxu0 %v279
  %1015 = vmatpush1.bf16.msra.mxu0 %v276
  %1016 = vmatprep.subr.bf16.mxu0 0
  %1017 = vmatpush1.bf16.msra.mxu0 0
  %1018 = vmatprep.subr.bf16.mxu0 0
  %1019 = vmatpush1.bf16.msra.mxu0 0
  %1020 = vmatprep.subr.bf16.mxu0 0
  %1021 = vmatpush1.bf16.msra.mxu0 0
  %1022 = vmatprep.subr.bf16.mxu0 0
  %1023 = vmatpush1.bf16.msra.mxu0 0
  %1024 = vmatprep.subr.bf16.mxu0 0
  %1025 = vmatpush1.bf16.msra.mxu0 0
  %1026 = vmatprep.subr.bf16.mxu0 0
  %1027 = vmatpush1.bf16.msra.mxu0 0
  %1028 = vmatprep.subr.bf16.mxu0 0
  %1029 = vmatpush1.bf16.msra.mxu0 0
  %1030 = vmatprep.subr.bf16.mxu0 0
  %1031 = vmatpush1.bf16.msra.mxu0 0
  %1032 = vmatprep.subr.bf16.mxu0 0
  %1033 = vmatpush1.bf16.msra.mxu0 0
  %1034 = vmatprep.subr.bf16.mxu0 0
  %1035 = vmatpush1.bf16.msra.mxu0 0
  %1036 = vmatprep.subr.bf16.mxu0 0
  %1037 = vmatpush1.bf16.msra.mxu0 0
  %1038 = vmatprep.subr.bf16.mxu0 0
  %1039 = vmatpush1.bf16.msra.mxu0 0
  %1040 = vmatprep.subr.bf16.mxu0 0
  %1041 = vmatpush1.bf16.msra.mxu0 0
  %1042 = vmatprep.subr.bf16.mxu0 0
  %1043 = vmatpush1.bf16.msra.mxu0 0
  %1044 = vmatprep.subr.bf16.mxu0 0
  %1045 = vmatpush1.bf16.msra.mxu0 0
  %1046 = vmatprep.mubr.bf16.mxu0 0
  %1047 = vmatmul.mubr.bf16.gmra.mrb[0].mxu0 %v167
  %v1048 = vpop.f32.mrb[0].mxu0
  %v1049 = vadd.f32 0.0, %v1048
  %v1050 = vpop.f32.mrb[0].mxu0
  %v1051 = vadd.f32 0.0, %v1050
  %v1052 = vpop.f32.mrb[0].mxu0
  %v1053 = vpop.f32.mrb[0].mxu0
  %1054 = vdwg.mxu0
  %1055 = vmatprep.subr.bf16.mxu0 %v285
  %1056 = vmatpush1.bf16.msra.mxu0 %v282
  %1057 = vmatprep.subr.bf16.mxu0 0
  %1058 = vmatpush1.bf16.msra.mxu0 0
  %1059 = vmatprep.subr.bf16.mxu0 0
  %1060 = vmatpush1.bf16.msra.mxu0 0
  %1061 = vmatprep.subr.bf16.mxu0 0
  %1062 = vmatpush1.bf16.msra.mxu0 0
  %1063 = vmatprep.subr.bf16.mxu0 0
  %1064 = vmatpush1.bf16.msra.mxu0 0
  %1065 = vmatprep.subr.bf16.mxu0 0
  %1066 = vmatpush1.bf16.msra.mxu0 0
  %1067 = vmatprep.subr.bf16.mxu0 0
  %1068 = vmatpush1.bf16.msra.mxu0 0
  %1069 = vmatprep.subr.bf16.mxu0 0
  %1070 = vmatpush1.bf16.msra.mxu0 0
  %1071 = vmatprep.subr.bf16.mxu0 0
  %1072 = vmatpush1.bf16.msra.mxu0 0
  %1073 = vmatprep.subr.bf16.mxu0 0
  %1074 = vmatpush1.bf16.msra.mxu0 0
  %1075 = vmatprep.subr.bf16.mxu0 0
  %1076 = vmatpush1.bf16.msra.mxu0 0
  %1077 = vmatprep.subr.bf16.mxu0 0
  %1078 = vmatpush1.bf16.msra.mxu0 0
  %1079 = vmatprep.subr.bf16.mxu0 0
  %1080 = vmatpush1.bf16.msra.mxu0 0
  %1081 = vmatprep.subr.bf16.mxu0 0
  %1082 = vmatpush1.bf16.msra.mxu0 0
  %1083 = vmatprep.subr.bf16.mxu0 0
  %1084 = vmatpush1.bf16.msra.mxu0 0
  %1085 = vmatprep.subr.bf16.mxu0 0
  %1086 = vmatpush1.bf16.msra.mxu0 0
  %1087 = vmatprep.mubr.bf16.mxu0 0
  %1088 = vmatmul.mubr.bf16.gmra.mrb[0].mxu0 %v167
  %v1089 = vpop.f32.mrb[0].mxu0
  %v1090 = vadd.f32 0.0, %v1089
  %v1091 = vpop.f32.mrb[0].mxu0
  %v1092 = vadd.f32 0.0, %v1091
  %v1093 = vpop.f32.mrb[0].mxu0
  %v1094 = vpop.f32.mrb[0].mxu0
  %1095 = vdwg.mxu0
  %1096 = vmatprep.subr.bf16.mxu0 %v291
  %1097 = vmatpush1.bf16.msra.mxu0 %v288
  %1098 = vmatprep.subr.bf16.mxu0 0
  %1099 = vmatpush1.bf16.msra.mxu0 0
  %1100 = vmatprep.subr.bf16.mxu0 0
  %1101 = vmatpush1.bf16.msra.mxu0 0
  %1102 = vmatprep.subr.bf16.mxu0 0
  %1103 = vmatpush1.bf16.msra.mxu0 0
  %1104 = vmatprep.subr.bf16.mxu0 0
  %1105 = vmatpush1.bf16.msra.mxu0 0
  %1106 = vmatprep.subr.bf16.mxu0 0
  %1107 = vmatpush1.bf16.msra.mxu0 0
  %1108 = vmatprep.subr.bf16.mxu0 0
  %1109 = vmatpush1.bf16.msra.mxu0 0
  %1110 = vmatprep.subr.bf16.mxu0 0
  %1111 = vmatpush1.bf16.msra.mxu0 0
  %1112 = vmatprep.subr.bf16.mxu0 0
  %1113 = vmatpush1.bf16.msra.mxu0 0
  %1114 = vmatprep.subr.bf16.mxu0 0
  %1115 = vmatpush1.bf16.msra.mxu0 0
  %1116 = vmatprep.subr.bf16.mxu0 0
  %1117 = vmatpush1.bf16.msra.mxu0 0
  %1118 = vmatprep.subr.bf16.mxu0 0
  %1119 = vmatpush1.bf16.msra.mxu0 0
  %1120 = vmatprep.subr.bf16.mxu0 0
  %1121 = vmatpush1.bf16.msra.mxu0 0
  %1122 = vmatprep.subr.bf16.mxu0 0
  %1123 = vmatpush1.bf16.msra.mxu0 0
  %1124 = vmatprep.subr.bf16.mxu0 0
  %1125 = vmatpush1.bf16.msra.mxu0 0
  %1126 = vmatprep.subr.bf16.mxu0 0
  %1127 = vmatpush1.bf16.msra.mxu0 0
  %1128 = vmatprep.mubr.bf16.mxu0 0
  %1129 = vmatmul.mubr.bf16.gmra.mrb[0].mxu0 %v167
  %v1130 = vpop.f32.mrb[0].mxu0
  %v1131 = vadd.f32 0.0, %v1130
  %v1132 = vpop.f32.mrb[0].mxu0
  %v1133 = vadd.f32 0.0, %v1132
  %v1134 = vpop.f32.mrb[0].mxu0
  %v1135 = vpop.f32.mrb[0].mxu0
  %1136 = vdwg.mxu0
  %1137 = vmatprep.subr.bf16.mxu0 %v297
  %1138 = vmatpush1.bf16.msra.mxu0 %v294
  %1139 = vmatprep.subr.bf16.mxu0 0
  %1140 = vmatpush1.bf16.msra.mxu0 0
  %1141 = vmatprep.subr.bf16.mxu0 0
  %1142 = vmatpush1.bf16.msra.mxu0 0
  %1143 = vmatprep.subr.bf16.mxu0 0
  %1144 = vmatpush1.bf16.msra.mxu0 0
  %1145 = vmatprep.subr.bf16.mxu0 0
  %1146 = vmatpush1.bf16.msra.mxu0 0
  %1147 = vmatprep.subr.bf16.mxu0 0
  %1148 = vmatpush1.bf16.msra.mxu0 0
  %1149 = vmatprep.subr.bf16.mxu0 0
  %1150 = vmatpush1.bf16.msra.mxu0 0
  %1151 = vmatprep.subr.bf16.mxu0 0
  %1152 = vmatpush1.bf16.msra.mxu0 0
  %1153 = vmatprep.subr.bf16.mxu0 0
  %1154 = vmatpush1.bf16.msra.mxu0 0
  %1155 = vmatprep.subr.bf16.mxu0 0
  %1156 = vmatpush1.bf16.msra.mxu0 0
  %1157 = vmatprep.subr.bf16.mxu0 0
  %1158 = vmatpush1.bf16.msra.mxu0 0
  %1159 = vmatprep.subr.bf16.mxu0 0
  %1160 = vmatpush1.bf16.msra.mxu0 0
  %1161 = vmatprep.subr.bf16.mxu0 0
  %1162 = vmatpush1.bf16.msra.mxu0 0
  %1163 = vmatprep.subr.bf16.mxu0 0
  %1164 = vmatpush1.bf16.msra.mxu0 0
  %1165 = vmatprep.subr.bf16.mxu0 0
  %1166 = vmatpush1.bf16.msra.mxu0 0
  %1167 = vmatprep.subr.bf16.mxu0 0
  %1168 = vmatpush1.bf16.msra.mxu0 0
  %1169 = vmatprep.mubr.bf16.mxu0 0
  %1170 = vmatmul.mubr.bf16.gmra.mrb[0].mxu0 %v167
  %v1171 = vpop.f32.mrb[0].mxu0
  %v1172 = vadd.f32 0.0, %v1171
  %v1173 = vpop.f32.mrb[0].mxu0
  %v1174 = vadd.f32 0.0, %v1173
  %v1175 = vpop.f32.mrb[0].mxu0
  %v1176 = vpop.f32.mrb[0].mxu0
  %1177 = vdwg.mxu0
  %1178 = vmatprep.subr.bf16.mxu0 %v303
  %1179 = vmatpush1.bf16.msra.mxu0 %v300
  %1180 = vmatprep.subr.bf16.mxu0 0
  %1181 = vmatpush1.bf16.msra.mxu0 0
  %1182 = vmatprep.subr.bf16.mxu0 0
  %1183 = vmatpush1.bf16.msra.mxu0 0
  %1184 = vmatprep.subr.bf16.mxu0 0
  %1185 = vmatpush1.bf16.msra.mxu0 0
  %1186 = vmatprep.subr.bf16.mxu0 0
  %1187 = vmatpush1.bf16.msra.mxu0 0
  %1188 = vmatprep.subr.bf16.mxu0 0
  %1189 = vmatpush1.bf16.msra.mxu0 0
  %1190 = vmatprep.subr.bf16.mxu0 0
  %1191 = vmatpush1.bf16.msra.mxu0 0
  %1192 = vmatprep.subr.bf16.mxu0 0
  %1193 = vmatpush1.bf16.msra.mxu0 0
  %1194 = vmatprep.subr.bf16.mxu0 0
  %1195 = vmatpush1.bf16.msra.mxu0 0
  %1196 = vmatprep.subr.bf16.mxu0 0
  %1197 = vmatpush1.bf16.msra.mxu0 0
  %1198 = vmatprep.subr.bf16.mxu0 0
  %1199 = vmatpush1.bf16.msra.mxu0 0
  %1200 = vmatprep.subr.bf16.mxu0 0
  %1201 = vmatpush1.bf16.msra.mxu0 0
  %1202 = vmatprep.subr.bf16.mxu0 0
  %1203 = vmatpush1.bf16.msra.mxu0 0
  %1204 = vmatprep.subr.bf16.mxu0 0
  %1205 = vmatpush1.bf16.msra.mxu0 0
  %1206 = vmatprep.subr.bf16.mxu0 0
  %1207 = vmatpush1.bf16.msra.mxu0 0
  %1208 = vmatprep.subr.bf16.mxu0 0
  %1209 = vmatpush1.bf16.msra.mxu0 0
  %1210 = vmatprep.mubr.bf16.mxu0 0
  %1211 = vmatmul.mubr.bf16.gmra.mrb[0].mxu0 %v167
  %v1212 = vpop.f32.mrb[0].mxu0
  %v1213 = vadd.f32 0.0, %v1212
  %v1214 = vpop.f32.mrb[0].mxu0
  %v1215 = vadd.f32 0.0, %v1214
  %v1216 = vpop.f32.mrb[0].mxu0
  %v1217 = vpop.f32.mrb[0].mxu0
  %1218 = vdwg.mxu0
  %1219 = vmatprep.subr.bf16.mxu0 %v309
  %1220 = vmatpush1.bf16.msra.mxu0 %v306
  %1221 = vmatprep.subr.bf16.mxu0 0
  %1222 = vmatpush1.bf16.msra.mxu0 0
  %1223 = vmatprep.subr.bf16.mxu0 0
  %1224 = vmatpush1.bf16.msra.mxu0 0
  %1225 = vmatprep.subr.bf16.mxu0 0
  %1226 = vmatpush1.bf16.msra.mxu0 0
  %1227 = vmatprep.subr.bf16.mxu0 0
  %1228 = vmatpush1.bf16.msra.mxu0 0
  %1229 = vmatprep.subr.bf16.mxu0 0
  %1230 = vmatpush1.bf16.msra.mxu0 0
  %1231 = vmatprep.subr.bf16.mxu0 0
  %1232 = vmatpush1.bf16.msra.mxu0 0
  %1233 = vmatprep.subr.bf16.mxu0 0
  %1234 = vmatpush1.bf16.msra.mxu0 0
  %1235 = vmatprep.subr.bf16.mxu0 0
  %1236 = vmatpush1.bf16.msra.mxu0 0
  %1237 = vmatprep.subr.bf16.mxu0 0
  %1238 = vmatpush1.bf16.msra.mxu0 0
  %1239 = vmatprep.subr.bf16.mxu0 0
  %1240 = vmatpush1.bf16.msra.mxu0 0
  %1241 = vmatprep.subr.bf16.mxu0 0
  %1242 = vmatpush1.bf16.msra.mxu0 0
  %1243 = vmatprep.subr.bf16.mxu0 0
  %1244 = vmatpush1.bf16.msra.mxu0 0
  %1245 = vmatprep.subr.bf16.mxu0 0
  %1246 = vmatpush1.bf16.msra.mxu0 0
  %1247 = vmatprep.subr.bf16.mxu0 0
  %1248 = vmatpush1.bf16.msra.mxu0 0
  %1249 = vmatprep.subr.bf16.mxu0 0
  %1250 = vmatpush1.bf16.msra.mxu0 0
  %1251 = vmatprep.mubr.bf16.mxu0 0
  %1252 = vmatmul.mubr.bf16.gmra.mrb[0].mxu0 %v167
  %v1253 = vpop.f32.mrb[0].mxu0
  %v1254 = vadd.f32 0.0, %v1253
  %v1255 = vpop.f32.mrb[0].mxu0
  %v1256 = vadd.f32 0.0, %v1255
  %v1257 = vpop.f32.mrb[0].mxu0
  %v1258 = vpop.f32.mrb[0].mxu0
  %1259 = vdwg.mxu0
  %1260 = vmatprep.subr.bf16.mxu0 %v315
  %1261 = vmatpush1.bf16.msra.mxu0 %v312
  %1262 = vmatprep.subr.bf16.mxu0 0
  %1263 = vmatpush1.bf16.msra.mxu0 0
  %1264 = vmatprep.subr.bf16.mxu0 0
  %1265 = vmatpush1.bf16.msra.mxu0 0
  %1266 = vmatprep.subr.bf16.mxu0 0
  %1267 = vmatpush1.bf16.msra.mxu0 0
  %1268 = vmatprep.subr.bf16.mxu0 0
  %1269 = vmatpush1.bf16.msra.mxu0 0
  %1270 = vmatprep.subr.bf16.mxu0 0
  %1271 = vmatpush1.bf16.msra.mxu0 0
  %1272 = vmatprep.subr.bf16.mxu0 0
  %1273 = vmatpush1.bf16.msra.mxu0 0
  %1274 = vmatprep.subr.bf16.mxu0 0
  %1275 = vmatpush1.bf16.msra.mxu0 0
  %1276 = vmatprep.subr.bf16.mxu0 0
  %1277 = vmatpush1.bf16.msra.mxu0 0
  %1278 = vmatprep.subr.bf16.mxu0 0
  %1279 = vmatpush1.bf16.msra.mxu0 0
  %1280 = vmatprep.subr.bf16.mxu0 0
  %1281 = vmatpush1.bf16.msra.mxu0 0
  %1282 = vmatprep.subr.bf16.mxu0 0
  %1283 = vmatpush1.bf16.msra.mxu0 0
  %1284 = vmatprep.subr.bf16.mxu0 0
  %1285 = vmatpush1.bf16.msra.mxu0 0
  %1286 = vmatprep.subr.bf16.mxu0 0
  %1287 = vmatpush1.bf16.msra.mxu0 0
  %1288 = vmatprep.subr.bf16.mxu0 0
  %1289 = vmatpush1.bf16.msra.mxu0 0
  %1290 = vmatprep.subr.bf16.mxu0 0
  %1291 = vmatpush1.bf16.msra.mxu0 0
  %1292 = vmatprep.mubr.bf16.mxu0 0
  %1293 = vmatmul.mubr.bf16.gmra.mrb[0].mxu0 %v167
  %v1294 = vpop.f32.mrb[0].mxu0
  %v1295 = vadd.f32 0.0, %v1294
  %v1296 = vpop.f32.mrb[0].mxu0
  %v1297 = vadd.f32 0.0, %v1296
  %v1298 = vpop.f32.mrb[0].mxu0
  %v1299 = vpop.f32.mrb[0].mxu0
  %1300 = vdwg.mxu0
  %v1301 = vmul.f32 %v352, %v352
  %v1302 = vmul.f32 %v354, %v354
  %v1303 = vmul.f32 %v393, %v393
  %v1304 = vmul.f32 %v395, %v395
  %v1305 = vmul.f32 %v434, %v434
  %v1306 = vmul.f32 %v436, %v436
  %v1307 = vmul.f32 %v475, %v475
  %v1308 = vmul.f32 %v477, %v477
  %v1309 = vmul.f32 %v516, %v516
  %v1310 = vmul.f32 %v518, %v518
  %v1311 = vmul.f32 %v557, %v557
  %v1312 = vmul.f32 %v559, %v559
  %v1313 = vmul.f32 %v598, %v598
  %v1314 = vmul.f32 %v600, %v600
  %v1315 = vmul.f32 %v639, %v639
  %v1316 = vmul.f32 %v641, %v641
  %v1317 = vmul.f32 %v680, %v680
  %v1318 = vmul.f32 %v682, %v682
  %v1319 = vmul.f32 %v721, %v721
  %v1320 = vmul.f32 %v723, %v723
  %v1321 = vmul.f32 %v762, %v762
  %v1322 = vmul.f32 %v764, %v764
  %v1323 = vmul.f32 %v803, %v803
  %v1324 = vmul.f32 %v805, %v805
  %v1325 = vmul.f32 %v844, %v844
  %v1326 = vmul.f32 %v846, %v846
  %v1327 = vmul.f32 %v885, %v885
  %v1328 = vmul.f32 %v887, %v887
  %v1329 = vmul.f32 %v926, %v926
  %v1330 = vmul.f32 %v928, %v928
  %v1331 = vmul.f32 %v967, %v967
  %v1332 = vmul.f32 %v969, %v969
  %v1333 = vadd.f32 %v1301, %v1317
  %v1334 = vadd.f32 %v1302, %v1318
  %v1335 = vadd.f32 %v1303, %v1319
  %v1336 = vadd.f32 %v1304, %v1320
  %v1337 = vadd.f32 %v1305, %v1321
  %v1338 = vadd.f32 %v1306, %v1322
  %v1339 = vadd.f32 %v1307, %v1323
  %v1340 = vadd.f32 %v1308, %v1324
  %v1341 = vadd.f32 %v1309, %v1325
  %v1342 = vadd.f32 %v1310, %v1326
  %v1343 = vadd.f32 %v1311, %v1327
  %v1344 = vadd.f32 %v1312, %v1328
  %v1345 = vadd.f32 %v1313, %v1329
  %v1346 = vadd.f32 %v1314, %v1330
  %v1347 = vadd.f32 %v1315, %v1331
  %v1348 = vadd.f32 %v1316, %v1332
  %v1349 = vmul.f32 %v1008, %v1008
  %v1350 = vmul.f32 %v1010, %v1010
  %v1351 = vmul.f32 %v1049, %v1049
  %v1352 = vmul.f32 %v1051, %v1051
  %v1353 = vmul.f32 %v1090, %v1090
  %v1354 = vmul.f32 %v1092, %v1092
  %v1355 = vmul.f32 %v1131, %v1131
  %v1356 = vmul.f32 %v1133, %v1133
  %v1357 = vmul.f32 %v1172, %v1172
  %v1358 = vmul.f32 %v1174, %v1174
  %v1359 = vmul.f32 %v1213, %v1213
  %v1360 = vmul.f32 %v1215, %v1215
  %v1361 = vmul.f32 %v1254, %v1254
  %v1362 = vmul.f32 %v1256, %v1256
  %v1363 = vmul.f32 %v1295, %v1295
  %v1364 = vmul.f32 %v1297, %v1297
  %v1365 = vadd.f32 %v1333, %v1349
  %v1366 = vadd.f32 %v1334, %v1350
  %v1367 = vadd.f32 %v1335, %v1351
  %v1368 = vadd.f32 %v1336, %v1352
  %v1369 = vadd.f32 %v1337, %v1353
  %v1370 = vadd.f32 %v1338, %v1354
  %v1371 = vadd.f32 %v1339, %v1355
  %v1372 = vadd.f32 %v1340, %v1356
  %v1373 = vadd.f32 %v1341, %v1357
  %v1374 = vadd.f32 %v1342, %v1358
  %v1375 = vadd.f32 %v1343, %v1359
  %v1376 = vadd.f32 %v1344, %v1360
  %v1377 = vadd.f32 %v1345, %v1361
  %v1378 = vadd.f32 %v1346, %v1362
  %v1379 = vadd.f32 %v1347, %v1363
  %v1380 = vadd.f32 %v1348, %v1364
  %v1381 = vrsqrt.pop %v1365
  %v1382 = vmul.f32 %v1365, %v1381
  %vm1383 = vcmp.eq.f32.partialorder %v1365, inf
  %v1384 = vsel %vm1383, %v1365, %v1382
  %vm1385 = vcmp.eq.f32.partialorder %v1365, 0.0
  %v1386 = vand.u32 %v1365, 2147483648
  %v1387 = vsel %vm1385, %v1386, %v1384
  %v1388 = vrsqrt.pop %v1366
  %v1389 = vmul.f32 %v1366, %v1388
  %vm1390 = vcmp.eq.f32.partialorder %v1366, inf
  %v1391 = vsel %vm1390, %v1366, %v1389
  %vm1392 = vcmp.eq.f32.partialorder %v1366, 0.0
  %v1393 = vand.u32 %v1366, 2147483648
  %v1394 = vsel %vm1392, %v1393, %v1391
  %v1395 = vrsqrt.pop %v1367
  %v1396 = vmul.f32 %v1367, %v1395
  %vm1397 = vcmp.eq.f32.partialorder %v1367, inf
  %v1398 = vsel %vm1397, %v1367, %v1396
  %vm1399 = vcmp.eq.f32.partialorder %v1367, 0.0
  %v1400 = vand.u32 %v1367, 2147483648
  %v1401 = vsel %vm1399, %v1400, %v1398
  %v1402 = vrsqrt.pop %v1368
  %v1403 = vmul.f32 %v1368, %v1402
  %vm1404 = vcmp.eq.f32.partialorder %v1368, inf
  %v1405 = vsel %vm1404, %v1368, %v1403
  %vm1406 = vcmp.eq.f32.partialorder %v1368, 0.0
  %v1407 = vand.u32 %v1368, 2147483648
  %v1408 = vsel %vm1406, %v1407, %v1405
  %v1409 = vrsqrt.pop %v1369
  %v1410 = vmul.f32 %v1369, %v1409
  %vm1411 = vcmp.eq.f32.partialorder %v1369, inf
  %v1412 = vsel %vm1411, %v1369, %v1410
  %vm1413 = vcmp.eq.f32.partialorder %v1369, 0.0
  %v1414 = vand.u32 %v1369, 2147483648
  %v1415 = vsel %vm1413, %v1414, %v1412
  %v1416 = vrsqrt.pop %v1370
  %v1417 = vmul.f32 %v1370, %v1416
  %vm1418 = vcmp.eq.f32.partialorder %v1370, inf
  %v1419 = vsel %vm1418, %v1370, %v1417
  %vm1420 = vcmp.eq.f32.partialorder %v1370, 0.0
  %v1421 = vand.u32 %v1370, 2147483648
  %v1422 = vsel %vm1420, %v1421, %v1419
  %v1423 = vrsqrt.pop %v1371
  %v1424 = vmul.f32 %v1371, %v1423
  %vm1425 = vcmp.eq.f32.partialorder %v1371, inf
  %v1426 = vsel %vm1425, %v1371, %v1424
  %vm1427 = vcmp.eq.f32.partialorder %v1371, 0.0
  %v1428 = vand.u32 %v1371, 2147483648
  %v1429 = vsel %vm1427, %v1428, %v1426
  %v1430 = vrsqrt.pop %v1372
  %v1431 = vmul.f32 %v1372, %v1430
  %vm1432 = vcmp.eq.f32.partialorder %v1372, inf
  %v1433 = vsel %vm1432, %v1372, %v1431
  %vm1434 = vcmp.eq.f32.partialorder %v1372, 0.0
  %v1435 = vand.u32 %v1372, 2147483648
  %v1436 = vsel %vm1434, %v1435, %v1433
  %v1437 = vrsqrt.pop %v1373
  %v1438 = vmul.f32 %v1373, %v1437
  %vm1439 = vcmp.eq.f32.partialorder %v1373, inf
  %v1440 = vsel %vm1439, %v1373, %v1438
  %vm1441 = vcmp.eq.f32.partialorder %v1373, 0.0
  %v1442 = vand.u32 %v1373, 2147483648
  %v1443 = vsel %vm1441, %v1442, %v1440
  %v1444 = vrsqrt.pop %v1374
  %v1445 = vmul.f32 %v1374, %v1444
  %vm1446 = vcmp.eq.f32.partialorder %v1374, inf
  %v1447 = vsel %vm1446, %v1374, %v1445
  %vm1448 = vcmp.eq.f32.partialorder %v1374, 0.0
  %v1449 = vand.u32 %v1374, 2147483648
  %v1450 = vsel %vm1448, %v1449, %v1447
  %v1451 = vrsqrt.pop %v1375
  %v1452 = vmul.f32 %v1375, %v1451
  %vm1453 = vcmp.eq.f32.partialorder %v1375, inf
  %v1454 = vsel %vm1453, %v1375, %v1452
  %vm1455 = vcmp.eq.f32.partialorder %v1375, 0.0
  %v1456 = vand.u32 %v1375, 2147483648
  %v1457 = vsel %vm1455, %v1456, %v1454
  %v1458 = vrsqrt.pop %v1376
  %v1459 = vmul.f32 %v1376, %v1458
  %vm1460 = vcmp.eq.f32.partialorder %v1376, inf
  %v1461 = vsel %vm1460, %v1376, %v1459
  %vm1462 = vcmp.eq.f32.partialorder %v1376, 0.0
  %v1463 = vand.u32 %v1376, 2147483648
  %v1464 = vsel %vm1462, %v1463, %v1461
  %v1465 = vrsqrt.pop %v1377
  %v1466 = vmul.f32 %v1377, %v1465
  %vm1467 = vcmp.eq.f32.partialorder %v1377, inf
  %v1468 = vsel %vm1467, %v1377, %v1466
  %vm1469 = vcmp.eq.f32.partialorder %v1377, 0.0
  %v1470 = vand.u32 %v1377, 2147483648
  %v1471 = vsel %vm1469, %v1470, %v1468
  %v1472 = vrsqrt.pop %v1378
  %v1473 = vmul.f32 %v1378, %v1472
  %vm1474 = vcmp.eq.f32.partialorder %v1378, inf
  %v1475 = vsel %vm1474, %v1378, %v1473
  %vm1476 = vcmp.eq.f32.partialorder %v1378, 0.0
  %v1477 = vand.u32 %v1378, 2147483648
  %v1478 = vsel %vm1476, %v1477, %v1475
  %v1479 = vrsqrt.pop %v1379
  %v1480 = vmul.f32 %v1379, %v1479
  %vm1481 = vcmp.eq.f32.partialorder %v1379, inf
  %v1482 = vsel %vm1481, %v1379, %v1480
  %vm1483 = vcmp.eq.f32.partialorder %v1379, 0.0
  %v1484 = vand.u32 %v1379, 2147483648
  %v1485 = vsel %vm1483, %v1484, %v1482
  %v1486 = vrsqrt.pop %v1380
  %v1487 = vmul.f32 %v1380, %v1486
  %vm1488 = vcmp.eq.f32.partialorder %v1380, inf
  %v1489 = vsel %vm1488, %v1380, %v1487
  %vm1490 = vcmp.eq.f32.partialorder %v1380, 0.0
  %v1491 = vand.u32 %v1380, 2147483648
  %v1492 = vsel %vm1490, %v1491, %v1489
  %v1493 = vld [vmem:[%s3] sm:$0xff]
  %1495 = vset.pattern.permute.xlu0 0
  %1496 = vperm.xlu0 %1495, %v1493
  %v1497 = vpop.permute.xlu0 %1496
  %v1499 = vmul.f32 %v1387, %v1497
  %v1500 = vmul.f32 %v1394, %v1497
  %v1501 = vmul.f32 %v1401, %v1497
  %v1502 = vmul.f32 %v1408, %v1497
  %v1503 = vmul.f32 %v1415, %v1497
  %v1504 = vmul.f32 %v1422, %v1497
  %v1505 = vmul.f32 %v1429, %v1497
  %v1506 = vmul.f32 %v1436, %v1497
  %v1507 = vmul.f32 %v1443, %v1497
  %v1508 = vmul.f32 %v1450, %v1497
  %v1509 = vmul.f32 %v1457, %v1497
  %v1510 = vmul.f32 %v1464, %v1497
  %v1511 = vmul.f32 %v1471, %v1497
  %v1512 = vmul.f32 %v1478, %v1497
  %v1513 = vmul.f32 %v1485, %v1497
  %v1514 = vmul.f32 %v1492, %v1497
  %v1515 = vld [vmem:[%s2] sm:$0xff]
  %1517 = vset.pattern.permute.xlu0 0
  %1518 = vperm.xlu0 %1517, %v1515
  %v1519 = vpop.permute.xlu0 %1518
  %v1521 = vmin.f32 %v1499, %v1519
  %v1522 = vmin.f32 %v1500, %v1519
  %v1523 = vmin.f32 %v1501, %v1519
  %v1524 = vmin.f32 %v1502, %v1519
  %v1525 = vmin.f32 %v1503, %v1519
  %v1526 = vmin.f32 %v1504, %v1519
  %v1527 = vmin.f32 %v1505, %v1519
  %v1528 = vmin.f32 %v1506, %v1519
  %v1529 = vmin.f32 %v1507, %v1519
  %v1530 = vmin.f32 %v1508, %v1519
  %v1531 = vmin.f32 %v1509, %v1519
  %v1532 = vmin.f32 %v1510, %v1519
  %v1533 = vmin.f32 %v1511, %v1519
  %v1534 = vmin.f32 %v1512, %v1519
  %v1535 = vmin.f32 %v1513, %v1519
  %v1536 = vmin.f32 %v1514, %v1519
  %v1537 = vmul.f32 %v352, %v1521
  %v1538 = vmul.f32 %v354, %v1522
  %v1539 = vmul.f32 %v393, %v1523
  %v1540 = vmul.f32 %v395, %v1524
  %v1541 = vmul.f32 %v434, %v1525
  %v1542 = vmul.f32 %v436, %v1526
  %v1543 = vmul.f32 %v475, %v1527
  %v1544 = vmul.f32 %v477, %v1528
  %v1545 = vmul.f32 %v516, %v1529
  %v1546 = vmul.f32 %v518, %v1530
  %v1547 = vmul.f32 %v557, %v1531
  %v1548 = vmul.f32 %v559, %v1532
  %v1549 = vmul.f32 %v598, %v1533
  %v1550 = vmul.f32 %v600, %v1534
  %v1551 = vmul.f32 %v639, %v1535
  %v1552 = vmul.f32 %v641, %v1536
  %v1553 = vpack.c.bf16 %v1537, %v1537
  %v1554 = vpack.c.bf16 %v1538, %v1538
  %v1555 = vpack.c.bf16 %v1539, %v1539
  %v1556 = vpack.c.bf16 %v1540, %v1540
  %v1557 = vpack.c.bf16 %v1541, %v1541
  %v1558 = vpack.c.bf16 %v1542, %v1542
  %v1559 = vpack.c.bf16 %v1543, %v1543
  %v1560 = vpack.c.bf16 %v1544, %v1544
  %v1561 = vpack.c.bf16 %v1545, %v1545
  %v1562 = vpack.c.bf16 %v1546, %v1546
  %v1563 = vpack.c.bf16 %v1547, %v1547
  %v1564 = vpack.c.bf16 %v1548, %v1548
  %v1565 = vpack.c.bf16 %v1549, %v1549
  %v1566 = vpack.c.bf16 %v1550, %v1550
  %v1567 = vpack.c.bf16 %v1551, %v1551
  %v1568 = vpack.c.bf16 %v1552, %v1552
  %v1569 = vmul.f32 %v680, %v1521
  %v1570 = vmul.f32 %v682, %v1522
  %v1571 = vmul.f32 %v721, %v1523
  %v1572 = vmul.f32 %v723, %v1524
  %v1573 = vmul.f32 %v762, %v1525
  %v1574 = vmul.f32 %v764, %v1526
  %v1575 = vmul.f32 %v803, %v1527
  %v1576 = vmul.f32 %v805, %v1528
  %v1577 = vmul.f32 %v844, %v1529
  %v1578 = vmul.f32 %v846, %v1530
  %v1579 = vmul.f32 %v885, %v1531
  %v1580 = vmul.f32 %v887, %v1532
  %v1581 = vmul.f32 %v926, %v1533
  %v1582 = vmul.f32 %v928, %v1534
  %v1583 = vmul.f32 %v967, %v1535
  %v1584 = vmul.f32 %v969, %v1536
  %v1585 = vpack.c.bf16 %v1569, %v1569
  %v1586 = vpack.c.bf16 %v1570, %v1570
  %v1587 = vpack.c.bf16 %v1571, %v1571
  %v1588 = vpack.c.bf16 %v1572, %v1572
  %v1589 = vpack.c.bf16 %v1573, %v1573
  %v1590 = vpack.c.bf16 %v1574, %v1574
  %v1591 = vpack.c.bf16 %v1575, %v1575
  %v1592 = vpack.c.bf16 %v1576, %v1576
  %v1593 = vpack.c.bf16 %v1577, %v1577
  %v1594 = vpack.c.bf16 %v1578, %v1578
  %v1595 = vpack.c.bf16 %v1579, %v1579
  %v1596 = vpack.c.bf16 %v1580, %v1580
  %v1597 = vpack.c.bf16 %v1581, %v1581
  %v1598 = vpack.c.bf16 %v1582, %v1582
  %v1599 = vpack.c.bf16 %v1583, %v1583
  %v1600 = vpack.c.bf16 %v1584, %v1584
  %v1601 = vmul.f32 %v1008, %v1521
  %v1602 = vmul.f32 %v1010, %v1522
  %v1603 = vmul.f32 %v1049, %v1523
  %v1604 = vmul.f32 %v1051, %v1524
  %v1605 = vmul.f32 %v1090, %v1525
  %v1606 = vmul.f32 %v1092, %v1526
  %v1607 = vmul.f32 %v1131, %v1527
  %v1608 = vmul.f32 %v1133, %v1528
  %v1609 = vmul.f32 %v1172, %v1529
  %v1610 = vmul.f32 %v1174, %v1530
  %v1611 = vmul.f32 %v1213, %v1531
  %v1612 = vmul.f32 %v1215, %v1532
  %v1613 = vmul.f32 %v1254, %v1533
  %v1614 = vmul.f32 %v1256, %v1534
  %v1615 = vmul.f32 %v1295, %v1535
  %v1616 = vmul.f32 %v1297, %v1536
  %v1617 = vpack.c.bf16 %v1601, %v1601
  %v1618 = vpack.c.bf16 %v1602, %v1602
  %v1619 = vpack.c.bf16 %v1603, %v1603
  %v1620 = vpack.c.bf16 %v1604, %v1604
  %v1621 = vpack.c.bf16 %v1605, %v1605
  %v1622 = vpack.c.bf16 %v1606, %v1606
  %v1623 = vpack.c.bf16 %v1607, %v1607
  %v1624 = vpack.c.bf16 %v1608, %v1608
  %v1625 = vpack.c.bf16 %v1609, %v1609
  %v1626 = vpack.c.bf16 %v1610, %v1610
  %v1627 = vpack.c.bf16 %v1611, %v1611
  %v1628 = vpack.c.bf16 %v1612, %v1612
  %v1629 = vpack.c.bf16 %v1613, %v1613
  %v1630 = vpack.c.bf16 %v1614, %v1614
  %v1631 = vpack.c.bf16 %v1615, %v1615
  %v1632 = vpack.c.bf16 %v1616, %v1616
  %v1649 = vunpack.c.l.b16 %v1553
  %v1650 = vunpack.c.l.b16 %v1554
  %v1651 = vunpack.c.l.b16 %v1555
  %v1652 = vunpack.c.l.b16 %v1556
  %v1653 = vunpack.c.l.b16 %v1557
  %v1654 = vunpack.c.l.b16 %v1558
  %v1655 = vunpack.c.l.b16 %v1559
  %v1656 = vunpack.c.l.b16 %v1560
  %v1657 = vunpack.c.l.b16 %v1561
  %v1658 = vunpack.c.l.b16 %v1562
  %v1659 = vunpack.c.l.b16 %v1563
  %v1660 = vunpack.c.l.b16 %v1564
  %v1661 = vunpack.c.l.b16 %v1565
  %v1662 = vunpack.c.l.b16 %v1566
  %v1663 = vunpack.c.l.b16 %v1567
  %v1664 = vunpack.c.l.b16 %v1568
  %v1665 = vpack.c.b16 %v1650, %v1649
  %v1666 = vpack.c.b16 %v1652, %v1651
  %v1667 = vpack.c.b16 %v1654, %v1653
  %v1668 = vpack.c.b16 %v1656, %v1655
  %v1669 = vpack.c.b16 %v1658, %v1657
  %v1670 = vpack.c.b16 %v1660, %v1659
  %v1671 = vpack.c.b16 %v1662, %v1661
  %v1672 = vpack.c.b16 %v1664, %v1663
  %1681 = vst [vmem:[%s4] sm:$0xff] %v1665
  %1682 = vst [vmem:[%s4 + $0x8] sm:$0xff] %v1666
  %1683 = vst [vmem:[%s4 + $0x10] sm:$0xff] %v1667
  %1684 = vst [vmem:[%s4 + $0x18] sm:$0xff] %v1668
  %1685 = vst [vmem:[%s4 + $0x20] sm:$0xff] %v1669
  %1686 = vst [vmem:[%s4 + $0x28] sm:$0xff] %v1670
  %1687 = vst [vmem:[%s4 + $0x30] sm:$0xff] %v1671
  %1688 = vst [vmem:[%s4 + $0x38] sm:$0xff] %v1672
  %v1705 = vunpack.c.l.b16 %v1585
  %v1706 = vunpack.c.l.b16 %v1586
  %v1707 = vunpack.c.l.b16 %v1587
  %v1708 = vunpack.c.l.b16 %v1588
  %v1709 = vunpack.c.l.b16 %v1589
  %v1710 = vunpack.c.l.b16 %v1590
  %v1711 = vunpack.c.l.b16 %v1591
  %v1712 = vunpack.c.l.b16 %v1592
  %v1713 = vunpack.c.l.b16 %v1593
  %v1714 = vunpack.c.l.b16 %v1594
  %v1715 = vunpack.c.l.b16 %v1595
  %v1716 = vunpack.c.l.b16 %v1596
  %v1717 = vunpack.c.l.b16 %v1597
  %v1718 = vunpack.c.l.b16 %v1598
  %v1719 = vunpack.c.l.b16 %v1599
  %v1720 = vunpack.c.l.b16 %v1600
  %v1721 = vpack.c.b16 %v1706, %v1705
  %v1722 = vpack.c.b16 %v1708, %v1707
  %v1723 = vpack.c.b16 %v1710, %v1709
  %v1724 = vpack.c.b16 %v1712, %v1711
  %v1725 = vpack.c.b16 %v1714, %v1713
  %v1726 = vpack.c.b16 %v1716, %v1715
  %v1727 = vpack.c.b16 %v1718, %v1717
  %v1728 = vpack.c.b16 %v1720, %v1719
  %1737 = vst [vmem:[%s4 + $0x40] sm:$0xff] %v1721
  %1738 = vst [vmem:[%s4 + $0x48] sm:$0xff] %v1722
  %1739 = vst [vmem:[%s4 + $0x50] sm:$0xff] %v1723
  %1740 = vst [vmem:[%s4 + $0x58] sm:$0xff] %v1724
  %1741 = vst [vmem:[%s4 + $0x60] sm:$0xff] %v1725
  %1742 = vst [vmem:[%s4 + $0x68] sm:$0xff] %v1726
  %1743 = vst [vmem:[%s4 + $0x70] sm:$0xff] %v1727
  %1744 = vst [vmem:[%s4 + $0x78] sm:$0xff] %v1728
  %v1761 = vunpack.c.l.b16 %v1617
  %v1762 = vunpack.c.l.b16 %v1618
  %v1763 = vunpack.c.l.b16 %v1619
  %v1764 = vunpack.c.l.b16 %v1620
  %v1765 = vunpack.c.l.b16 %v1621
  %v1766 = vunpack.c.l.b16 %v1622
  %v1767 = vunpack.c.l.b16 %v1623
  %v1768 = vunpack.c.l.b16 %v1624
  %v1769 = vunpack.c.l.b16 %v1625
  %v1770 = vunpack.c.l.b16 %v1626
  %v1771 = vunpack.c.l.b16 %v1627
  %v1772 = vunpack.c.l.b16 %v1628
  %v1773 = vunpack.c.l.b16 %v1629
  %v1774 = vunpack.c.l.b16 %v1630
  %v1775 = vunpack.c.l.b16 %v1631
  %v1776 = vunpack.c.l.b16 %v1632
  %v1777 = vpack.c.b16 %v1762, %v1761
  %v1778 = vpack.c.b16 %v1764, %v1763
  %v1779 = vpack.c.b16 %v1766, %v1765
  %v1780 = vpack.c.b16 %v1768, %v1767
  %v1781 = vpack.c.b16 %v1770, %v1769
  %v1782 = vpack.c.b16 %v1772, %v1771
  %v1783 = vpack.c.b16 %v1774, %v1773
  %v1784 = vpack.c.b16 %v1776, %v1775
  %1793 = vst [vmem:[%s4 + $0x80] sm:$0xff] %v1777
  %1794 = vst [vmem:[%s4 + $0x88] sm:$0xff] %v1778
  %1795 = vst [vmem:[%s4 + $0x90] sm:$0xff] %v1779
  %1796 = vst [vmem:[%s4 + $0x98] sm:$0xff] %v1780
  %1797 = vst [vmem:[%s4 + $0xa0] sm:$0xff] %v1781
  %1798 = vst [vmem:[%s4 + $0xa8] sm:$0xff] %v1782
  %1799 = vst [vmem:[%s4 + $0xb0] sm:$0xff] %v1783
  %1800 = vst [vmem:[%s4 + $0xb8] sm:$0xff] %v1784
  %1801 = vmatprep.subr.bf16.mxu0 %v1586
  %1802 = vmatpush1.bf16.xpose.msra.mxu0 %v1585
  %1803 = vmatprep.subr.bf16.mxu0 0
  %1804 = vmatpush1.bf16.xpose.msra.mxu0 0
  %1805 = vmatprep.subr.bf16.mxu0 0
  %1806 = vmatpush1.bf16.xpose.msra.mxu0 0
  %1807 = vmatprep.subr.bf16.mxu0 0
  %1808 = vmatpush1.bf16.xpose.msra.mxu0 0
  %1809 = vmatprep.subr.bf16.mxu0 0
  %1810 = vmatpush1.bf16.xpose.msra.mxu0 0
  %1811 = vmatprep.subr.bf16.mxu0 0
  %1812 = vmatpush1.bf16.xpose.msra.mxu0 0
  %1813 = vmatprep.subr.bf16.mxu0 0
  %1814 = vmatpush1.bf16.xpose.msra.mxu0 0
  %1815 = vmatprep.subr.bf16.mxu0 0
  %1816 = vmatpush1.bf16.xpose.msra.mxu0 0
  %1817 = vmatprep.subr.bf16.mxu0 0
  %1818 = vmatpush1.bf16.xpose.msra.mxu0 0
  %1819 = vmatprep.subr.bf16.mxu0 0
  %1820 = vmatpush1.bf16.xpose.msra.mxu0 0
  %1821 = vmatprep.subr.bf16.mxu0 0
  %1822 = vmatpush1.bf16.xpose.msra.mxu0 0
  %1823 = vmatprep.subr.bf16.mxu0 0
  %1824 = vmatpush1.bf16.xpose.msra.mxu0 0
  %1825 = vmatprep.subr.bf16.mxu0 0
  %1826 = vmatpush1.bf16.xpose.msra.mxu0 0
  %1827 = vmatprep.subr.bf16.mxu0 0
  %1828 = vmatpush1.bf16.xpose.msra.mxu0 0
  %1829 = vmatprep.subr.bf16.mxu0 0
  %1830 = vmatpush1.bf16.xpose.msra.mxu0 0
  %1831 = vmatprep.subr.bf16.mxu0 0
  %1832 = vmatpush1.bf16.xpose.msra.mxu0 0
  %1833 = vmatprep.mubr.bf16.mxu0 %v1586
  %1834 = vmatmul.mubr.bf16.gmra.mrb[0].mxu0 %v1585
  %v1835 = vpop.f32.mrb[0].mxu0
  %v1836 = vadd.f32 0.0, %v1835
  %v1837 = vpop.f32.mrb[0].mxu0
  %v1838 = vpop.f32.mrb[0].mxu0
  %v1839 = vpop.f32.mrb[0].mxu0
  %1840 = vdwg.mxu0
  %1841 = vmatprep.subr.bf16.mxu0 %v1588
  %1842 = vmatpush1.bf16.xpose.msra.mxu0 %v1587
  %1843 = vmatprep.subr.bf16.mxu0 0
  %1844 = vmatpush1.bf16.xpose.msra.mxu0 0
  %1845 = vmatprep.subr.bf16.mxu0 0
  %1846 = vmatpush1.bf16.xpose.msra.mxu0 0
  %1847 = vmatprep.subr.bf16.mxu0 0
  %1848 = vmatpush1.bf16.xpose.msra.mxu0 0
  %1849 = vmatprep.subr.bf16.mxu0 0
  %1850 = vmatpush1.bf16.xpose.msra.mxu0 0
  %1851 = vmatprep.subr.bf16.mxu0 0
  %1852 = vmatpush1.bf16.xpose.msra.mxu0 0
  %1853 = vmatprep.subr.bf16.mxu0 0
  %1854 = vmatpush1.bf16.xpose.msra.mxu0 0
  %1855 = vmatprep.subr.bf16.mxu0 0
  %1856 = vmatpush1.bf16.xpose.msra.mxu0 0
  %1857 = vmatprep.subr.bf16.mxu0 0
  %1858 = vmatpush1.bf16.xpose.msra.mxu0 0
  %1859 = vmatprep.subr.bf16.mxu0 0
  %1860 = vmatpush1.bf16.xpose.msra.mxu0 0
  %1861 = vmatprep.subr.bf16.mxu0 0
  %1862 = vmatpush1.bf16.xpose.msra.mxu0 0
  %1863 = vmatprep.subr.bf16.mxu0 0
  %1864 = vmatpush1.bf16.xpose.msra.mxu0 0
  %1865 = vmatprep.subr.bf16.mxu0 0
  %1866 = vmatpush1.bf16.xpose.msra.mxu0 0
  %1867 = vmatprep.subr.bf16.mxu0 0
  %1868 = vmatpush1.bf16.xpose.msra.mxu0 0
  %1869 = vmatprep.subr.bf16.mxu0 0
  %1870 = vmatpush1.bf16.xpose.msra.mxu0 0
  %1871 = vmatprep.subr.bf16.mxu0 0
  %1872 = vmatpush1.bf16.xpose.msra.mxu0 0
  %1873 = vmatprep.mubr.bf16.mxu0 %v1588
  %1874 = vmatmul.mubr.bf16.gmra.mrb[0].mxu0 %v1587
  %v1875 = vpop.f32.mrb[0].mxu0
  %v1876 = vadd.f32 %v1836, %v1875
  %v1877 = vpop.f32.mrb[0].mxu0
  %v1878 = vpop.f32.mrb[0].mxu0
  %v1879 = vpop.f32.mrb[0].mxu0
  %1880 = vdwg.mxu0
  %1881 = vmatprep.subr.bf16.mxu0 %v1590
  %1882 = vmatpush1.bf16.xpose.msra.mxu0 %v1589
  %1883 = vmatprep.subr.bf16.mxu0 0
  %1884 = vmatpush1.bf16.xpose.msra.mxu0 0
  %1885 = vmatprep.subr.bf16.mxu0 0
  %1886 = vmatpush1.bf16.xpose.msra.mxu0 0
  %1887 = vmatprep.subr.bf16.mxu0 0
  %1888 = vmatpush1.bf16.xpose.msra.mxu0 0
  %1889 = vmatprep.subr.bf16.mxu0 0
  %1890 = vmatpush1.bf16.xpose.msra.mxu0 0
  %1891 = vmatprep.subr.bf16.mxu0 0
  %1892 = vmatpush1.bf16.xpose.msra.mxu0 0
  %1893 = vmatprep.subr.bf16.mxu0 0
  %1894 = vmatpush1.bf16.xpose.msra.mxu0 0
  %1895 = vmatprep.subr.bf16.mxu0 0
  %1896 = vmatpush1.bf16.xpose.msra.mxu0 0
  %1897 = vmatprep.subr.bf16.mxu0 0
  %1898 = vmatpush1.bf16.xpose.msra.mxu0 0
  %1899 = vmatprep.subr.bf16.mxu0 0
  %1900 = vmatpush1.bf16.xpose.msra.mxu0 0
  %1901 = vmatprep.subr.bf16.mxu0 0
  %1902 = vmatpush1.bf16.xpose.msra.mxu0 0
  %1903 = vmatprep.subr.bf16.mxu0 0
  %1904 = vmatpush1.bf16.xpose.msra.mxu0 0
  %1905 = vmatprep.subr.bf16.mxu0 0
  %1906 = vmatpush1.bf16.xpose.msra.mxu0 0
  %1907 = vmatprep.subr.bf16.mxu0 0
  %1908 = vmatpush1.bf16.xpose.msra.mxu0 0
  %1909 = vmatprep.subr.bf16.mxu0 0
  %1910 = vmatpush1.bf16.xpose.msra.mxu0 0
  %1911 = vmatprep.subr.bf16.mxu0 0
  %1912 = vmatpush1.bf16.xpose.msra.mxu0 0
  %1913 = vmatprep.mubr.bf16.mxu0 %v1590
  %1914 = vmatmul.mubr.bf16.gmra.mrb[0].mxu0 %v1589
  %v1915 = vpop.f32.mrb[0].mxu0
  %v1916 = vadd.f32 %v1876, %v1915
  %v1917 = vpop.f32.mrb[0].mxu0
  %v1918 = vpop.f32.mrb[0].mxu0
  %v1919 = vpop.f32.mrb[0].mxu0
  %1920 = vdwg.mxu0
  %1921 = vmatprep.subr.bf16.mxu0 %v1592
  %1922 = vmatpush1.bf16.xpose.msra.mxu0 %v1591
  %1923 = vmatprep.subr.bf16.mxu0 0
  %1924 = vmatpush1.bf16.xpose.msra.mxu0 0
  %1925 = vmatprep.subr.bf16.mxu0 0
  %1926 = vmatpush1.bf16.xpose.msra.mxu0 0
  %1927 = vmatprep.subr.bf16.mxu0 0
  %1928 = vmatpush1.bf16.xpose.msra.mxu0 0
  %1929 = vmatprep.subr.bf16.mxu0 0
  %1930 = vmatpush1.bf16.xpose.msra.mxu0 0
  %1931 = vmatprep.subr.bf16.mxu0 0
  %1932 = vmatpush1.bf16.xpose.msra.mxu0 0
  %1933 = vmatprep.subr.bf16.mxu0 0
  %1934 = vmatpush1.bf16.xpose.msra.mxu0 0
  %1935 = vmatprep.subr.bf16.mxu0 0
  %1936 = vmatpush1.bf16.xpose.msra.mxu0 0
  %1937 = vmatprep.subr.bf16.mxu0 0
  %1938 = vmatpush1.bf16.xpose.msra.mxu0 0
  %1939 = vmatprep.subr.bf16.mxu0 0
  %1940 = vmatpush1.bf16.xpose.msra.mxu0 0
  %1941 = vmatprep.subr.bf16.mxu0 0
  %1942 = vmatpush1.bf16.xpose.msra.mxu0 0
  %1943 = vmatprep.subr.bf16.mxu0 0
  %1944 = vmatpush1.bf16.xpose.msra.mxu0 0
  %1945 = vmatprep.subr.bf16.mxu0 0
  %1946 = vmatpush1.bf16.xpose.msra.mxu0 0
  %1947 = vmatprep.subr.bf16.mxu0 0
  %1948 = vmatpush1.bf16.xpose.msra.mxu0 0
  %1949 = vmatprep.subr.bf16.mxu0 0
  %1950 = vmatpush1.bf16.xpose.msra.mxu0 0
  %1951 = vmatprep.subr.bf16.mxu0 0
  %1952 = vmatpush1.bf16.xpose.msra.mxu0 0
  %1953 = vmatprep.mubr.bf16.mxu0 %v1592
  %1954 = vmatmul.mubr.bf16.gmra.mrb[0].mxu0 %v1591
  %v1955 = vpop.f32.mrb[0].mxu0
  %v1956 = vadd.f32 %v1916, %v1955
  %v1957 = vpop.f32.mrb[0].mxu0
  %v1958 = vpop.f32.mrb[0].mxu0
  %v1959 = vpop.f32.mrb[0].mxu0
  %1960 = vdwg.mxu0
  %1961 = vmatprep.subr.bf16.mxu0 %v1594
  %1962 = vmatpush1.bf16.xpose.msra.mxu0 %v1593
  %1963 = vmatprep.subr.bf16.mxu0 0
  %1964 = vmatpush1.bf16.xpose.msra.mxu0 0
  %1965 = vmatprep.subr.bf16.mxu0 0
  %1966 = vmatpush1.bf16.xpose.msra.mxu0 0
  %1967 = vmatprep.subr.bf16.mxu0 0
  %1968 = vmatpush1.bf16.xpose.msra.mxu0 0
  %1969 = vmatprep.subr.bf16.mxu0 0
  %1970 = vmatpush1.bf16.xpose.msra.mxu0 0
  %1971 = vmatprep.subr.bf16.mxu0 0
  %1972 = vmatpush1.bf16.xpose.msra.mxu0 0
  %1973 = vmatprep.subr.bf16.mxu0 0
  %1974 = vmatpush1.bf16.xpose.msra.mxu0 0
  %1975 = vmatprep.subr.bf16.mxu0 0
  %1976 = vmatpush1.bf16.xpose.msra.mxu0 0
  %1977 = vmatprep.subr.bf16.mxu0 0
  %1978 = vmatpush1.bf16.xpose.msra.mxu0 0
  %1979 = vmatprep.subr.bf16.mxu0 0
  %1980 = vmatpush1.bf16.xpose.msra.mxu0 0
  %1981 = vmatprep.subr.bf16.mxu0 0
  %1982 = vmatpush1.bf16.xpose.msra.mxu0 0
  %1983 = vmatprep.subr.bf16.mxu0 0
  %1984 = vmatpush1.bf16.xpose.msra.mxu0 0
  %1985 = vmatprep.subr.bf16.mxu0 0
  %1986 = vmatpush1.bf16.xpose.msra.mxu0 0
  %1987 = vmatprep.subr.bf16.mxu0 0
  %1988 = vmatpush1.bf16.xpose.msra.mxu0 0
  %1989 = vmatprep.subr.bf16.mxu0 0
  %1990 = vmatpush1.bf16.xpose.msra.mxu0 0
  %1991 = vmatprep.subr.bf16.mxu0 0
  %1992 = vmatpush1.bf16.xpose.msra.mxu0 0
  %1993 = vmatprep.mubr.bf16.mxu0 %v1594
  %1994 = vmatmul.mubr.bf16.gmra.mrb[0].mxu0 %v1593
  %v1995 = vpop.f32.mrb[0].mxu0
  %v1996 = vadd.f32 %v1956, %v1995
  %v1997 = vpop.f32.mrb[0].mxu0
  %v1998 = vpop.f32.mrb[0].mxu0
  %v1999 = vpop.f32.mrb[0].mxu0
  %2000 = vdwg.mxu0
  %2001 = vmatprep.subr.bf16.mxu0 %v1596
  %2002 = vmatpush1.bf16.xpose.msra.mxu0 %v1595
  %2003 = vmatprep.subr.bf16.mxu0 0
  %2004 = vmatpush1.bf16.xpose.msra.mxu0 0
  %2005 = vmatprep.subr.bf16.mxu0 0
  %2006 = vmatpush1.bf16.xpose.msra.mxu0 0
  %2007 = vmatprep.subr.bf16.mxu0 0
  %2008 = vmatpush1.bf16.xpose.msra.mxu0 0
  %2009 = vmatprep.subr.bf16.mxu0 0
  %2010 = vmatpush1.bf16.xpose.msra.mxu0 0
  %2011 = vmatprep.subr.bf16.mxu0 0
  %2012 = vmatpush1.bf16.xpose.msra.mxu0 0
  %2013 = vmatprep.subr.bf16.mxu0 0
  %2014 = vmatpush1.bf16.xpose.msra.mxu0 0
  %2015 = vmatprep.subr.bf16.mxu0 0
  %2016 = vmatpush1.bf16.xpose.msra.mxu0 0
  %2017 = vmatprep.subr.bf16.mxu0 0
  %2018 = vmatpush1.bf16.xpose.msra.mxu0 0
  %2019 = vmatprep.subr.bf16.mxu0 0
  %2020 = vmatpush1.bf16.xpose.msra.mxu0 0
  %2021 = vmatprep.subr.bf16.mxu0 0
  %2022 = vmatpush1.bf16.xpose.msra.mxu0 0
  %2023 = vmatprep.subr.bf16.mxu0 0
  %2024 = vmatpush1.bf16.xpose.msra.mxu0 0
  %2025 = vmatprep.subr.bf16.mxu0 0
  %2026 = vmatpush1.bf16.xpose.msra.mxu0 0
  %2027 = vmatprep.subr.bf16.mxu0 0
  %2028 = vmatpush1.bf16.xpose.msra.mxu0 0
  %2029 = vmatprep.subr.bf16.mxu0 0
  %2030 = vmatpush1.bf16.xpose.msra.mxu0 0
  %2031 = vmatprep.subr.bf16.mxu0 0
  %2032 = vmatpush1.bf16.xpose.msra.mxu0 0
  %2033 = vmatprep.mubr.bf16.mxu0 %v1596
  %2034 = vmatmul.mubr.bf16.gmra.mrb[0].mxu0 %v1595
  %v2035 = vpop.f32.mrb[0].mxu0
  %v2036 = vadd.f32 %v1996, %v2035
  %v2037 = vpop.f32.mrb[0].mxu0
  %v2038 = vpop.f32.mrb[0].mxu0
  %v2039 = vpop.f32.mrb[0].mxu0
  %2040 = vdwg.mxu0
  %2041 = vmatprep.subr.bf16.mxu0 %v1598
  %2042 = vmatpush1.bf16.xpose.msra.mxu0 %v1597
  %2043 = vmatprep.subr.bf16.mxu0 0
  %2044 = vmatpush1.bf16.xpose.msra.mxu0 0
  %2045 = vmatprep.subr.bf16.mxu0 0
  %2046 = vmatpush1.bf16.xpose.msra.mxu0 0
  %2047 = vmatprep.subr.bf16.mxu0 0
  %2048 = vmatpush1.bf16.xpose.msra.mxu0 0
  %2049 = vmatprep.subr.bf16.mxu0 0
  %2050 = vmatpush1.bf16.xpose.msra.mxu0 0
  %2051 = vmatprep.subr.bf16.mxu0 0
  %2052 = vmatpush1.bf16.xpose.msra.mxu0 0
  %2053 = vmatprep.subr.bf16.mxu0 0
  %2054 = vmatpush1.bf16.xpose.msra.mxu0 0
  %2055 = vmatprep.subr.bf16.mxu0 0
  %2056 = vmatpush1.bf16.xpose.msra.mxu0 0
  %2057 = vmatprep.subr.bf16.mxu0 0
  %2058 = vmatpush1.bf16.xpose.msra.mxu0 0
  %2059 = vmatprep.subr.bf16.mxu0 0
  %2060 = vmatpush1.bf16.xpose.msra.mxu0 0
  %2061 = vmatprep.subr.bf16.mxu0 0
  %2062 = vmatpush1.bf16.xpose.msra.mxu0 0
  %2063 = vmatprep.subr.bf16.mxu0 0
  %2064 = vmatpush1.bf16.xpose.msra.mxu0 0
  %2065 = vmatprep.subr.bf16.mxu0 0
  %2066 = vmatpush1.bf16.xpose.msra.mxu0 0
  %2067 = vmatprep.subr.bf16.mxu0 0
  %2068 = vmatpush1.bf16.xpose.msra.mxu0 0
  %2069 = vmatprep.subr.bf16.mxu0 0
  %2070 = vmatpush1.bf16.xpose.msra.mxu0 0
  %2071 = vmatprep.subr.bf16.mxu0 0
  %2072 = vmatpush1.bf16.xpose.msra.mxu0 0
  %2073 = vmatprep.mubr.bf16.mxu0 %v1598
  %2074 = vmatmul.mubr.bf16.gmra.mrb[0].mxu0 %v1597
  %v2075 = vpop.f32.mrb[0].mxu0
  %v2076 = vadd.f32 %v2036, %v2075
  %v2077 = vpop.f32.mrb[0].mxu0
  %v2078 = vpop.f32.mrb[0].mxu0
  %v2079 = vpop.f32.mrb[0].mxu0
  %2080 = vdwg.mxu0
  %2081 = vmatprep.subr.bf16.mxu0 %v1600
  %2082 = vmatpush1.bf16.xpose.msra.mxu0 %v1599
  %2083 = vmatprep.subr.bf16.mxu0 0
  %2084 = vmatpush1.bf16.xpose.msra.mxu0 0
  %2085 = vmatprep.subr.bf16.mxu0 0
  %2086 = vmatpush1.bf16.xpose.msra.mxu0 0
  %2087 = vmatprep.subr.bf16.mxu0 0
  %2088 = vmatpush1.bf16.xpose.msra.mxu0 0
  %2089 = vmatprep.subr.bf16.mxu0 0
  %2090 = vmatpush1.bf16.xpose.msra.mxu0 0
  %2091 = vmatprep.subr.bf16.mxu0 0
  %2092 = vmatpush1.bf16.xpose.msra.mxu0 0
  %2093 = vmatprep.subr.bf16.mxu0 0
  %2094 = vmatpush1.bf16.xpose.msra.mxu0 0
  %2095 = vmatprep.subr.bf16.mxu0 0
  %2096 = vmatpush1.bf16.xpose.msra.mxu0 0
  %2097 = vmatprep.subr.bf16.mxu0 0
  %2098 = vmatpush1.bf16.xpose.msra.mxu0 0
  %2099 = vmatprep.subr.bf16.mxu0 0
  %2100 = vmatpush1.bf16.xpose.msra.mxu0 0
  %2101 = vmatprep.subr.bf16.mxu0 0
  %2102 = vmatpush1.bf16.xpose.msra.mxu0 0
  %2103 = vmatprep.subr.bf16.mxu0 0
  %2104 = vmatpush1.bf16.xpose.msra.mxu0 0
  %2105 = vmatprep.subr.bf16.mxu0 0
  %2106 = vmatpush1.bf16.xpose.msra.mxu0 0
  %2107 = vmatprep.subr.bf16.mxu0 0
  %2108 = vmatpush1.bf16.xpose.msra.mxu0 0
  %2109 = vmatprep.subr.bf16.mxu0 0
  %2110 = vmatpush1.bf16.xpose.msra.mxu0 0
  %2111 = vmatprep.subr.bf16.mxu0 0
  %2112 = vmatpush1.bf16.xpose.msra.mxu0 0
  %2113 = vmatprep.mubr.bf16.mxu0 %v1600
  %2114 = vmatmul.mubr.bf16.gmra.mrb[0].mxu0 %v1599
  %v2115 = vpop.f32.mrb[0].mxu0
  %v2116 = vadd.f32 %v2076, %v2115
  %v2117 = vpop.f32.mrb[0].mxu0
  %v2118 = vpop.f32.mrb[0].mxu0
  %v2119 = vpop.f32.mrb[0].mxu0
  %2120 = vdwg.mxu0
  %2121 = vmatprep.subr.bf16.mxu0 %v1554
  %2122 = vmatpush1.bf16.xpose.msra.mxu0 %v1553
  %2123 = vmatprep.subr.bf16.mxu0 0
  %2124 = vmatpush1.bf16.xpose.msra.mxu0 0
  %2125 = vmatprep.subr.bf16.mxu0 0
  %2126 = vmatpush1.bf16.xpose.msra.mxu0 0
  %2127 = vmatprep.subr.bf16.mxu0 0
  %2128 = vmatpush1.bf16.xpose.msra.mxu0 0
  %2129 = vmatprep.subr.bf16.mxu0 0
  %2130 = vmatpush1.bf16.xpose.msra.mxu0 0
  %2131 = vmatprep.subr.bf16.mxu0 0
  %2132 = vmatpush1.bf16.xpose.msra.mxu0 0
  %2133 = vmatprep.subr.bf16.mxu0 0
  %2134 = vmatpush1.bf16.xpose.msra.mxu0 0
  %2135 = vmatprep.subr.bf16.mxu0 0
  %2136 = vmatpush1.bf16.xpose.msra.mxu0 0
  %2137 = vmatprep.subr.bf16.mxu0 0
  %2138 = vmatpush1.bf16.xpose.msra.mxu0 0
  %2139 = vmatprep.subr.bf16.mxu0 0
  %2140 = vmatpush1.bf16.xpose.msra.mxu0 0
  %2141 = vmatprep.subr.bf16.mxu0 0
  %2142 = vmatpush1.bf16.xpose.msra.mxu0 0
  %2143 = vmatprep.subr.bf16.mxu0 0
  %2144 = vmatpush1.bf16.xpose.msra.mxu0 0
  %2145 = vmatprep.subr.bf16.mxu0 0
  %2146 = vmatpush1.bf16.xpose.msra.mxu0 0
  %2147 = vmatprep.subr.bf16.mxu0 0
  %2148 = vmatpush1.bf16.xpose.msra.mxu0 0
  %2149 = vmatprep.subr.bf16.mxu0 0
  %2150 = vmatpush1.bf16.xpose.msra.mxu0 0
  %2151 = vmatprep.subr.bf16.mxu0 0
  %2152 = vmatpush1.bf16.xpose.msra.mxu0 0
  %2153 = vmatprep.mubr.bf16.mxu0 %v1554
  %2154 = vmatmul.mubr.bf16.gmra.mrb[0].mxu0 %v1553
  %v2155 = vpop.f32.mrb[0].mxu0
  %v2156 = vadd.f32 %v2116, %v2155
  %v2157 = vpop.f32.mrb[0].mxu0
  %v2158 = vpop.f32.mrb[0].mxu0
  %v2159 = vpop.f32.mrb[0].mxu0
  %2160 = vdwg.mxu0
  %2161 = vmatprep.subr.bf16.mxu0 %v1556
  %2162 = vmatpush1.bf16.xpose.msra.mxu0 %v1555
  %2163 = vmatprep.subr.bf16.mxu0 0
  %2164 = vmatpush1.bf16.xpose.msra.mxu0 0
  %2165 = vmatprep.subr.bf16.mxu0 0
  %2166 = vmatpush1.bf16.xpose.msra.mxu0 0
  %2167 = vmatprep.subr.bf16.mxu0 0
  %2168 = vmatpush1.bf16.xpose.msra.mxu0 0
  %2169 = vmatprep.subr.bf16.mxu0 0
  %2170 = vmatpush1.bf16.xpose.msra.mxu0 0
  %2171 = vmatprep.subr.bf16.mxu0 0
  %2172 = vmatpush1.bf16.xpose.msra.mxu0 0
  %2173 = vmatprep.subr.bf16.mxu0 0
  %2174 = vmatpush1.bf16.xpose.msra.mxu0 0
  %2175 = vmatprep.subr.bf16.mxu0 0
  %2176 = vmatpush1.bf16.xpose.msra.mxu0 0
  %2177 = vmatprep.subr.bf16.mxu0 0
  %2178 = vmatpush1.bf16.xpose.msra.mxu0 0
  %2179 = vmatprep.subr.bf16.mxu0 0
  %2180 = vmatpush1.bf16.xpose.msra.mxu0 0
  %2181 = vmatprep.subr.bf16.mxu0 0
  %2182 = vmatpush1.bf16.xpose.msra.mxu0 0
  %2183 = vmatprep.subr.bf16.mxu0 0
  %2184 = vmatpush1.bf16.xpose.msra.mxu0 0
  %2185 = vmatprep.subr.bf16.mxu0 0
  %2186 = vmatpush1.bf16.xpose.msra.mxu0 0
  %2187 = vmatprep.subr.bf16.mxu0 0
  %2188 = vmatpush1.bf16.xpose.msra.mxu0 0
  %2189 = vmatprep.subr.bf16.mxu0 0
  %2190 = vmatpush1.bf16.xpose.msra.mxu0 0
  %2191 = vmatprep.subr.bf16.mxu0 0
  %2192 = vmatpush1.bf16.xpose.msra.mxu0 0
  %2193 = vmatprep.mubr.bf16.mxu0 %v1556
  %2194 = vmatmul.mubr.bf16.gmra.mrb[0].mxu0 %v1555
  %v2195 = vpop.f32.mrb[0].mxu0
  %v2196 = vadd.f32 %v2156, %v2195
  %v2197 = vpop.f32.mrb[0].mxu0
  %v2198 = vpop.f32.mrb[0].mxu0
  %v2199 = vpop.f32.mrb[0].mxu0
  %2200 = vdwg.mxu0
  %2201 = vmatprep.subr.bf16.mxu0 %v1558
  %2202 = vmatpush1.bf16.xpose.msra.mxu0 %v1557
  %2203 = vmatprep.subr.bf16.mxu0 0
  %2204 = vmatpush1.bf16.xpose.msra.mxu0 0
  %2205 = vmatprep.subr.bf16.mxu0 0
  %2206 = vmatpush1.bf16.xpose.msra.mxu0 0
  %2207 = vmatprep.subr.bf16.mxu0 0
  %2208 = vmatpush1.bf16.xpose.msra.mxu0 0
  %2209 = vmatprep.subr.bf16.mxu0 0
  %2210 = vmatpush1.bf16.xpose.msra.mxu0 0
  %2211 = vmatprep.subr.bf16.mxu0 0
  %2212 = vmatpush1.bf16.xpose.msra.mxu0 0
  %2213 = vmatprep.subr.bf16.mxu0 0
  %2214 = vmatpush1.bf16.xpose.msra.mxu0 0
  %2215 = vmatprep.subr.bf16.mxu0 0
  %2216 = vmatpush1.bf16.xpose.msra.mxu0 0
  %2217 = vmatprep.subr.bf16.mxu0 0
  %2218 = vmatpush1.bf16.xpose.msra.mxu0 0
  %2219 = vmatprep.subr.bf16.mxu0 0
  %2220 = vmatpush1.bf16.xpose.msra.mxu0 0
  %2221 = vmatprep.subr.bf16.mxu0 0
  %2222 = vmatpush1.bf16.xpose.msra.mxu0 0
  %2223 = vmatprep.subr.bf16.mxu0 0
  %2224 = vmatpush1.bf16.xpose.msra.mxu0 0
  %2225 = vmatprep.subr.bf16.mxu0 0
  %2226 = vmatpush1.bf16.xpose.msra.mxu0 0
  %2227 = vmatprep.subr.bf16.mxu0 0
  %2228 = vmatpush1.bf16.xpose.msra.mxu0 0
  %2229 = vmatprep.subr.bf16.mxu0 0
  %2230 = vmatpush1.bf16.xpose.msra.mxu0 0
  %2231 = vmatprep.subr.bf16.mxu0 0
  %2232 = vmatpush1.bf16.xpose.msra.mxu0 0
  %2233 = vmatprep.mubr.bf16.mxu0 %v1558
  %2234 = vmatmul.mubr.bf16.gmra.mrb[0].mxu0 %v1557
  %v2235 = vpop.f32.mrb[0].mxu0
  %v2236 = vadd.f32 %v2196, %v2235
  %v2237 = vpop.f32.mrb[0].mxu0
  %v2238 = vpop.f32.mrb[0].mxu0
  %v2239 = vpop.f32.mrb[0].mxu0
  %2240 = vdwg.mxu0
  %2241 = vmatprep.subr.bf16.mxu0 %v1560
  %2242 = vmatpush1.bf16.xpose.msra.mxu0 %v1559
  %2243 = vmatprep.subr.bf16.mxu0 0
  %2244 = vmatpush1.bf16.xpose.msra.mxu0 0
  %2245 = vmatprep.subr.bf16.mxu0 0
  %2246 = vmatpush1.bf16.xpose.msra.mxu0 0
  %2247 = vmatprep.subr.bf16.mxu0 0
  %2248 = vmatpush1.bf16.xpose.msra.mxu0 0
  %2249 = vmatprep.subr.bf16.mxu0 0
  %2250 = vmatpush1.bf16.xpose.msra.mxu0 0
  %2251 = vmatprep.subr.bf16.mxu0 0
  %2252 = vmatpush1.bf16.xpose.msra.mxu0 0
  %2253 = vmatprep.subr.bf16.mxu0 0
  %2254 = vmatpush1.bf16.xpose.msra.mxu0 0
  %2255 = vmatprep.subr.bf16.mxu0 0
  %2256 = vmatpush1.bf16.xpose.msra.mxu0 0
  %2257 = vmatprep.subr.bf16.mxu0 0
  %2258 = vmatpush1.bf16.xpose.msra.mxu0 0
  %2259 = vmatprep.subr.bf16.mxu0 0
  %2260 = vmatpush1.bf16.xpose.msra.mxu0 0
  %2261 = vmatprep.subr.bf16.mxu0 0
  %2262 = vmatpush1.bf16.xpose.msra.mxu0 0
  %2263 = vmatprep.subr.bf16.mxu0 0
  %2264 = vmatpush1.bf16.xpose.msra.mxu0 0
  %2265 = vmatprep.subr.bf16.mxu0 0
  %2266 = vmatpush1.bf16.xpose.msra.mxu0 0
  %2267 = vmatprep.subr.bf16.mxu0 0
  %2268 = vmatpush1.bf16.xpose.msra.mxu0 0
  %2269 = vmatprep.subr.bf16.mxu0 0
  %2270 = vmatpush1.bf16.xpose.msra.mxu0 0
  %2271 = vmatprep.subr.bf16.mxu0 0
  %2272 = vmatpush1.bf16.xpose.msra.mxu0 0
  %2273 = vmatprep.mubr.bf16.mxu0 %v1560
  %2274 = vmatmul.mubr.bf16.gmra.mrb[0].mxu0 %v1559
  %v2275 = vpop.f32.mrb[0].mxu0
  %v2276 = vadd.f32 %v2236, %v2275
  %v2277 = vpop.f32.mrb[0].mxu0
  %v2278 = vpop.f32.mrb[0].mxu0
  %v2279 = vpop.f32.mrb[0].mxu0
  %2280 = vdwg.mxu0
  %2281 = vmatprep.subr.bf16.mxu0 %v1562
  %2282 = vmatpush1.bf16.xpose.msra.mxu0 %v1561
  %2283 = vmatprep.subr.bf16.mxu0 0
  %2284 = vmatpush1.bf16.xpose.msra.mxu0 0
  %2285 = vmatprep.subr.bf16.mxu0 0
  %2286 = vmatpush1.bf16.xpose.msra.mxu0 0
  %2287 = vmatprep.subr.bf16.mxu0 0
  %2288 = vmatpush1.bf16.xpose.msra.mxu0 0
  %2289 = vmatprep.subr.bf16.mxu0 0
  %2290 = vmatpush1.bf16.xpose.msra.mxu0 0
  %2291 = vmatprep.subr.bf16.mxu0 0
  %2292 = vmatpush1.bf16.xpose.msra.mxu0 0
  %2293 = vmatprep.subr.bf16.mxu0 0
  %2294 = vmatpush1.bf16.xpose.msra.mxu0 0
  %2295 = vmatprep.subr.bf16.mxu0 0
  %2296 = vmatpush1.bf16.xpose.msra.mxu0 0
  %2297 = vmatprep.subr.bf16.mxu0 0
  %2298 = vmatpush1.bf16.xpose.msra.mxu0 0
  %2299 = vmatprep.subr.bf16.mxu0 0
  %2300 = vmatpush1.bf16.xpose.msra.mxu0 0
  %2301 = vmatprep.subr.bf16.mxu0 0
  %2302 = vmatpush1.bf16.xpose.msra.mxu0 0
  %2303 = vmatprep.subr.bf16.mxu0 0
  %2304 = vmatpush1.bf16.xpose.msra.mxu0 0
  %2305 = vmatprep.subr.bf16.mxu0 0
  %2306 = vmatpush1.bf16.xpose.msra.mxu0 0
  %2307 = vmatprep.subr.bf16.mxu0 0
  %2308 = vmatpush1.bf16.xpose.msra.mxu0 0
  %2309 = vmatprep.subr.bf16.mxu0 0
  %2310 = vmatpush1.bf16.xpose.msra.mxu0 0
  %2311 = vmatprep.subr.bf16.mxu0 0
  %2312 = vmatpush1.bf16.xpose.msra.mxu0 0
  %2313 = vmatprep.mubr.bf16.mxu0 %v1562
  %2314 = vmatmul.mubr.bf16.gmra.mrb[0].mxu0 %v1561
  %v2315 = vpop.f32.mrb[0].mxu0
  %v2316 = vadd.f32 %v2276, %v2315
  %v2317 = vpop.f32.mrb[0].mxu0
  %v2318 = vpop.f32.mrb[0].mxu0
  %v2319 = vpop.f32.mrb[0].mxu0
  %2320 = vdwg.mxu0
  %2321 = vmatprep.subr.bf16.mxu0 %v1564
  %2322 = vmatpush1.bf16.xpose.msra.mxu0 %v1563
  %2323 = vmatprep.subr.bf16.mxu0 0
  %2324 = vmatpush1.bf16.xpose.msra.mxu0 0
  %2325 = vmatprep.subr.bf16.mxu0 0
  %2326 = vmatpush1.bf16.xpose.msra.mxu0 0
  %2327 = vmatprep.subr.bf16.mxu0 0
  %2328 = vmatpush1.bf16.xpose.msra.mxu0 0
  %2329 = vmatprep.subr.bf16.mxu0 0
  %2330 = vmatpush1.bf16.xpose.msra.mxu0 0
  %2331 = vmatprep.subr.bf16.mxu0 0
  %2332 = vmatpush1.bf16.xpose.msra.mxu0 0
  %2333 = vmatprep.subr.bf16.mxu0 0
  %2334 = vmatpush1.bf16.xpose.msra.mxu0 0
  %2335 = vmatprep.subr.bf16.mxu0 0
  %2336 = vmatpush1.bf16.xpose.msra.mxu0 0
  %2337 = vmatprep.subr.bf16.mxu0 0
  %2338 = vmatpush1.bf16.xpose.msra.mxu0 0
  %2339 = vmatprep.subr.bf16.mxu0 0
  %2340 = vmatpush1.bf16.xpose.msra.mxu0 0
  %2341 = vmatprep.subr.bf16.mxu0 0
  %2342 = vmatpush1.bf16.xpose.msra.mxu0 0
  %2343 = vmatprep.subr.bf16.mxu0 0
  %2344 = vmatpush1.bf16.xpose.msra.mxu0 0
  %2345 = vmatprep.subr.bf16.mxu0 0
  %2346 = vmatpush1.bf16.xpose.msra.mxu0 0
  %2347 = vmatprep.subr.bf16.mxu0 0
  %2348 = vmatpush1.bf16.xpose.msra.mxu0 0
  %2349 = vmatprep.subr.bf16.mxu0 0
  %2350 = vmatpush1.bf16.xpose.msra.mxu0 0
  %2351 = vmatprep.subr.bf16.mxu0 0
  %2352 = vmatpush1.bf16.xpose.msra.mxu0 0
  %2353 = vmatprep.mubr.bf16.mxu0 %v1564
  %2354 = vmatmul.mubr.bf16.gmra.mrb[0].mxu0 %v1563
  %v2355 = vpop.f32.mrb[0].mxu0
  %v2356 = vadd.f32 %v2316, %v2355
  %v2357 = vpop.f32.mrb[0].mxu0
  %v2358 = vpop.f32.mrb[0].mxu0
  %v2359 = vpop.f32.mrb[0].mxu0
  %2360 = vdwg.mxu0
  %2361 = vmatprep.subr.bf16.mxu0 %v1566
  %2362 = vmatpush1.bf16.xpose.msra.mxu0 %v1565
  %2363 = vmatprep.subr.bf16.mxu0 0
  %2364 = vmatpush1.bf16.xpose.msra.mxu0 0
  %2365 = vmatprep.subr.bf16.mxu0 0
  %2366 = vmatpush1.bf16.xpose.msra.mxu0 0
  %2367 = vmatprep.subr.bf16.mxu0 0
  %2368 = vmatpush1.bf16.xpose.msra.mxu0 0
  %2369 = vmatprep.subr.bf16.mxu0 0
  %2370 = vmatpush1.bf16.xpose.msra.mxu0 0
  %2371 = vmatprep.subr.bf16.mxu0 0
  %2372 = vmatpush1.bf16.xpose.msra.mxu0 0
  %2373 = vmatprep.subr.bf16.mxu0 0
  %2374 = vmatpush1.bf16.xpose.msra.mxu0 0
  %2375 = vmatprep.subr.bf16.mxu0 0
  %2376 = vmatpush1.bf16.xpose.msra.mxu0 0
  %2377 = vmatprep.subr.bf16.mxu0 0
  %2378 = vmatpush1.bf16.xpose.msra.mxu0 0
  %2379 = vmatprep.subr.bf16.mxu0 0
  %2380 = vmatpush1.bf16.xpose.msra.mxu0 0
  %2381 = vmatprep.subr.bf16.mxu0 0
  %2382 = vmatpush1.bf16.xpose.msra.mxu0 0
  %2383 = vmatprep.subr.bf16.mxu0 0
  %2384 = vmatpush1.bf16.xpose.msra.mxu0 0
  %2385 = vmatprep.subr.bf16.mxu0 0
  %2386 = vmatpush1.bf16.xpose.msra.mxu0 0
  %2387 = vmatprep.subr.bf16.mxu0 0
  %2388 = vmatpush1.bf16.xpose.msra.mxu0 0
  %2389 = vmatprep.subr.bf16.mxu0 0
  %2390 = vmatpush1.bf16.xpose.msra.mxu0 0
  %2391 = vmatprep.subr.bf16.mxu0 0
  %2392 = vmatpush1.bf16.xpose.msra.mxu0 0
  %2393 = vmatprep.mubr.bf16.mxu0 %v1566
  %2394 = vmatmul.mubr.bf16.gmra.mrb[0].mxu0 %v1565
  %v2395 = vpop.f32.mrb[0].mxu0
  %v2396 = vadd.f32 %v2356, %v2395
  %v2397 = vpop.f32.mrb[0].mxu0
  %v2398 = vpop.f32.mrb[0].mxu0
  %v2399 = vpop.f32.mrb[0].mxu0
  %2400 = vdwg.mxu0
  %2401 = vmatprep.subr.bf16.mxu0 %v1568
  %2402 = vmatpush1.bf16.xpose.msra.mxu0 %v1567
  %2403 = vmatprep.subr.bf16.mxu0 0
  %2404 = vmatpush1.bf16.xpose.msra.mxu0 0
  %2405 = vmatprep.subr.bf16.mxu0 0
  %2406 = vmatpush1.bf16.xpose.msra.mxu0 0
  %2407 = vmatprep.subr.bf16.mxu0 0
  %2408 = vmatpush1.bf16.xpose.msra.mxu0 0
  %2409 = vmatprep.subr.bf16.mxu0 0
  %2410 = vmatpush1.bf16.xpose.msra.mxu0 0
  %2411 = vmatprep.subr.bf16.mxu0 0
  %2412 = vmatpush1.bf16.xpose.msra.mxu0 0
  %2413 = vmatprep.subr.bf16.mxu0 0
  %2414 = vmatpush1.bf16.xpose.msra.mxu0 0
  %2415 = vmatprep.subr.bf16.mxu0 0
  %2416 = vmatpush1.bf16.xpose.msra.mxu0 0
  %2417 = vmatprep.subr.bf16.mxu0 0
  %2418 = vmatpush1.bf16.xpose.msra.mxu0 0
  %2419 = vmatprep.subr.bf16.mxu0 0
  %2420 = vmatpush1.bf16.xpose.msra.mxu0 0
  %2421 = vmatprep.subr.bf16.mxu0 0
  %2422 = vmatpush1.bf16.xpose.msra.mxu0 0
  %2423 = vmatprep.subr.bf16.mxu0 0
  %2424 = vmatpush1.bf16.xpose.msra.mxu0 0
  %2425 = vmatprep.subr.bf16.mxu0 0
  %2426 = vmatpush1.bf16.xpose.msra.mxu0 0
  %2427 = vmatprep.subr.bf16.mxu0 0
  %2428 = vmatpush1.bf16.xpose.msra.mxu0 0
  %2429 = vmatprep.subr.bf16.mxu0 0
  %2430 = vmatpush1.bf16.xpose.msra.mxu0 0
  %2431 = vmatprep.subr.bf16.mxu0 0
  %2432 = vmatpush1.bf16.xpose.msra.mxu0 0
  %2433 = vmatprep.mubr.bf16.mxu0 %v1568
  %2434 = vmatmul.mubr.bf16.gmra.mrb[0].mxu0 %v1567
  %v2435 = vpop.f32.mrb[0].mxu0
  %v2436 = vadd.f32 %v2396, %v2435
  %v2437 = vpop.f32.mrb[0].mxu0
  %v2438 = vpop.f32.mrb[0].mxu0
  %v2439 = vpop.f32.mrb[0].mxu0
  %2440 = vdwg.mxu0
  %2441 = vmatprep.subr.bf16.mxu0 %v1618
  %2442 = vmatpush1.bf16.xpose.msra.mxu0 %v1617
  %2443 = vmatprep.subr.bf16.mxu0 0
  %2444 = vmatpush1.bf16.xpose.msra.mxu0 0
  %2445 = vmatprep.subr.bf16.mxu0 0
  %2446 = vmatpush1.bf16.xpose.msra.mxu0 0
  %2447 = vmatprep.subr.bf16.mxu0 0
  %2448 = vmatpush1.bf16.xpose.msra.mxu0 0
  %2449 = vmatprep.subr.bf16.mxu0 0
  %2450 = vmatpush1.bf16.xpose.msra.mxu0 0
  %2451 = vmatprep.subr.bf16.mxu0 0
  %2452 = vmatpush1.bf16.xpose.msra.mxu0 0
  %2453 = vmatprep.subr.bf16.mxu0 0
  %2454 = vmatpush1.bf16.xpose.msra.mxu0 0
  %2455 = vmatprep.subr.bf16.mxu0 0
  %2456 = vmatpush1.bf16.xpose.msra.mxu0 0
  %2457 = vmatprep.subr.bf16.mxu0 0
  %2458 = vmatpush1.bf16.xpose.msra.mxu0 0
  %2459 = vmatprep.subr.bf16.mxu0 0
  %2460 = vmatpush1.bf16.xpose.msra.mxu0 0
  %2461 = vmatprep.subr.bf16.mxu0 0
  %2462 = vmatpush1.bf16.xpose.msra.mxu0 0
  %2463 = vmatprep.subr.bf16.mxu0 0
  %2464 = vmatpush1.bf16.xpose.msra.mxu0 0
  %2465 = vmatprep.subr.bf16.mxu0 0
  %2466 = vmatpush1.bf16.xpose.msra.mxu0 0
  %2467 = vmatprep.subr.bf16.mxu0 0
  %2468 = vmatpush1.bf16.xpose.msra.mxu0 0
  %2469 = vmatprep.subr.bf16.mxu0 0
  %2470 = vmatpush1.bf16.xpose.msra.mxu0 0
  %2471 = vmatprep.subr.bf16.mxu0 0
  %2472 = vmatpush1.bf16.xpose.msra.mxu0 0
  %2473 = vmatprep.mubr.bf16.mxu0 %v1618
  %2474 = vmatmul.mubr.bf16.gmra.mrb[0].mxu0 %v1617
  %v2475 = vpop.f32.mrb[0].mxu0
  %v2476 = vadd.f32 0.0, %v2475
  %v2477 = vpop.f32.mrb[0].mxu0
  %v2478 = vpop.f32.mrb[0].mxu0
  %v2479 = vpop.f32.mrb[0].mxu0
  %2480 = vdwg.mxu0
  %2481 = vmatprep.subr.bf16.mxu0 %v1620
  %2482 = vmatpush1.bf16.xpose.msra.mxu0 %v1619
  %2483 = vmatprep.subr.bf16.mxu0 0
  %2484 = vmatpush1.bf16.xpose.msra.mxu0 0
  %2485 = vmatprep.subr.bf16.mxu0 0
  %2486 = vmatpush1.bf16.xpose.msra.mxu0 0
  %2487 = vmatprep.subr.bf16.mxu0 0
  %2488 = vmatpush1.bf16.xpose.msra.mxu0 0
  %2489 = vmatprep.subr.bf16.mxu0 0
  %2490 = vmatpush1.bf16.xpose.msra.mxu0 0
  %2491 = vmatprep.subr.bf16.mxu0 0
  %2492 = vmatpush1.bf16.xpose.msra.mxu0 0
  %2493 = vmatprep.subr.bf16.mxu0 0
  %2494 = vmatpush1.bf16.xpose.msra.mxu0 0
  %2495 = vmatprep.subr.bf16.mxu0 0
  %2496 = vmatpush1.bf16.xpose.msra.mxu0 0
  %2497 = vmatprep.subr.bf16.mxu0 0
  %2498 = vmatpush1.bf16.xpose.msra.mxu0 0
  %2499 = vmatprep.subr.bf16.mxu0 0
  %2500 = vmatpush1.bf16.xpose.msra.mxu0 0
  %2501 = vmatprep.subr.bf16.mxu0 0
  %2502 = vmatpush1.bf16.xpose.msra.mxu0 0
  %2503 = vmatprep.subr.bf16.mxu0 0
  %2504 = vmatpush1.bf16.xpose.msra.mxu0 0
  %2505 = vmatprep.subr.bf16.mxu0 0
  %2506 = vmatpush1.bf16.xpose.msra.mxu0 0
  %2507 = vmatprep.subr.bf16.mxu0 0
  %2508 = vmatpush1.bf16.xpose.msra.mxu0 0
  %2509 = vmatprep.subr.bf16.mxu0 0
  %2510 = vmatpush1.bf16.xpose.msra.mxu0 0
  %2511 = vmatprep.subr.bf16.mxu0 0
  %2512 = vmatpush1.bf16.xpose.msra.mxu0 0
  %2513 = vmatprep.mubr.bf16.mxu0 %v1620
  %2514 = vmatmul.mubr.bf16.gmra.mrb[0].mxu0 %v1619
  %v2515 = vpop.f32.mrb[0].mxu0
  %v2516 = vadd.f32 %v2476, %v2515
  %v2517 = vpop.f32.mrb[0].mxu0
  %v2518 = vpop.f32.mrb[0].mxu0
  %v2519 = vpop.f32.mrb[0].mxu0
  %2520 = vdwg.mxu0
  %2521 = vmatprep.subr.bf16.mxu0 %v1622
  %2522 = vmatpush1.bf16.xpose.msra.mxu0 %v1621
  %2523 = vmatprep.subr.bf16.mxu0 0
  %2524 = vmatpush1.bf16.xpose.msra.mxu0 0
  %2525 = vmatprep.subr.bf16.mxu0 0
  %2526 = vmatpush1.bf16.xpose.msra.mxu0 0
  %2527 = vmatprep.subr.bf16.mxu0 0
  %2528 = vmatpush1.bf16.xpose.msra.mxu0 0
  %2529 = vmatprep.subr.bf16.mxu0 0
  %2530 = vmatpush1.bf16.xpose.msra.mxu0 0
  %2531 = vmatprep.subr.bf16.mxu0 0
  %2532 = vmatpush1.bf16.xpose.msra.mxu0 0
  %2533 = vmatprep.subr.bf16.mxu0 0
  %2534 = vmatpush1.bf16.xpose.msra.mxu0 0
  %2535 = vmatprep.subr.bf16.mxu0 0
  %2536 = vmatpush1.bf16.xpose.msra.mxu0 0
  %2537 = vmatprep.subr.bf16.mxu0 0
  %2538 = vmatpush1.bf16.xpose.msra.mxu0 0
  %2539 = vmatprep.subr.bf16.mxu0 0
  %2540 = vmatpush1.bf16.xpose.msra.mxu0 0
  %2541 = vmatprep.subr.bf16.mxu0 0
  %2542 = vmatpush1.bf16.xpose.msra.mxu0 0
  %2543 = vmatprep.subr.bf16.mxu0 0
  %2544 = vmatpush1.bf16.xpose.msra.mxu0 0
  %2545 = vmatprep.subr.bf16.mxu0 0
  %2546 = vmatpush1.bf16.xpose.msra.mxu0 0
  %2547 = vmatprep.subr.bf16.mxu0 0
  %2548 = vmatpush1.bf16.xpose.msra.mxu0 0
  %2549 = vmatprep.subr.bf16.mxu0 0
  %2550 = vmatpush1.bf16.xpose.msra.mxu0 0
  %2551 = vmatprep.subr.bf16.mxu0 0
  %2552 = vmatpush1.bf16.xpose.msra.mxu0 0
  %2553 = vmatprep.mubr.bf16.mxu0 %v1622
  %2554 = vmatmul.mubr.bf16.gmra.mrb[0].mxu0 %v1621
  %v2555 = vpop.f32.mrb[0].mxu0
  %v2556 = vadd.f32 %v2516, %v2555
  %v2557 = vpop.f32.mrb[0].mxu0
  %v2558 = vpop.f32.mrb[0].mxu0
  %v2559 = vpop.f32.mrb[0].mxu0
  %2560 = vdwg.mxu0
  %2561 = vmatprep.subr.bf16.mxu0 %v1624
  %2562 = vmatpush1.bf16.xpose.msra.mxu0 %v1623
  %2563 = vmatprep.subr.bf16.mxu0 0
  %2564 = vmatpush1.bf16.xpose.msra.mxu0 0
  %2565 = vmatprep.subr.bf16.mxu0 0
  %2566 = vmatpush1.bf16.xpose.msra.mxu0 0
  %2567 = vmatprep.subr.bf16.mxu0 0
  %2568 = vmatpush1.bf16.xpose.msra.mxu0 0
  %2569 = vmatprep.subr.bf16.mxu0 0
  %2570 = vmatpush1.bf16.xpose.msra.mxu0 0
  %2571 = vmatprep.subr.bf16.mxu0 0
  %2572 = vmatpush1.bf16.xpose.msra.mxu0 0
  %2573 = vmatprep.subr.bf16.mxu0 0
  %2574 = vmatpush1.bf16.xpose.msra.mxu0 0
  %2575 = vmatprep.subr.bf16.mxu0 0
  %2576 = vmatpush1.bf16.xpose.msra.mxu0 0
  %2577 = vmatprep.subr.bf16.mxu0 0
  %2578 = vmatpush1.bf16.xpose.msra.mxu0 0
  %2579 = vmatprep.subr.bf16.mxu0 0
  %2580 = vmatpush1.bf16.xpose.msra.mxu0 0
  %2581 = vmatprep.subr.bf16.mxu0 0
  %2582 = vmatpush1.bf16.xpose.msra.mxu0 0
  %2583 = vmatprep.subr.bf16.mxu0 0
  %2584 = vmatpush1.bf16.xpose.msra.mxu0 0
  %2585 = vmatprep.subr.bf16.mxu0 0
  %2586 = vmatpush1.bf16.xpose.msra.mxu0 0
  %2587 = vmatprep.subr.bf16.mxu0 0
  %2588 = vmatpush1.bf16.xpose.msra.mxu0 0
  %2589 = vmatprep.subr.bf16.mxu0 0
  %2590 = vmatpush1.bf16.xpose.msra.mxu0 0
  %2591 = vmatprep.subr.bf16.mxu0 0
  %2592 = vmatpush1.bf16.xpose.msra.mxu0 0
  %2593 = vmatprep.mubr.bf16.mxu0 %v1624
  %2594 = vmatmul.mubr.bf16.gmra.mrb[0].mxu0 %v1623
  %v2595 = vpop.f32.mrb[0].mxu0
  %v2596 = vadd.f32 %v2556, %v2595
  %v2597 = vpop.f32.mrb[0].mxu0
  %v2598 = vpop.f32.mrb[0].mxu0
  %v2599 = vpop.f32.mrb[0].mxu0
  %2600 = vdwg.mxu0
  %2601 = vmatprep.subr.bf16.mxu0 %v1626
  %2602 = vmatpush1.bf16.xpose.msra.mxu0 %v1625
  %2603 = vmatprep.subr.bf16.mxu0 0
  %2604 = vmatpush1.bf16.xpose.msra.mxu0 0
  %2605 = vmatprep.subr.bf16.mxu0 0
  %2606 = vmatpush1.bf16.xpose.msra.mxu0 0
  %2607 = vmatprep.subr.bf16.mxu0 0
  %2608 = vmatpush1.bf16.xpose.msra.mxu0 0
  %2609 = vmatprep.subr.bf16.mxu0 0
  %2610 = vmatpush1.bf16.xpose.msra.mxu0 0
  %2611 = vmatprep.subr.bf16.mxu0 0
  %2612 = vmatpush1.bf16.xpose.msra.mxu0 0
  %2613 = vmatprep.subr.bf16.mxu0 0
  %2614 = vmatpush1.bf16.xpose.msra.mxu0 0
  %2615 = vmatprep.subr.bf16.mxu0 0
  %2616 = vmatpush1.bf16.xpose.msra.mxu0 0
  %2617 = vmatprep.subr.bf16.mxu0 0
  %2618 = vmatpush1.bf16.xpose.msra.mxu0 0
  %2619 = vmatprep.subr.bf16.mxu0 0
  %2620 = vmatpush1.bf16.xpose.msra.mxu0 0
  %2621 = vmatprep.subr.bf16.mxu0 0
  %2622 = vmatpush1.bf16.xpose.msra.mxu0 0
  %2623 = vmatprep.subr.bf16.mxu0 0
  %2624 = vmatpush1.bf16.xpose.msra.mxu0 0
  %2625 = vmatprep.subr.bf16.mxu0 0
  %2626 = vmatpush1.bf16.xpose.msra.mxu0 0
  %2627 = vmatprep.subr.bf16.mxu0 0
  %2628 = vmatpush1.bf16.xpose.msra.mxu0 0
  %2629 = vmatprep.subr.bf16.mxu0 0
  %2630 = vmatpush1.bf16.xpose.msra.mxu0 0
  %2631 = vmatprep.subr.bf16.mxu0 0
  %2632 = vmatpush1.bf16.xpose.msra.mxu0 0
  %2633 = vmatprep.mubr.bf16.mxu0 %v1626
  %2634 = vmatmul.mubr.bf16.gmra.mrb[0].mxu0 %v1625
  %v2635 = vpop.f32.mrb[0].mxu0
  %v2636 = vadd.f32 %v2596, %v2635
  %v2637 = vpop.f32.mrb[0].mxu0
  %v2638 = vpop.f32.mrb[0].mxu0
  %v2639 = vpop.f32.mrb[0].mxu0
  %2640 = vdwg.mxu0
  %2641 = vmatprep.subr.bf16.mxu0 %v1628
  %2642 = vmatpush1.bf16.xpose.msra.mxu0 %v1627
  %2643 = vmatprep.subr.bf16.mxu0 0
  %2644 = vmatpush1.bf16.xpose.msra.mxu0 0
  %2645 = vmatprep.subr.bf16.mxu0 0
  %2646 = vmatpush1.bf16.xpose.msra.mxu0 0
  %2647 = vmatprep.subr.bf16.mxu0 0
  %2648 = vmatpush1.bf16.xpose.msra.mxu0 0
  %2649 = vmatprep.subr.bf16.mxu0 0
  %2650 = vmatpush1.bf16.xpose.msra.mxu0 0
  %2651 = vmatprep.subr.bf16.mxu0 0
  %2652 = vmatpush1.bf16.xpose.msra.mxu0 0
  %2653 = vmatprep.subr.bf16.mxu0 0
  %2654 = vmatpush1.bf16.xpose.msra.mxu0 0
  %2655 = vmatprep.subr.bf16.mxu0 0
  %2656 = vmatpush1.bf16.xpose.msra.mxu0 0
  %2657 = vmatprep.subr.bf16.mxu0 0
  %2658 = vmatpush1.bf16.xpose.msra.mxu0 0
  %2659 = vmatprep.subr.bf16.mxu0 0
  %2660 = vmatpush1.bf16.xpose.msra.mxu0 0
  %2661 = vmatprep.subr.bf16.mxu0 0
  %2662 = vmatpush1.bf16.xpose.msra.mxu0 0
  %2663 = vmatprep.subr.bf16.mxu0 0
  %2664 = vmatpush1.bf16.xpose.msra.mxu0 0
  %2665 = vmatprep.subr.bf16.mxu0 0
  %2666 = vmatpush1.bf16.xpose.msra.mxu0 0
  %2667 = vmatprep.subr.bf16.mxu0 0
  %2668 = vmatpush1.bf16.xpose.msra.mxu0 0
  %2669 = vmatprep.subr.bf16.mxu0 0
  %2670 = vmatpush1.bf16.xpose.msra.mxu0 0
  %2671 = vmatprep.subr.bf16.mxu0 0
  %2672 = vmatpush1.bf16.xpose.msra.mxu0 0
  %2673 = vmatprep.mubr.bf16.mxu0 %v1628
  %2674 = vmatmul.mubr.bf16.gmra.mrb[0].mxu0 %v1627
  %v2675 = vpop.f32.mrb[0].mxu0
  %v2676 = vadd.f32 %v2636, %v2675
  %v2677 = vpop.f32.mrb[0].mxu0
  %v2678 = vpop.f32.mrb[0].mxu0
  %v2679 = vpop.f32.mrb[0].mxu0
  %2680 = vdwg.mxu0
  %2681 = vmatprep.subr.bf16.mxu0 %v1630
  %2682 = vmatpush1.bf16.xpose.msra.mxu0 %v1629
  %2683 = vmatprep.subr.bf16.mxu0 0
  %2684 = vmatpush1.bf16.xpose.msra.mxu0 0
  %2685 = vmatprep.subr.bf16.mxu0 0
  %2686 = vmatpush1.bf16.xpose.msra.mxu0 0
  %2687 = vmatprep.subr.bf16.mxu0 0
  %2688 = vmatpush1.bf16.xpose.msra.mxu0 0
  %2689 = vmatprep.subr.bf16.mxu0 0
  %2690 = vmatpush1.bf16.xpose.msra.mxu0 0
  %2691 = vmatprep.subr.bf16.mxu0 0
  %2692 = vmatpush1.bf16.xpose.msra.mxu0 0
  %2693 = vmatprep.subr.bf16.mxu0 0
  %2694 = vmatpush1.bf16.xpose.msra.mxu0 0
  %2695 = vmatprep.subr.bf16.mxu0 0
  %2696 = vmatpush1.bf16.xpose.msra.mxu0 0
  %2697 = vmatprep.subr.bf16.mxu0 0
  %2698 = vmatpush1.bf16.xpose.msra.mxu0 0
  %2699 = vmatprep.subr.bf16.mxu0 0
  %2700 = vmatpush1.bf16.xpose.msra.mxu0 0
  %2701 = vmatprep.subr.bf16.mxu0 0
  %2702 = vmatpush1.bf16.xpose.msra.mxu0 0
  %2703 = vmatprep.subr.bf16.mxu0 0
  %2704 = vmatpush1.bf16.xpose.msra.mxu0 0
  %2705 = vmatprep.subr.bf16.mxu0 0
  %2706 = vmatpush1.bf16.xpose.msra.mxu0 0
  %2707 = vmatprep.subr.bf16.mxu0 0
  %2708 = vmatpush1.bf16.xpose.msra.mxu0 0
  %2709 = vmatprep.subr.bf16.mxu0 0
  %2710 = vmatpush1.bf16.xpose.msra.mxu0 0
  %2711 = vmatprep.subr.bf16.mxu0 0
  %2712 = vmatpush1.bf16.xpose.msra.mxu0 0
  %2713 = vmatprep.mubr.bf16.mxu0 %v1630
  %2714 = vmatmul.mubr.bf16.gmra.mrb[0].mxu0 %v1629
  %v2715 = vpop.f32.mrb[0].mxu0
  %v2716 = vadd.f32 %v2676, %v2715
  %v2717 = vpop.f32.mrb[0].mxu0
  %v2718 = vpop.f32.mrb[0].mxu0
  %v2719 = vpop.f32.mrb[0].mxu0
  %2720 = vdwg.mxu0
  %2721 = vmatprep.subr.bf16.mxu0 %v1632
  %2722 = vmatpush1.bf16.xpose.msra.mxu0 %v1631
  %2723 = vmatprep.subr.bf16.mxu0 0
  %2724 = vmatpush1.bf16.xpose.msra.mxu0 0
  %2725 = vmatprep.subr.bf16.mxu0 0
  %2726 = vmatpush1.bf16.xpose.msra.mxu0 0
  %2727 = vmatprep.subr.bf16.mxu0 0
  %2728 = vmatpush1.bf16.xpose.msra.mxu0 0
  %2729 = vmatprep.subr.bf16.mxu0 0
  %2730 = vmatpush1.bf16.xpose.msra.mxu0 0
  %2731 = vmatprep.subr.bf16.mxu0 0
  %2732 = vmatpush1.bf16.xpose.msra.mxu0 0
  %2733 = vmatprep.subr.bf16.mxu0 0
  %2734 = vmatpush1.bf16.xpose.msra.mxu0 0
  %2735 = vmatprep.subr.bf16.mxu0 0
  %2736 = vmatpush1.bf16.xpose.msra.mxu0 0
  %2737 = vmatprep.subr.bf16.mxu0 0
  %2738 = vmatpush1.bf16.xpose.msra.mxu0 0
  %2739 = vmatprep.subr.bf16.mxu0 0
  %2740 = vmatpush1.bf16.xpose.msra.mxu0 0
  %2741 = vmatprep.subr.bf16.mxu0 0
  %2742 = vmatpush1.bf16.xpose.msra.mxu0 0
  %2743 = vmatprep.subr.bf16.mxu0 0
  %2744 = vmatpush1.bf16.xpose.msra.mxu0 0
  %2745 = vmatprep.subr.bf16.mxu0 0
  %2746 = vmatpush1.bf16.xpose.msra.mxu0 0
  %2747 = vmatprep.subr.bf16.mxu0 0
  %2748 = vmatpush1.bf16.xpose.msra.mxu0 0
  %2749 = vmatprep.subr.bf16.mxu0 0
  %2750 = vmatpush1.bf16.xpose.msra.mxu0 0
  %2751 = vmatprep.subr.bf16.mxu0 0
  %2752 = vmatpush1.bf16.xpose.msra.mxu0 0
  %2753 = vmatprep.mubr.bf16.mxu0 %v1632
  %2754 = vmatmul.mubr.bf16.gmra.mrb[0].mxu0 %v1631
  %v2755 = vpop.f32.mrb[0].mxu0
  %v2756 = vadd.f32 %v2716, %v2755
  %v2757 = vpop.f32.mrb[0].mxu0
  %v2758 = vpop.f32.mrb[0].mxu0
  %v2759 = vpop.f32.mrb[0].mxu0
  %2760 = vdwg.mxu0
  %v2761 = vadd.f32 %v2436, %v2756
  %vm2762 = vcmask 64512
  %2763 = vst.msk [vmem:[%s5] sm:$0xff] %vm2762, %v2761
  // Predicated region
  $region18: #{a_call__.10} parent=0 // pred_check
    _
  $region19: #{a_call__.10} parent=0 // pred_check_branch
    %2765 = sbr.rel (0) target = $region21
  $region20: #{a_call__.10} parent=0 // pred_region
    _
  $region21: #{a_call__.10} parent=0 // pred_fallthru
    _
  // Predicated region
  $region22: #{a_call__.10} parent=0 // pred_check
    _
  $region23: #{a_call__.10} parent=0 // pred_check_branch
    %2767 = sbr.rel (0) target = $region25
  $region24: #{a_call__.10} parent=0 // pred_region
    _
  $region25: #{a_call__.10} parent=0 // pred_fallthru
    _
  // Predicated region
  $region26: #{a_call__.10} parent=0 // pred_check
    _
  $region27: #{a_call__.10} parent=0 // pred_check_branch
    %2769 = sbr.rel (0) target = $region29
  $region28: #{a_call__.10} parent=0 // pred_region
    _
  $region29: #{a_call__.10} parent=0 // pred_fallthru
    _
  // Predicated region
  $region30: #{a_call__.10} parent=0 // pred_check
    _
  $region31: #{a_call__.10} parent=0 // pred_check_branch
    %2771 = sbr.rel (0) target = $region33
  $region32: #{a_call__.10} parent=0 // pred_region
    _
  $region33: #{a_call__.10} parent=0 // pred_fallthru
    _

// kernel: a_call__.11
$region0: #{a_call__.11}
  #allocation0 [shape = 'u32[]', space=smem, size = 0x4, offset = 0x4, fixed_abs, tag = 'smem constant byte address 0x4 - core index']
  #allocation1 [shape = 'u32[144,128]{1,0:T(1,128)}', space=vmem, size = 0x12000, scoped, tag = 'internal scratch']
  %s0 = inlined_call_operand.vmem [shape: bf16[8,6144], index: 0, kind: input, shape index: {}]
  %s1 = inlined_call_operand.vmem [shape: bf16[16,8], index: 1, kind: input, shape index: {}]
  %s2 = inlined_call_operand.vmem [shape: f32[16,1], index: 2, kind: input, shape index: {}]
  %s3 = inlined_call_operand.vmem [shape: f32[16,1], index: 3, kind: input, shape index: {}]
  %s4 = inlined_call_operand.vmem [shape: f32[3,16,128], index: 4, kind: output, shape index: {}]
  %s5 = sld [smem:[#allocation0]]
  $region26: #{a_call__.11} parent=0
    _
  %s7 = ssub.s32 1, %s5
  %s8 = scalar_select 0, %s7, %s5
  // Predicated region
  $region2: #{a_call__.11} parent=0 // pred_check
    _
  $region3: #{a_call__.11} parent=0 // pred_check_branch
    %10 = sbr.rel (0) target = $region5
  $region4: #{a_call__.11} parent=0 // pred_region
    _
  $region5: #{a_call__.11} parent=0 // pred_fallthru
    _
  // Predicated region
  $region6: #{a_call__.11} parent=0 // pred_check
    _
  $region7: #{a_call__.11} parent=0 // pred_check_branch
    %12 = sbr.rel (0) target = $region9
  $region8: #{a_call__.11} parent=0 // pred_region
    _
  $region9: #{a_call__.11} parent=0 // pred_fallthru
    _
  // Predicated region
  $region10: #{a_call__.11} parent=0 // pred_check
    _
  $region11: #{a_call__.11} parent=0 // pred_check_branch
    %14 = sbr.rel (0) target = $region13
  $region12: #{a_call__.11} parent=0 // pred_region
    _
  $region13: #{a_call__.11} parent=0 // pred_fallthru
    _
  // Predicated region
  $region14: #{a_call__.11} parent=0 // pred_check
    _
  $region15: #{a_call__.11} parent=0 // pred_check_branch
    %16 = sbr.rel (0) target = $region17
  $region16: #{a_call__.11} parent=0 // pred_region
    _
  $region17: #{a_call__.11} parent=0 // pred_fallthru
    _
  %v18 = vld [vmem:[%s1] sm:$0xf]
  %v19 = vld [vmem:[%s1 + $0x4] sm:$0xf]
  %v20 = vld [vmem:[%s0] sm:$0xff]
  %v21 = vld [vmem:[%s0 + $0x8] sm:$0xff]
  %v22 = vld [vmem:[%s0 + $0x10] sm:$0xff]
  %v23 = vld [vmem:[%s0 + $0x18] sm:$0xff]
  %v24 = vld [vmem:[%s0 + $0x20] sm:$0xff]
  %v25 = vld [vmem:[%s0 + $0x28] sm:$0xff]
  %v26 = vld [vmem:[%s0 + $0x30] sm:$0xff]
  %v27 = vld [vmem:[%s0 + $0x38] sm:$0xff]
  %v28 = vld [vmem:[%s0 + $0x40] sm:$0xff]
  %v29 = vld [vmem:[%s0 + $0x48] sm:$0xff]
  %v30 = vld [vmem:[%s0 + $0x50] sm:$0xff]
  %v31 = vld [vmem:[%s0 + $0x58] sm:$0xff]
  %v32 = vld [vmem:[%s0 + $0x60] sm:$0xff]
  %v33 = vld [vmem:[%s0 + $0x68] sm:$0xff]
  %v34 = vld [vmem:[%s0 + $0x70] sm:$0xff]
  %v35 = vld [vmem:[%s0 + $0x78] sm:$0xff]
  %v36 = vld [vmem:[%s0 + $0x80] sm:$0xff]
  %v37 = vld [vmem:[%s0 + $0x88] sm:$0xff]
  %v38 = vld [vmem:[%s0 + $0x90] sm:$0xff]
  %v39 = vld [vmem:[%s0 + $0x98] sm:$0xff]
  %v40 = vld [vmem:[%s0 + $0xa0] sm:$0xff]
  %v41 = vld [vmem:[%s0 + $0xa8] sm:$0xff]
  %v42 = vld [vmem:[%s0 + $0xb0] sm:$0xff]
  %v43 = vld [vmem:[%s0 + $0xb8] sm:$0xff]
  %v46 = vunpack.c.l.b16 %v18
  %v47 = vunpack.c.l.b16 %v19
  %v48 = vpack.c.b16 %v47, %v46
  %v73 = vunpack.c.l.b16 %v20
  %v74 = vunpack.c.h.b16 %v20
  %v75 = vunpack.c.l.b16 %v21
  %v76 = vunpack.c.h.b16 %v21
  %v77 = vunpack.c.l.b16 %v22
  %v78 = vunpack.c.h.b16 %v22
  %v79 = vunpack.c.l.b16 %v23
  %v80 = vunpack.c.h.b16 %v23
  %v81 = vunpack.c.l.b16 %v24
  %v82 = vunpack.c.h.b16 %v24
  %v83 = vunpack.c.l.b16 %v25
  %v84 = vunpack.c.h.b16 %v25
  %v85 = vunpack.c.l.b16 %v26
  %v86 = vunpack.c.h.b16 %v26
  %v87 = vunpack.c.l.b16 %v27
  %v88 = vunpack.c.h.b16 %v27
  %v89 = vunpack.c.l.b16 %v28
  %v90 = vunpack.c.h.b16 %v28
  %v91 = vunpack.c.l.b16 %v29
  %v92 = vunpack.c.h.b16 %v29
  %v93 = vunpack.c.l.b16 %v30
  %v94 = vunpack.c.h.b16 %v30
  %v95 = vunpack.c.l.b16 %v31
  %v96 = vunpack.c.h.b16 %v31
  %v97 = vunpack.c.l.b16 %v32
  %v98 = vunpack.c.h.b16 %v32
  %v99 = vunpack.c.l.b16 %v33
  %v100 = vunpack.c.h.b16 %v33
  %v101 = vunpack.c.l.b16 %v34
  %v102 = vunpack.c.h.b16 %v34
  %v103 = vunpack.c.l.b16 %v35
  %v104 = vunpack.c.h.b16 %v35
  %v105 = vunpack.c.l.b16 %v36
  %v106 = vunpack.c.h.b16 %v36
  %v107 = vunpack.c.l.b16 %v37
  %v108 = vunpack.c.h.b16 %v37
  %v109 = vunpack.c.l.b16 %v38
  %v110 = vunpack.c.h.b16 %v38
  %v111 = vunpack.c.l.b16 %v39
  %v112 = vunpack.c.h.b16 %v39
  %v113 = vunpack.c.l.b16 %v40
  %v114 = vunpack.c.h.b16 %v40
  %v115 = vunpack.c.l.b16 %v41
  %v116 = vunpack.c.h.b16 %v41
  %v117 = vunpack.c.l.b16 %v42
  %v118 = vunpack.c.h.b16 %v42
  %v119 = vunpack.c.l.b16 %v43
  %v120 = vunpack.c.h.b16 %v43
  %v121 = vpack.c.b16 %v73, %v73
  %v122 = vpack.c.b16 %v74, %v74
  %v123 = vpack.c.b16 %v75, %v75
  %v124 = vpack.c.b16 %v76, %v76
  %v125 = vpack.c.b16 %v77, %v77
  %v126 = vpack.c.b16 %v78, %v78
  %v127 = vpack.c.b16 %v79, %v79
  %v128 = vpack.c.b16 %v80, %v80
  %v129 = vpack.c.b16 %v81, %v81
  %v130 = vpack.c.b16 %v82, %v82
  %v131 = vpack.c.b16 %v83, %v83
  %v132 = vpack.c.b16 %v84, %v84
  %v133 = vpack.c.b16 %v85, %v85
  %v134 = vpack.c.b16 %v86, %v86
  %v135 = vpack.c.b16 %v87, %v87
  %v136 = vpack.c.b16 %v88, %v88
  %v137 = vpack.c.b16 %v89, %v89
  %v138 = vpack.c.b16 %v90, %v90
  %v139 = vpack.c.b16 %v91, %v91
  %v140 = vpack.c.b16 %v92, %v92
  %v141 = vpack.c.b16 %v93, %v93
  %v142 = vpack.c.b16 %v94, %v94
  %v143 = vpack.c.b16 %v95, %v95
  %v144 = vpack.c.b16 %v96, %v96
  %v145 = vpack.c.b16 %v97, %v97
  %v146 = vpack.c.b16 %v98, %v98
  %v147 = vpack.c.b16 %v99, %v99
  %v148 = vpack.c.b16 %v100, %v100
  %v149 = vpack.c.b16 %v101, %v101
  %v150 = vpack.c.b16 %v102, %v102
  %v151 = vpack.c.b16 %v103, %v103
  %v152 = vpack.c.b16 %v104, %v104
  %v153 = vpack.c.b16 %v105, %v105
  %v154 = vpack.c.b16 %v106, %v106
  %v155 = vpack.c.b16 %v107, %v107
  %v156 = vpack.c.b16 %v108, %v108
  %v157 = vpack.c.b16 %v109, %v109
  %v158 = vpack.c.b16 %v110, %v110
  %v159 = vpack.c.b16 %v111, %v111
  %v160 = vpack.c.b16 %v112, %v112
  %v161 = vpack.c.b16 %v113, %v113
  %v162 = vpack.c.b16 %v114, %v114
  %v163 = vpack.c.b16 %v115, %v115
  %v164 = vpack.c.b16 %v116, %v116
  %v165 = vpack.c.b16 %v117, %v117
  %v166 = vpack.c.b16 %v118, %v118
  %v167 = vpack.c.b16 %v119, %v119
  %v168 = vpack.c.b16 %v120, %v120
  %vm169 = vcmask 64512
  %v171 = vsel %vm169, %v48, 0
  %vm173 = vcmask 1043456
  %v175 = vsel %vm173, %v121, 0
  %v178 = vsel %vm173, %v122, 0
  %v181 = vsel %vm173, %v123, 0
  %v184 = vsel %vm173, %v124, 0
  %v187 = vsel %vm173, %v125, 0
  %v190 = vsel %vm173, %v126, 0
  %v193 = vsel %vm173, %v127, 0
  %v196 = vsel %vm173, %v128, 0
  %v199 = vsel %vm173, %v129, 0
  %v202 = vsel %vm173, %v130, 0
  %v205 = vsel %vm173, %v131, 0
  %v208 = vsel %vm173, %v132, 0
  %v211 = vsel %vm173, %v133, 0
  %v214 = vsel %vm173, %v134, 0
  %v217 = vsel %vm173, %v135, 0
  %v220 = vsel %vm173, %v136, 0
  %v223 = vsel %vm173, %v137, 0
  %v226 = vsel %vm173, %v138, 0
  %v229 = vsel %vm173, %v139, 0
  %v232 = vsel %vm173, %v140, 0
  %v235 = vsel %vm173, %v141, 0
  %v238 = vsel %vm173, %v142, 0
  %v241 = vsel %vm173, %v143, 0
  %v244 = vsel %vm173, %v144, 0
  %v247 = vsel %vm173, %v145, 0
  %v250 = vsel %vm173, %v146, 0
  %v253 = vsel %vm173, %v147, 0
  %v256 = vsel %vm173, %v148, 0
  %v259 = vsel %vm173, %v149, 0
  %v262 = vsel %vm173, %v150, 0
  %v265 = vsel %vm173, %v151, 0
  %v268 = vsel %vm173, %v152, 0
  %v271 = vsel %vm173, %v153, 0
  %v274 = vsel %vm173, %v154, 0
  %v277 = vsel %vm173, %v155, 0
  %v280 = vsel %vm173, %v156, 0
  %v283 = vsel %vm173, %v157, 0
  %v286 = vsel %vm173, %v158, 0
  %v289 = vsel %vm173, %v159, 0
  %v292 = vsel %vm173, %v160, 0
  %v295 = vsel %vm173, %v161, 0
  %v298 = vsel %vm173, %v162, 0
  %v301 = vsel %vm173, %v163, 0
  %v304 = vsel %vm173, %v164, 0
  %v307 = vsel %vm173, %v165, 0
  %v310 = vsel %vm173, %v166, 0
  %v313 = vsel %vm173, %v167, 0
  %v316 = vsel %vm173, %v168, 0
  %318 = vmatprep.subr.bf16.mxu0 %v178
  %319 = vmatpush1.bf16.msra.mxu0 %v175
  %320 = vmatprep.subr.bf16.mxu0 0
  %321 = vmatpush1.bf16.msra.mxu0 0
  %322 = vmatprep.subr.bf16.mxu0 0
  %323 = vmatpush1.bf16.msra.mxu0 0
  %324 = vmatprep.subr.bf16.mxu0 0
  %325 = vmatpush1.bf16.msra.mxu0 0
  %326 = vmatprep.subr.bf16.mxu0 0
  %327 = vmatpush1.bf16.msra.mxu0 0
  %328 = vmatprep.subr.bf16.mxu0 0
  %329 = vmatpush1.bf16.msra.mxu0 0
  %330 = vmatprep.subr.bf16.mxu0 0
  %331 = vmatpush1.bf16.msra.mxu0 0
  %332 = vmatprep.subr.bf16.mxu0 0
  %333 = vmatpush1.bf16.msra.mxu0 0
  %334 = vmatprep.subr.bf16.mxu0 0
  %335 = vmatpush1.bf16.msra.mxu0 0
  %336 = vmatprep.subr.bf16.mxu0 0
  %337 = vmatpush1.bf16.msra.mxu0 0
  %338 = vmatprep.subr.bf16.mxu0 0
  %339 = vmatpush1.bf16.msra.mxu0 0
  %340 = vmatprep.subr.bf16.mxu0 0
  %341 = vmatpush1.bf16.msra.mxu0 0
  %342 = vmatprep.subr.bf16.mxu0 0
  %343 = vmatpush1.bf16.msra.mxu0 0
  %344 = vmatprep.subr.bf16.mxu0 0
  %345 = vmatpush1.bf16.msra.mxu0 0
  %346 = vmatprep.subr.bf16.mxu0 0
  %347 = vmatpush1.bf16.msra.mxu0 0
  %348 = vmatprep.subr.bf16.mxu0 0
  %349 = vmatpush1.bf16.msra.mxu0 0
  %350 = vmatprep.mubr.bf16.mxu0 0
  %351 = vmatmul.mubr.bf16.gmra.mrb[0].mxu0 %v171
  %v352 = vpop.f32.mrb[0].mxu0
  %v353 = vadd.f32 0.0, %v352
  %v354 = vpop.f32.mrb[0].mxu0
  %v355 = vadd.f32 0.0, %v354
  %v356 = vpop.f32.mrb[0].mxu0
  %v357 = vadd.f32 0.0, %v356
  %v358 = vpop.f32.mrb[0].mxu0
  %v359 = vadd.f32 0.0, %v358
  %360 = vdwg.mxu0
  %361 = vmatprep.subr.bf16.mxu0 %v184
  %362 = vmatpush1.bf16.msra.mxu0 %v181
  %363 = vmatprep.subr.bf16.mxu0 0
  %364 = vmatpush1.bf16.msra.mxu0 0
  %365 = vmatprep.subr.bf16.mxu0 0
  %366 = vmatpush1.bf16.msra.mxu0 0
  %367 = vmatprep.subr.bf16.mxu0 0
  %368 = vmatpush1.bf16.msra.mxu0 0
  %369 = vmatprep.subr.bf16.mxu0 0
  %370 = vmatpush1.bf16.msra.mxu0 0
  %371 = vmatprep.subr.bf16.mxu0 0
  %372 = vmatpush1.bf16.msra.mxu0 0
  %373 = vmatprep.subr.bf16.mxu0 0
  %374 = vmatpush1.bf16.msra.mxu0 0
  %375 = vmatprep.subr.bf16.mxu0 0
  %376 = vmatpush1.bf16.msra.mxu0 0
  %377 = vmatprep.subr.bf16.mxu0 0
  %378 = vmatpush1.bf16.msra.mxu0 0
  %379 = vmatprep.subr.bf16.mxu0 0
  %380 = vmatpush1.bf16.msra.mxu0 0
  %381 = vmatprep.subr.bf16.mxu0 0
  %382 = vmatpush1.bf16.msra.mxu0 0
  %383 = vmatprep.subr.bf16.mxu0 0
  %384 = vmatpush1.bf16.msra.mxu0 0
  %385 = vmatprep.subr.bf16.mxu0 0
  %386 = vmatpush1.bf16.msra.mxu0 0
  %387 = vmatprep.subr.bf16.mxu0 0
  %388 = vmatpush1.bf16.msra.mxu0 0
  %389 = vmatprep.subr.bf16.mxu0 0
  %390 = vmatpush1.bf16.msra.mxu0 0
  %391 = vmatprep.subr.bf16.mxu0 0
  %392 = vmatpush1.bf16.msra.mxu0 0
  %393 = vmatprep.mubr.bf16.mxu0 0
  %394 = vmatmul.mubr.bf16.gmra.mrb[0].mxu0 %v171
  %v395 = vpop.f32.mrb[0].mxu0
  %v396 = vadd.f32 0.0, %v395
  %v397 = vpop.f32.mrb[0].mxu0
  %v398 = vadd.f32 0.0, %v397
  %v399 = vpop.f32.mrb[0].mxu0
  %v400 = vadd.f32 0.0, %v399
  %v401 = vpop.f32.mrb[0].mxu0
  %v402 = vadd.f32 0.0, %v401
  %403 = vdwg.mxu0
  %404 = vmatprep.subr.bf16.mxu0 %v190
  %405 = vmatpush1.bf16.msra.mxu0 %v187
  %406 = vmatprep.subr.bf16.mxu0 0
  %407 = vmatpush1.bf16.msra.mxu0 0
  %408 = vmatprep.subr.bf16.mxu0 0
  %409 = vmatpush1.bf16.msra.mxu0 0
  %410 = vmatprep.subr.bf16.mxu0 0
  %411 = vmatpush1.bf16.msra.mxu0 0
  %412 = vmatprep.subr.bf16.mxu0 0
  %413 = vmatpush1.bf16.msra.mxu0 0
  %414 = vmatprep.subr.bf16.mxu0 0
  %415 = vmatpush1.bf16.msra.mxu0 0
  %416 = vmatprep.subr.bf16.mxu0 0
  %417 = vmatpush1.bf16.msra.mxu0 0
  %418 = vmatprep.subr.bf16.mxu0 0
  %419 = vmatpush1.bf16.msra.mxu0 0
  %420 = vmatprep.subr.bf16.mxu0 0
  %421 = vmatpush1.bf16.msra.mxu0 0
  %422 = vmatprep.subr.bf16.mxu0 0
  %423 = vmatpush1.bf16.msra.mxu0 0
  %424 = vmatprep.subr.bf16.mxu0 0
  %425 = vmatpush1.bf16.msra.mxu0 0
  %426 = vmatprep.subr.bf16.mxu0 0
  %427 = vmatpush1.bf16.msra.mxu0 0
  %428 = vmatprep.subr.bf16.mxu0 0
  %429 = vmatpush1.bf16.msra.mxu0 0
  %430 = vmatprep.subr.bf16.mxu0 0
  %431 = vmatpush1.bf16.msra.mxu0 0
  %432 = vmatprep.subr.bf16.mxu0 0
  %433 = vmatpush1.bf16.msra.mxu0 0
  %434 = vmatprep.subr.bf16.mxu0 0
  %435 = vmatpush1.bf16.msra.mxu0 0
  %436 = vmatprep.mubr.bf16.mxu0 0
  %437 = vmatmul.mubr.bf16.gmra.mrb[0].mxu0 %v171
  %v438 = vpop.f32.mrb[0].mxu0
  %v439 = vadd.f32 0.0, %v438
  %v440 = vpop.f32.mrb[0].mxu0
  %v441 = vadd.f32 0.0, %v440
  %v442 = vpop.f32.mrb[0].mxu0
  %v443 = vadd.f32 0.0, %v442
  %v444 = vpop.f32.mrb[0].mxu0
  %v445 = vadd.f32 0.0, %v444
  %446 = vdwg.mxu0
  %447 = vmatprep.subr.bf16.mxu0 %v196
  %448 = vmatpush1.bf16.msra.mxu0 %v193
  %449 = vmatprep.subr.bf16.mxu0 0
  %450 = vmatpush1.bf16.msra.mxu0 0
  %451 = vmatprep.subr.bf16.mxu0 0
  %452 = vmatpush1.bf16.msra.mxu0 0
  %453 = vmatprep.subr.bf16.mxu0 0
  %454 = vmatpush1.bf16.msra.mxu0 0
  %455 = vmatprep.subr.bf16.mxu0 0
  %456 = vmatpush1.bf16.msra.mxu0 0
  %457 = vmatprep.subr.bf16.mxu0 0
  %458 = vmatpush1.bf16.msra.mxu0 0
  %459 = vmatprep.subr.bf16.mxu0 0
  %460 = vmatpush1.bf16.msra.mxu0 0
  %461 = vmatprep.subr.bf16.mxu0 0
  %462 = vmatpush1.bf16.msra.mxu0 0
  %463 = vmatprep.subr.bf16.mxu0 0
  %464 = vmatpush1.bf16.msra.mxu0 0
  %465 = vmatprep.subr.bf16.mxu0 0
  %466 = vmatpush1.bf16.msra.mxu0 0
  %467 = vmatprep.subr.bf16.mxu0 0
  %468 = vmatpush1.bf16.msra.mxu0 0
  %469 = vmatprep.subr.bf16.mxu0 0
  %470 = vmatpush1.bf16.msra.mxu0 0
  %471 = vmatprep.subr.bf16.mxu0 0
  %472 = vmatpush1.bf16.msra.mxu0 0
  %473 = vmatprep.subr.bf16.mxu0 0
  %474 = vmatpush1.bf16.msra.mxu0 0
  %475 = vmatprep.subr.bf16.mxu0 0
  %476 = vmatpush1.bf16.msra.mxu0 0
  %477 = vmatprep.subr.bf16.mxu0 0
  %478 = vmatpush1.bf16.msra.mxu0 0
  %479 = vmatprep.mubr.bf16.mxu0 0
  %480 = vmatmul.mubr.bf16.gmra.mrb[0].mxu0 %v171
  %v481 = vpop.f32.mrb[0].mxu0
  %v482 = vadd.f32 0.0, %v481
  %v483 = vpop.f32.mrb[0].mxu0
  %v484 = vadd.f32 0.0, %v483
  %v485 = vpop.f32.mrb[0].mxu0
  %v486 = vadd.f32 0.0, %v485
  %v487 = vpop.f32.mrb[0].mxu0
  %v488 = vadd.f32 0.0, %v487
  %489 = vdwg.mxu0
  %490 = vmatprep.subr.bf16.mxu0 %v202
  %491 = vmatpush1.bf16.msra.mxu0 %v199
  %492 = vmatprep.subr.bf16.mxu0 0
  %493 = vmatpush1.bf16.msra.mxu0 0
  %494 = vmatprep.subr.bf16.mxu0 0
  %495 = vmatpush1.bf16.msra.mxu0 0
  %496 = vmatprep.subr.bf16.mxu0 0
  %497 = vmatpush1.bf16.msra.mxu0 0
  %498 = vmatprep.subr.bf16.mxu0 0
  %499 = vmatpush1.bf16.msra.mxu0 0
  %500 = vmatprep.subr.bf16.mxu0 0
  %501 = vmatpush1.bf16.msra.mxu0 0
  %502 = vmatprep.subr.bf16.mxu0 0
  %503 = vmatpush1.bf16.msra.mxu0 0
  %504 = vmatprep.subr.bf16.mxu0 0
  %505 = vmatpush1.bf16.msra.mxu0 0
  %506 = vmatprep.subr.bf16.mxu0 0
  %507 = vmatpush1.bf16.msra.mxu0 0
  %508 = vmatprep.subr.bf16.mxu0 0
  %509 = vmatpush1.bf16.msra.mxu0 0
  %510 = vmatprep.subr.bf16.mxu0 0
  %511 = vmatpush1.bf16.msra.mxu0 0
  %512 = vmatprep.subr.bf16.mxu0 0
  %513 = vmatpush1.bf16.msra.mxu0 0
  %514 = vmatprep.subr.bf16.mxu0 0
  %515 = vmatpush1.bf16.msra.mxu0 0
  %516 = vmatprep.subr.bf16.mxu0 0
  %517 = vmatpush1.bf16.msra.mxu0 0
  %518 = vmatprep.subr.bf16.mxu0 0
  %519 = vmatpush1.bf16.msra.mxu0 0
  %520 = vmatprep.subr.bf16.mxu0 0
  %521 = vmatpush1.bf16.msra.mxu0 0
  %522 = vmatprep.mubr.bf16.mxu0 0
  %523 = vmatmul.mubr.bf16.gmra.mrb[0].mxu0 %v171
  %v524 = vpop.f32.mrb[0].mxu0
  %v525 = vadd.f32 0.0, %v524
  %v526 = vpop.f32.mrb[0].mxu0
  %v527 = vadd.f32 0.0, %v526
  %v528 = vpop.f32.mrb[0].mxu0
  %v529 = vadd.f32 0.0, %v528
  %v530 = vpop.f32.mrb[0].mxu0
  %v531 = vadd.f32 0.0, %v530
  %532 = vdwg.mxu0
  %533 = vmatprep.subr.bf16.mxu0 %v208
  %534 = vmatpush1.bf16.msra.mxu0 %v205
  %535 = vmatprep.subr.bf16.mxu0 0
  %536 = vmatpush1.bf16.msra.mxu0 0
  %537 = vmatprep.subr.bf16.mxu0 0
  %538 = vmatpush1.bf16.msra.mxu0 0
  %539 = vmatprep.subr.bf16.mxu0 0
  %540 = vmatpush1.bf16.msra.mxu0 0
  %541 = vmatprep.subr.bf16.mxu0 0
  %542 = vmatpush1.bf16.msra.mxu0 0
  %543 = vmatprep.subr.bf16.mxu0 0
  %544 = vmatpush1.bf16.msra.mxu0 0
  %545 = vmatprep.subr.bf16.mxu0 0
  %546 = vmatpush1.bf16.msra.mxu0 0
  %547 = vmatprep.subr.bf16.mxu0 0
  %548 = vmatpush1.bf16.msra.mxu0 0
  %549 = vmatprep.subr.bf16.mxu0 0
  %550 = vmatpush1.bf16.msra.mxu0 0
  %551 = vmatprep.subr.bf16.mxu0 0
  %552 = vmatpush1.bf16.msra.mxu0 0
  %553 = vmatprep.subr.bf16.mxu0 0
  %554 = vmatpush1.bf16.msra.mxu0 0
  %555 = vmatprep.subr.bf16.mxu0 0
  %556 = vmatpush1.bf16.msra.mxu0 0
  %557 = vmatprep.subr.bf16.mxu0 0
  %558 = vmatpush1.bf16.msra.mxu0 0
  %559 = vmatprep.subr.bf16.mxu0 0
  %560 = vmatpush1.bf16.msra.mxu0 0
  %561 = vmatprep.subr.bf16.mxu0 0
  %562 = vmatpush1.bf16.msra.mxu0 0
  %563 = vmatprep.subr.bf16.mxu0 0
  %564 = vmatpush1.bf16.msra.mxu0 0
  %565 = vmatprep.mubr.bf16.mxu0 0
  %566 = vmatmul.mubr.bf16.gmra.mrb[0].mxu0 %v171
  %v567 = vpop.f32.mrb[0].mxu0
  %v568 = vadd.f32 0.0, %v567
  %v569 = vpop.f32.mrb[0].mxu0
  %v570 = vadd.f32 0.0, %v569
  %v571 = vpop.f32.mrb[0].mxu0
  %v572 = vadd.f32 0.0, %v571
  %v573 = vpop.f32.mrb[0].mxu0
  %v574 = vadd.f32 0.0, %v573
  %575 = vdwg.mxu0
  %576 = vmatprep.subr.bf16.mxu0 %v214
  %577 = vmatpush1.bf16.msra.mxu0 %v211
  %578 = vmatprep.subr.bf16.mxu0 0
  %579 = vmatpush1.bf16.msra.mxu0 0
  %580 = vmatprep.subr.bf16.mxu0 0
  %581 = vmatpush1.bf16.msra.mxu0 0
  %582 = vmatprep.subr.bf16.mxu0 0
  %583 = vmatpush1.bf16.msra.mxu0 0
  %584 = vmatprep.subr.bf16.mxu0 0
  %585 = vmatpush1.bf16.msra.mxu0 0
  %586 = vmatprep.subr.bf16.mxu0 0
  %587 = vmatpush1.bf16.msra.mxu0 0
  %588 = vmatprep.subr.bf16.mxu0 0
  %589 = vmatpush1.bf16.msra.mxu0 0
  %590 = vmatprep.subr.bf16.mxu0 0
  %591 = vmatpush1.bf16.msra.mxu0 0
  %592 = vmatprep.subr.bf16.mxu0 0
  %593 = vmatpush1.bf16.msra.mxu0 0
  %594 = vmatprep.subr.bf16.mxu0 0
  %595 = vmatpush1.bf16.msra.mxu0 0
  %596 = vmatprep.subr.bf16.mxu0 0
  %597 = vmatpush1.bf16.msra.mxu0 0
  %598 = vmatprep.subr.bf16.mxu0 0
  %599 = vmatpush1.bf16.msra.mxu0 0
  %600 = vmatprep.subr.bf16.mxu0 0
  %601 = vmatpush1.bf16.msra.mxu0 0
  %602 = vmatprep.subr.bf16.mxu0 0
  %603 = vmatpush1.bf16.msra.mxu0 0
  %604 = vmatprep.subr.bf16.mxu0 0
  %605 = vmatpush1.bf16.msra.mxu0 0
  %606 = vmatprep.subr.bf16.mxu0 0
  %607 = vmatpush1.bf16.msra.mxu0 0
  %608 = vmatprep.mubr.bf16.mxu0 0
  %609 = vmatmul.mubr.bf16.gmra.mrb[0].mxu0 %v171
  %v610 = vpop.f32.mrb[0].mxu0
  %v611 = vadd.f32 0.0, %v610
  %v612 = vpop.f32.mrb[0].mxu0
  %v613 = vadd.f32 0.0, %v612
  %v614 = vpop.f32.mrb[0].mxu0
  %v615 = vadd.f32 0.0, %v614
  %v616 = vpop.f32.mrb[0].mxu0
  %v617 = vadd.f32 0.0, %v616
  %618 = vdwg.mxu0
  %619 = vmatprep.subr.bf16.mxu0 %v220
  %620 = vmatpush1.bf16.msra.mxu0 %v217
  %621 = vmatprep.subr.bf16.mxu0 0
  %622 = vmatpush1.bf16.msra.mxu0 0
  %623 = vmatprep.subr.bf16.mxu0 0
  %624 = vmatpush1.bf16.msra.mxu0 0
  %625 = vmatprep.subr.bf16.mxu0 0
  %626 = vmatpush1.bf16.msra.mxu0 0
  %627 = vmatprep.subr.bf16.mxu0 0
  %628 = vmatpush1.bf16.msra.mxu0 0
  %629 = vmatprep.subr.bf16.mxu0 0
  %630 = vmatpush1.bf16.msra.mxu0 0
  %631 = vmatprep.subr.bf16.mxu0 0
  %632 = vmatpush1.bf16.msra.mxu0 0
  %633 = vmatprep.subr.bf16.mxu0 0
  %634 = vmatpush1.bf16.msra.mxu0 0
  %635 = vmatprep.subr.bf16.mxu0 0
  %636 = vmatpush1.bf16.msra.mxu0 0
  %637 = vmatprep.subr.bf16.mxu0 0
  %638 = vmatpush1.bf16.msra.mxu0 0
  %639 = vmatprep.subr.bf16.mxu0 0
  %640 = vmatpush1.bf16.msra.mxu0 0
  %641 = vmatprep.subr.bf16.mxu0 0
  %642 = vmatpush1.bf16.msra.mxu0 0
  %643 = vmatprep.subr.bf16.mxu0 0
  %644 = vmatpush1.bf16.msra.mxu0 0
  %645 = vmatprep.subr.bf16.mxu0 0
  %646 = vmatpush1.bf16.msra.mxu0 0
  %647 = vmatprep.subr.bf16.mxu0 0
  %648 = vmatpush1.bf16.msra.mxu0 0
  %649 = vmatprep.subr.bf16.mxu0 0
  %650 = vmatpush1.bf16.msra.mxu0 0
  %651 = vmatprep.mubr.bf16.mxu0 0
  %652 = vmatmul.mubr.bf16.gmra.mrb[0].mxu0 %v171
  %v653 = vpop.f32.mrb[0].mxu0
  %v654 = vadd.f32 0.0, %v653
  %v655 = vpop.f32.mrb[0].mxu0
  %v656 = vadd.f32 0.0, %v655
  %v657 = vpop.f32.mrb[0].mxu0
  %v658 = vadd.f32 0.0, %v657
  %v659 = vpop.f32.mrb[0].mxu0
  %v660 = vadd.f32 0.0, %v659
  %661 = vdwg.mxu0
  %662 = vmatprep.subr.bf16.mxu0 %v226
  %663 = vmatpush1.bf16.msra.mxu0 %v223
  %664 = vmatprep.subr.bf16.mxu0 0
  %665 = vmatpush1.bf16.msra.mxu0 0
  %666 = vmatprep.subr.bf16.mxu0 0
  %667 = vmatpush1.bf16.msra.mxu0 0
  %668 = vmatprep.subr.bf16.mxu0 0
  %669 = vmatpush1.bf16.msra.mxu0 0
  %670 = vmatprep.subr.bf16.mxu0 0
  %671 = vmatpush1.bf16.msra.mxu0 0
  %672 = vmatprep.subr.bf16.mxu0 0
  %673 = vmatpush1.bf16.msra.mxu0 0
  %674 = vmatprep.subr.bf16.mxu0 0
  %675 = vmatpush1.bf16.msra.mxu0 0
  %676 = vmatprep.subr.bf16.mxu0 0
  %677 = vmatpush1.bf16.msra.mxu0 0
  %678 = vmatprep.subr.bf16.mxu0 0
  %679 = vmatpush1.bf16.msra.mxu0 0
  %680 = vmatprep.subr.bf16.mxu0 0
  %681 = vmatpush1.bf16.msra.mxu0 0
  %682 = vmatprep.subr.bf16.mxu0 0
  %683 = vmatpush1.bf16.msra.mxu0 0
  %684 = vmatprep.subr.bf16.mxu0 0
  %685 = vmatpush1.bf16.msra.mxu0 0
  %686 = vmatprep.subr.bf16.mxu0 0
  %687 = vmatpush1.bf16.msra.mxu0 0
  %688 = vmatprep.subr.bf16.mxu0 0
  %689 = vmatpush1.bf16.msra.mxu0 0
  %690 = vmatprep.subr.bf16.mxu0 0
  %691 = vmatpush1.bf16.msra.mxu0 0
  %692 = vmatprep.subr.bf16.mxu0 0
  %693 = vmatpush1.bf16.msra.mxu0 0
  %694 = vmatprep.mubr.bf16.mxu0 0
  %695 = vmatmul.mubr.bf16.gmra.mrb[0].mxu0 %v171
  %v696 = vpop.f32.mrb[0].mxu0
  %v697 = vadd.f32 0.0, %v696
  %v698 = vpop.f32.mrb[0].mxu0
  %v699 = vadd.f32 0.0, %v698
  %v700 = vpop.f32.mrb[0].mxu0
  %v701 = vadd.f32 0.0, %v700
  %v702 = vpop.f32.mrb[0].mxu0
  %v703 = vadd.f32 0.0, %v702
  %704 = vdwg.mxu0
  %705 = vmatprep.subr.bf16.mxu0 %v232
  %706 = vmatpush1.bf16.msra.mxu0 %v229
  %707 = vmatprep.subr.bf16.mxu0 0
  %708 = vmatpush1.bf16.msra.mxu0 0
  %709 = vmatprep.subr.bf16.mxu0 0
  %710 = vmatpush1.bf16.msra.mxu0 0
  %711 = vmatprep.subr.bf16.mxu0 0
  %712 = vmatpush1.bf16.msra.mxu0 0
  %713 = vmatprep.subr.bf16.mxu0 0
  %714 = vmatpush1.bf16.msra.mxu0 0
  %715 = vmatprep.subr.bf16.mxu0 0
  %716 = vmatpush1.bf16.msra.mxu0 0
  %717 = vmatprep.subr.bf16.mxu0 0
  %718 = vmatpush1.bf16.msra.mxu0 0
  %719 = vmatprep.subr.bf16.mxu0 0
  %720 = vmatpush1.bf16.msra.mxu0 0
  %721 = vmatprep.subr.bf16.mxu0 0
  %722 = vmatpush1.bf16.msra.mxu0 0
  %723 = vmatprep.subr.bf16.mxu0 0
  %724 = vmatpush1.bf16.msra.mxu0 0
  %725 = vmatprep.subr.bf16.mxu0 0
  %726 = vmatpush1.bf16.msra.mxu0 0
  %727 = vmatprep.subr.bf16.mxu0 0
  %728 = vmatpush1.bf16.msra.mxu0 0
  %729 = vmatprep.subr.bf16.mxu0 0
  %730 = vmatpush1.bf16.msra.mxu0 0
  %731 = vmatprep.subr.bf16.mxu0 0
  %732 = vmatpush1.bf16.msra.mxu0 0
  %733 = vmatprep.subr.bf16.mxu0 0
  %734 = vmatpush1.bf16.msra.mxu0 0
  %735 = vmatprep.subr.bf16.mxu0 0
  %736 = vmatpush1.bf16.msra.mxu0 0
  %737 = vmatprep.mubr.bf16.mxu0 0
  %738 = vmatmul.mubr.bf16.gmra.mrb[0].mxu0 %v171
  %v739 = vpop.f32.mrb[0].mxu0
  %v740 = vadd.f32 0.0, %v739
  %v741 = vpop.f32.mrb[0].mxu0
  %v742 = vadd.f32 0.0, %v741
  %v743 = vpop.f32.mrb[0].mxu0
  %v744 = vadd.f32 0.0, %v743
  %v745 = vpop.f32.mrb[0].mxu0
  %v746 = vadd.f32 0.0, %v745
  %747 = vdwg.mxu0
  %748 = vmatprep.subr.bf16.mxu0 %v238
  %749 = vmatpush1.bf16.msra.mxu0 %v235
  %750 = vmatprep.subr.bf16.mxu0 0
  %751 = vmatpush1.bf16.msra.mxu0 0
  %752 = vmatprep.subr.bf16.mxu0 0
  %753 = vmatpush1.bf16.msra.mxu0 0
  %754 = vmatprep.subr.bf16.mxu0 0
  %755 = vmatpush1.bf16.msra.mxu0 0
  %756 = vmatprep.subr.bf16.mxu0 0
  %757 = vmatpush1.bf16.msra.mxu0 0
  %758 = vmatprep.subr.bf16.mxu0 0
  %759 = vmatpush1.bf16.msra.mxu0 0
  %760 = vmatprep.subr.bf16.mxu0 0
  %761 = vmatpush1.bf16.msra.mxu0 0
  %762 = vmatprep.subr.bf16.mxu0 0
  %763 = vmatpush1.bf16.msra.mxu0 0
  %764 = vmatprep.subr.bf16.mxu0 0
  %765 = vmatpush1.bf16.msra.mxu0 0
  %766 = vmatprep.subr.bf16.mxu0 0
  %767 = vmatpush1.bf16.msra.mxu0 0
  %768 = vmatprep.subr.bf16.mxu0 0
  %769 = vmatpush1.bf16.msra.mxu0 0
  %770 = vmatprep.subr.bf16.mxu0 0
  %771 = vmatpush1.bf16.msra.mxu0 0
  %772 = vmatprep.subr.bf16.mxu0 0
  %773 = vmatpush1.bf16.msra.mxu0 0
  %774 = vmatprep.subr.bf16.mxu0 0
  %775 = vmatpush1.bf16.msra.mxu0 0
  %776 = vmatprep.subr.bf16.mxu0 0
  %777 = vmatpush1.bf16.msra.mxu0 0
  %778 = vmatprep.subr.bf16.mxu0 0
  %779 = vmatpush1.bf16.msra.mxu0 0
  %780 = vmatprep.mubr.bf16.mxu0 0
  %781 = vmatmul.mubr.bf16.gmra.mrb[0].mxu0 %v171
  %v782 = vpop.f32.mrb[0].mxu0
  %v783 = vadd.f32 0.0, %v782
  %v784 = vpop.f32.mrb[0].mxu0
  %v785 = vadd.f32 0.0, %v784
  %v786 = vpop.f32.mrb[0].mxu0
  %v787 = vadd.f32 0.0, %v786
  %v788 = vpop.f32.mrb[0].mxu0
  %v789 = vadd.f32 0.0, %v788
  %790 = vdwg.mxu0
  %791 = vmatprep.subr.bf16.mxu0 %v244
  %792 = vmatpush1.bf16.msra.mxu0 %v241
  %793 = vmatprep.subr.bf16.mxu0 0
  %794 = vmatpush1.bf16.msra.mxu0 0
  %795 = vmatprep.subr.bf16.mxu0 0
  %796 = vmatpush1.bf16.msra.mxu0 0
  %797 = vmatprep.subr.bf16.mxu0 0
  %798 = vmatpush1.bf16.msra.mxu0 0
  %799 = vmatprep.subr.bf16.mxu0 0
  %800 = vmatpush1.bf16.msra.mxu0 0
  %801 = vmatprep.subr.bf16.mxu0 0
  %802 = vmatpush1.bf16.msra.mxu0 0
  %803 = vmatprep.subr.bf16.mxu0 0
  %804 = vmatpush1.bf16.msra.mxu0 0
  %805 = vmatprep.subr.bf16.mxu0 0
  %806 = vmatpush1.bf16.msra.mxu0 0
  %807 = vmatprep.subr.bf16.mxu0 0
  %808 = vmatpush1.bf16.msra.mxu0 0
  %809 = vmatprep.subr.bf16.mxu0 0
  %810 = vmatpush1.bf16.msra.mxu0 0
  %811 = vmatprep.subr.bf16.mxu0 0
  %812 = vmatpush1.bf16.msra.mxu0 0
  %813 = vmatprep.subr.bf16.mxu0 0
  %814 = vmatpush1.bf16.msra.mxu0 0
  %815 = vmatprep.subr.bf16.mxu0 0
  %816 = vmatpush1.bf16.msra.mxu0 0
  %817 = vmatprep.subr.bf16.mxu0 0
  %818 = vmatpush1.bf16.msra.mxu0 0
  %819 = vmatprep.subr.bf16.mxu0 0
  %820 = vmatpush1.bf16.msra.mxu0 0
  %821 = vmatprep.subr.bf16.mxu0 0
  %822 = vmatpush1.bf16.msra.mxu0 0
  %823 = vmatprep.mubr.bf16.mxu0 0
  %824 = vmatmul.mubr.bf16.gmra.mrb[0].mxu0 %v171
  %v825 = vpop.f32.mrb[0].mxu0
  %v826 = vadd.f32 0.0, %v825
  %v827 = vpop.f32.mrb[0].mxu0
  %v828 = vadd.f32 0.0, %v827
  %v829 = vpop.f32.mrb[0].mxu0
  %v830 = vadd.f32 0.0, %v829
  %v831 = vpop.f32.mrb[0].mxu0
  %v832 = vadd.f32 0.0, %v831
  %833 = vdwg.mxu0
  %834 = vmatprep.subr.bf16.mxu0 %v250
  %835 = vmatpush1.bf16.msra.mxu0 %v247
  %836 = vmatprep.subr.bf16.mxu0 0
  %837 = vmatpush1.bf16.msra.mxu0 0
  %838 = vmatprep.subr.bf16.mxu0 0
  %839 = vmatpush1.bf16.msra.mxu0 0
  %840 = vmatprep.subr.bf16.mxu0 0
  %841 = vmatpush1.bf16.msra.mxu0 0
  %842 = vmatprep.subr.bf16.mxu0 0
  %843 = vmatpush1.bf16.msra.mxu0 0
  %844 = vmatprep.subr.bf16.mxu0 0
  %845 = vmatpush1.bf16.msra.mxu0 0
  %846 = vmatprep.subr.bf16.mxu0 0
  %847 = vmatpush1.bf16.msra.mxu0 0
  %848 = vmatprep.subr.bf16.mxu0 0
  %849 = vmatpush1.bf16.msra.mxu0 0
  %850 = vmatprep.subr.bf16.mxu0 0
  %851 = vmatpush1.bf16.msra.mxu0 0
  %852 = vmatprep.subr.bf16.mxu0 0
  %853 = vmatpush1.bf16.msra.mxu0 0
  %854 = vmatprep.subr.bf16.mxu0 0
  %855 = vmatpush1.bf16.msra.mxu0 0
  %856 = vmatprep.subr.bf16.mxu0 0
  %857 = vmatpush1.bf16.msra.mxu0 0
  %858 = vmatprep.subr.bf16.mxu0 0
  %859 = vmatpush1.bf16.msra.mxu0 0
  %860 = vmatprep.subr.bf16.mxu0 0
  %861 = vmatpush1.bf16.msra.mxu0 0
  %862 = vmatprep.subr.bf16.mxu0 0
  %863 = vmatpush1.bf16.msra.mxu0 0
  %864 = vmatprep.subr.bf16.mxu0 0
  %865 = vmatpush1.bf16.msra.mxu0 0
  %866 = vmatprep.mubr.bf16.mxu0 0
  %867 = vmatmul.mubr.bf16.gmra.mrb[0].mxu0 %v171
  %v868 = vpop.f32.mrb[0].mxu0
  %v869 = vadd.f32 0.0, %v868
  %v870 = vpop.f32.mrb[0].mxu0
  %v871 = vadd.f32 0.0, %v870
  %v872 = vpop.f32.mrb[0].mxu0
  %v873 = vadd.f32 0.0, %v872
  %v874 = vpop.f32.mrb[0].mxu0
  %v875 = vadd.f32 0.0, %v874
  %876 = vdwg.mxu0
  %877 = vmatprep.subr.bf16.mxu0 %v256
  %878 = vmatpush1.bf16.msra.mxu0 %v253
  %879 = vmatprep.subr.bf16.mxu0 0
  %880 = vmatpush1.bf16.msra.mxu0 0
  %881 = vmatprep.subr.bf16.mxu0 0
  %882 = vmatpush1.bf16.msra.mxu0 0
  %883 = vmatprep.subr.bf16.mxu0 0
  %884 = vmatpush1.bf16.msra.mxu0 0
  %885 = vmatprep.subr.bf16.mxu0 0
  %886 = vmatpush1.bf16.msra.mxu0 0
  %887 = vmatprep.subr.bf16.mxu0 0
  %888 = vmatpush1.bf16.msra.mxu0 0
  %889 = vmatprep.subr.bf16.mxu0 0
  %890 = vmatpush1.bf16.msra.mxu0 0
  %891 = vmatprep.subr.bf16.mxu0 0
  %892 = vmatpush1.bf16.msra.mxu0 0
  %893 = vmatprep.subr.bf16.mxu0 0
  %894 = vmatpush1.bf16.msra.mxu0 0
  %895 = vmatprep.subr.bf16.mxu0 0
  %896 = vmatpush1.bf16.msra.mxu0 0
  %897 = vmatprep.subr.bf16.mxu0 0
  %898 = vmatpush1.bf16.msra.mxu0 0
  %899 = vmatprep.subr.bf16.mxu0 0
  %900 = vmatpush1.bf16.msra.mxu0 0
  %901 = vmatprep.subr.bf16.mxu0 0
  %902 = vmatpush1.bf16.msra.mxu0 0
  %903 = vmatprep.subr.bf16.mxu0 0
  %904 = vmatpush1.bf16.msra.mxu0 0
  %905 = vmatprep.subr.bf16.mxu0 0
  %906 = vmatpush1.bf16.msra.mxu0 0
  %907 = vmatprep.subr.bf16.mxu0 0
  %908 = vmatpush1.bf16.msra.mxu0 0
  %909 = vmatprep.mubr.bf16.mxu0 0
  %910 = vmatmul.mubr.bf16.gmra.mrb[0].mxu0 %v171
  %v911 = vpop.f32.mrb[0].mxu0
  %v912 = vadd.f32 0.0, %v911
  %v913 = vpop.f32.mrb[0].mxu0
  %v914 = vadd.f32 0.0, %v913
  %v915 = vpop.f32.mrb[0].mxu0
  %v916 = vadd.f32 0.0, %v915
  %v917 = vpop.f32.mrb[0].mxu0
  %v918 = vadd.f32 0.0, %v917
  %919 = vdwg.mxu0
  %920 = vmatprep.subr.bf16.mxu0 %v262
  %921 = vmatpush1.bf16.msra.mxu0 %v259
  %922 = vmatprep.subr.bf16.mxu0 0
  %923 = vmatpush1.bf16.msra.mxu0 0
  %924 = vmatprep.subr.bf16.mxu0 0
  %925 = vmatpush1.bf16.msra.mxu0 0
  %926 = vmatprep.subr.bf16.mxu0 0
  %927 = vmatpush1.bf16.msra.mxu0 0
  %928 = vmatprep.subr.bf16.mxu0 0
  %929 = vmatpush1.bf16.msra.mxu0 0
  %930 = vmatprep.subr.bf16.mxu0 0
  %931 = vmatpush1.bf16.msra.mxu0 0
  %932 = vmatprep.subr.bf16.mxu0 0
  %933 = vmatpush1.bf16.msra.mxu0 0
  %934 = vmatprep.subr.bf16.mxu0 0
  %935 = vmatpush1.bf16.msra.mxu0 0
  %936 = vmatprep.subr.bf16.mxu0 0
  %937 = vmatpush1.bf16.msra.mxu0 0
  %938 = vmatprep.subr.bf16.mxu0 0
  %939 = vmatpush1.bf16.msra.mxu0 0
  %940 = vmatprep.subr.bf16.mxu0 0
  %941 = vmatpush1.bf16.msra.mxu0 0
  %942 = vmatprep.subr.bf16.mxu0 0
  %943 = vmatpush1.bf16.msra.mxu0 0
  %944 = vmatprep.subr.bf16.mxu0 0
  %945 = vmatpush1.bf16.msra.mxu0 0
  %946 = vmatprep.subr.bf16.mxu0 0
  %947 = vmatpush1.bf16.msra.mxu0 0
  %948 = vmatprep.subr.bf16.mxu0 0
  %949 = vmatpush1.bf16.msra.mxu0 0
  %950 = vmatprep.subr.bf16.mxu0 0
  %951 = vmatpush1.bf16.msra.mxu0 0
  %952 = vmatprep.mubr.bf16.mxu0 0
  %953 = vmatmul.mubr.bf16.gmra.mrb[0].mxu0 %v171
  %v954 = vpop.f32.mrb[0].mxu0
  %v955 = vadd.f32 0.0, %v954
  %v956 = vpop.f32.mrb[0].mxu0
  %v957 = vadd.f32 0.0, %v956
  %v958 = vpop.f32.mrb[0].mxu0
  %v959 = vadd.f32 0.0, %v958
  %v960 = vpop.f32.mrb[0].mxu0
  %v961 = vadd.f32 0.0, %v960
  %962 = vdwg.mxu0
  %963 = vmatprep.subr.bf16.mxu0 %v268
  %964 = vmatpush1.bf16.msra.mxu0 %v265
  %965 = vmatprep.subr.bf16.mxu0 0
  %966 = vmatpush1.bf16.msra.mxu0 0
  %967 = vmatprep.subr.bf16.mxu0 0
  %968 = vmatpush1.bf16.msra.mxu0 0
  %969 = vmatprep.subr.bf16.mxu0 0
  %970 = vmatpush1.bf16.msra.mxu0 0
  %971 = vmatprep.subr.bf16.mxu0 0
  %972 = vmatpush1.bf16.msra.mxu0 0
  %973 = vmatprep.subr.bf16.mxu0 0
  %974 = vmatpush1.bf16.msra.mxu0 0
  %975 = vmatprep.subr.bf16.mxu0 0
  %976 = vmatpush1.bf16.msra.mxu0 0
  %977 = vmatprep.subr.bf16.mxu0 0
  %978 = vmatpush1.bf16.msra.mxu0 0
  %979 = vmatprep.subr.bf16.mxu0 0
  %980 = vmatpush1.bf16.msra.mxu0 0
  %981 = vmatprep.subr.bf16.mxu0 0
  %982 = vmatpush1.bf16.msra.mxu0 0
  %983 = vmatprep.subr.bf16.mxu0 0
  %984 = vmatpush1.bf16.msra.mxu0 0
  %985 = vmatprep.subr.bf16.mxu0 0
  %986 = vmatpush1.bf16.msra.mxu0 0
  %987 = vmatprep.subr.bf16.mxu0 0
  %988 = vmatpush1.bf16.msra.mxu0 0
  %989 = vmatprep.subr.bf16.mxu0 0
  %990 = vmatpush1.bf16.msra.mxu0 0
  %991 = vmatprep.subr.bf16.mxu0 0
  %992 = vmatpush1.bf16.msra.mxu0 0
  %993 = vmatprep.subr.bf16.mxu0 0
  %994 = vmatpush1.bf16.msra.mxu0 0
  %995 = vmatprep.mubr.bf16.mxu0 0
  %996 = vmatmul.mubr.bf16.gmra.mrb[0].mxu0 %v171
  %v997 = vpop.f32.mrb[0].mxu0
  %v998 = vadd.f32 0.0, %v997
  %v999 = vpop.f32.mrb[0].mxu0
  %v1000 = vadd.f32 0.0, %v999
  %v1001 = vpop.f32.mrb[0].mxu0
  %v1002 = vadd.f32 0.0, %v1001
  %v1003 = vpop.f32.mrb[0].mxu0
  %v1004 = vadd.f32 0.0, %v1003
  %1005 = vdwg.mxu0
  %1006 = vmatprep.subr.bf16.mxu0 %v274
  %1007 = vmatpush1.bf16.msra.mxu0 %v271
  %1008 = vmatprep.subr.bf16.mxu0 0
  %1009 = vmatpush1.bf16.msra.mxu0 0
  %1010 = vmatprep.subr.bf16.mxu0 0
  %1011 = vmatpush1.bf16.msra.mxu0 0
  %1012 = vmatprep.subr.bf16.mxu0 0
  %1013 = vmatpush1.bf16.msra.mxu0 0
  %1014 = vmatprep.subr.bf16.mxu0 0
  %1015 = vmatpush1.bf16.msra.mxu0 0
  %1016 = vmatprep.subr.bf16.mxu0 0
  %1017 = vmatpush1.bf16.msra.mxu0 0
  %1018 = vmatprep.subr.bf16.mxu0 0
  %1019 = vmatpush1.bf16.msra.mxu0 0
  %1020 = vmatprep.subr.bf16.mxu0 0
  %1021 = vmatpush1.bf16.msra.mxu0 0
  %1022 = vmatprep.subr.bf16.mxu0 0
  %1023 = vmatpush1.bf16.msra.mxu0 0
  %1024 = vmatprep.subr.bf16.mxu0 0
  %1025 = vmatpush1.bf16.msra.mxu0 0
  %1026 = vmatprep.subr.bf16.mxu0 0
  %1027 = vmatpush1.bf16.msra.mxu0 0
  %1028 = vmatprep.subr.bf16.mxu0 0
  %1029 = vmatpush1.bf16.msra.mxu0 0
  %1030 = vmatprep.subr.bf16.mxu0 0
  %1031 = vmatpush1.bf16.msra.mxu0 0
  %1032 = vmatprep.subr.bf16.mxu0 0
  %1033 = vmatpush1.bf16.msra.mxu0 0
  %1034 = vmatprep.subr.bf16.mxu0 0
  %1035 = vmatpush1.bf16.msra.mxu0 0
  %1036 = vmatprep.subr.bf16.mxu0 0
  %1037 = vmatpush1.bf16.msra.mxu0 0
  %1038 = vmatprep.mubr.bf16.mxu0 0
  %1039 = vmatmul.mubr.bf16.gmra.mrb[0].mxu0 %v171
  %v1040 = vpop.f32.mrb[0].mxu0
  %v1041 = vadd.f32 0.0, %v1040
  %v1042 = vpop.f32.mrb[0].mxu0
  %v1043 = vadd.f32 0.0, %v1042
  %v1044 = vpop.f32.mrb[0].mxu0
  %v1045 = vadd.f32 0.0, %v1044
  %v1046 = vpop.f32.mrb[0].mxu0
  %v1047 = vadd.f32 0.0, %v1046
  %1048 = vdwg.mxu0
  %1049 = vmatprep.subr.bf16.mxu0 %v280
  %1050 = vmatpush1.bf16.msra.mxu0 %v277
  %1051 = vmatprep.subr.bf16.mxu0 0
  %1052 = vmatpush1.bf16.msra.mxu0 0
  %1053 = vmatprep.subr.bf16.mxu0 0
  %1054 = vmatpush1.bf16.msra.mxu0 0
  %1055 = vmatprep.subr.bf16.mxu0 0
  %1056 = vmatpush1.bf16.msra.mxu0 0
  %1057 = vmatprep.subr.bf16.mxu0 0
  %1058 = vmatpush1.bf16.msra.mxu0 0
  %1059 = vmatprep.subr.bf16.mxu0 0
  %1060 = vmatpush1.bf16.msra.mxu0 0
  %1061 = vmatprep.subr.bf16.mxu0 0
  %1062 = vmatpush1.bf16.msra.mxu0 0
  %1063 = vmatprep.subr.bf16.mxu0 0
  %1064 = vmatpush1.bf16.msra.mxu0 0
  %1065 = vmatprep.subr.bf16.mxu0 0
  %1066 = vmatpush1.bf16.msra.mxu0 0
  %1067 = vmatprep.subr.bf16.mxu0 0
  %1068 = vmatpush1.bf16.msra.mxu0 0
  %1069 = vmatprep.subr.bf16.mxu0 0
  %1070 = vmatpush1.bf16.msra.mxu0 0
  %1071 = vmatprep.subr.bf16.mxu0 0
  %1072 = vmatpush1.bf16.msra.mxu0 0
  %1073 = vmatprep.subr.bf16.mxu0 0
  %1074 = vmatpush1.bf16.msra.mxu0 0
  %1075 = vmatprep.subr.bf16.mxu0 0
  %1076 = vmatpush1.bf16.msra.mxu0 0
  %1077 = vmatprep.subr.bf16.mxu0 0
  %1078 = vmatpush1.bf16.msra.mxu0 0
  %1079 = vmatprep.subr.bf16.mxu0 0
  %1080 = vmatpush1.bf16.msra.mxu0 0
  %1081 = vmatprep.mubr.bf16.mxu0 0
  %1082 = vmatmul.mubr.bf16.gmra.mrb[0].mxu0 %v171
  %v1083 = vpop.f32.mrb[0].mxu0
  %v1084 = vadd.f32 0.0, %v1083
  %v1085 = vpop.f32.mrb[0].mxu0
  %v1086 = vadd.f32 0.0, %v1085
  %v1087 = vpop.f32.mrb[0].mxu0
  %v1088 = vadd.f32 0.0, %v1087
  %v1089 = vpop.f32.mrb[0].mxu0
  %v1090 = vadd.f32 0.0, %v1089
  %1091 = vdwg.mxu0
  %1092 = vmatprep.subr.bf16.mxu0 %v286
  %1093 = vmatpush1.bf16.msra.mxu0 %v283
  %1094 = vmatprep.subr.bf16.mxu0 0
  %1095 = vmatpush1.bf16.msra.mxu0 0
  %1096 = vmatprep.subr.bf16.mxu0 0
  %1097 = vmatpush1.bf16.msra.mxu0 0
  %1098 = vmatprep.subr.bf16.mxu0 0
  %1099 = vmatpush1.bf16.msra.mxu0 0
  %1100 = vmatprep.subr.bf16.mxu0 0
  %1101 = vmatpush1.bf16.msra.mxu0 0
  %1102 = vmatprep.subr.bf16.mxu0 0
  %1103 = vmatpush1.bf16.msra.mxu0 0
  %1104 = vmatprep.subr.bf16.mxu0 0
  %1105 = vmatpush1.bf16.msra.mxu0 0
  %1106 = vmatprep.subr.bf16.mxu0 0
  %1107 = vmatpush1.bf16.msra.mxu0 0
  %1108 = vmatprep.subr.bf16.mxu0 0
  %1109 = vmatpush1.bf16.msra.mxu0 0
  %1110 = vmatprep.subr.bf16.mxu0 0
  %1111 = vmatpush1.bf16.msra.mxu0 0
  %1112 = vmatprep.subr.bf16.mxu0 0
  %1113 = vmatpush1.bf16.msra.mxu0 0
  %1114 = vmatprep.subr.bf16.mxu0 0
  %1115 = vmatpush1.bf16.msra.mxu0 0
  %1116 = vmatprep.subr.bf16.mxu0 0
  %1117 = vmatpush1.bf16.msra.mxu0 0
  %1118 = vmatprep.subr.bf16.mxu0 0
  %1119 = vmatpush1.bf16.msra.mxu0 0
  %1120 = vmatprep.subr.bf16.mxu0 0
  %1121 = vmatpush1.bf16.msra.mxu0 0
  %1122 = vmatprep.subr.bf16.mxu0 0
  %1123 = vmatpush1.bf16.msra.mxu0 0
  %1124 = vmatprep.mubr.bf16.mxu0 0
  %1125 = vmatmul.mubr.bf16.gmra.mrb[0].mxu0 %v171
  %v1126 = vpop.f32.mrb[0].mxu0
  %v1127 = vadd.f32 0.0, %v1126
  %v1128 = vpop.f32.mrb[0].mxu0
  %v1129 = vadd.f32 0.0, %v1128
  %v1130 = vpop.f32.mrb[0].mxu0
  %v1131 = vadd.f32 0.0, %v1130
  %v1132 = vpop.f32.mrb[0].mxu0
  %v1133 = vadd.f32 0.0, %v1132
  %1134 = vdwg.mxu0
  %1135 = vmatprep.subr.bf16.mxu0 %v292
  %1136 = vmatpush1.bf16.msra.mxu0 %v289
  %1137 = vmatprep.subr.bf16.mxu0 0
  %1138 = vmatpush1.bf16.msra.mxu0 0
  %1139 = vmatprep.subr.bf16.mxu0 0
  %1140 = vmatpush1.bf16.msra.mxu0 0
  %1141 = vmatprep.subr.bf16.mxu0 0
  %1142 = vmatpush1.bf16.msra.mxu0 0
  %1143 = vmatprep.subr.bf16.mxu0 0
  %1144 = vmatpush1.bf16.msra.mxu0 0
  %1145 = vmatprep.subr.bf16.mxu0 0
  %1146 = vmatpush1.bf16.msra.mxu0 0
  %1147 = vmatprep.subr.bf16.mxu0 0
  %1148 = vmatpush1.bf16.msra.mxu0 0
  %1149 = vmatprep.subr.bf16.mxu0 0
  %1150 = vmatpush1.bf16.msra.mxu0 0
  %1151 = vmatprep.subr.bf16.mxu0 0
  %1152 = vmatpush1.bf16.msra.mxu0 0
  %1153 = vmatprep.subr.bf16.mxu0 0
  %1154 = vmatpush1.bf16.msra.mxu0 0
  %1155 = vmatprep.subr.bf16.mxu0 0
  %1156 = vmatpush1.bf16.msra.mxu0 0
  %1157 = vmatprep.subr.bf16.mxu0 0
  %1158 = vmatpush1.bf16.msra.mxu0 0
  %1159 = vmatprep.subr.bf16.mxu0 0
  %1160 = vmatpush1.bf16.msra.mxu0 0
  %1161 = vmatprep.subr.bf16.mxu0 0
  %1162 = vmatpush1.bf16.msra.mxu0 0
  %1163 = vmatprep.subr.bf16.mxu0 0
  %1164 = vmatpush1.bf16.msra.mxu0 0
  %1165 = vmatprep.subr.bf16.mxu0 0
  %1166 = vmatpush1.bf16.msra.mxu0 0
  %1167 = vmatprep.mubr.bf16.mxu0 0
  %1168 = vmatmul.mubr.bf16.gmra.mrb[0].mxu0 %v171
  %v1169 = vpop.f32.mrb[0].mxu0
  %v1170 = vadd.f32 0.0, %v1169
  %v1171 = vpop.f32.mrb[0].mxu0
  %v1172 = vadd.f32 0.0, %v1171
  %v1173 = vpop.f32.mrb[0].mxu0
  %v1174 = vadd.f32 0.0, %v1173
  %v1175 = vpop.f32.mrb[0].mxu0
  %v1176 = vadd.f32 0.0, %v1175
  %1177 = vdwg.mxu0
  %1178 = vmatprep.subr.bf16.mxu0 %v298
  %1179 = vmatpush1.bf16.msra.mxu0 %v295
  %1180 = vmatprep.subr.bf16.mxu0 0
  %1181 = vmatpush1.bf16.msra.mxu0 0
  %1182 = vmatprep.subr.bf16.mxu0 0
  %1183 = vmatpush1.bf16.msra.mxu0 0
  %1184 = vmatprep.subr.bf16.mxu0 0
  %1185 = vmatpush1.bf16.msra.mxu0 0
  %1186 = vmatprep.subr.bf16.mxu0 0
  %1187 = vmatpush1.bf16.msra.mxu0 0
  %1188 = vmatprep.subr.bf16.mxu0 0
  %1189 = vmatpush1.bf16.msra.mxu0 0
  %1190 = vmatprep.subr.bf16.mxu0 0
  %1191 = vmatpush1.bf16.msra.mxu0 0
  %1192 = vmatprep.subr.bf16.mxu0 0
  %1193 = vmatpush1.bf16.msra.mxu0 0
  %1194 = vmatprep.subr.bf16.mxu0 0
  %1195 = vmatpush1.bf16.msra.mxu0 0
  %1196 = vmatprep.subr.bf16.mxu0 0
  %1197 = vmatpush1.bf16.msra.mxu0 0
  %1198 = vmatprep.subr.bf16.mxu0 0
  %1199 = vmatpush1.bf16.msra.mxu0 0
  %1200 = vmatprep.subr.bf16.mxu0 0
  %1201 = vmatpush1.bf16.msra.mxu0 0
  %1202 = vmatprep.subr.bf16.mxu0 0
  %1203 = vmatpush1.bf16.msra.mxu0 0
  %1204 = vmatprep.subr.bf16.mxu0 0
  %1205 = vmatpush1.bf16.msra.mxu0 0
  %1206 = vmatprep.subr.bf16.mxu0 0
  %1207 = vmatpush1.bf16.msra.mxu0 0
  %1208 = vmatprep.subr.bf16.mxu0 0
  %1209 = vmatpush1.bf16.msra.mxu0 0
  %1210 = vmatprep.mubr.bf16.mxu0 0
  %1211 = vmatmul.mubr.bf16.gmra.mrb[0].mxu0 %v171
  %v1212 = vpop.f32.mrb[0].mxu0
  %v1213 = vadd.f32 0.0, %v1212
  %v1214 = vpop.f32.mrb[0].mxu0
  %v1215 = vadd.f32 0.0, %v1214
  %v1216 = vpop.f32.mrb[0].mxu0
  %v1217 = vadd.f32 0.0, %v1216
  %v1218 = vpop.f32.mrb[0].mxu0
  %v1219 = vadd.f32 0.0, %v1218
  %1220 = vdwg.mxu0
  %1221 = vmatprep.subr.bf16.mxu0 %v304
  %1222 = vmatpush1.bf16.msra.mxu0 %v301
  %1223 = vmatprep.subr.bf16.mxu0 0
  %1224 = vmatpush1.bf16.msra.mxu0 0
  %1225 = vmatprep.subr.bf16.mxu0 0
  %1226 = vmatpush1.bf16.msra.mxu0 0
  %1227 = vmatprep.subr.bf16.mxu0 0
  %1228 = vmatpush1.bf16.msra.mxu0 0
  %1229 = vmatprep.subr.bf16.mxu0 0
  %1230 = vmatpush1.bf16.msra.mxu0 0
  %1231 = vmatprep.subr.bf16.mxu0 0
  %1232 = vmatpush1.bf16.msra.mxu0 0
  %1233 = vmatprep.subr.bf16.mxu0 0
  %1234 = vmatpush1.bf16.msra.mxu0 0
  %1235 = vmatprep.subr.bf16.mxu0 0
  %1236 = vmatpush1.bf16.msra.mxu0 0
  %1237 = vmatprep.subr.bf16.mxu0 0
  %1238 = vmatpush1.bf16.msra.mxu0 0
  %1239 = vmatprep.subr.bf16.mxu0 0
  %1240 = vmatpush1.bf16.msra.mxu0 0
  %1241 = vmatprep.subr.bf16.mxu0 0
  %1242 = vmatpush1.bf16.msra.mxu0 0
  %1243 = vmatprep.subr.bf16.mxu0 0
  %1244 = vmatpush1.bf16.msra.mxu0 0
  %1245 = vmatprep.subr.bf16.mxu0 0
  %1246 = vmatpush1.bf16.msra.mxu0 0
  %1247 = vmatprep.subr.bf16.mxu0 0
  %1248 = vmatpush1.bf16.msra.mxu0 0
  %1249 = vmatprep.subr.bf16.mxu0 0
  %1250 = vmatpush1.bf16.msra.mxu0 0
  %1251 = vmatprep.subr.bf16.mxu0 0
  %1252 = vmatpush1.bf16.msra.mxu0 0
  %1253 = vmatprep.mubr.bf16.mxu0 0
  %1254 = vmatmul.mubr.bf16.gmra.mrb[0].mxu0 %v171
  %v1255 = vpop.f32.mrb[0].mxu0
  %v1256 = vadd.f32 0.0, %v1255
  %v1257 = vpop.f32.mrb[0].mxu0
  %v1258 = vadd.f32 0.0, %v1257
  %v1259 = vpop.f32.mrb[0].mxu0
  %v1260 = vadd.f32 0.0, %v1259
  %v1261 = vpop.f32.mrb[0].mxu0
  %v1262 = vadd.f32 0.0, %v1261
  %1263 = vdwg.mxu0
  %1264 = vmatprep.subr.bf16.mxu0 %v310
  %1265 = vmatpush1.bf16.msra.mxu0 %v307
  %1266 = vmatprep.subr.bf16.mxu0 0
  %1267 = vmatpush1.bf16.msra.mxu0 0
  %1268 = vmatprep.subr.bf16.mxu0 0
  %1269 = vmatpush1.bf16.msra.mxu0 0
  %1270 = vmatprep.subr.bf16.mxu0 0
  %1271 = vmatpush1.bf16.msra.mxu0 0
  %1272 = vmatprep.subr.bf16.mxu0 0
  %1273 = vmatpush1.bf16.msra.mxu0 0
  %1274 = vmatprep.subr.bf16.mxu0 0
  %1275 = vmatpush1.bf16.msra.mxu0 0
  %1276 = vmatprep.subr.bf16.mxu0 0
  %1277 = vmatpush1.bf16.msra.mxu0 0
  %1278 = vmatprep.subr.bf16.mxu0 0
  %1279 = vmatpush1.bf16.msra.mxu0 0
  %1280 = vmatprep.subr.bf16.mxu0 0
  %1281 = vmatpush1.bf16.msra.mxu0 0
  %1282 = vmatprep.subr.bf16.mxu0 0
  %1283 = vmatpush1.bf16.msra.mxu0 0
  %1284 = vmatprep.subr.bf16.mxu0 0
  %1285 = vmatpush1.bf16.msra.mxu0 0
  %1286 = vmatprep.subr.bf16.mxu0 0
  %1287 = vmatpush1.bf16.msra.mxu0 0
  %1288 = vmatprep.subr.bf16.mxu0 0
  %1289 = vmatpush1.bf16.msra.mxu0 0
  %1290 = vmatprep.subr.bf16.mxu0 0
  %1291 = vmatpush1.bf16.msra.mxu0 0
  %1292 = vmatprep.subr.bf16.mxu0 0
  %1293 = vmatpush1.bf16.msra.mxu0 0
  %1294 = vmatprep.subr.bf16.mxu0 0
  %1295 = vmatpush1.bf16.msra.mxu0 0
  %1296 = vmatprep.mubr.bf16.mxu0 0
  %1297 = vmatmul.mubr.bf16.gmra.mrb[0].mxu0 %v171
  %v1298 = vpop.f32.mrb[0].mxu0
  %v1299 = vadd.f32 0.0, %v1298
  %v1300 = vpop.f32.mrb[0].mxu0
  %v1301 = vadd.f32 0.0, %v1300
  %v1302 = vpop.f32.mrb[0].mxu0
  %v1303 = vadd.f32 0.0, %v1302
  %v1304 = vpop.f32.mrb[0].mxu0
  %v1305 = vadd.f32 0.0, %v1304
  %1306 = vdwg.mxu0
  %1307 = vmatprep.subr.bf16.mxu0 %v316
  %1308 = vmatpush1.bf16.msra.mxu0 %v313
  %1309 = vmatprep.subr.bf16.mxu0 0
  %1310 = vmatpush1.bf16.msra.mxu0 0
  %1311 = vmatprep.subr.bf16.mxu0 0
  %1312 = vmatpush1.bf16.msra.mxu0 0
  %1313 = vmatprep.subr.bf16.mxu0 0
  %1314 = vmatpush1.bf16.msra.mxu0 0
  %1315 = vmatprep.subr.bf16.mxu0 0
  %1316 = vmatpush1.bf16.msra.mxu0 0
  %1317 = vmatprep.subr.bf16.mxu0 0
  %1318 = vmatpush1.bf16.msra.mxu0 0
  %1319 = vmatprep.subr.bf16.mxu0 0
  %1320 = vmatpush1.bf16.msra.mxu0 0
  %1321 = vmatprep.subr.bf16.mxu0 0
  %1322 = vmatpush1.bf16.msra.mxu0 0
  %1323 = vmatprep.subr.bf16.mxu0 0
  %1324 = vmatpush1.bf16.msra.mxu0 0
  %1325 = vmatprep.subr.bf16.mxu0 0
  %1326 = vmatpush1.bf16.msra.mxu0 0
  %1327 = vmatprep.subr.bf16.mxu0 0
  %1328 = vmatpush1.bf16.msra.mxu0 0
  %1329 = vmatprep.subr.bf16.mxu0 0
  %1330 = vmatpush1.bf16.msra.mxu0 0
  %1331 = vmatprep.subr.bf16.mxu0 0
  %1332 = vmatpush1.bf16.msra.mxu0 0
  %1333 = vmatprep.subr.bf16.mxu0 0
  %1334 = vmatpush1.bf16.msra.mxu0 0
  %1335 = vmatprep.subr.bf16.mxu0 0
  %1336 = vmatpush1.bf16.msra.mxu0 0
  %1337 = vmatprep.subr.bf16.mxu0 0
  %1338 = vmatpush1.bf16.msra.mxu0 0
  %1339 = vmatprep.mubr.bf16.mxu0 0
  %1340 = vmatmul.mubr.bf16.gmra.mrb[0].mxu0 %v171
  %v1341 = vpop.f32.mrb[0].mxu0
  %v1342 = vadd.f32 0.0, %v1341
  %v1343 = vpop.f32.mrb[0].mxu0
  %v1344 = vadd.f32 0.0, %v1343
  %v1345 = vpop.f32.mrb[0].mxu0
  %v1346 = vadd.f32 0.0, %v1345
  %v1347 = vpop.f32.mrb[0].mxu0
  %v1348 = vadd.f32 0.0, %v1347
  %1349 = vdwg.mxu0
  %v1350 = vmul.f32 %v353, %v353
  %v1351 = vmul.f32 %v355, %v355
  %v1352 = vmul.f32 %v396, %v396
  %v1353 = vmul.f32 %v398, %v398
  %v1354 = vmul.f32 %v439, %v439
  %v1355 = vmul.f32 %v441, %v441
  %v1356 = vmul.f32 %v482, %v482
  %v1357 = vmul.f32 %v484, %v484
  %v1358 = vmul.f32 %v525, %v525
  %v1359 = vmul.f32 %v527, %v527
  %v1360 = vmul.f32 %v568, %v568
  %v1361 = vmul.f32 %v570, %v570
  %v1362 = vmul.f32 %v611, %v611
  %v1363 = vmul.f32 %v613, %v613
  %v1364 = vmul.f32 %v654, %v654
  %v1365 = vmul.f32 %v656, %v656
  %v1366 = vmul.f32 %v357, %v357
  %v1367 = vmul.f32 %v359, %v359
  %v1368 = vmul.f32 %v400, %v400
  %v1369 = vmul.f32 %v402, %v402
  %v1370 = vmul.f32 %v443, %v443
  %v1371 = vmul.f32 %v445, %v445
  %v1372 = vmul.f32 %v486, %v486
  %v1373 = vmul.f32 %v488, %v488
  %v1374 = vmul.f32 %v529, %v529
  %v1375 = vmul.f32 %v531, %v531
  %v1376 = vmul.f32 %v572, %v572
  %v1377 = vmul.f32 %v574, %v574
  %v1378 = vmul.f32 %v615, %v615
  %v1379 = vmul.f32 %v617, %v617
  %v1380 = vmul.f32 %v658, %v658
  %v1381 = vmul.f32 %v660, %v660
  %v1382 = vmul.f32 %v697, %v697
  %v1383 = vmul.f32 %v699, %v699
  %v1384 = vmul.f32 %v740, %v740
  %v1385 = vmul.f32 %v742, %v742
  %v1386 = vmul.f32 %v783, %v783
  %v1387 = vmul.f32 %v785, %v785
  %v1388 = vmul.f32 %v826, %v826
  %v1389 = vmul.f32 %v828, %v828
  %v1390 = vmul.f32 %v869, %v869
  %v1391 = vmul.f32 %v871, %v871
  %v1392 = vmul.f32 %v912, %v912
  %v1393 = vmul.f32 %v914, %v914
  %v1394 = vmul.f32 %v955, %v955
  %v1395 = vmul.f32 %v957, %v957
  %v1396 = vmul.f32 %v998, %v998
  %v1397 = vmul.f32 %v1000, %v1000
  %v1398 = vmul.f32 %v701, %v701
  %v1399 = vmul.f32 %v703, %v703
  %v1400 = vmul.f32 %v744, %v744
  %v1401 = vmul.f32 %v746, %v746
  %v1402 = vmul.f32 %v787, %v787
  %v1403 = vmul.f32 %v789, %v789
  %v1404 = vmul.f32 %v830, %v830
  %v1405 = vmul.f32 %v832, %v832
  %v1406 = vmul.f32 %v873, %v873
  %v1407 = vmul.f32 %v875, %v875
  %v1408 = vmul.f32 %v916, %v916
  %v1409 = vmul.f32 %v918, %v918
  %v1410 = vmul.f32 %v959, %v959
  %v1411 = vmul.f32 %v961, %v961
  %v1412 = vmul.f32 %v1002, %v1002
  %v1413 = vmul.f32 %v1004, %v1004
  %v1414 = vadd.f32 %v1350, %v1382
  %v1415 = vadd.f32 %v1351, %v1383
  %v1416 = vadd.f32 %v1352, %v1384
  %v1417 = vadd.f32 %v1353, %v1385
  %v1418 = vadd.f32 %v1354, %v1386
  %v1419 = vadd.f32 %v1355, %v1387
  %v1420 = vadd.f32 %v1356, %v1388
  %v1421 = vadd.f32 %v1357, %v1389
  %v1422 = vadd.f32 %v1358, %v1390
  %v1423 = vadd.f32 %v1359, %v1391
  %v1424 = vadd.f32 %v1360, %v1392
  %v1425 = vadd.f32 %v1361, %v1393
  %v1426 = vadd.f32 %v1362, %v1394
  %v1427 = vadd.f32 %v1363, %v1395
  %v1428 = vadd.f32 %v1364, %v1396
  %v1429 = vadd.f32 %v1365, %v1397
  %v1430 = vadd.f32 %v1366, %v1398
  %v1431 = vadd.f32 %v1367, %v1399
  %v1432 = vadd.f32 %v1368, %v1400
  %v1433 = vadd.f32 %v1369, %v1401
  %v1434 = vadd.f32 %v1370, %v1402
  %v1435 = vadd.f32 %v1371, %v1403
  %v1436 = vadd.f32 %v1372, %v1404
  %v1437 = vadd.f32 %v1373, %v1405
  %v1438 = vadd.f32 %v1374, %v1406
  %v1439 = vadd.f32 %v1375, %v1407
  %v1440 = vadd.f32 %v1376, %v1408
  %v1441 = vadd.f32 %v1377, %v1409
  %v1442 = vadd.f32 %v1378, %v1410
  %v1443 = vadd.f32 %v1379, %v1411
  %v1444 = vadd.f32 %v1380, %v1412
  %v1445 = vadd.f32 %v1381, %v1413
  %v1446 = vmul.f32 %v1041, %v1041
  %v1447 = vmul.f32 %v1043, %v1043
  %v1448 = vmul.f32 %v1084, %v1084
  %v1449 = vmul.f32 %v1086, %v1086
  %v1450 = vmul.f32 %v1127, %v1127
  %v1451 = vmul.f32 %v1129, %v1129
  %v1452 = vmul.f32 %v1170, %v1170
  %v1453 = vmul.f32 %v1172, %v1172
  %v1454 = vmul.f32 %v1213, %v1213
  %v1455 = vmul.f32 %v1215, %v1215
  %v1456 = vmul.f32 %v1256, %v1256
  %v1457 = vmul.f32 %v1258, %v1258
  %v1458 = vmul.f32 %v1299, %v1299
  %v1459 = vmul.f32 %v1301, %v1301
  %v1460 = vmul.f32 %v1342, %v1342
  %v1461 = vmul.f32 %v1344, %v1344
  %v1462 = vmul.f32 %v1045, %v1045
  %v1463 = vmul.f32 %v1047, %v1047
  %v1464 = vmul.f32 %v1088, %v1088
  %v1465 = vmul.f32 %v1090, %v1090
  %v1466 = vmul.f32 %v1131, %v1131
  %v1467 = vmul.f32 %v1133, %v1133
  %v1468 = vmul.f32 %v1174, %v1174
  %v1469 = vmul.f32 %v1176, %v1176
  %v1470 = vmul.f32 %v1217, %v1217
  %v1471 = vmul.f32 %v1219, %v1219
  %v1472 = vmul.f32 %v1260, %v1260
  %v1473 = vmul.f32 %v1262, %v1262
  %v1474 = vmul.f32 %v1303, %v1303
  %v1475 = vmul.f32 %v1305, %v1305
  %v1476 = vmul.f32 %v1346, %v1346
  %v1477 = vmul.f32 %v1348, %v1348
  %v1478 = vadd.f32 %v1414, %v1446
  %v1479 = vadd.f32 %v1415, %v1447
  %v1480 = vadd.f32 %v1416, %v1448
  %v1481 = vadd.f32 %v1417, %v1449
  %v1482 = vadd.f32 %v1418, %v1450
  %v1483 = vadd.f32 %v1419, %v1451
  %v1484 = vadd.f32 %v1420, %v1452
  %v1485 = vadd.f32 %v1421, %v1453
  %v1486 = vadd.f32 %v1422, %v1454
  %v1487 = vadd.f32 %v1423, %v1455
  %v1488 = vadd.f32 %v1424, %v1456
  %v1489 = vadd.f32 %v1425, %v1457
  %v1490 = vadd.f32 %v1426, %v1458
  %v1491 = vadd.f32 %v1427, %v1459
  %v1492 = vadd.f32 %v1428, %v1460
  %v1493 = vadd.f32 %v1429, %v1461
  %v1494 = vadd.f32 %v1430, %v1462
  %v1495 = vadd.f32 %v1431, %v1463
  %v1496 = vadd.f32 %v1432, %v1464
  %v1497 = vadd.f32 %v1433, %v1465
  %v1498 = vadd.f32 %v1434, %v1466
  %v1499 = vadd.f32 %v1435, %v1467
  %v1500 = vadd.f32 %v1436, %v1468
  %v1501 = vadd.f32 %v1437, %v1469
  %v1502 = vadd.f32 %v1438, %v1470
  %v1503 = vadd.f32 %v1439, %v1471
  %v1504 = vadd.f32 %v1440, %v1472
  %v1505 = vadd.f32 %v1441, %v1473
  %v1506 = vadd.f32 %v1442, %v1474
  %v1507 = vadd.f32 %v1443, %v1475
  %v1508 = vadd.f32 %v1444, %v1476
  %v1509 = vadd.f32 %v1445, %v1477
  %v1510 = vrsqrt.pop %v1478
  %v1511 = vmul.f32 %v1478, %v1510
  %vm1512 = vcmp.eq.f32.partialorder %v1478, inf
  %v1513 = vsel %vm1512, %v1478, %v1511
  %vm1514 = vcmp.eq.f32.partialorder %v1478, 0.0
  %v1515 = vand.u32 %v1478, 2147483648
  %v1516 = vsel %vm1514, %v1515, %v1513
  %v1517 = vrsqrt.pop %v1479
  %v1518 = vmul.f32 %v1479, %v1517
  %vm1519 = vcmp.eq.f32.partialorder %v1479, inf
  %v1520 = vsel %vm1519, %v1479, %v1518
  %vm1521 = vcmp.eq.f32.partialorder %v1479, 0.0
  %v1522 = vand.u32 %v1479, 2147483648
  %v1523 = vsel %vm1521, %v1522, %v1520
  %v1524 = vrsqrt.pop %v1480
  %v1525 = vmul.f32 %v1480, %v1524
  %vm1526 = vcmp.eq.f32.partialorder %v1480, inf
  %v1527 = vsel %vm1526, %v1480, %v1525
  %vm1528 = vcmp.eq.f32.partialorder %v1480, 0.0
  %v1529 = vand.u32 %v1480, 2147483648
  %v1530 = vsel %vm1528, %v1529, %v1527
  %v1531 = vrsqrt.pop %v1481
  %v1532 = vmul.f32 %v1481, %v1531
  %vm1533 = vcmp.eq.f32.partialorder %v1481, inf
  %v1534 = vsel %vm1533, %v1481, %v1532
  %vm1535 = vcmp.eq.f32.partialorder %v1481, 0.0
  %v1536 = vand.u32 %v1481, 2147483648
  %v1537 = vsel %vm1535, %v1536, %v1534
  %v1538 = vrsqrt.pop %v1482
  %v1539 = vmul.f32 %v1482, %v1538
  %vm1540 = vcmp.eq.f32.partialorder %v1482, inf
  %v1541 = vsel %vm1540, %v1482, %v1539
  %vm1542 = vcmp.eq.f32.partialorder %v1482, 0.0
  %v1543 = vand.u32 %v1482, 2147483648
  %v1544 = vsel %vm1542, %v1543, %v1541
  %v1545 = vrsqrt.pop %v1483
  %v1546 = vmul.f32 %v1483, %v1545
  %vm1547 = vcmp.eq.f32.partialorder %v1483, inf
  %v1548 = vsel %vm1547, %v1483, %v1546
  %vm1549 = vcmp.eq.f32.partialorder %v1483, 0.0
  %v1550 = vand.u32 %v1483, 2147483648
  %v1551 = vsel %vm1549, %v1550, %v1548
  %v1552 = vrsqrt.pop %v1484
  %v1553 = vmul.f32 %v1484, %v1552
  %vm1554 = vcmp.eq.f32.partialorder %v1484, inf
  %v1555 = vsel %vm1554, %v1484, %v1553
  %vm1556 = vcmp.eq.f32.partialorder %v1484, 0.0
  %v1557 = vand.u32 %v1484, 2147483648
  %v1558 = vsel %vm1556, %v1557, %v1555
  %v1559 = vrsqrt.pop %v1485
  %v1560 = vmul.f32 %v1485, %v1559
  %vm1561 = vcmp.eq.f32.partialorder %v1485, inf
  %v1562 = vsel %vm1561, %v1485, %v1560
  %vm1563 = vcmp.eq.f32.partialorder %v1485, 0.0
  %v1564 = vand.u32 %v1485, 2147483648
  %v1565 = vsel %vm1563, %v1564, %v1562
  %v1566 = vrsqrt.pop %v1486
  %v1567 = vmul.f32 %v1486, %v1566
  %vm1568 = vcmp.eq.f32.partialorder %v1486, inf
  %v1569 = vsel %vm1568, %v1486, %v1567
  %vm1570 = vcmp.eq.f32.partialorder %v1486, 0.0
  %v1571 = vand.u32 %v1486, 2147483648
  %v1572 = vsel %vm1570, %v1571, %v1569
  %v1573 = vrsqrt.pop %v1487
  %v1574 = vmul.f32 %v1487, %v1573
  %vm1575 = vcmp.eq.f32.partialorder %v1487, inf
  %v1576 = vsel %vm1575, %v1487, %v1574
  %vm1577 = vcmp.eq.f32.partialorder %v1487, 0.0
  %v1578 = vand.u32 %v1487, 2147483648
  %v1579 = vsel %vm1577, %v1578, %v1576
  %v1580 = vrsqrt.pop %v1488
  %v1581 = vmul.f32 %v1488, %v1580
  %vm1582 = vcmp.eq.f32.partialorder %v1488, inf
  %v1583 = vsel %vm1582, %v1488, %v1581
  %vm1584 = vcmp.eq.f32.partialorder %v1488, 0.0
  %v1585 = vand.u32 %v1488, 2147483648
  %v1586 = vsel %vm1584, %v1585, %v1583
  %v1587 = vrsqrt.pop %v1489
  %v1588 = vmul.f32 %v1489, %v1587
  %vm1589 = vcmp.eq.f32.partialorder %v1489, inf
  %v1590 = vsel %vm1589, %v1489, %v1588
  %vm1591 = vcmp.eq.f32.partialorder %v1489, 0.0
  %v1592 = vand.u32 %v1489, 2147483648
  %v1593 = vsel %vm1591, %v1592, %v1590
  %v1594 = vrsqrt.pop %v1490
  %v1595 = vmul.f32 %v1490, %v1594
  %vm1596 = vcmp.eq.f32.partialorder %v1490, inf
  %v1597 = vsel %vm1596, %v1490, %v1595
  %vm1598 = vcmp.eq.f32.partialorder %v1490, 0.0
  %v1599 = vand.u32 %v1490, 2147483648
  %v1600 = vsel %vm1598, %v1599, %v1597
  %v1601 = vrsqrt.pop %v1491
  %v1602 = vmul.f32 %v1491, %v1601
  %vm1603 = vcmp.eq.f32.partialorder %v1491, inf
  %v1604 = vsel %vm1603, %v1491, %v1602
  %vm1605 = vcmp.eq.f32.partialorder %v1491, 0.0
  %v1606 = vand.u32 %v1491, 2147483648
  %v1607 = vsel %vm1605, %v1606, %v1604
  %v1608 = vrsqrt.pop %v1492
  %v1609 = vmul.f32 %v1492, %v1608
  %vm1610 = vcmp.eq.f32.partialorder %v1492, inf
  %v1611 = vsel %vm1610, %v1492, %v1609
  %vm1612 = vcmp.eq.f32.partialorder %v1492, 0.0
  %v1613 = vand.u32 %v1492, 2147483648
  %v1614 = vsel %vm1612, %v1613, %v1611
  %v1615 = vrsqrt.pop %v1493
  %v1616 = vmul.f32 %v1493, %v1615
  %vm1617 = vcmp.eq.f32.partialorder %v1493, inf
  %v1618 = vsel %vm1617, %v1493, %v1616
  %vm1619 = vcmp.eq.f32.partialorder %v1493, 0.0
  %v1620 = vand.u32 %v1493, 2147483648
  %v1621 = vsel %vm1619, %v1620, %v1618
  %v1622 = vrsqrt.pop %v1494
  %v1623 = vmul.f32 %v1494, %v1622
  %vm1624 = vcmp.eq.f32.partialorder %v1494, inf
  %v1625 = vsel %vm1624, %v1494, %v1623
  %vm1626 = vcmp.eq.f32.partialorder %v1494, 0.0
  %v1627 = vand.u32 %v1494, 2147483648
  %v1628 = vsel %vm1626, %v1627, %v1625
  %v1629 = vrsqrt.pop %v1495
  %v1630 = vmul.f32 %v1495, %v1629
  %vm1631 = vcmp.eq.f32.partialorder %v1495, inf
  %v1632 = vsel %vm1631, %v1495, %v1630
  %vm1633 = vcmp.eq.f32.partialorder %v1495, 0.0
  %v1634 = vand.u32 %v1495, 2147483648
  %v1635 = vsel %vm1633, %v1634, %v1632
  %v1636 = vrsqrt.pop %v1496
  %v1637 = vmul.f32 %v1496, %v1636
  %vm1638 = vcmp.eq.f32.partialorder %v1496, inf
  %v1639 = vsel %vm1638, %v1496, %v1637
  %vm1640 = vcmp.eq.f32.partialorder %v1496, 0.0
  %v1641 = vand.u32 %v1496, 2147483648
  %v1642 = vsel %vm1640, %v1641, %v1639
  %v1643 = vrsqrt.pop %v1497
  %v1644 = vmul.f32 %v1497, %v1643
  %vm1645 = vcmp.eq.f32.partialorder %v1497, inf
  %v1646 = vsel %vm1645, %v1497, %v1644
  %vm1647 = vcmp.eq.f32.partialorder %v1497, 0.0
  %v1648 = vand.u32 %v1497, 2147483648
  %v1649 = vsel %vm1647, %v1648, %v1646
  %v1650 = vrsqrt.pop %v1498
  %v1651 = vmul.f32 %v1498, %v1650
  %vm1652 = vcmp.eq.f32.partialorder %v1498, inf
  %v1653 = vsel %vm1652, %v1498, %v1651
  %vm1654 = vcmp.eq.f32.partialorder %v1498, 0.0
  %v1655 = vand.u32 %v1498, 2147483648
  %v1656 = vsel %vm1654, %v1655, %v1653
  %v1657 = vrsqrt.pop %v1499
  %v1658 = vmul.f32 %v1499, %v1657
  %vm1659 = vcmp.eq.f32.partialorder %v1499, inf
  %v1660 = vsel %vm1659, %v1499, %v1658
  %vm1661 = vcmp.eq.f32.partialorder %v1499, 0.0
  %v1662 = vand.u32 %v1499, 2147483648
  %v1663 = vsel %vm1661, %v1662, %v1660
  %v1664 = vrsqrt.pop %v1500
  %v1665 = vmul.f32 %v1500, %v1664
  %vm1666 = vcmp.eq.f32.partialorder %v1500, inf
  %v1667 = vsel %vm1666, %v1500, %v1665
  %vm1668 = vcmp.eq.f32.partialorder %v1500, 0.0
  %v1669 = vand.u32 %v1500, 2147483648
  %v1670 = vsel %vm1668, %v1669, %v1667
  %v1671 = vrsqrt.pop %v1501
  %v1672 = vmul.f32 %v1501, %v1671
  %vm1673 = vcmp.eq.f32.partialorder %v1501, inf
  %v1674 = vsel %vm1673, %v1501, %v1672
  %vm1675 = vcmp.eq.f32.partialorder %v1501, 0.0
  %v1676 = vand.u32 %v1501, 2147483648
  %v1677 = vsel %vm1675, %v1676, %v1674
  %v1678 = vrsqrt.pop %v1502
  %v1679 = vmul.f32 %v1502, %v1678
  %vm1680 = vcmp.eq.f32.partialorder %v1502, inf
  %v1681 = vsel %vm1680, %v1502, %v1679
  %vm1682 = vcmp.eq.f32.partialorder %v1502, 0.0
  %v1683 = vand.u32 %v1502, 2147483648
  %v1684 = vsel %vm1682, %v1683, %v1681
  %v1685 = vrsqrt.pop %v1503
  %v1686 = vmul.f32 %v1503, %v1685
  %vm1687 = vcmp.eq.f32.partialorder %v1503, inf
  %v1688 = vsel %vm1687, %v1503, %v1686
  %vm1689 = vcmp.eq.f32.partialorder %v1503, 0.0
  %v1690 = vand.u32 %v1503, 2147483648
  %v1691 = vsel %vm1689, %v1690, %v1688
  %v1692 = vrsqrt.pop %v1504
  %v1693 = vmul.f32 %v1504, %v1692
  %vm1694 = vcmp.eq.f32.partialorder %v1504, inf
  %v1695 = vsel %vm1694, %v1504, %v1693
  %vm1696 = vcmp.eq.f32.partialorder %v1504, 0.0
  %v1697 = vand.u32 %v1504, 2147483648
  %v1698 = vsel %vm1696, %v1697, %v1695
  %v1699 = vrsqrt.pop %v1505
  %v1700 = vmul.f32 %v1505, %v1699
  %vm1701 = vcmp.eq.f32.partialorder %v1505, inf
  %v1702 = vsel %vm1701, %v1505, %v1700
  %vm1703 = vcmp.eq.f32.partialorder %v1505, 0.0
  %v1704 = vand.u32 %v1505, 2147483648
  %v1705 = vsel %vm1703, %v1704, %v1702
  %v1706 = vrsqrt.pop %v1506
  %v1707 = vmul.f32 %v1506, %v1706
  %vm1708 = vcmp.eq.f32.partialorder %v1506, inf
  %v1709 = vsel %vm1708, %v1506, %v1707
  %vm1710 = vcmp.eq.f32.partialorder %v1506, 0.0
  %v1711 = vand.u32 %v1506, 2147483648
  %v1712 = vsel %vm1710, %v1711, %v1709
  %v1713 = vrsqrt.pop %v1507
  %v1714 = vmul.f32 %v1507, %v1713
  %vm1715 = vcmp.eq.f32.partialorder %v1507, inf
  %v1716 = vsel %vm1715, %v1507, %v1714
  %vm1717 = vcmp.eq.f32.partialorder %v1507, 0.0
  %v1718 = vand.u32 %v1507, 2147483648
  %v1719 = vsel %vm1717, %v1718, %v1716
  %v1720 = vrsqrt.pop %v1508
  %v1721 = vmul.f32 %v1508, %v1720
  %vm1722 = vcmp.eq.f32.partialorder %v1508, inf
  %v1723 = vsel %vm1722, %v1508, %v1721
  %vm1724 = vcmp.eq.f32.partialorder %v1508, 0.0
  %v1725 = vand.u32 %v1508, 2147483648
  %v1726 = vsel %vm1724, %v1725, %v1723
  %v1727 = vrsqrt.pop %v1509
  %v1728 = vmul.f32 %v1509, %v1727
  %vm1729 = vcmp.eq.f32.partialorder %v1509, inf
  %v1730 = vsel %vm1729, %v1509, %v1728
  %vm1731 = vcmp.eq.f32.partialorder %v1509, 0.0
  %v1732 = vand.u32 %v1509, 2147483648
  %v1733 = vsel %vm1731, %v1732, %v1730
  %v1734 = vld [vmem:[%s3] sm:$0xff]
  %v1735 = vld [vmem:[%s3 + $0x8] sm:$0xff]
  %1737 = vset.pattern.permute.xlu0 0
  %1738 = vperm.xlu0 %1737, %v1734
  %v1739 = vpop.permute.xlu0 %1738
  %1742 = vset.pattern.permute.xlu0 0
  %1743 = vperm.xlu0 %1742, %v1735
  %v1744 = vpop.permute.xlu0 %1743
  %v1746 = vmul.f32 %v1516, %v1739
  %v1747 = vmul.f32 %v1523, %v1739
  %v1748 = vmul.f32 %v1530, %v1739
  %v1749 = vmul.f32 %v1537, %v1739
  %v1750 = vmul.f32 %v1544, %v1739
  %v1751 = vmul.f32 %v1551, %v1739
  %v1752 = vmul.f32 %v1558, %v1739
  %v1753 = vmul.f32 %v1565, %v1739
  %v1754 = vmul.f32 %v1572, %v1739
  %v1755 = vmul.f32 %v1579, %v1739
  %v1756 = vmul.f32 %v1586, %v1739
  %v1757 = vmul.f32 %v1593, %v1739
  %v1758 = vmul.f32 %v1600, %v1739
  %v1759 = vmul.f32 %v1607, %v1739
  %v1760 = vmul.f32 %v1614, %v1739
  %v1761 = vmul.f32 %v1621, %v1739
  %v1762 = vmul.f32 %v1628, %v1744
  %v1763 = vmul.f32 %v1635, %v1744
  %v1764 = vmul.f32 %v1642, %v1744
  %v1765 = vmul.f32 %v1649, %v1744
  %v1766 = vmul.f32 %v1656, %v1744
  %v1767 = vmul.f32 %v1663, %v1744
  %v1768 = vmul.f32 %v1670, %v1744
  %v1769 = vmul.f32 %v1677, %v1744
  %v1770 = vmul.f32 %v1684, %v1744
  %v1771 = vmul.f32 %v1691, %v1744
  %v1772 = vmul.f32 %v1698, %v1744
  %v1773 = vmul.f32 %v1705, %v1744
  %v1774 = vmul.f32 %v1712, %v1744
  %v1775 = vmul.f32 %v1719, %v1744
  %v1776 = vmul.f32 %v1726, %v1744
  %v1777 = vmul.f32 %v1733, %v1744
  %v1778 = vld [vmem:[%s2] sm:$0xff]
  %v1779 = vld [vmem:[%s2 + $0x8] sm:$0xff]
  %1781 = vset.pattern.permute.xlu0 0
  %1782 = vperm.xlu0 %1781, %v1778
  %v1783 = vpop.permute.xlu0 %1782
  %1786 = vset.pattern.permute.xlu0 0
  %1787 = vperm.xlu0 %1786, %v1779
  %v1788 = vpop.permute.xlu0 %1787
  %v1790 = vmin.f32 %v1746, %v1783
  %v1791 = vmin.f32 %v1747, %v1783
  %v1792 = vmin.f32 %v1748, %v1783
  %v1793 = vmin.f32 %v1749, %v1783
  %v1794 = vmin.f32 %v1750, %v1783
  %v1795 = vmin.f32 %v1751, %v1783
  %v1796 = vmin.f32 %v1752, %v1783
  %v1797 = vmin.f32 %v1753, %v1783
  %v1798 = vmin.f32 %v1754, %v1783
  %v1799 = vmin.f32 %v1755, %v1783
  %v1800 = vmin.f32 %v1756, %v1783
  %v1801 = vmin.f32 %v1757, %v1783
  %v1802 = vmin.f32 %v1758, %v1783
  %v1803 = vmin.f32 %v1759, %v1783
  %v1804 = vmin.f32 %v1760, %v1783
  %v1805 = vmin.f32 %v1761, %v1783
  %v1806 = vmin.f32 %v1762, %v1788
  %v1807 = vmin.f32 %v1763, %v1788
  %v1808 = vmin.f32 %v1764, %v1788
  %v1809 = vmin.f32 %v1765, %v1788
  %v1810 = vmin.f32 %v1766, %v1788
  %v1811 = vmin.f32 %v1767, %v1788
  %v1812 = vmin.f32 %v1768, %v1788
  %v1813 = vmin.f32 %v1769, %v1788
  %v1814 = vmin.f32 %v1770, %v1788
  %v1815 = vmin.f32 %v1771, %v1788
  %v1816 = vmin.f32 %v1772, %v1788
  %v1817 = vmin.f32 %v1773, %v1788
  %v1818 = vmin.f32 %v1774, %v1788
  %v1819 = vmin.f32 %v1775, %v1788
  %v1820 = vmin.f32 %v1776, %v1788
  %v1821 = vmin.f32 %v1777, %v1788
  %v1822 = vmul.f32 %v353, %v1790
  %v1823 = vmul.f32 %v355, %v1791
  %v1824 = vmul.f32 %v396, %v1792
  %v1825 = vmul.f32 %v398, %v1793
  %v1826 = vmul.f32 %v439, %v1794
  %v1827 = vmul.f32 %v441, %v1795
  %v1828 = vmul.f32 %v482, %v1796
  %v1829 = vmul.f32 %v484, %v1797
  %v1830 = vmul.f32 %v525, %v1798
  %v1831 = vmul.f32 %v527, %v1799
  %v1832 = vmul.f32 %v568, %v1800
  %v1833 = vmul.f32 %v570, %v1801
  %v1834 = vmul.f32 %v611, %v1802
  %v1835 = vmul.f32 %v613, %v1803
  %v1836 = vmul.f32 %v654, %v1804
  %v1837 = vmul.f32 %v656, %v1805
  %v1838 = vmul.f32 %v357, %v1806
  %v1839 = vmul.f32 %v359, %v1807
  %v1840 = vmul.f32 %v400, %v1808
  %v1841 = vmul.f32 %v402, %v1809
  %v1842 = vmul.f32 %v443, %v1810
  %v1843 = vmul.f32 %v445, %v1811
  %v1844 = vmul.f32 %v486, %v1812
  %v1845 = vmul.f32 %v488, %v1813
  %v1846 = vmul.f32 %v529, %v1814
  %v1847 = vmul.f32 %v531, %v1815
  %v1848 = vmul.f32 %v572, %v1816
  %v1849 = vmul.f32 %v574, %v1817
  %v1850 = vmul.f32 %v615, %v1818
  %v1851 = vmul.f32 %v617, %v1819
  %v1852 = vmul.f32 %v658, %v1820
  %v1853 = vmul.f32 %v660, %v1821
  %v1854 = vmul.f32 %v697, %v1790
  %v1855 = vmul.f32 %v699, %v1791
  %v1856 = vmul.f32 %v740, %v1792
  %v1857 = vmul.f32 %v742, %v1793
  %v1858 = vmul.f32 %v783, %v1794
  %v1859 = vmul.f32 %v785, %v1795
  %v1860 = vmul.f32 %v826, %v1796
  %v1861 = vmul.f32 %v828, %v1797
  %v1862 = vmul.f32 %v869, %v1798
  %v1863 = vmul.f32 %v871, %v1799
  %v1864 = vmul.f32 %v912, %v1800
  %v1865 = vmul.f32 %v914, %v1801
  %v1866 = vmul.f32 %v955, %v1802
  %v1867 = vmul.f32 %v957, %v1803
  %v1868 = vmul.f32 %v998, %v1804
  %v1869 = vmul.f32 %v1000, %v1805
  %v1870 = vmul.f32 %v701, %v1806
  %v1871 = vmul.f32 %v703, %v1807
  %v1872 = vmul.f32 %v744, %v1808
  %v1873 = vmul.f32 %v746, %v1809
  %v1874 = vmul.f32 %v787, %v1810
  %v1875 = vmul.f32 %v789, %v1811
  %v1876 = vmul.f32 %v830, %v1812
  %v1877 = vmul.f32 %v832, %v1813
  %v1878 = vmul.f32 %v873, %v1814
  %v1879 = vmul.f32 %v875, %v1815
  %v1880 = vmul.f32 %v916, %v1816
  %v1881 = vmul.f32 %v918, %v1817
  %v1882 = vmul.f32 %v959, %v1818
  %v1883 = vmul.f32 %v961, %v1819
  %v1884 = vmul.f32 %v1002, %v1820
  %v1885 = vmul.f32 %v1004, %v1821
  %v1886 = vmul.f32 %v1041, %v1790
  %v1887 = vmul.f32 %v1043, %v1791
  %v1888 = vmul.f32 %v1084, %v1792
  %v1889 = vmul.f32 %v1086, %v1793
  %v1890 = vmul.f32 %v1127, %v1794
  %v1891 = vmul.f32 %v1129, %v1795
  %v1892 = vmul.f32 %v1170, %v1796
  %v1893 = vmul.f32 %v1172, %v1797
  %v1894 = vmul.f32 %v1213, %v1798
  %v1895 = vmul.f32 %v1215, %v1799
  %v1896 = vmul.f32 %v1256, %v1800
  %v1897 = vmul.f32 %v1258, %v1801
  %v1898 = vmul.f32 %v1299, %v1802
  %v1899 = vmul.f32 %v1301, %v1803
  %v1900 = vmul.f32 %v1342, %v1804
  %v1901 = vmul.f32 %v1344, %v1805
  %v1902 = vmul.f32 %v1045, %v1806
  %v1903 = vmul.f32 %v1047, %v1807
  %v1904 = vmul.f32 %v1088, %v1808
  %v1905 = vmul.f32 %v1090, %v1809
  %v1906 = vmul.f32 %v1131, %v1810
  %v1907 = vmul.f32 %v1133, %v1811
  %v1908 = vmul.f32 %v1174, %v1812
  %v1909 = vmul.f32 %v1176, %v1813
  %v1910 = vmul.f32 %v1217, %v1814
  %v1911 = vmul.f32 %v1219, %v1815
  %v1912 = vmul.f32 %v1260, %v1816
  %v1913 = vmul.f32 %v1262, %v1817
  %v1914 = vmul.f32 %v1303, %v1818
  %v1915 = vmul.f32 %v1305, %v1819
  %v1916 = vmul.f32 %v1346, %v1820
  %v1917 = vmul.f32 %v1348, %v1821
  %vm1918 = vcmp.gt.f32.partialorder %v1479, %v1478
  %vm1919 = vcmp.gt.f32.partialorder %v1495, %v1494
  %v1920 = vsel %vm1918, %v1479, %v1478
  %v1921 = vsel %vm1919, %v1495, %v1494
  %v1922 = vsel %vm1918, %v1823, %v1822
  %v1923 = vsel %vm1919, %v1839, %v1838
  %v1924 = vsel %vm1918, %v1855, %v1854
  %v1925 = vsel %vm1919, %v1871, %v1870
  %v1926 = vsel %vm1918, %v1887, %v1886
  %v1927 = vsel %vm1919, %v1903, %v1902
  %vm1928 = vcmp.gt.f32.partialorder %v1480, %v1920
  %vm1929 = vcmp.gt.f32.partialorder %v1496, %v1921
  %v1930 = vsel %vm1928, %v1480, %v1920
  %v1931 = vsel %vm1929, %v1496, %v1921
  %v1932 = vsel %vm1928, %v1824, %v1922
  %v1933 = vsel %vm1929, %v1840, %v1923
  %v1934 = vsel %vm1928, %v1856, %v1924
  %v1935 = vsel %vm1929, %v1872, %v1925
  %v1936 = vsel %vm1928, %v1888, %v1926
  %v1937 = vsel %vm1929, %v1904, %v1927
  %vm1938 = vcmp.gt.f32.partialorder %v1481, %v1930
  %vm1939 = vcmp.gt.f32.partialorder %v1497, %v1931
  %v1940 = vsel %vm1938, %v1481, %v1930
  %v1941 = vsel %vm1939, %v1497, %v1931
  %v1942 = vsel %vm1938, %v1825, %v1932
  %v1943 = vsel %vm1939, %v1841, %v1933
  %v1944 = vsel %vm1938, %v1857, %v1934
  %v1945 = vsel %vm1939, %v1873, %v1935
  %v1946 = vsel %vm1938, %v1889, %v1936
  %v1947 = vsel %vm1939, %v1905, %v1937
  %vm1948 = vcmp.gt.f32.partialorder %v1482, %v1940
  %vm1949 = vcmp.gt.f32.partialorder %v1498, %v1941
  %v1950 = vsel %vm1948, %v1482, %v1940
  %v1951 = vsel %vm1949, %v1498, %v1941
  %v1952 = vsel %vm1948, %v1826, %v1942
  %v1953 = vsel %vm1949, %v1842, %v1943
  %v1954 = vsel %vm1948, %v1858, %v1944
  %v1955 = vsel %vm1949, %v1874, %v1945
  %v1956 = vsel %vm1948, %v1890, %v1946
  %v1957 = vsel %vm1949, %v1906, %v1947
  %vm1958 = vcmp.gt.f32.partialorder %v1483, %v1950
  %vm1959 = vcmp.gt.f32.partialorder %v1499, %v1951
  %v1960 = vsel %vm1958, %v1483, %v1950
  %v1961 = vsel %vm1959, %v1499, %v1951
  %v1962 = vsel %vm1958, %v1827, %v1952
  %v1963 = vsel %vm1959, %v1843, %v1953
  %v1964 = vsel %vm1958, %v1859, %v1954
  %v1965 = vsel %vm1959, %v1875, %v1955
  %v1966 = vsel %vm1958, %v1891, %v1956
  %v1967 = vsel %vm1959, %v1907, %v1957
  %vm1968 = vcmp.gt.f32.partialorder %v1484, %v1960
  %vm1969 = vcmp.gt.f32.partialorder %v1500, %v1961
  %v1970 = vsel %vm1968, %v1484, %v1960
  %v1971 = vsel %vm1969, %v1500, %v1961
  %v1972 = vsel %vm1968, %v1828, %v1962
  %v1973 = vsel %vm1969, %v1844, %v1963
  %v1974 = vsel %vm1968, %v1860, %v1964
  %v1975 = vsel %vm1969, %v1876, %v1965
  %v1976 = vsel %vm1968, %v1892, %v1966
  %v1977 = vsel %vm1969, %v1908, %v1967
  %vm1978 = vcmp.gt.f32.partialorder %v1485, %v1970
  %vm1979 = vcmp.gt.f32.partialorder %v1501, %v1971
  %v1980 = vsel %vm1978, %v1485, %v1970
  %v1981 = vsel %vm1979, %v1501, %v1971
  %v1982 = vsel %vm1978, %v1829, %v1972
  %v1983 = vsel %vm1979, %v1845, %v1973
  %v1984 = vsel %vm1978, %v1861, %v1974
  %v1985 = vsel %vm1979, %v1877, %v1975
  %v1986 = vsel %vm1978, %v1893, %v1976
  %v1987 = vsel %vm1979, %v1909, %v1977
  %vm1988 = vcmp.gt.f32.partialorder %v1486, %v1980
  %vm1989 = vcmp.gt.f32.partialorder %v1502, %v1981
  %v1990 = vsel %vm1988, %v1486, %v1980
  %v1991 = vsel %vm1989, %v1502, %v1981
  %v1992 = vsel %vm1988, %v1830, %v1982
  %v1993 = vsel %vm1989, %v1846, %v1983
  %v1994 = vsel %vm1988, %v1862, %v1984
  %v1995 = vsel %vm1989, %v1878, %v1985
  %v1996 = vsel %vm1988, %v1894, %v1986
  %v1997 = vsel %vm1989, %v1910, %v1987
  %vm1998 = vcmp.gt.f32.partialorder %v1487, %v1990
  %vm1999 = vcmp.gt.f32.partialorder %v1503, %v1991
  %v2000 = vsel %vm1998, %v1487, %v1990
  %v2001 = vsel %vm1999, %v1503, %v1991
  %v2002 = vsel %vm1998, %v1831, %v1992
  %v2003 = vsel %vm1999, %v1847, %v1993
  %v2004 = vsel %vm1998, %v1863, %v1994
  %v2005 = vsel %vm1999, %v1879, %v1995
  %v2006 = vsel %vm1998, %v1895, %v1996
  %v2007 = vsel %vm1999, %v1911, %v1997
  %vm2008 = vcmp.gt.f32.partialorder %v1488, %v2000
  %vm2009 = vcmp.gt.f32.partialorder %v1504, %v2001
  %v2010 = vsel %vm2008, %v1488, %v2000
  %v2011 = vsel %vm2009, %v1504, %v2001
  %v2012 = vsel %vm2008, %v1832, %v2002
  %v2013 = vsel %vm2009, %v1848, %v2003
  %v2014 = vsel %vm2008, %v1864, %v2004
  %v2015 = vsel %vm2009, %v1880, %v2005
  %v2016 = vsel %vm2008, %v1896, %v2006
  %v2017 = vsel %vm2009, %v1912, %v2007
  %vm2018 = vcmp.gt.f32.partialorder %v1489, %v2010
  %vm2019 = vcmp.gt.f32.partialorder %v1505, %v2011
  %v2020 = vsel %vm2018, %v1489, %v2010
  %v2021 = vsel %vm2019, %v1505, %v2011
  %v2022 = vsel %vm2018, %v1833, %v2012
  %v2023 = vsel %vm2019, %v1849, %v2013
  %v2024 = vsel %vm2018, %v1865, %v2014
  %v2025 = vsel %vm2019, %v1881, %v2015
  %v2026 = vsel %vm2018, %v1897, %v2016
  %v2027 = vsel %vm2019, %v1913, %v2017
  %vm2028 = vcmp.gt.f32.partialorder %v1490, %v2020
  %vm2029 = vcmp.gt.f32.partialorder %v1506, %v2021
  %v2030 = vsel %vm2028, %v1490, %v2020
  %v2031 = vsel %vm2029, %v1506, %v2021
  %v2032 = vsel %vm2028, %v1834, %v2022
  %v2033 = vsel %vm2029, %v1850, %v2023
  %v2034 = vsel %vm2028, %v1866, %v2024
  %v2035 = vsel %vm2029, %v1882, %v2025
  %v2036 = vsel %vm2028, %v1898, %v2026
  %v2037 = vsel %vm2029, %v1914, %v2027
  %vm2038 = vcmp.gt.f32.partialorder %v1491, %v2030
  %vm2039 = vcmp.gt.f32.partialorder %v1507, %v2031
  %v2040 = vsel %vm2038, %v1491, %v2030
  %v2041 = vsel %vm2039, %v1507, %v2031
  %v2042 = vsel %vm2038, %v1835, %v2032
  %v2043 = vsel %vm2039, %v1851, %v2033
  %v2044 = vsel %vm2038, %v1867, %v2034
  %v2045 = vsel %vm2039, %v1883, %v2035
  %v2046 = vsel %vm2038, %v1899, %v2036
  %v2047 = vsel %vm2039, %v1915, %v2037
  %vm2048 = vcmp.gt.f32.partialorder %v1492, %v2040
  %vm2049 = vcmp.gt.f32.partialorder %v1508, %v2041
  %v2050 = vsel %vm2048, %v1492, %v2040
  %v2051 = vsel %vm2049, %v1508, %v2041
  %v2052 = vsel %vm2048, %v1836, %v2042
  %v2053 = vsel %vm2049, %v1852, %v2043
  %v2054 = vsel %vm2048, %v1868, %v2044
  %v2055 = vsel %vm2049, %v1884, %v2045
  %v2056 = vsel %vm2048, %v1900, %v2046
  %v2057 = vsel %vm2049, %v1916, %v2047
  %vm2058 = vcmp.gt.f32.partialorder %v1493, %v2050
  %vm2059 = vcmp.gt.f32.partialorder %v1509, %v2051
  %v2060 = vsel %vm2058, %v1837, %v2052
  %v2061 = vsel %vm2059, %v1853, %v2053
  %v2062 = vsel %vm2058, %v1869, %v2054
  %v2063 = vsel %vm2059, %v1885, %v2055
  %v2064 = vsel %vm2058, %v1901, %v2056
  %v2065 = vsel %vm2059, %v1917, %v2057
  %2066 = vst [vmem:[%s4] sm:$0xff] %v2060
  %2067 = vst [vmem:[%s4 + $0x8] sm:$0xff] %v2061
  %s2068 = scalar_lea.vmem %s4, 16
  %2069 = vst [vmem:[%s2068] sm:$0xff] %v2062
  %2070 = vst [vmem:[%s2068 + $0x8] sm:$0xff] %v2063
  %s2071 = scalar_lea.vmem %s4, 32
  %2072 = vst [vmem:[%s2071] sm:$0xff] %v2064
  %2073 = vst [vmem:[%s2071 + $0x8] sm:$0xff] %v2065
  // Predicated region
  $region18: #{a_call__.11} parent=0 // pred_check
    _
  $region19: #{a_call__.11} parent=0 // pred_check_branch
    %2075 = sbr.rel (0) target = $region21
  $region20: #{a_call__.11} parent=0 // pred_region
    _
  $region21: #{a_call__.11} parent=0 // pred_fallthru
    _
  // Predicated region
  $region22: #{a_call__.11} parent=0 // pred_check
    _
  $region23: #{a_call__.11} parent=0 // pred_check_branch
    %2077 = sbr.rel (0) target = $region25
  $region24: #{a_call__.11} parent=0 // pred_region
    _
  $region25: #{a_call__.11} parent=0 // pred_fallthru
    _

</llo_original>
